<compile_context>
chip_gen: v5e
topology: v5e:2x2
jax: 0.10.0
libtpu: 0.0.40
codegen_flags: <defaults>
</compile_context>

<pallas_src>
import math
from functools import partial

import jax
import jax.numpy as jnp
from jax import lax
from jax.experimental import pallas as pl
from jax.experimental.pallas import tpu as pltpu

# ----------------------------- model config ---------------------------------
D_MODEL = 32            # d_model (small synthetic size; 768 in the original)
N_HEAD = 4              # must divide D_MODEL
NUM_LAYERS = 2
HEAD_DIM = D_MODEL // N_HEAD
HIDDEN = D_MODEL // 2   # LSTM hidden size per direction (2*HIDDEN == D_MODEL)
LN_EPS = 1e-5
NEG_INF = -1e30


# ----------------------------- kernel helpers --------------------------------
def _layer_norm(x, gamma, beta):
    mu = jnp.mean(x, axis=-1, keepdims=True)
    xc = x - mu
    var = jnp.mean(xc * xc, axis=-1, keepdims=True)
    return xc * lax.rsqrt(var + LN_EPS) * gamma + beta


def _lstm_cell(g, c_prev, H):
    # Full-width transcendentals once (EUP), then cheap slices.
    # PyTorch gate order: i, f, g, o.
    sg = jax.nn.sigmoid(g)
    tg = jnp.tanh(g)
    i_ = sg[:, 0:H]
    f_ = sg[:, H:2 * H]
    gg = tg[:, 2 * H:3 * H]
    o_ = sg[:, 3 * H:4 * H]
    c_new = f_ * c_prev + i_ * gg
    h_new = o_ * jnp.tanh(c_new)
    return h_new, c_new


# -----------------------------------------------------------------------------
# Fused per-layer kernel: MHA -> add+LN1 -> BiLSTM -> add+LN2.
# Grid is (B,); each program handles one batch row (batch rows are independent).
# -----------------------------------------------------------------------------
def lab_layer_kernel(x_ref, mask_ref,
                     wqkv_ref, bqkv_ref, wfc_ref, bfc_ref,
                     ln1_g_ref, ln1_b_ref,
                     wih_ref, bih_ref, whh_ref,
                     ln2_g_ref, ln2_b_ref,
                     out_ref, hn_ref, cn_ref,
                     *, n_head, hidden, scale_inv):
    L, D = x_ref.shape
    H = hidden
    hd = D // n_head

    x = x_ref[...].astype(jnp.float32)                                   # (L, D)

    # ---------------- multi-head self-attention (all heads batched) ----------
    qkv = jnp.dot(x, wqkv_ref[...],
                  preferred_element_type=jnp.float32) + bqkv_ref[...]     # (L, 3D)
    q = qkv[:, 0:D].reshape(L, n_head, hd)
    k = qkv[:, D:2 * D].reshape(L, n_head, hd)
    v = qkv[:, 2 * D:3 * D].reshape(L, n_head, hd)

    s = jnp.einsum('qhd,khd->hqk', q, k,
                   preferred_element_type=jnp.float32) * scale_inv        # (nh, L, L)
    # key-padding mask (int compare, applied along the key axis).  NOTE: a
    # fully-padded row degrades to a uniform softmax here (finite NEG_INF),
    # instead of NaN like PyTorch; never hit in LAB usage.
    key_bias = jnp.where(mask_ref[...] == 0, NEG_INF, 0.0)                # (1, L)
    s = s + key_bias[None, :, :]
    s = s - jnp.max(s, axis=-1, keepdims=True)
    e = jnp.exp(s)
    p = e * pl.reciprocal(jnp.sum(e, axis=-1, keepdims=True), approx=True)
    ctx = jnp.einsum('hqk,khd->qhd', p, v,
                     preferred_element_type=jnp.float32).reshape(L, D)
    a = jnp.dot(ctx, wfc_ref[...],
                preferred_element_type=jnp.float32) + bfc_ref[...]        # (L, D)

    # ---------------- residual + LayerNorm1 (dropout = identity) -------------
    x1 = _layer_norm(a + x, ln1_g_ref[...], ln1_b_ref[...])               # (L, D)

    # ---------------- bidirectional LSTM -------------------------------------
    # One wide input projection for BOTH directions: (L, D) @ (D, 8H).
    gx = jnp.dot(x1, wih_ref[...],
                 preferred_element_type=jnp.float32) + bih_ref[...]       # (L, 8H)
    gx_f = gx[:, 0:4 * H]           # forward-direction input gates
    gx_b = gx[:, 4 * H:8 * H]       # backward-direction input gates
    whh_f = whh_ref[0]              # (H, 4H)
    whh_b = whh_ref[1]              # (H, 4H)

    h_f = jnp.zeros((1, H), jnp.float32)
    c_f = jnp.zeros((1, H), jnp.float32)
    h_b = jnp.zeros((1, H), jnp.float32)
    c_b = jnp.zeros((1, H), jnp.float32)
    yf = [None] * L
    yb = [None] * L
    # Merged fwd/bwd recurrence, fully unrolled at trace time (L is static) —
    # equivalent to fori_loop(..., unroll=True): both independent direction
    # chains live in the same iteration so the scheduler can interleave them.
    for t in range(L):
        rt = L - 1 - t
        g_f = gx_f[t:t + 1, :] + jnp.dot(h_f, whh_f,
                                         preferred_element_type=jnp.float32)
        g_b = gx_b[rt:rt + 1, :] + jnp.dot(h_b, whh_b,
                                           preferred_element_type=jnp.float32)
        h_f, c_f = _lstm_cell(g_f, c_f, H)
        h_b, c_b = _lstm_cell(g_b, c_b, H)
        yf[t] = h_f
        yb[rt] = h_b

    y = jnp.concatenate([jnp.concatenate(yf, axis=0),
                         jnp.concatenate(yb, axis=0)], axis=-1)           # (L, 2H=D)

    # ---------------- residual + LayerNorm2 ----------------------------------
    out_ref[...] = _layer_norm(x1 + y, ln2_g_ref[...],
                               ln2_b_ref[...]).astype(out_ref.dtype)
    hn_ref[...] = jnp.concatenate([h_f, h_b], axis=0)                     # (2, H)
    cn_ref[...] = jnp.concatenate([c_f, c_b], axis=0)                     # (2, H)


def lab_layer(x, mask3, lp):
    """One fused Transformer+BiLSTM layer.  x: (B,L,D), mask3: (B,1,L) int32."""
    B, L, D = x.shape
    H = HIDDEN
    kernel = partial(lab_layer_kernel, n_head=N_HEAD, hidden=H,
                     scale_inv=1.0 / math.sqrt(D // N_HEAD))

    def replicated(shape):
        nd = len(shape)
        return pl.BlockSpec(shape, lambda b: (0,) * nd)

    grid_spec = pltpu.PrefetchScalarGridSpec(
        num_scalar_prefetch=0,
        grid=(B,),
        in_specs=[
            pl.BlockSpec((None, L, D), lambda b: (b, 0, 0)),         # x
            pl.BlockSpec((None, 1, L), lambda b: (b, 0, 0)),         # key-pad mask
            replicated((D, 3 * D)), replicated((1, 3 * D)),          # qkv proj
            replicated((D, D)), replicated((1, D)),                  # out proj
            replicated((1, D)), replicated((1, D)),                  # LN1 g, b
            replicated((D, 8 * H)), replicated((1, 8 * H)),          # LSTM W_ih/b (both dirs)
            replicated((2, H, 4 * H)),                               # LSTM W_hh (stacked)
            replicated((1, D)), replicated((1, D)),                  # LN2 g, b
        ],
        out_specs=(
            pl.BlockSpec((None, L, D), lambda b: (b, 0, 0)),         # layer output
            pl.BlockSpec((None, 2, H), lambda b: (b, 0, 0)),         # h_n (per batch)
            pl.BlockSpec((None, 2, H), lambda b: (b, 0, 0)),         # c_n (per batch)
        ),
    )
    return pl.pallas_call(
        kernel,
        out_shape=(
            jax.ShapeDtypeStruct((B, L, D), jnp.float32),
            jax.ShapeDtypeStruct((B, 2, H), jnp.float32),
            jax.ShapeDtypeStruct((B, 2, H), jnp.float32),
        ),
        grid_spec=grid_spec,
        compiler_params=pltpu.CompilerParams(
            dimension_semantics=("parallel",)),      # v7x: shard batch over TCs
    )(x, mask3,
      lp["wqkv_t"], lp["bqkv"], lp["wfc_t"], lp["bfc"],
      lp["ln1_g"], lp["ln1_b"],
      lp["wih_cat"], lp["b_cat"], lp["whh_stack"],
      lp["ln2_g"], lp["ln2_b"])


# ----------------------------- JAX glue --------------------------------------
def sinusoidal_table(num_embeddings, dim, padding_idx=0):
    half = dim // 2
    freq = math.log(10000.0) / (half - 1)
    freq = jnp.exp(jnp.arange(half, dtype=jnp.float32) * -freq)
    ang = jnp.arange(num_embeddings, dtype=jnp.float32)[:, None] * freq[None, :]
    emb = jnp.concatenate([jnp.sin(ang), jnp.cos(ang)], axis=1)
    if dim % 2 == 1:
        emb = jnp.concatenate([emb, jnp.zeros((num_embeddings, 1), jnp.float32)],
                              axis=1)
    emb = emb.at[padding_idx].set(0.0)
    return emb


@jax.jit
def lab_forward(x, padding_mask, params):
    mask = (padding_mask != 0).astype(jnp.int32)
    positions = jnp.cumsum(mask, axis=1) * mask          # padding_idx = 0
    # positional-embedding gather done in JAX glue (dynamic per-token gather).
    x = x + params["pos_tbl"][positions]
    mask3 = mask[:, None, :]                             # (B, 1, L) int32

    h_n = c_n = None
    for lp in params["layers"]:
        x, h_n, c_n = lab_layer(x, mask3, lp)
    # (B, 2, H) -> (2, B, H) to match PyTorch nn.LSTM (num_directions, B, H);
    # done once for the tiny final state only.
    h_n = jnp.transpose(h_n, (1, 0, 2))
    c_n = jnp.transpose(c_n, (1, 0, 2))
    return x, (h_n, c_n)


# ----------------------------- parameters ------------------------------------
def _uniform(key, shape, bound):
    return jax.random.uniform(key, shape, jnp.float32, -bound, bound)


def init_params(key):
    """Random PyTorch-layout init, pre-arranged once into kernel layouts."""
    layers = []
    bd = 1.0 / math.sqrt(D_MODEL)
    bh = 1.0 / math.sqrt(HIDDEN)
    for _ in range(NUM_LAYERS):
        (key, k1, k2, k3, k4, k5, k6, k7, k8,
         k9, k10, k11, k12) = jax.random.split(key, 13)
        # PyTorch-style parameter layouts
        w_qkv = _uniform(k1, (3 * D_MODEL, D_MODEL), bd)
        b_qkv = _uniform(k2, (3 * D_MODEL,), bd)
        w_fc = _uniform(k3, (D_MODEL, D_MODEL), bd)
        b_fc = _uniform(k4, (D_MODEL,), bd)
        w_ih_f = _uniform(k5, (4 * HIDDEN, D_MODEL), bh)
        w_hh_f = _uniform(k6, (4 * HIDDEN, HIDDEN), bh)
        b_ih_f = _uniform(k7, (4 * HIDDEN,), bh)
        b_hh_f = _uniform(k8, (4 * HIDDEN,), bh)
        w_ih_b = _uniform(k9, (4 * HIDDEN, D_MODEL), bh)
        w_hh_b = _uniform(k10, (4 * HIDDEN, HIDDEN), bh)
        b_ih_b = _uniform(k11, (4 * HIDDEN,), bh)
        b_hh_b = _uniform(k12, (4 * HIDDEN,), bh)
        # Kernel layouts: pre-transposed, LSTM directions concatenated/stacked,
        # LSTM biases summed (b_ih + b_hh) as a real checkpoint port would do.
        layers.append({
            "wqkv_t": w_qkv.T,                                        # (D, 3D)
            "bqkv": b_qkv[None, :],                                   # (1, 3D)
            "wfc_t": w_fc.T,                                          # (D, D)
            "bfc": b_fc[None, :],                                     # (1, D)
            "ln1_g": jnp.ones((1, D_MODEL), jnp.float32),
            "ln1_b": jnp.zeros((1, D_MODEL), jnp.float32),
            "wih_cat": jnp.concatenate([w_ih_f.T, w_ih_b.T], axis=1),  # (D, 8H)
            "b_cat": jnp.concatenate([b_ih_f + b_hh_f,
                                      b_ih_b + b_hh_b])[None, :],      # (1, 8H)
            "whh_stack": jnp.stack([w_hh_f.T, w_hh_b.T], axis=0),      # (2, H, 4H)
            "ln2_g": jnp.ones((1, D_MODEL), jnp.float32),
            "ln2_b": jnp.zeros((1, D_MODEL), jnp.float32),
        })
    return {"layers": layers,
            "pos_tbl": sinusoidal_table(512, D_MODEL, padding_idx=0)}


# ----------------------------- main -------------------------------------------
if __name__ == "__main__":
    root = jax.random.PRNGKey(0)
    kx, kp = jax.random.split(root)

    B, L = 2, 8
    x = jax.random.normal(kx, (B, L, D_MODEL), jnp.float32)
    # non-zero entries = valid tokens, zeros = padding (padding_idx = 0)
    padding_mask = jnp.array([[1, 1, 1, 1, 1, 1, 0, 0],
                              [1, 1, 1, 1, 1, 1, 1, 1]], dtype=jnp.int32)

    params = init_params(kp)

    out, (h_n, c_n) = lab_forward(x, padding_mask, params)
    jax.block_until_ready((out, h_n, c_n))

    assert out.shape == (B, L, D_MODEL)
    assert h_n.shape == (2, B, HIDDEN) and c_n.shape == (2, B, HIDDEN)
    assert bool(jnp.all(jnp.isfinite(out)))
    assert bool(jnp.all(jnp.isfinite(h_n))) and bool(jnp.all(jnp.isfinite(c_n)))

    # TODO(synk): dropout layers are identity (eval mode); attn_mask / lstm_len
    # (pack_padded_sequence) paths are not exercised (both None in LAB usage);
    # the averaged attention-weight (2nd MHA return) is discarded by
    # TransformerLayer and therefore not computed.
    print("KERNEL_OK")
</pallas_src>

<mosaic_0001>
module attributes {stable_mosaic.version = 11 : i64} {
  func.func @lab_layer_kernel(%arg0: i32, %arg1: memref<1x8x32xf32, #tpu.memory_space<vmem>>, %arg2: memref<1x1x8xi32, #tpu.memory_space<vmem>>, %arg3: memref<32x96xf32, #tpu.memory_space<vmem>>, %arg4: memref<1x96xf32, #tpu.memory_space<vmem>>, %arg5: memref<32x32xf32, #tpu.memory_space<vmem>>, %arg6: memref<1x32xf32, #tpu.memory_space<vmem>>, %arg7: memref<1x32xf32, #tpu.memory_space<vmem>>, %arg8: memref<1x32xf32, #tpu.memory_space<vmem>>, %arg9: memref<32x128xf32, #tpu.memory_space<vmem>>, %arg10: memref<1x128xf32, #tpu.memory_space<vmem>>, %arg11: memref<2x16x64xf32, #tpu.memory_space<vmem>>, %arg12: memref<1x32xf32, #tpu.memory_space<vmem>>, %arg13: memref<1x32xf32, #tpu.memory_space<vmem>>, %arg14: memref<1x8x32xf32, #tpu.memory_space<vmem>>, %arg15: memref<1x2x16xf32, #tpu.memory_space<vmem>>, %arg16: memref<1x2x16xf32, #tpu.memory_space<vmem>>) attributes {dimension_semantics = [#tpu.dimension_semantics<parallel>], iteration_bounds = array<i64: 2>, scalar_prefetch = 0 : i64, scratch_operands = 0 : i64, tpu.core_type = #tpu.core_type<tc>, window_params = [{transform_indices = @transform_0, window_bounds = array<i64: 1, 8, 32>}, {transform_indices = @transform_1, window_bounds = array<i64: 1, 1, 8>}, {pipeline_mode = #tpu.pipeline_mode<synchronous>, transform_indices = @transform_2, window_bounds = array<i64: 32, 96>}, {pipeline_mode = #tpu.pipeline_mode<synchronous>, transform_indices = @transform_3, window_bounds = array<i64: 1, 96>}, {pipeline_mode = #tpu.pipeline_mode<synchronous>, transform_indices = @transform_4, window_bounds = array<i64: 32, 32>}, {pipeline_mode = #tpu.pipeline_mode<synchronous>, transform_indices = @transform_5, window_bounds = array<i64: 1, 32>}, {pipeline_mode = #tpu.pipeline_mode<synchronous>, transform_indices = @transform_6, window_bounds = array<i64: 1, 32>}, {pipeline_mode = #tpu.pipeline_mode<synchronous>, transform_indices = @transform_7, window_bounds = array<i64: 1, 32>}, {pipeline_mode = #tpu.pipeline_mode<synchronous>, transform_indices = @transform_8, window_bounds = array<i64: 32, 128>}, {pipeline_mode = #tpu.pipeline_mode<synchronous>, transform_indices = @transform_9, window_bounds = array<i64: 1, 128>}, {pipeline_mode = #tpu.pipeline_mode<synchronous>, transform_indices = @transform_10, window_bounds = array<i64: 2, 16, 64>}, {pipeline_mode = #tpu.pipeline_mode<synchronous>, transform_indices = @transform_11, window_bounds = array<i64: 1, 32>}, {pipeline_mode = #tpu.pipeline_mode<synchronous>, transform_indices = @transform_12, window_bounds = array<i64: 1, 32>}, {transform_indices = @transform_13, window_bounds = array<i64: 1, 8, 32>}, {transform_indices = @transform_14, window_bounds = array<i64: 1, 2, 16>}, {transform_indices = @transform_15, window_bounds = array<i64: 1, 2, 16>}]} {
    %c0 = arith.constant 0 : index
    %c0_0 = arith.constant 0 : index
    %c0_1 = arith.constant 0 : index
    %0 = vector.load %arg1[%c0, %c0_0, %c0_1] : memref<1x8x32xf32, #tpu.memory_space<vmem>>, vector<1x8x32xf32>
    %1 = vector.shape_cast %0 : vector<1x8x32xf32> to vector<8x32xf32>
    %c0_2 = arith.constant 0 : index
    %c0_3 = arith.constant 0 : index
    %2 = vector.load %arg3[%c0_2, %c0_3] : memref<32x96xf32, #tpu.memory_space<vmem>>, vector<32x96xf32>
    %cst = arith.constant dense<0.000000e+00> : vector<8x96xf32>
    %3 = tpu.matmul %1, %2, %cst {dimension_numbers = #tpu.dot_dimension_numbers<[1], [0], [0], [1], [0, 0, 1, 1], [], []>} : vector<8x32xf32>, vector<32x96xf32>, vector<8x96xf32> -> vector<8x96xf32>
    %c0_4 = arith.constant 0 : index
    %c0_5 = arith.constant 0 : index
    %4 = vector.load %arg4[%c0_4, %c0_5] : memref<1x96xf32, #tpu.memory_space<vmem>>, vector<1x96xf32>
    %5 = vector.broadcast %4 : vector<1x96xf32> to vector<8x96xf32>
    %6 = arith.addf %3, %5 : vector<8x96xf32>
    %7 = vector.extract_strided_slice %6 {offsets = [0, 0], sizes = [8, 32], strides = [1, 1]} : vector<8x96xf32> to vector<8x32xf32>
    %8 = vector.shape_cast %7 : vector<8x32xf32> to vector<8x4x8xf32>
    %9 = vector.extract_strided_slice %6 {offsets = [0, 32], sizes = [8, 32], strides = [1, 1]} : vector<8x96xf32> to vector<8x32xf32>
    %10 = vector.shape_cast %9 : vector<8x32xf32> to vector<8x4x8xf32>
    %11 = vector.extract_strided_slice %6 {offsets = [0, 64], sizes = [8, 32], strides = [1, 1]} : vector<8x96xf32> to vector<8x32xf32>
    %12 = vector.shape_cast %11 : vector<8x32xf32> to vector<8x4x8xf32>
    "tpu.trace_start"() <{level = 10 : i32, message = "qhd,khd->hqk"}> : () -> ()
    %cst_6 = arith.constant dense<0.000000e+00> : vector<4x8x8xf32>
    %13 = tpu.matmul %8, %10, %cst_6 {dimension_numbers = #tpu.dot_dimension_numbers<[2], [2], [0], [0], [0, 1, 0, 0, 1, 0], [1], [1]>} : vector<8x4x8xf32>, vector<8x4x8xf32>, vector<4x8x8xf32> -> vector<4x8x8xf32>
    "tpu.trace_stop"() : () -> ()
    %cst_7 = arith.constant 0.353553385 : f32
    %14 = vector.broadcast %cst_7 : f32 to vector<4x8x8xf32>
    %15 = arith.mulf %13, %14 : vector<4x8x8xf32>
    %c0_8 = arith.constant 0 : index
    %c0_9 = arith.constant 0 : index
    %c0_10 = arith.constant 0 : index
    %16 = vector.load %arg2[%c0_8, %c0_9, %c0_10] : memref<1x1x8xi32, #tpu.memory_space<vmem>>, vector<1x1x8xi32>
    %17 = vector.shape_cast %16 : vector<1x1x8xi32> to vector<1x8xi32>
    %c0_i32 = arith.constant 0 : i32
    %18 = vector.broadcast %c0_i32 : i32 to vector<1x8xi32>
    %19 = arith.cmpi eq, %17, %18 : vector<1x8xi32>
    %cst_11 = arith.constant -1.000000e+30 : f32
    %cst_12 = arith.constant 0.000000e+00 : f32
    %20 = vector.broadcast %cst_11 : f32 to vector<1x8xf32>
    %21 = vector.broadcast %cst_12 : f32 to vector<1x8xf32>
    %22 = arith.select %19, %20, %21 : vector<1x8xi1>, vector<1x8xf32>
    %23 = vector.shape_cast %22 : vector<1x8xf32> to vector<1x1x8xf32>
    %24 = vector.broadcast %23 : vector<1x1x8xf32> to vector<4x8x8xf32>
    %25 = arith.addf %15, %24 : vector<4x8x8xf32>
    %cst_13 = arith.constant dense<0xFF800000> : vector<4x8xf32>
    %26 = vector.multi_reduction <maximumf>, %25, %cst_13 [2] : vector<4x8x8xf32> to vector<4x8xf32>
    %27 = vector.shape_cast %26 : vector<4x8xf32> to vector<4x8x1xf32>
    %28 = vector.broadcast %27 : vector<4x8x1xf32> to vector<4x8x8xf32>
    %29 = arith.subf %25, %28 : vector<4x8x8xf32>
    %30 = math.exp %29 : vector<4x8x8xf32>
    %cst_14 = arith.constant dense<0.000000e+00> : vector<4x8xf32>
    %31 = vector.multi_reduction <add>, %30, %cst_14 [2] : vector<4x8x8xf32> to vector<4x8xf32>
    %32 = vector.shape_cast %31 : vector<4x8xf32> to vector<4x8x1xf32>
    %33 = tpu.reciprocal %32 {approx = true} : vector<4x8x1xf32> -> vector<4x8x1xf32>
    %34 = vector.broadcast %33 : vector<4x8x1xf32> to vector<4x8x8xf32>
    %35 = arith.mulf %30, %34 : vector<4x8x8xf32>
    "tpu.trace_start"() <{level = 10 : i32, message = "hqk,khd->qhd"}> : () -> ()
    %cst_15 = arith.constant dense<0.000000e+00> : vector<4x8x8xf32>
    %36 = tpu.matmul %12, %35, %cst_15 {dimension_numbers = #tpu.dot_dimension_numbers<[0], [2], [2], [1], [0, 1, 0, 2, 1, 1], [1], [0]>} : vector<8x4x8xf32>, vector<4x8x8xf32>, vector<4x8x8xf32> -> vector<4x8x8xf32>
    %37 = tpu.transpose %36, [2, 0, 1] : vector<4x8x8xf32> -> vector<8x4x8xf32>
    "tpu.trace_stop"() : () -> ()
    %38 = vector.shape_cast %37 : vector<8x4x8xf32> to vector<8x32xf32>
    %c0_16 = arith.constant 0 : index
    %c0_17 = arith.constant 0 : index
    %39 = vector.load %arg5[%c0_16, %c0_17] : memref<32x32xf32, #tpu.memory_space<vmem>>, vector<32x32xf32>
    %cst_18 = arith.constant dense<0.000000e+00> : vector<8x32xf32>
    %40 = tpu.matmul %38, %39, %cst_18 {dimension_numbers = #tpu.dot_dimension_numbers<[1], [0], [0], [1], [0, 0, 1, 1], [], []>} : vector<8x32xf32>, vector<32x32xf32>, vector<8x32xf32> -> vector<8x32xf32>
    %c0_19 = arith.constant 0 : index
    %c0_20 = arith.constant 0 : index
    %41 = vector.load %arg6[%c0_19, %c0_20] : memref<1x32xf32, #tpu.memory_space<vmem>>, vector<1x32xf32>
    %42 = vector.broadcast %41 : vector<1x32xf32> to vector<8x32xf32>
    %43 = arith.addf %40, %42 : vector<8x32xf32>
    %44 = arith.addf %43, %1 : vector<8x32xf32>
    %c0_21 = arith.constant 0 : index
    %c0_22 = arith.constant 0 : index
    %45 = vector.load %arg7[%c0_21, %c0_22] : memref<1x32xf32, #tpu.memory_space<vmem>>, vector<1x32xf32>
    %c0_23 = arith.constant 0 : index
    %c0_24 = arith.constant 0 : index
    %46 = vector.load %arg8[%c0_23, %c0_24] : memref<1x32xf32, #tpu.memory_space<vmem>>, vector<1x32xf32>
    %cst_25 = arith.constant dense<0.000000e+00> : vector<8xf32>
    %47 = vector.multi_reduction <add>, %44, %cst_25 [1] : vector<8x32xf32> to vector<8xf32>
    %48 = vector.shape_cast %47 : vector<8xf32> to vector<8x1xf32>
    %cst_26 = arith.constant 3.200000e+01 : f32
    %49 = vector.broadcast %cst_26 : f32 to vector<8x1xf32>
    %50 = arith.divf %48, %49 : vector<8x1xf32>
    %51 = vector.broadcast %50 : vector<8x1xf32> to vector<8x32xf32>
    %52 = arith.subf %44, %51 : vector<8x32xf32>
    %53 = arith.mulf %52, %52 : vector<8x32xf32>
    %cst_27 = arith.constant dense<0.000000e+00> : vector<8xf32>
    %54 = vector.multi_reduction <add>, %53, %cst_27 [1] : vector<8x32xf32> to vector<8xf32>
    %55 = vector.shape_cast %54 : vector<8xf32> to vector<8x1xf32>
    %cst_28 = arith.constant 3.200000e+01 : f32
    %56 = vector.broadcast %cst_28 : f32 to vector<8x1xf32>
    %57 = arith.divf %55, %56 : vector<8x1xf32>
    %cst_29 = arith.constant 9.99999974E-6 : f32
    %58 = vector.broadcast %cst_29 : f32 to vector<8x1xf32>
    %59 = arith.addf %57, %58 : vector<8x1xf32>
    %60 = math.rsqrt %59 : vector<8x1xf32>
    %61 = vector.broadcast %60 : vector<8x1xf32> to vector<8x32xf32>
    %62 = arith.mulf %52, %61 : vector<8x32xf32>
    %63 = vector.broadcast %45 : vector<1x32xf32> to vector<8x32xf32>
    %64 = arith.mulf %62, %63 : vector<8x32xf32>
    %65 = vector.broadcast %46 : vector<1x32xf32> to vector<8x32xf32>
    %66 = arith.addf %64, %65 : vector<8x32xf32>
    %c0_30 = arith.constant 0 : index
    %c0_31 = arith.constant 0 : index
    %67 = vector.load %arg9[%c0_30, %c0_31] : memref<32x128xf32, #tpu.memory_space<vmem>>, vector<32x128xf32>
    %cst_32 = arith.constant dense<0.000000e+00> : vector<8x128xf32>
    %68 = tpu.matmul %66, %67, %cst_32 {dimension_numbers = #tpu.dot_dimension_numbers<[1], [0], [0], [1], [0, 0, 1, 1], [], []>} : vector<8x32xf32>, vector<32x128xf32>, vector<8x128xf32> -> vector<8x128xf32>
    %c0_33 = arith.constant 0 : index
    %c0_34 = arith.constant 0 : index
    %69 = vector.load %arg10[%c0_33, %c0_34] : memref<1x128xf32, #tpu.memory_space<vmem>>, vector<1x128xf32>
    %70 = vector.broadcast %69 : vector<1x128xf32> to vector<8x128xf32>
    %71 = arith.addf %68, %70 : vector<8x128xf32>
    %72 = vector.extract_strided_slice %71 {offsets = [0, 0], sizes = [8, 64], strides = [1, 1]} : vector<8x128xf32> to vector<8x64xf32>
    %73 = vector.extract_strided_slice %71 {offsets = [0, 64], sizes = [8, 64], strides = [1, 1]} : vector<8x128xf32> to vector<8x64xf32>
    %c0_35 = arith.constant 0 : index
    %c0_36 = arith.constant 0 : index
    %c0_37 = arith.constant 0 : index
    %74 = vector.load %arg11[%c0_35, %c0_36, %c0_37] : memref<2x16x64xf32, #tpu.memory_space<vmem>>, vector<1x16x64xf32>
    %75 = vector.shape_cast %74 : vector<1x16x64xf32> to vector<16x64xf32>
    %c1 = arith.constant 1 : index
    %c0_38 = arith.constant 0 : index
    %c0_39 = arith.constant 0 : index
    %76 = vector.load %arg11[%c1, %c0_38, %c0_39] : memref<2x16x64xf32, #tpu.memory_space<vmem>>, vector<1x16x64xf32>
    %77 = vector.shape_cast %76 : vector<1x16x64xf32> to vector<16x64xf32>
    %cst_40 = arith.constant 0.000000e+00 : f32
    %78 = vector.broadcast %cst_40 : f32 to vector<1x16xf32>
    %cst_41 = arith.constant 0.000000e+00 : f32
    %79 = vector.broadcast %cst_41 : f32 to vector<1x16xf32>
    %cst_42 = arith.constant 0.000000e+00 : f32
    %80 = vector.broadcast %cst_42 : f32 to vector<1x16xf32>
    %cst_43 = arith.constant 0.000000e+00 : f32
    %81 = vector.broadcast %cst_43 : f32 to vector<1x16xf32>
    %82 = vector.extract_strided_slice %72 {offsets = [0, 0], sizes = [1, 64], strides = [1, 1]} : vector<8x64xf32> to vector<1x64xf32>
    %cst_44 = arith.constant dense<0.000000e+00> : vector<1x64xf32>
    %83 = tpu.matmul %78, %75, %cst_44 {dimension_numbers = #tpu.dot_dimension_numbers<[1], [0], [0], [1], [0, 0, 1, 1], [], []>} : vector<1x16xf32>, vector<16x64xf32>, vector<1x64xf32> -> vector<1x64xf32>
    %84 = arith.addf %82, %83 : vector<1x64xf32>
    %85 = vector.extract_strided_slice %73 {offsets = [7, 0], sizes = [1, 64], strides = [1, 1]} : vector<8x64xf32> to vector<1x64xf32>
    %cst_45 = arith.constant dense<0.000000e+00> : vector<1x64xf32>
    %86 = tpu.matmul %80, %77, %cst_45 {dimension_numbers = #tpu.dot_dimension_numbers<[1], [0], [0], [1], [0, 0, 1, 1], [], []>} : vector<1x16xf32>, vector<16x64xf32>, vector<1x64xf32> -> vector<1x64xf32>
    %87 = arith.addf %85, %86 : vector<1x64xf32>
    %88 = arith.negf %84 : vector<1x64xf32>
    %89 = math.exp %88 : vector<1x64xf32>
    %cst_46 = arith.constant 1.000000e+00 : f32
    %90 = vector.broadcast %cst_46 : f32 to vector<1x64xf32>
    %91 = arith.addf %90, %89 : vector<1x64xf32>
    %92 = arith.divf %90, %91 : vector<1x64xf32>
    %93 = math.tanh %84 : vector<1x64xf32>
    %94 = vector.extract_strided_slice %92 {offsets = [0, 0], sizes = [1, 16], strides = [1, 1]} : vector<1x64xf32> to vector<1x16xf32>
    %95 = vector.extract_strided_slice %92 {offsets = [0, 16], sizes = [1, 16], strides = [1, 1]} : vector<1x64xf32> to vector<1x16xf32>
    %96 = vector.extract_strided_slice %93 {offsets = [0, 32], sizes = [1, 16], strides = [1, 1]} : vector<1x64xf32> to vector<1x16xf32>
    %97 = vector.extract_strided_slice %92 {offsets = [0, 48], sizes = [1, 16], strides = [1, 1]} : vector<1x64xf32> to vector<1x16xf32>
    %98 = arith.mulf %95, %79 : vector<1x16xf32>
    %99 = arith.mulf %94, %96 : vector<1x16xf32>
    %100 = arith.addf %98, %99 : vector<1x16xf32>
    %101 = math.tanh %100 : vector<1x16xf32>
    %102 = arith.mulf %97, %101 : vector<1x16xf32>
    %103 = arith.negf %87 : vector<1x64xf32>
    %104 = math.exp %103 : vector<1x64xf32>
    %cst_47 = arith.constant 1.000000e+00 : f32
    %105 = vector.broadcast %cst_47 : f32 to vector<1x64xf32>
    %106 = arith.addf %105, %104 : vector<1x64xf32>
    %107 = arith.divf %105, %106 : vector<1x64xf32>
    %108 = math.tanh %87 : vector<1x64xf32>
    %109 = vector.extract_strided_slice %107 {offsets = [0, 0], sizes = [1, 16], strides = [1, 1]} : vector<1x64xf32> to vector<1x16xf32>
    %110 = vector.extract_strided_slice %107 {offsets = [0, 16], sizes = [1, 16], strides = [1, 1]} : vector<1x64xf32> to vector<1x16xf32>
    %111 = vector.extract_strided_slice %108 {offsets = [0, 32], sizes = [1, 16], strides = [1, 1]} : vector<1x64xf32> to vector<1x16xf32>
    %112 = vector.extract_strided_slice %107 {offsets = [0, 48], sizes = [1, 16], strides = [1, 1]} : vector<1x64xf32> to vector<1x16xf32>
    %113 = arith.mulf %110, %81 : vector<1x16xf32>
    %114 = arith.mulf %109, %111 : vector<1x16xf32>
    %115 = arith.addf %113, %114 : vector<1x16xf32>
    %116 = math.tanh %115 : vector<1x16xf32>
    %117 = arith.mulf %112, %116 : vector<1x16xf32>
    %118 = vector.extract_strided_slice %72 {offsets = [1, 0], sizes = [1, 64], strides = [1, 1]} : vector<8x64xf32> to vector<1x64xf32>
    %cst_48 = arith.constant dense<0.000000e+00> : vector<1x64xf32>
    %119 = tpu.matmul %102, %75, %cst_48 {dimension_numbers = #tpu.dot_dimension_numbers<[1], [0], [0], [1], [0, 0, 1, 1], [], []>} : vector<1x16xf32>, vector<16x64xf32>, vector<1x64xf32> -> vector<1x64xf32>
    %120 = arith.addf %118, %119 : vector<1x64xf32>
    %121 = vector.extract_strided_slice %73 {offsets = [6, 0], sizes = [1, 64], strides = [1, 1]} : vector<8x64xf32> to vector<1x64xf32>
    %cst_49 = arith.constant dense<0.000000e+00> : vector<1x64xf32>
    %122 = tpu.matmul %117, %77, %cst_49 {dimension_numbers = #tpu.dot_dimension_numbers<[1], [0], [0], [1], [0, 0, 1, 1], [], []>} : vector<1x16xf32>, vector<16x64xf32>, vector<1x64xf32> -> vector<1x64xf32>
    %123 = arith.addf %121, %122 : vector<1x64xf32>
    %124 = arith.negf %120 : vector<1x64xf32>
    %125 = math.exp %124 : vector<1x64xf32>
    %cst_50 = arith.constant 1.000000e+00 : f32
    %126 = vector.broadcast %cst_50 : f32 to vector<1x64xf32>
    %127 = arith.addf %126, %125 : vector<1x64xf32>
    %128 = arith.divf %126, %127 : vector<1x64xf32>
    %129 = math.tanh %120 : vector<1x64xf32>
    %130 = vector.extract_strided_slice %128 {offsets = [0, 0], sizes = [1, 16], strides = [1, 1]} : vector<1x64xf32> to vector<1x16xf32>
    %131 = vector.extract_strided_slice %128 {offsets = [0, 16], sizes = [1, 16], strides = [1, 1]} : vector<1x64xf32> to vector<1x16xf32>
    %132 = vector.extract_strided_slice %129 {offsets = [0, 32], sizes = [1, 16], strides = [1, 1]} : vector<1x64xf32> to vector<1x16xf32>
    %133 = vector.extract_strided_slice %128 {offsets = [0, 48], sizes = [1, 16], strides = [1, 1]} : vector<1x64xf32> to vector<1x16xf32>
    %134 = arith.mulf %131, %100 : vector<1x16xf32>
    %135 = arith.mulf %130, %132 : vector<1x16xf32>
    %136 = arith.addf %134, %135 : vector<1x16xf32>
    %137 = math.tanh %136 : vector<1x16xf32>
    %138 = arith.mulf %133, %137 : vector<1x16xf32>
    %139 = arith.negf %123 : vector<1x64xf32>
    %140 = math.exp %139 : vector<1x64xf32>
    %cst_51 = arith.constant 1.000000e+00 : f32
    %141 = vector.broadcast %cst_51 : f32 to vector<1x64xf32>
    %142 = arith.addf %141, %140 : vector<1x64xf32>
    %143 = arith.divf %141, %142 : vector<1x64xf32>
    %144 = math.tanh %123 : vector<1x64xf32>
    %145 = vector.extract_strided_slice %143 {offsets = [0, 0], sizes = [1, 16], strides = [1, 1]} : vector<1x64xf32> to vector<1x16xf32>
    %146 = vector.extract_strided_slice %143 {offsets = [0, 16], sizes = [1, 16], strides = [1, 1]} : vector<1x64xf32> to vector<1x16xf32>
    %147 = vector.extract_strided_slice %144 {offsets = [0, 32], sizes = [1, 16], strides = [1, 1]} : vector<1x64xf32> to vector<1x16xf32>
    %148 = vector.extract_strided_slice %143 {offsets = [0, 48], sizes = [1, 16], strides = [1, 1]} : vector<1x64xf32> to vector<1x16xf32>
    %149 = arith.mulf %146, %115 : vector<1x16xf32>
    %150 = arith.mulf %145, %147 : vector<1x16xf32>
    %151 = arith.addf %149, %150 : vector<1x16xf32>
    %152 = math.tanh %151 : vector<1x16xf32>
    %153 = arith.mulf %148, %152 : vector<1x16xf32>
    %154 = vector.extract_strided_slice %72 {offsets = [2, 0], sizes = [1, 64], strides = [1, 1]} : vector<8x64xf32> to vector<1x64xf32>
    %cst_52 = arith.constant dense<0.000000e+00> : vector<1x64xf32>
    %155 = tpu.matmul %138, %75, %cst_52 {dimension_numbers = #tpu.dot_dimension_numbers<[1], [0], [0], [1], [0, 0, 1, 1], [], []>} : vector<1x16xf32>, vector<16x64xf32>, vector<1x64xf32> -> vector<1x64xf32>
    %156 = arith.addf %154, %155 : vector<1x64xf32>
    %157 = vector.extract_strided_slice %73 {offsets = [5, 0], sizes = [1, 64], strides = [1, 1]} : vector<8x64xf32> to vector<1x64xf32>
    %cst_53 = arith.constant dense<0.000000e+00> : vector<1x64xf32>
    %158 = tpu.matmul %153, %77, %cst_53 {dimension_numbers = #tpu.dot_dimension_numbers<[1], [0], [0], [1], [0, 0, 1, 1], [], []>} : vector<1x16xf32>, vector<16x64xf32>, vector<1x64xf32> -> vector<1x64xf32>
    %159 = arith.addf %157, %158 : vector<1x64xf32>
    %160 = arith.negf %156 : vector<1x64xf32>
    %161 = math.exp %160 : vector<1x64xf32>
    %cst_54 = arith.constant 1.000000e+00 : f32
    %162 = vector.broadcast %cst_54 : f32 to vector<1x64xf32>
    %163 = arith.addf %162, %161 : vector<1x64xf32>
    %164 = arith.divf %162, %163 : vector<1x64xf32>
    %165 = math.tanh %156 : vector<1x64xf32>
    %166 = vector.extract_strided_slice %164 {offsets = [0, 0], sizes = [1, 16], strides = [1, 1]} : vector<1x64xf32> to vector<1x16xf32>
    %167 = vector.extract_strided_slice %164 {offsets = [0, 16], sizes = [1, 16], strides = [1, 1]} : vector<1x64xf32> to vector<1x16xf32>
    %168 = vector.extract_strided_slice %165 {offsets = [0, 32], sizes = [1, 16], strides = [1, 1]} : vector<1x64xf32> to vector<1x16xf32>
    %169 = vector.extract_strided_slice %164 {offsets = [0, 48], sizes = [1, 16], strides = [1, 1]} : vector<1x64xf32> to vector<1x16xf32>
    %170 = arith.mulf %167, %136 : vector<1x16xf32>
    %171 = arith.mulf %166, %168 : vector<1x16xf32>
    %172 = arith.addf %170, %171 : vector<1x16xf32>
    %173 = math.tanh %172 : vector<1x16xf32>
    %174 = arith.mulf %169, %173 : vector<1x16xf32>
    %175 = arith.negf %159 : vector<1x64xf32>
    %176 = math.exp %175 : vector<1x64xf32>
    %cst_55 = arith.constant 1.000000e+00 : f32
    %177 = vector.broadcast %cst_55 : f32 to vector<1x64xf32>
    %178 = arith.addf %177, %176 : vector<1x64xf32>
    %179 = arith.divf %177, %178 : vector<1x64xf32>
    %180 = math.tanh %159 : vector<1x64xf32>
    %181 = vector.extract_strided_slice %179 {offsets = [0, 0], sizes = [1, 16], strides = [1, 1]} : vector<1x64xf32> to vector<1x16xf32>
    %182 = vector.extract_strided_slice %179 {offsets = [0, 16], sizes = [1, 16], strides = [1, 1]} : vector<1x64xf32> to vector<1x16xf32>
    %183 = vector.extract_strided_slice %180 {offsets = [0, 32], sizes = [1, 16], strides = [1, 1]} : vector<1x64xf32> to vector<1x16xf32>
    %184 = vector.extract_strided_slice %179 {offsets = [0, 48], sizes = [1, 16], strides = [1, 1]} : vector<1x64xf32> to vector<1x16xf32>
    %185 = arith.mulf %182, %151 : vector<1x16xf32>
    %186 = arith.mulf %181, %183 : vector<1x16xf32>
    %187 = arith.addf %185, %186 : vector<1x16xf32>
    %188 = math.tanh %187 : vector<1x16xf32>
    %189 = arith.mulf %184, %188 : vector<1x16xf32>
    %190 = vector.extract_strided_slice %72 {offsets = [3, 0], sizes = [1, 64], strides = [1, 1]} : vector<8x64xf32> to vector<1x64xf32>
    %cst_56 = arith.constant dense<0.000000e+00> : vector<1x64xf32>
    %191 = tpu.matmul %174, %75, %cst_56 {dimension_numbers = #tpu.dot_dimension_numbers<[1], [0], [0], [1], [0, 0, 1, 1], [], []>} : vector<1x16xf32>, vector<16x64xf32>, vector<1x64xf32> -> vector<1x64xf32>
    %192 = arith.addf %190, %191 : vector<1x64xf32>
    %193 = vector.extract_strided_slice %73 {offsets = [4, 0], sizes = [1, 64], strides = [1, 1]} : vector<8x64xf32> to vector<1x64xf32>
    %cst_57 = arith.constant dense<0.000000e+00> : vector<1x64xf32>
    %194 = tpu.matmul %189, %77, %cst_57 {dimension_numbers = #tpu.dot_dimension_numbers<[1], [0], [0], [1], [0, 0, 1, 1], [], []>} : vector<1x16xf32>, vector<16x64xf32>, vector<1x64xf32> -> vector<1x64xf32>
    %195 = arith.addf %193, %194 : vector<1x64xf32>
    %196 = arith.negf %192 : vector<1x64xf32>
    %197 = math.exp %196 : vector<1x64xf32>
    %cst_58 = arith.constant 1.000000e+00 : f32
    %198 = vector.broadcast %cst_58 : f32 to vector<1x64xf32>
    %199 = arith.addf %198, %197 : vector<1x64xf32>
    %200 = arith.divf %198, %199 : vector<1x64xf32>
    %201 = math.tanh %192 : vector<1x64xf32>
    %202 = vector.extract_strided_slice %200 {offsets = [0, 0], sizes = [1, 16], strides = [1, 1]} : vector<1x64xf32> to vector<1x16xf32>
    %203 = vector.extract_strided_slice %200 {offsets = [0, 16], sizes = [1, 16], strides = [1, 1]} : vector<1x64xf32> to vector<1x16xf32>
    %204 = vector.extract_strided_slice %201 {offsets = [0, 32], sizes = [1, 16], strides = [1, 1]} : vector<1x64xf32> to vector<1x16xf32>
    %205 = vector.extract_strided_slice %200 {offsets = [0, 48], sizes = [1, 16], strides = [1, 1]} : vector<1x64xf32> to vector<1x16xf32>
    %206 = arith.mulf %203, %172 : vector<1x16xf32>
    %207 = arith.mulf %202, %204 : vector<1x16xf32>
    %208 = arith.addf %206, %207 : vector<1x16xf32>
    %209 = math.tanh %208 : vector<1x16xf32>
    %210 = arith.mulf %205, %209 : vector<1x16xf32>
    %211 = arith.negf %195 : vector<1x64xf32>
    %212 = math.exp %211 : vector<1x64xf32>
    %cst_59 = arith.constant 1.000000e+00 : f32
    %213 = vector.broadcast %cst_59 : f32 to vector<1x64xf32>
    %214 = arith.addf %213, %212 : vector<1x64xf32>
    %215 = arith.divf %213, %214 : vector<1x64xf32>
    %216 = math.tanh %195 : vector<1x64xf32>
    %217 = vector.extract_strided_slice %215 {offsets = [0, 0], sizes = [1, 16], strides = [1, 1]} : vector<1x64xf32> to vector<1x16xf32>
    %218 = vector.extract_strided_slice %215 {offsets = [0, 16], sizes = [1, 16], strides = [1, 1]} : vector<1x64xf32> to vector<1x16xf32>
    %219 = vector.extract_strided_slice %216 {offsets = [0, 32], sizes = [1, 16], strides = [1, 1]} : vector<1x64xf32> to vector<1x16xf32>
    %220 = vector.extract_strided_slice %215 {offsets = [0, 48], sizes = [1, 16], strides = [1, 1]} : vector<1x64xf32> to vector<1x16xf32>
    %221 = arith.mulf %218, %187 : vector<1x16xf32>
    %222 = arith.mulf %217, %219 : vector<1x16xf32>
    %223 = arith.addf %221, %222 : vector<1x16xf32>
    %224 = math.tanh %223 : vector<1x16xf32>
    %225 = arith.mulf %220, %224 : vector<1x16xf32>
    %226 = vector.extract_strided_slice %72 {offsets = [4, 0], sizes = [1, 64], strides = [1, 1]} : vector<8x64xf32> to vector<1x64xf32>
    %cst_60 = arith.constant dense<0.000000e+00> : vector<1x64xf32>
    %227 = tpu.matmul %210, %75, %cst_60 {dimension_numbers = #tpu.dot_dimension_numbers<[1], [0], [0], [1], [0, 0, 1, 1], [], []>} : vector<1x16xf32>, vector<16x64xf32>, vector<1x64xf32> -> vector<1x64xf32>
    %228 = arith.addf %226, %227 : vector<1x64xf32>
    %229 = vector.extract_strided_slice %73 {offsets = [3, 0], sizes = [1, 64], strides = [1, 1]} : vector<8x64xf32> to vector<1x64xf32>
    %cst_61 = arith.constant dense<0.000000e+00> : vector<1x64xf32>
    %230 = tpu.matmul %225, %77, %cst_61 {dimension_numbers = #tpu.dot_dimension_numbers<[1], [0], [0], [1], [0, 0, 1, 1], [], []>} : vector<1x16xf32>, vector<16x64xf32>, vector<1x64xf32> -> vector<1x64xf32>
    %231 = arith.addf %229, %230 : vector<1x64xf32>
    %232 = arith.negf %228 : vector<1x64xf32>
    %233 = math.exp %232 : vector<1x64xf32>
    %cst_62 = arith.constant 1.000000e+00 : f32
    %234 = vector.broadcast %cst_62 : f32 to vector<1x64xf32>
    %235 = arith.addf %234, %233 : vector<1x64xf32>
    %236 = arith.divf %234, %235 : vector<1x64xf32>
    %237 = math.tanh %228 : vector<1x64xf32>
    %238 = vector.extract_strided_slice %236 {offsets = [0, 0], sizes = [1, 16], strides = [1, 1]} : vector<1x64xf32> to vector<1x16xf32>
    %239 = vector.extract_strided_slice %236 {offsets = [0, 16], sizes = [1, 16], strides = [1, 1]} : vector<1x64xf32> to vector<1x16xf32>
    %240 = vector.extract_strided_slice %237 {offsets = [0, 32], sizes = [1, 16], strides = [1, 1]} : vector<1x64xf32> to vector<1x16xf32>
    %241 = vector.extract_strided_slice %236 {offsets = [0, 48], sizes = [1, 16], strides = [1, 1]} : vector<1x64xf32> to vector<1x16xf32>
    %242 = arith.mulf %239, %208 : vector<1x16xf32>
    %243 = arith.mulf %238, %240 : vector<1x16xf32>
    %244 = arith.addf %242, %243 : vector<1x16xf32>
    %245 = math.tanh %244 : vector<1x16xf32>
    %246 = arith.mulf %241, %245 : vector<1x16xf32>
    %247 = arith.negf %231 : vector<1x64xf32>
    %248 = math.exp %247 : vector<1x64xf32>
    %cst_63 = arith.constant 1.000000e+00 : f32
    %249 = vector.broadcast %cst_63 : f32 to vector<1x64xf32>
    %250 = arith.addf %249, %248 : vector<1x64xf32>
    %251 = arith.divf %249, %250 : vector<1x64xf32>
    %252 = math.tanh %231 : vector<1x64xf32>
    %253 = vector.extract_strided_slice %251 {offsets = [0, 0], sizes = [1, 16], strides = [1, 1]} : vector<1x64xf32> to vector<1x16xf32>
    %254 = vector.extract_strided_slice %251 {offsets = [0, 16], sizes = [1, 16], strides = [1, 1]} : vector<1x64xf32> to vector<1x16xf32>
    %255 = vector.extract_strided_slice %252 {offsets = [0, 32], sizes = [1, 16], strides = [1, 1]} : vector<1x64xf32> to vector<1x16xf32>
    %256 = vector.extract_strided_slice %251 {offsets = [0, 48], sizes = [1, 16], strides = [1, 1]} : vector<1x64xf32> to vector<1x16xf32>
    %257 = arith.mulf %254, %223 : vector<1x16xf32>
    %258 = arith.mulf %253, %255 : vector<1x16xf32>
    %259 = arith.addf %257, %258 : vector<1x16xf32>
    %260 = math.tanh %259 : vector<1x16xf32>
    %261 = arith.mulf %256, %260 : vector<1x16xf32>
    %262 = vector.extract_strided_slice %72 {offsets = [5, 0], sizes = [1, 64], strides = [1, 1]} : vector<8x64xf32> to vector<1x64xf32>
    %cst_64 = arith.constant dense<0.000000e+00> : vector<1x64xf32>
    %263 = tpu.matmul %246, %75, %cst_64 {dimension_numbers = #tpu.dot_dimension_numbers<[1], [0], [0], [1], [0, 0, 1, 1], [], []>} : vector<1x16xf32>, vector<16x64xf32>, vector<1x64xf32> -> vector<1x64xf32>
    %264 = arith.addf %262, %263 : vector<1x64xf32>
    %265 = vector.extract_strided_slice %73 {offsets = [2, 0], sizes = [1, 64], strides = [1, 1]} : vector<8x64xf32> to vector<1x64xf32>
    %cst_65 = arith.constant dense<0.000000e+00> : vector<1x64xf32>
    %266 = tpu.matmul %261, %77, %cst_65 {dimension_numbers = #tpu.dot_dimension_numbers<[1], [0], [0], [1], [0, 0, 1, 1], [], []>} : vector<1x16xf32>, vector<16x64xf32>, vector<1x64xf32> -> vector<1x64xf32>
    %267 = arith.addf %265, %266 : vector<1x64xf32>
    %268 = arith.negf %264 : vector<1x64xf32>
    %269 = math.exp %268 : vector<1x64xf32>
    %cst_66 = arith.constant 1.000000e+00 : f32
    %270 = vector.broadcast %cst_66 : f32 to vector<1x64xf32>
    %271 = arith.addf %270, %269 : vector<1x64xf32>
    %272 = arith.divf %270, %271 : vector<1x64xf32>
    %273 = math.tanh %264 : vector<1x64xf32>
    %274 = vector.extract_strided_slice %272 {offsets = [0, 0], sizes = [1, 16], strides = [1, 1]} : vector<1x64xf32> to vector<1x16xf32>
    %275 = vector.extract_strided_slice %272 {offsets = [0, 16], sizes = [1, 16], strides = [1, 1]} : vector<1x64xf32> to vector<1x16xf32>
    %276 = vector.extract_strided_slice %273 {offsets = [0, 32], sizes = [1, 16], strides = [1, 1]} : vector<1x64xf32> to vector<1x16xf32>
    %277 = vector.extract_strided_slice %272 {offsets = [0, 48], sizes = [1, 16], strides = [1, 1]} : vector<1x64xf32> to vector<1x16xf32>
    %278 = arith.mulf %275, %244 : vector<1x16xf32>
    %279 = arith.mulf %274, %276 : vector<1x16xf32>
    %280 = arith.addf %278, %279 : vector<1x16xf32>
    %281 = math.tanh %280 : vector<1x16xf32>
    %282 = arith.mulf %277, %281 : vector<1x16xf32>
    %283 = arith.negf %267 : vector<1x64xf32>
    %284 = math.exp %283 : vector<1x64xf32>
    %cst_67 = arith.constant 1.000000e+00 : f32
    %285 = vector.broadcast %cst_67 : f32 to vector<1x64xf32>
    %286 = arith.addf %285, %284 : vector<1x64xf32>
    %287 = arith.divf %285, %286 : vector<1x64xf32>
    %288 = math.tanh %267 : vector<1x64xf32>
    %289 = vector.extract_strided_slice %287 {offsets = [0, 0], sizes = [1, 16], strides = [1, 1]} : vector<1x64xf32> to vector<1x16xf32>
    %290 = vector.extract_strided_slice %287 {offsets = [0, 16], sizes = [1, 16], strides = [1, 1]} : vector<1x64xf32> to vector<1x16xf32>
    %291 = vector.extract_strided_slice %288 {offsets = [0, 32], sizes = [1, 16], strides = [1, 1]} : vector<1x64xf32> to vector<1x16xf32>
    %292 = vector.extract_strided_slice %287 {offsets = [0, 48], sizes = [1, 16], strides = [1, 1]} : vector<1x64xf32> to vector<1x16xf32>
    %293 = arith.mulf %290, %259 : vector<1x16xf32>
    %294 = arith.mulf %289, %291 : vector<1x16xf32>
    %295 = arith.addf %293, %294 : vector<1x16xf32>
    %296 = math.tanh %295 : vector<1x16xf32>
    %297 = arith.mulf %292, %296 : vector<1x16xf32>
    %298 = vector.extract_strided_slice %72 {offsets = [6, 0], sizes = [1, 64], strides = [1, 1]} : vector<8x64xf32> to vector<1x64xf32>
    %cst_68 = arith.constant dense<0.000000e+00> : vector<1x64xf32>
    %299 = tpu.matmul %282, %75, %cst_68 {dimension_numbers = #tpu.dot_dimension_numbers<[1], [0], [0], [1], [0, 0, 1, 1], [], []>} : vector<1x16xf32>, vector<16x64xf32>, vector<1x64xf32> -> vector<1x64xf32>
    %300 = arith.addf %298, %299 : vector<1x64xf32>
    %301 = vector.extract_strided_slice %73 {offsets = [1, 0], sizes = [1, 64], strides = [1, 1]} : vector<8x64xf32> to vector<1x64xf32>
    %cst_69 = arith.constant dense<0.000000e+00> : vector<1x64xf32>
    %302 = tpu.matmul %297, %77, %cst_69 {dimension_numbers = #tpu.dot_dimension_numbers<[1], [0], [0], [1], [0, 0, 1, 1], [], []>} : vector<1x16xf32>, vector<16x64xf32>, vector<1x64xf32> -> vector<1x64xf32>
    %303 = arith.addf %301, %302 : vector<1x64xf32>
    %304 = arith.negf %300 : vector<1x64xf32>
    %305 = math.exp %304 : vector<1x64xf32>
    %cst_70 = arith.constant 1.000000e+00 : f32
    %306 = vector.broadcast %cst_70 : f32 to vector<1x64xf32>
    %307 = arith.addf %306, %305 : vector<1x64xf32>
    %308 = arith.divf %306, %307 : vector<1x64xf32>
    %309 = math.tanh %300 : vector<1x64xf32>
    %310 = vector.extract_strided_slice %308 {offsets = [0, 0], sizes = [1, 16], strides = [1, 1]} : vector<1x64xf32> to vector<1x16xf32>
    %311 = vector.extract_strided_slice %308 {offsets = [0, 16], sizes = [1, 16], strides = [1, 1]} : vector<1x64xf32> to vector<1x16xf32>
    %312 = vector.extract_strided_slice %309 {offsets = [0, 32], sizes = [1, 16], strides = [1, 1]} : vector<1x64xf32> to vector<1x16xf32>
    %313 = vector.extract_strided_slice %308 {offsets = [0, 48], sizes = [1, 16], strides = [1, 1]} : vector<1x64xf32> to vector<1x16xf32>
    %314 = arith.mulf %311, %280 : vector<1x16xf32>
    %315 = arith.mulf %310, %312 : vector<1x16xf32>
    %316 = arith.addf %314, %315 : vector<1x16xf32>
    %317 = math.tanh %316 : vector<1x16xf32>
    %318 = arith.mulf %313, %317 : vector<1x16xf32>
    %319 = arith.negf %303 : vector<1x64xf32>
    %320 = math.exp %319 : vector<1x64xf32>
    %cst_71 = arith.constant 1.000000e+00 : f32
    %321 = vector.broadcast %cst_71 : f32 to vector<1x64xf32>
    %322 = arith.addf %321, %320 : vector<1x64xf32>
    %323 = arith.divf %321, %322 : vector<1x64xf32>
    %324 = math.tanh %303 : vector<1x64xf32>
    %325 = vector.extract_strided_slice %323 {offsets = [0, 0], sizes = [1, 16], strides = [1, 1]} : vector<1x64xf32> to vector<1x16xf32>
    %326 = vector.extract_strided_slice %323 {offsets = [0, 16], sizes = [1, 16], strides = [1, 1]} : vector<1x64xf32> to vector<1x16xf32>
    %327 = vector.extract_strided_slice %324 {offsets = [0, 32], sizes = [1, 16], strides = [1, 1]} : vector<1x64xf32> to vector<1x16xf32>
    %328 = vector.extract_strided_slice %323 {offsets = [0, 48], sizes = [1, 16], strides = [1, 1]} : vector<1x64xf32> to vector<1x16xf32>
    %329 = arith.mulf %326, %295 : vector<1x16xf32>
    %330 = arith.mulf %325, %327 : vector<1x16xf32>
    %331 = arith.addf %329, %330 : vector<1x16xf32>
    %332 = math.tanh %331 : vector<1x16xf32>
    %333 = arith.mulf %328, %332 : vector<1x16xf32>
    %334 = vector.extract_strided_slice %72 {offsets = [7, 0], sizes = [1, 64], strides = [1, 1]} : vector<8x64xf32> to vector<1x64xf32>
    %cst_72 = arith.constant dense<0.000000e+00> : vector<1x64xf32>
    %335 = tpu.matmul %318, %75, %cst_72 {dimension_numbers = #tpu.dot_dimension_numbers<[1], [0], [0], [1], [0, 0, 1, 1], [], []>} : vector<1x16xf32>, vector<16x64xf32>, vector<1x64xf32> -> vector<1x64xf32>
    %336 = arith.addf %334, %335 : vector<1x64xf32>
    %337 = vector.extract_strided_slice %73 {offsets = [0, 0], sizes = [1, 64], strides = [1, 1]} : vector<8x64xf32> to vector<1x64xf32>
    %cst_73 = arith.constant dense<0.000000e+00> : vector<1x64xf32>
    %338 = tpu.matmul %333, %77, %cst_73 {dimension_numbers = #tpu.dot_dimension_numbers<[1], [0], [0], [1], [0, 0, 1, 1], [], []>} : vector<1x16xf32>, vector<16x64xf32>, vector<1x64xf32> -> vector<1x64xf32>
    %339 = arith.addf %337, %338 : vector<1x64xf32>
    %340 = arith.negf %336 : vector<1x64xf32>
    %341 = math.exp %340 : vector<1x64xf32>
    %cst_74 = arith.constant 1.000000e+00 : f32
    %342 = vector.broadcast %cst_74 : f32 to vector<1x64xf32>
    %343 = arith.addf %342, %341 : vector<1x64xf32>
    %344 = arith.divf %342, %343 : vector<1x64xf32>
    %345 = math.tanh %336 : vector<1x64xf32>
    %346 = vector.extract_strided_slice %344 {offsets = [0, 0], sizes = [1, 16], strides = [1, 1]} : vector<1x64xf32> to vector<1x16xf32>
    %347 = vector.extract_strided_slice %344 {offsets = [0, 16], sizes = [1, 16], strides = [1, 1]} : vector<1x64xf32> to vector<1x16xf32>
    %348 = vector.extract_strided_slice %345 {offsets = [0, 32], sizes = [1, 16], strides = [1, 1]} : vector<1x64xf32> to vector<1x16xf32>
    %349 = vector.extract_strided_slice %344 {offsets = [0, 48], sizes = [1, 16], strides = [1, 1]} : vector<1x64xf32> to vector<1x16xf32>
    %350 = arith.mulf %347, %316 : vector<1x16xf32>
    %351 = arith.mulf %346, %348 : vector<1x16xf32>
    %352 = arith.addf %350, %351 : vector<1x16xf32>
    %353 = math.tanh %352 : vector<1x16xf32>
    %354 = arith.mulf %349, %353 : vector<1x16xf32>
    %355 = arith.negf %339 : vector<1x64xf32>
    %356 = math.exp %355 : vector<1x64xf32>
    %cst_75 = arith.constant 1.000000e+00 : f32
    %357 = vector.broadcast %cst_75 : f32 to vector<1x64xf32>
    %358 = arith.addf %357, %356 : vector<1x64xf32>
    %359 = arith.divf %357, %358 : vector<1x64xf32>
    %360 = math.tanh %339 : vector<1x64xf32>
    %361 = vector.extract_strided_slice %359 {offsets = [0, 0], sizes = [1, 16], strides = [1, 1]} : vector<1x64xf32> to vector<1x16xf32>
    %362 = vector.extract_strided_slice %359 {offsets = [0, 16], sizes = [1, 16], strides = [1, 1]} : vector<1x64xf32> to vector<1x16xf32>
    %363 = vector.extract_strided_slice %360 {offsets = [0, 32], sizes = [1, 16], strides = [1, 1]} : vector<1x64xf32> to vector<1x16xf32>
    %364 = vector.extract_strided_slice %359 {offsets = [0, 48], sizes = [1, 16], strides = [1, 1]} : vector<1x64xf32> to vector<1x16xf32>
    %365 = arith.mulf %362, %331 : vector<1x16xf32>
    %366 = arith.mulf %361, %363 : vector<1x16xf32>
    %367 = arith.addf %365, %366 : vector<1x16xf32>
    %368 = math.tanh %367 : vector<1x16xf32>
    %369 = arith.mulf %364, %368 : vector<1x16xf32>
    %370 = tpu.concatenate %102, %138, %174, %210, %246, %282, %318, %354 in 0 : vector<1x16xf32>, vector<1x16xf32>, vector<1x16xf32>, vector<1x16xf32>, vector<1x16xf32>, vector<1x16xf32>, vector<1x16xf32>, vector<1x16xf32> -> vector<8x16xf32>
    %371 = tpu.concatenate %369, %333, %297, %261, %225, %189, %153, %117 in 0 : vector<1x16xf32>, vector<1x16xf32>, vector<1x16xf32>, vector<1x16xf32>, vector<1x16xf32>, vector<1x16xf32>, vector<1x16xf32>, vector<1x16xf32> -> vector<8x16xf32>
    %372 = tpu.concatenate %370, %371 in 1 : vector<8x16xf32>, vector<8x16xf32> -> vector<8x32xf32>
    %373 = arith.addf %66, %372 : vector<8x32xf32>
    %c0_76 = arith.constant 0 : index
    %c0_77 = arith.constant 0 : index
    %374 = vector.load %arg12[%c0_76, %c0_77] : memref<1x32xf32, #tpu.memory_space<vmem>>, vector<1x32xf32>
    %c0_78 = arith.constant 0 : index
    %c0_79 = arith.constant 0 : index
    %375 = vector.load %arg13[%c0_78, %c0_79] : memref<1x32xf32, #tpu.memory_space<vmem>>, vector<1x32xf32>
    %cst_80 = arith.constant dense<0.000000e+00> : vector<8xf32>
    %376 = vector.multi_reduction <add>, %373, %cst_80 [1] : vector<8x32xf32> to vector<8xf32>
    %377 = vector.shape_cast %376 : vector<8xf32> to vector<8x1xf32>
    %cst_81 = arith.constant 3.200000e+01 : f32
    %378 = vector.broadcast %cst_81 : f32 to vector<8x1xf32>
    %379 = arith.divf %377, %378 : vector<8x1xf32>
    %380 = vector.broadcast %379 : vector<8x1xf32> to vector<8x32xf32>
    %381 = arith.subf %373, %380 : vector<8x32xf32>
    %382 = arith.mulf %381, %381 : vector<8x32xf32>
    %cst_82 = arith.constant dense<0.000000e+00> : vector<8xf32>
    %383 = vector.multi_reduction <add>, %382, %cst_82 [1] : vector<8x32xf32> to vector<8xf32>
    %384 = vector.shape_cast %383 : vector<8xf32> to vector<8x1xf32>
    %cst_83 = arith.constant 3.200000e+01 : f32
    %385 = vector.broadcast %cst_83 : f32 to vector<8x1xf32>
    %386 = arith.divf %384, %385 : vector<8x1xf32>
    %cst_84 = arith.constant 9.99999974E-6 : f32
    %387 = vector.broadcast %cst_84 : f32 to vector<8x1xf32>
    %388 = arith.addf %386, %387 : vector<8x1xf32>
    %389 = math.rsqrt %388 : vector<8x1xf32>
    %390 = vector.broadcast %389 : vector<8x1xf32> to vector<8x32xf32>
    %391 = arith.mulf %381, %390 : vector<8x32xf32>
    %392 = vector.broadcast %374 : vector<1x32xf32> to vector<8x32xf32>
    %393 = arith.mulf %391, %392 : vector<8x32xf32>
    %394 = vector.broadcast %375 : vector<1x32xf32> to vector<8x32xf32>
    %395 = arith.addf %393, %394 : vector<8x32xf32>
    %c0_85 = arith.constant 0 : index
    %c0_86 = arith.constant 0 : index
    %c0_87 = arith.constant 0 : index
    %396 = vector.load %arg14[%c0_85, %c0_86, %c0_87] : memref<1x8x32xf32, #tpu.memory_space<vmem>>, vector<1x8x32xf32>
    %397 = vector.shape_cast %396 : vector<1x8x32xf32> to vector<8x32xf32>
    %398 = vector.shape_cast %395 : vector<8x32xf32> to vector<1x8x32xf32>
    tpu.vector_store %arg14[%c0_85, %c0_86, %c0_87], %398 {strides = array<i32>} : memref<1x8x32xf32, #tpu.memory_space<vmem>>, vector<1x8x32xf32>,
    %399 = tpu.concatenate %354, %369 in 0 : vector<1x16xf32>, vector<1x16xf32> -> vector<2x16xf32>
    %c0_88 = arith.constant 0 : index
    %c0_89 = arith.constant 0 : index
    %c0_90 = arith.constant 0 : index
    %400 = vector.load %arg15[%c0_88, %c0_89, %c0_90] : memref<1x2x16xf32, #tpu.memory_space<vmem>>, vector<1x2x16xf32>
    %401 = vector.shape_cast %400 : vector<1x2x16xf32> to vector<2x16xf32>
    %402 = vector.shape_cast %399 : vector<2x16xf32> to vector<1x2x16xf32>
    tpu.vector_store %arg15[%c0_88, %c0_89, %c0_90], %402 {strides = array<i32>} : memref<1x2x16xf32, #tpu.memory_space<vmem>>, vector<1x2x16xf32>,
    %403 = tpu.concatenate %352, %367 in 0 : vector<1x16xf32>, vector<1x16xf32> -> vector<2x16xf32>
    %c0_91 = arith.constant 0 : index
    %c0_92 = arith.constant 0 : index
    %c0_93 = arith.constant 0 : index
    %404 = vector.load %arg16[%c0_91, %c0_92, %c0_93] : memref<1x2x16xf32, #tpu.memory_space<vmem>>, vector<1x2x16xf32>
    %405 = vector.shape_cast %404 : vector<1x2x16xf32> to vector<2x16xf32>
    %406 = vector.shape_cast %403 : vector<2x16xf32> to vector<1x2x16xf32>
    tpu.vector_store %arg16[%c0_91, %c0_92, %c0_93], %406 {strides = array<i32>} : memref<1x2x16xf32, #tpu.memory_space<vmem>>, vector<1x2x16xf32>,
    return
  }
  func.func @transform_0(%arg0: i32) -> (i32, i32, i32) {
    %c0_i32 = arith.constant 0 : i32
    %c0_i32_0 = arith.constant 0 : i32
    %c0_i32_1 = arith.constant 0 : i32
    return %arg0, %c0_i32, %c0_i32_0 : i32, i32, i32
  }
  func.func @transform_1(%arg0: i32) -> (i32, i32, i32) {
    %c0_i32 = arith.constant 0 : i32
    %c0_i32_0 = arith.constant 0 : i32
    %c0_i32_1 = arith.constant 0 : i32
    return %arg0, %c0_i32, %c0_i32_0 : i32, i32, i32
  }
  func.func @transform_2(%arg0: i32) -> (i32, i32) {
    %c0_i32 = arith.constant 0 : i32
    %c0_i32_0 = arith.constant 0 : i32
    %c0_i32_1 = arith.constant 0 : i32
    return %c0_i32, %c0_i32_0 : i32, i32
  }
  func.func @transform_3(%arg0: i32) -> (i32, i32) {
    %c0_i32 = arith.constant 0 : i32
    %c0_i32_0 = arith.constant 0 : i32
    %c0_i32_1 = arith.constant 0 : i32
    return %c0_i32, %c0_i32_0 : i32, i32
  }
  func.func @transform_4(%arg0: i32) -> (i32, i32) {
    %c0_i32 = arith.constant 0 : i32
    %c0_i32_0 = arith.constant 0 : i32
    %c0_i32_1 = arith.constant 0 : i32
    return %c0_i32, %c0_i32_0 : i32, i32
  }
  func.func @transform_5(%arg0: i32) -> (i32, i32) {
    %c0_i32 = arith.constant 0 : i32
    %c0_i32_0 = arith.constant 0 : i32
    %c0_i32_1 = arith.constant 0 : i32
    return %c0_i32, %c0_i32_0 : i32, i32
  }
  func.func @transform_6(%arg0: i32) -> (i32, i32) {
    %c0_i32 = arith.constant 0 : i32
    %c0_i32_0 = arith.constant 0 : i32
    %c0_i32_1 = arith.constant 0 : i32
    return %c0_i32, %c0_i32_0 : i32, i32
  }
  func.func @transform_7(%arg0: i32) -> (i32, i32) {
    %c0_i32 = arith.constant 0 : i32
    %c0_i32_0 = arith.constant 0 : i32
    %c0_i32_1 = arith.constant 0 : i32
    return %c0_i32, %c0_i32_0 : i32, i32
  }
  func.func @transform_8(%arg0: i32) -> (i32, i32) {
    %c0_i32 = arith.constant 0 : i32
    %c0_i32_0 = arith.constant 0 : i32
    %c0_i32_1 = arith.constant 0 : i32
    return %c0_i32, %c0_i32_0 : i32, i32
  }
  func.func @transform_9(%arg0: i32) -> (i32, i32) {
    %c0_i32 = arith.constant 0 : i32
    %c0_i32_0 = arith.constant 0 : i32
    %c0_i32_1 = arith.constant 0 : i32
    return %c0_i32, %c0_i32_0 : i32, i32
  }
  func.func @transform_10(%arg0: i32) -> (i32, i32, i32) {
    %c0_i32 = arith.constant 0 : i32
    %c0_i32_0 = arith.constant 0 : i32
    %c0_i32_1 = arith.constant 0 : i32
    %c0_i32_2 = arith.constant 0 : i32
    return %c0_i32, %c0_i32_0, %c0_i32_1 : i32, i32, i32
  }
  func.func @transform_11(%arg0: i32) -> (i32, i32) {
    %c0_i32 = arith.constant 0 : i32
    %c0_i32_0 = arith.constant 0 : i32
    %c0_i32_1 = arith.constant 0 : i32
    return %c0_i32, %c0_i32_0 : i32, i32
  }
  func.func @transform_12(%arg0: i32) -> (i32, i32) {
    %c0_i32 = arith.constant 0 : i32
    %c0_i32_0 = arith.constant 0 : i32
    %c0_i32_1 = arith.constant 0 : i32
    return %c0_i32, %c0_i32_0 : i32, i32
  }
  func.func @transform_13(%arg0: i32) -> (i32, i32, i32) {
    %c0_i32 = arith.constant 0 : i32
    %c0_i32_0 = arith.constant 0 : i32
    %c0_i32_1 = arith.constant 0 : i32
    return %arg0, %c0_i32, %c0_i32_0 : i32, i32, i32
  }
  func.func @transform_14(%arg0: i32) -> (i32, i32, i32) {
    %c0_i32 = arith.constant 0 : i32
    %c0_i32_0 = arith.constant 0 : i32
    %c0_i32_1 = arith.constant 0 : i32
    return %arg0, %c0_i32, %c0_i32_0 : i32, i32, i32
  }
  func.func @transform_15(%arg0: i32) -> (i32, i32, i32) {
    %c0_i32 = arith.constant 0 : i32
    %c0_i32_0 = arith.constant 0 : i32
    %c0_i32_1 = arith.constant 0 : i32
    return %arg0, %c0_i32, %c0_i32_0 : i32, i32, i32
  }
}

module attributes {stable_mosaic.version = 11 : i64} {
  func.func @lab_layer_kernel(%arg0: i32, %arg1: memref<1x8x32xf32, #tpu.memory_space<vmem>>, %arg2: memref<1x1x8xi32, #tpu.memory_space<vmem>>, %arg3: memref<32x96xf32, #tpu.memory_space<vmem>>, %arg4: memref<1x96xf32, #tpu.memory_space<vmem>>, %arg5: memref<32x32xf32, #tpu.memory_space<vmem>>, %arg6: memref<1x32xf32, #tpu.memory_space<vmem>>, %arg7: memref<1x32xf32, #tpu.memory_space<vmem>>, %arg8: memref<1x32xf32, #tpu.memory_space<vmem>>, %arg9: memref<32x128xf32, #tpu.memory_space<vmem>>, %arg10: memref<1x128xf32, #tpu.memory_space<vmem>>, %arg11: memref<2x16x64xf32, #tpu.memory_space<vmem>>, %arg12: memref<1x32xf32, #tpu.memory_space<vmem>>, %arg13: memref<1x32xf32, #tpu.memory_space<vmem>>, %arg14: memref<1x8x32xf32, #tpu.memory_space<vmem>>, %arg15: memref<1x2x16xf32, #tpu.memory_space<vmem>>, %arg16: memref<1x2x16xf32, #tpu.memory_space<vmem>>) attributes {dimension_semantics = [#tpu.dimension_semantics<parallel>], iteration_bounds = array<i64: 2>, scalar_prefetch = 0 : i64, scratch_operands = 0 : i64, tpu.core_type = #tpu.core_type<tc>, window_params = [{transform_indices = @transform_0, window_bounds = array<i64: 1, 8, 32>}, {transform_indices = @transform_1, window_bounds = array<i64: 1, 1, 8>}, {pipeline_mode = #tpu.pipeline_mode<synchronous>, transform_indices = @transform_2, window_bounds = array<i64: 32, 96>}, {pipeline_mode = #tpu.pipeline_mode<synchronous>, transform_indices = @transform_3, window_bounds = array<i64: 1, 96>}, {pipeline_mode = #tpu.pipeline_mode<synchronous>, transform_indices = @transform_4, window_bounds = array<i64: 32, 32>}, {pipeline_mode = #tpu.pipeline_mode<synchronous>, transform_indices = @transform_5, window_bounds = array<i64: 1, 32>}, {pipeline_mode = #tpu.pipeline_mode<synchronous>, transform_indices = @transform_6, window_bounds = array<i64: 1, 32>}, {pipeline_mode = #tpu.pipeline_mode<synchronous>, transform_indices = @transform_7, window_bounds = array<i64: 1, 32>}, {pipeline_mode = #tpu.pipeline_mode<synchronous>, transform_indices = @transform_8, window_bounds = array<i64: 32, 128>}, {pipeline_mode = #tpu.pipeline_mode<synchronous>, transform_indices = @transform_9, window_bounds = array<i64: 1, 128>}, {pipeline_mode = #tpu.pipeline_mode<synchronous>, transform_indices = @transform_10, window_bounds = array<i64: 2, 16, 64>}, {pipeline_mode = #tpu.pipeline_mode<synchronous>, transform_indices = @transform_11, window_bounds = array<i64: 1, 32>}, {pipeline_mode = #tpu.pipeline_mode<synchronous>, transform_indices = @transform_12, window_bounds = array<i64: 1, 32>}, {transform_indices = @transform_13, window_bounds = array<i64: 1, 8, 32>}, {transform_indices = @transform_14, window_bounds = array<i64: 1, 2, 16>}, {transform_indices = @transform_15, window_bounds = array<i64: 1, 2, 16>}]} {
    %c0 = arith.constant 0 : index
    %c0_0 = arith.constant 0 : index
    %c0_1 = arith.constant 0 : index
    %0 = vector.load %arg1[%c0, %c0_0, %c0_1] : memref<1x8x32xf32, #tpu.memory_space<vmem>>, vector<1x8x32xf32>
    %1 = vector.shape_cast %0 : vector<1x8x32xf32> to vector<8x32xf32>
    %c0_2 = arith.constant 0 : index
    %c0_3 = arith.constant 0 : index
    %2 = vector.load %arg3[%c0_2, %c0_3] : memref<32x96xf32, #tpu.memory_space<vmem>>, vector<32x96xf32>
    %cst = arith.constant dense<0.000000e+00> : vector<8x96xf32>
    %3 = tpu.matmul %1, %2, %cst {dimension_numbers = #tpu.dot_dimension_numbers<[1], [0], [0], [1], [0, 0, 1, 1], [], []>} : vector<8x32xf32>, vector<32x96xf32>, vector<8x96xf32> -> vector<8x96xf32>
    %c0_4 = arith.constant 0 : index
    %c0_5 = arith.constant 0 : index
    %4 = vector.load %arg4[%c0_4, %c0_5] : memref<1x96xf32, #tpu.memory_space<vmem>>, vector<1x96xf32>
    %5 = vector.broadcast %4 : vector<1x96xf32> to vector<8x96xf32>
    %6 = arith.addf %3, %5 : vector<8x96xf32>
    %7 = vector.extract_strided_slice %6 {offsets = [0, 0], sizes = [8, 32], strides = [1, 1]} : vector<8x96xf32> to vector<8x32xf32>
    %8 = vector.shape_cast %7 : vector<8x32xf32> to vector<8x4x8xf32>
    %9 = vector.extract_strided_slice %6 {offsets = [0, 32], sizes = [8, 32], strides = [1, 1]} : vector<8x96xf32> to vector<8x32xf32>
    %10 = vector.shape_cast %9 : vector<8x32xf32> to vector<8x4x8xf32>
    %11 = vector.extract_strided_slice %6 {offsets = [0, 64], sizes = [8, 32], strides = [1, 1]} : vector<8x96xf32> to vector<8x32xf32>
    %12 = vector.shape_cast %11 : vector<8x32xf32> to vector<8x4x8xf32>
    "tpu.trace_start"() <{level = 10 : i32, message = "qhd,khd->hqk"}> : () -> ()
    %cst_6 = arith.constant dense<0.000000e+00> : vector<4x8x8xf32>
    %13 = tpu.matmul %8, %10, %cst_6 {dimension_numbers = #tpu.dot_dimension_numbers<[2], [2], [0], [0], [0, 1, 0, 0, 1, 0], [1], [1]>} : vector<8x4x8xf32>, vector<8x4x8xf32>, vector<4x8x8xf32> -> vector<4x8x8xf32>
    "tpu.trace_stop"() : () -> ()
    %cst_7 = arith.constant 0.353553385 : f32
    %14 = vector.broadcast %cst_7 : f32 to vector<4x8x8xf32>
    %15 = arith.mulf %13, %14 : vector<4x8x8xf32>
    %c0_8 = arith.constant 0 : index
    %c0_9 = arith.constant 0 : index
    %c0_10 = arith.constant 0 : index
    %16 = vector.load %arg2[%c0_8, %c0_9, %c0_10] : memref<1x1x8xi32, #tpu.memory_space<vmem>>, vector<1x1x8xi32>
    %17 = vector.shape_cast %16 : vector<1x1x8xi32> to vector<1x8xi32>
    %c0_i32 = arith.constant 0 : i32
    %18 = vector.broadcast %c0_i32 : i32 to vector<1x8xi32>
    %19 = arith.cmpi eq, %17, %18 : vector<1x8xi32>
    %cst_11 = arith.constant -1.000000e+30 : f32
    %cst_12 = arith.constant 0.000000e+00 : f32
    %20 = vector.broadcast %cst_11 : f32 to vector<1x8xf32>
    %21 = vector.broadcast %cst_12 : f32 to vector<1x8xf32>
    %22 = arith.select %19, %20, %21 : vector<1x8xi1>, vector<1x8xf32>
    %23 = vector.shape_cast %22 : vector<1x8xf32> to vector<1x1x8xf32>
    %24 = vector.broadcast %23 : vector<1x1x8xf32> to vector<4x8x8xf32>
    %25 = arith.addf %15, %24 : vector<4x8x8xf32>
    %cst_13 = arith.constant dense<0xFF800000> : vector<4x8xf32>
    %26 = vector.multi_reduction <maximumf>, %25, %cst_13 [2] : vector<4x8x8xf32> to vector<4x8xf32>
    %27 = vector.shape_cast %26 : vector<4x8xf32> to vector<4x8x1xf32>
    %28 = vector.broadcast %27 : vector<4x8x1xf32> to vector<4x8x8xf32>
    %29 = arith.subf %25, %28 : vector<4x8x8xf32>
    %30 = math.exp %29 : vector<4x8x8xf32>
    %cst_14 = arith.constant dense<0.000000e+00> : vector<4x8xf32>
    %31 = vector.multi_reduction <add>, %30, %cst_14 [2] : vector<4x8x8xf32> to vector<4x8xf32>
    %32 = vector.shape_cast %31 : vector<4x8xf32> to vector<4x8x1xf32>
    %33 = tpu.reciprocal %32 {approx = true} : vector<4x8x1xf32> -> vector<4x8x1xf32>
    %34 = vector.broadcast %33 : vector<4x8x1xf32> to vector<4x8x8xf32>
    %35 = arith.mulf %30, %34 : vector<4x8x8xf32>
    "tpu.trace_start"() <{level = 10 : i32, message = "hqk,khd->qhd"}> : () -> ()
    %cst_15 = arith.constant dense<0.000000e+00> : vector<4x8x8xf32>
    %36 = tpu.matmul %12, %35, %cst_15 {dimension_numbers = #tpu.dot_dimension_numbers<[0], [2], [2], [1], [0, 1, 0, 2, 1, 1], [1], [0]>} : vector<8x4x8xf32>, vector<4x8x8xf32>, vector<4x8x8xf32> -> vector<4x8x8xf32>
    %37 = tpu.transpose %36, [2, 0, 1] : vector<4x8x8xf32> -> vector<8x4x8xf32>
    "tpu.trace_stop"() : () -> ()
    %38 = vector.shape_cast %37 : vector<8x4x8xf32> to vector<8x32xf32>
    %c0_16 = arith.constant 0 : index
    %c0_17 = arith.constant 0 : index
    %39 = vector.load %arg5[%c0_16, %c0_17] : memref<32x32xf32, #tpu.memory_space<vmem>>, vector<32x32xf32>
    %cst_18 = arith.constant dense<0.000000e+00> : vector<8x32xf32>
    %40 = tpu.matmul %38, %39, %cst_18 {dimension_numbers = #tpu.dot_dimension_numbers<[1], [0], [0], [1], [0, 0, 1, 1], [], []>} : vector<8x32xf32>, vector<32x32xf32>, vector<8x32xf32> -> vector<8x32xf32>
    %c0_19 = arith.constant 0 : index
    %c0_20 = arith.constant 0 : index
    %41 = vector.load %arg6[%c0_19, %c0_20] : memref<1x32xf32, #tpu.memory_space<vmem>>, vector<1x32xf32>
    %42 = vector.broadcast %41 : vector<1x32xf32> to vector<8x32xf32>
    %43 = arith.addf %40, %42 : vector<8x32xf32>
    %44 = arith.addf %43, %1 : vector<8x32xf32>
    %c0_21 = arith.constant 0 : index
    %c0_22 = arith.constant 0 : index
    %45 = vector.load %arg7[%c0_21, %c0_22] : memref<1x32xf32, #tpu.memory_space<vmem>>, vector<1x32xf32>
    %c0_23 = arith.constant 0 : index
    %c0_24 = arith.constant 0 : index
    %46 = vector.load %arg8[%c0_23, %c0_24] : memref<1x32xf32, #tpu.memory_space<vmem>>, vector<1x32xf32>
    %cst_25 = arith.constant dense<0.000000e+00> : vector<8xf32>
    %47 = vector.multi_reduction <add>, %44, %cst_25 [1] : vector<8x32xf32> to vector<8xf32>
    %48 = vector.shape_cast %47 : vector<8xf32> to vector<8x1xf32>
    %cst_26 = arith.constant 3.200000e+01 : f32
    %49 = vector.broadcast %cst_26 : f32 to vector<8x1xf32>
    %50 = arith.divf %48, %49 : vector<8x1xf32>
    %51 = vector.broadcast %50 : vector<8x1xf32> to vector<8x32xf32>
    %52 = arith.subf %44, %51 : vector<8x32xf32>
    %53 = arith.mulf %52, %52 : vector<8x32xf32>
    %cst_27 = arith.constant dense<0.000000e+00> : vector<8xf32>
    %54 = vector.multi_reduction <add>, %53, %cst_27 [1] : vector<8x32xf32> to vector<8xf32>
    %55 = vector.shape_cast %54 : vector<8xf32> to vector<8x1xf32>
    %cst_28 = arith.constant 3.200000e+01 : f32
    %56 = vector.broadcast %cst_28 : f32 to vector<8x1xf32>
    %57 = arith.divf %55, %56 : vector<8x1xf32>
    %cst_29 = arith.constant 9.99999974E-6 : f32
    %58 = vector.broadcast %cst_29 : f32 to vector<8x1xf32>
    %59 = arith.addf %57, %58 : vector<8x1xf32>
    %60 = math.rsqrt %59 : vector<8x1xf32>
    %61 = vector.broadcast %60 : vector<8x1xf32> to vector<8x32xf32>
    %62 = arith.mulf %52, %61 : vector<8x32xf32>
    %63 = vector.broadcast %45 : vector<1x32xf32> to vector<8x32xf32>
    %64 = arith.mulf %62, %63 : vector<8x32xf32>
    %65 = vector.broadcast %46 : vector<1x32xf32> to vector<8x32xf32>
    %66 = arith.addf %64, %65 : vector<8x32xf32>
    %c0_30 = arith.constant 0 : index
    %c0_31 = arith.constant 0 : index
    %67 = vector.load %arg9[%c0_30, %c0_31] : memref<32x128xf32, #tpu.memory_space<vmem>>, vector<32x128xf32>
    %cst_32 = arith.constant dense<0.000000e+00> : vector<8x128xf32>
    %68 = tpu.matmul %66, %67, %cst_32 {dimension_numbers = #tpu.dot_dimension_numbers<[1], [0], [0], [1], [0, 0, 1, 1], [], []>} : vector<8x32xf32>, vector<32x128xf32>, vector<8x128xf32> -> vector<8x128xf32>
    %c0_33 = arith.constant 0 : index
    %c0_34 = arith.constant 0 : index
    %69 = vector.load %arg10[%c0_33, %c0_34] : memref<1x128xf32, #tpu.memory_space<vmem>>, vector<1x128xf32>
    %70 = vector.broadcast %69 : vector<1x128xf32> to vector<8x128xf32>
    %71 = arith.addf %68, %70 : vector<8x128xf32>
    %72 = vector.extract_strided_slice %71 {offsets = [0, 0], sizes = [8, 64], strides = [1, 1]} : vector<8x128xf32> to vector<8x64xf32>
    %73 = vector.extract_strided_slice %71 {offsets = [0, 64], sizes = [8, 64], strides = [1, 1]} : vector<8x128xf32> to vector<8x64xf32>
    %c0_35 = arith.constant 0 : index
    %c0_36 = arith.constant 0 : index
    %c0_37 = arith.constant 0 : index
    %74 = vector.load %arg11[%c0_35, %c0_36, %c0_37] : memref<2x16x64xf32, #tpu.memory_space<vmem>>, vector<1x16x64xf32>
    %75 = vector.shape_cast %74 : vector<1x16x64xf32> to vector<16x64xf32>
    %c1 = arith.constant 1 : index
    %c0_38 = arith.constant 0 : index
    %c0_39 = arith.constant 0 : index
    %76 = vector.load %arg11[%c1, %c0_38, %c0_39] : memref<2x16x64xf32, #tpu.memory_space<vmem>>, vector<1x16x64xf32>
    %77 = vector.shape_cast %76 : vector<1x16x64xf32> to vector<16x64xf32>
    %cst_40 = arith.constant 0.000000e+00 : f32
    %78 = vector.broadcast %cst_40 : f32 to vector<1x16xf32>
    %cst_41 = arith.constant 0.000000e+00 : f32
    %79 = vector.broadcast %cst_41 : f32 to vector<1x16xf32>
    %cst_42 = arith.constant 0.000000e+00 : f32
    %80 = vector.broadcast %cst_42 : f32 to vector<1x16xf32>
    %cst_43 = arith.constant 0.000000e+00 : f32
    %81 = vector.broadcast %cst_43 : f32 to vector<1x16xf32>
    %82 = vector.extract_strided_slice %72 {offsets = [0, 0], sizes = [1, 64], strides = [1, 1]} : vector<8x64xf32> to vector<1x64xf32>
    %cst_44 = arith.constant dense<0.000000e+00> : vector<1x64xf32>
    %83 = tpu.matmul %78, %75, %cst_44 {dimension_numbers = #tpu.dot_dimension_numbers<[1], [0], [0], [1], [0, 0, 1, 1], [], []>} : vector<1x16xf32>, vector<16x64xf32>, vector<1x64xf32> -> vector<1x64xf32>
    %84 = arith.addf %82, %83 : vector<1x64xf32>
    %85 = vector.extract_strided_slice %73 {offsets = [7, 0], sizes = [1, 64], strides = [1, 1]} : vector<8x64xf32> to vector<1x64xf32>
    %cst_45 = arith.constant dense<0.000000e+00> : vector<1x64xf32>
    %86 = tpu.matmul %80, %77, %cst_45 {dimension_numbers = #tpu.dot_dimension_numbers<[1], [0], [0], [1], [0, 0, 1, 1], [], []>} : vector<1x16xf32>, vector<16x64xf32>, vector<1x64xf32> -> vector<1x64xf32>
    %87 = arith.addf %85, %86 : vector<1x64xf32>
    %88 = arith.negf %84 : vector<1x64xf32>
    %89 = math.exp %88 : vector<1x64xf32>
    %cst_46 = arith.constant 1.000000e+00 : f32
    %90 = vector.broadcast %cst_46 : f32 to vector<1x64xf32>
    %91 = arith.addf %90, %89 : vector<1x64xf32>
    %92 = arith.divf %90, %91 : vector<1x64xf32>
    %93 = math.tanh %84 : vector<1x64xf32>
    %94 = vector.extract_strided_slice %92 {offsets = [0, 0], sizes = [1, 16], strides = [1, 1]} : vector<1x64xf32> to vector<1x16xf32>
    %95 = vector.extract_strided_slice %92 {offsets = [0, 16], sizes = [1, 16], strides = [1, 1]} : vector<1x64xf32> to vector<1x16xf32>
    %96 = vector.extract_strided_slice %93 {offsets = [0, 32], sizes = [1, 16], strides = [1, 1]} : vector<1x64xf32> to vector<1x16xf32>
    %97 = vector.extract_strided_slice %92 {offsets = [0, 48], sizes = [1, 16], strides = [1, 1]} : vector<1x64xf32> to vector<1x16xf32>
    %98 = arith.mulf %95, %79 : vector<1x16xf32>
    %99 = arith.mulf %94, %96 : vector<1x16xf32>
    %100 = arith.addf %98, %99 : vector<1x16xf32>
    %101 = math.tanh %100 : vector<1x16xf32>
    %102 = arith.mulf %97, %101 : vector<1x16xf32>
    %103 = arith.negf %87 : vector<1x64xf32>
    %104 = math.exp %103 : vector<1x64xf32>
    %cst_47 = arith.constant 1.000000e+00 : f32
    %105 = vector.broadcast %cst_47 : f32 to vector<1x64xf32>
    %106 = arith.addf %105, %104 : vector<1x64xf32>
    %107 = arith.divf %105, %106 : vector<1x64xf32>
    %108 = math.tanh %87 : vector<1x64xf32>
    %109 = vector.extract_strided_slice %107 {offsets = [0, 0], sizes = [1, 16], strides = [1, 1]} : vector<1x64xf32> to vector<1x16xf32>
    %110 = vector.extract_strided_slice %107 {offsets = [0, 16], sizes = [1, 16], strides = [1, 1]} : vector<1x64xf32> to vector<1x16xf32>
    %111 = vector.extract_strided_slice %108 {offsets = [0, 32], sizes = [1, 16], strides = [1, 1]} : vector<1x64xf32> to vector<1x16xf32>
    %112 = vector.extract_strided_slice %107 {offsets = [0, 48], sizes = [1, 16], strides = [1, 1]} : vector<1x64xf32> to vector<1x16xf32>
    %113 = arith.mulf %110, %81 : vector<1x16xf32>
    %114 = arith.mulf %109, %111 : vector<1x16xf32>
    %115 = arith.addf %113, %114 : vector<1x16xf32>
    %116 = math.tanh %115 : vector<1x16xf32>
    %117 = arith.mulf %112, %116 : vector<1x16xf32>
    %118 = vector.extract_strided_slice %72 {offsets = [1, 0], sizes = [1, 64], strides = [1, 1]} : vector<8x64xf32> to vector<1x64xf32>
    %cst_48 = arith.constant dense<0.000000e+00> : vector<1x64xf32>
    %119 = tpu.matmul %102, %75, %cst_48 {dimension_numbers = #tpu.dot_dimension_numbers<[1], [0], [0], [1], [0, 0, 1, 1], [], []>} : vector<1x16xf32>, vector<16x64xf32>, vector<1x64xf32> -> vector<1x64xf32>
    %120 = arith.addf %118, %119 : vector<1x64xf32>
    %121 = vector.extract_strided_slice %73 {offsets = [6, 0], sizes = [1, 64], strides = [1, 1]} : vector<8x64xf32> to vector<1x64xf32>
    %cst_49 = arith.constant dense<0.000000e+00> : vector<1x64xf32>
    %122 = tpu.matmul %117, %77, %cst_49 {dimension_numbers = #tpu.dot_dimension_numbers<[1], [0], [0], [1], [0, 0, 1, 1], [], []>} : vector<1x16xf32>, vector<16x64xf32>, vector<1x64xf32> -> vector<1x64xf32>
    %123 = arith.addf %121, %122 : vector<1x64xf32>
    %124 = arith.negf %120 : vector<1x64xf32>
    %125 = math.exp %124 : vector<1x64xf32>
    %cst_50 = arith.constant 1.000000e+00 : f32
    %126 = vector.broadcast %cst_50 : f32 to vector<1x64xf32>
    %127 = arith.addf %126, %125 : vector<1x64xf32>
    %128 = arith.divf %126, %127 : vector<1x64xf32>
    %129 = math.tanh %120 : vector<1x64xf32>
    %130 = vector.extract_strided_slice %128 {offsets = [0, 0], sizes = [1, 16], strides = [1, 1]} : vector<1x64xf32> to vector<1x16xf32>
    %131 = vector.extract_strided_slice %128 {offsets = [0, 16], sizes = [1, 16], strides = [1, 1]} : vector<1x64xf32> to vector<1x16xf32>
    %132 = vector.extract_strided_slice %129 {offsets = [0, 32], sizes = [1, 16], strides = [1, 1]} : vector<1x64xf32> to vector<1x16xf32>
    %133 = vector.extract_strided_slice %128 {offsets = [0, 48], sizes = [1, 16], strides = [1, 1]} : vector<1x64xf32> to vector<1x16xf32>
    %134 = arith.mulf %131, %100 : vector<1x16xf32>
    %135 = arith.mulf %130, %132 : vector<1x16xf32>
    %136 = arith.addf %134, %135 : vector<1x16xf32>
    %137 = math.tanh %136 : vector<1x16xf32>
    %138 = arith.mulf %133, %137 : vector<1x16xf32>
    %139 = arith.negf %123 : vector<1x64xf32>
    %140 = math.exp %139 : vector<1x64xf32>
    %cst_51 = arith.constant 1.000000e+00 : f32
    %141 = vector.broadcast %cst_51 : f32 to vector<1x64xf32>
    %142 = arith.addf %141, %140 : vector<1x64xf32>
    %143 = arith.divf %141, %142 : vector<1x64xf32>
    %144 = math.tanh %123 : vector<1x64xf32>
    %145 = vector.extract_strided_slice %143 {offsets = [0, 0], sizes = [1, 16], strides = [1, 1]} : vector<1x64xf32> to vector<1x16xf32>
    %146 = vector.extract_strided_slice %143 {offsets = [0, 16], sizes = [1, 16], strides = [1, 1]} : vector<1x64xf32> to vector<1x16xf32>
    %147 = vector.extract_strided_slice %144 {offsets = [0, 32], sizes = [1, 16], strides = [1, 1]} : vector<1x64xf32> to vector<1x16xf32>
    %148 = vector.extract_strided_slice %143 {offsets = [0, 48], sizes = [1, 16], strides = [1, 1]} : vector<1x64xf32> to vector<1x16xf32>
    %149 = arith.mulf %146, %115 : vector<1x16xf32>
    %150 = arith.mulf %145, %147 : vector<1x16xf32>
    %151 = arith.addf %149, %150 : vector<1x16xf32>
    %152 = math.tanh %151 : vector<1x16xf32>
    %153 = arith.mulf %148, %152 : vector<1x16xf32>
    %154 = vector.extract_strided_slice %72 {offsets = [2, 0], sizes = [1, 64], strides = [1, 1]} : vector<8x64xf32> to vector<1x64xf32>
    %cst_52 = arith.constant dense<0.000000e+00> : vector<1x64xf32>
    %155 = tpu.matmul %138, %75, %cst_52 {dimension_numbers = #tpu.dot_dimension_numbers<[1], [0], [0], [1], [0, 0, 1, 1], [], []>} : vector<1x16xf32>, vector<16x64xf32>, vector<1x64xf32> -> vector<1x64xf32>
    %156 = arith.addf %154, %155 : vector<1x64xf32>
    %157 = vector.extract_strided_slice %73 {offsets = [5, 0], sizes = [1, 64], strides = [1, 1]} : vector<8x64xf32> to vector<1x64xf32>
    %cst_53 = arith.constant dense<0.000000e+00> : vector<1x64xf32>
    %158 = tpu.matmul %153, %77, %cst_53 {dimension_numbers = #tpu.dot_dimension_numbers<[1], [0], [0], [1], [0, 0, 1, 1], [], []>} : vector<1x16xf32>, vector<16x64xf32>, vector<1x64xf32> -> vector<1x64xf32>
    %159 = arith.addf %157, %158 : vector<1x64xf32>
    %160 = arith.negf %156 : vector<1x64xf32>
    %161 = math.exp %160 : vector<1x64xf32>
    %cst_54 = arith.constant 1.000000e+00 : f32
    %162 = vector.broadcast %cst_54 : f32 to vector<1x64xf32>
    %163 = arith.addf %162, %161 : vector<1x64xf32>
    %164 = arith.divf %162, %163 : vector<1x64xf32>
    %165 = math.tanh %156 : vector<1x64xf32>
    %166 = vector.extract_strided_slice %164 {offsets = [0, 0], sizes = [1, 16], strides = [1, 1]} : vector<1x64xf32> to vector<1x16xf32>
    %167 = vector.extract_strided_slice %164 {offsets = [0, 16], sizes = [1, 16], strides = [1, 1]} : vector<1x64xf32> to vector<1x16xf32>
    %168 = vector.extract_strided_slice %165 {offsets = [0, 32], sizes = [1, 16], strides = [1, 1]} : vector<1x64xf32> to vector<1x16xf32>
    %169 = vector.extract_strided_slice %164 {offsets = [0, 48], sizes = [1, 16], strides = [1, 1]} : vector<1x64xf32> to vector<1x16xf32>
    %170 = arith.mulf %167, %136 : vector<1x16xf32>
    %171 = arith.mulf %166, %168 : vector<1x16xf32>
    %172 = arith.addf %170, %171 : vector<1x16xf32>
    %173 = math.tanh %172 : vector<1x16xf32>
    %174 = arith.mulf %169, %173 : vector<1x16xf32>
    %175 = arith.negf %159 : vector<1x64xf32>
    %176 = math.exp %175 : vector<1x64xf32>
    %cst_55 = arith.constant 1.000000e+00 : f32
    %177 = vector.broadcast %cst_55 : f32 to vector<1x64xf32>
    %178 = arith.addf %177, %176 : vector<1x64xf32>
    %179 = arith.divf %177, %178 : vector<1x64xf32>
    %180 = math.tanh %159 : vector<1x64xf32>
    %181 = vector.extract_strided_slice %179 {offsets = [0, 0], sizes = [1, 16], strides = [1, 1]} : vector<1x64xf32> to vector<1x16xf32>
    %182 = vector.extract_strided_slice %179 {offsets = [0, 16], sizes = [1, 16], strides = [1, 1]} : vector<1x64xf32> to vector<1x16xf32>
    %183 = vector.extract_strided_slice %180 {offsets = [0, 32], sizes = [1, 16], strides = [1, 1]} : vector<1x64xf32> to vector<1x16xf32>
    %184 = vector.extract_strided_slice %179 {offsets = [0, 48], sizes = [1, 16], strides = [1, 1]} : vector<1x64xf32> to vector<1x16xf32>
    %185 = arith.mulf %182, %151 : vector<1x16xf32>
    %186 = arith.mulf %181, %183 : vector<1x16xf32>
    %187 = arith.addf %185, %186 : vector<1x16xf32>
    %188 = math.tanh %187 : vector<1x16xf32>
    %189 = arith.mulf %184, %188 : vector<1x16xf32>
    %190 = vector.extract_strided_slice %72 {offsets = [3, 0], sizes = [1, 64], strides = [1, 1]} : vector<8x64xf32> to vector<1x64xf32>
    %cst_56 = arith.constant dense<0.000000e+00> : vector<1x64xf32>
    %191 = tpu.matmul %174, %75, %cst_56 {dimension_numbers = #tpu.dot_dimension_numbers<[1], [0], [0], [1], [0, 0, 1, 1], [], []>} : vector<1x16xf32>, vector<16x64xf32>, vector<1x64xf32> -> vector<1x64xf32>
    %192 = arith.addf %190, %191 : vector<1x64xf32>
    %193 = vector.extract_strided_slice %73 {offsets = [4, 0], sizes = [1, 64], strides = [1, 1]} : vector<8x64xf32> to vector<1x64xf32>
    %cst_57 = arith.constant dense<0.000000e+00> : vector<1x64xf32>
    %194 = tpu.matmul %189, %77, %cst_57 {dimension_numbers = #tpu.dot_dimension_numbers<[1], [0], [0], [1], [0, 0, 1, 1], [], []>} : vector<1x16xf32>, vector<16x64xf32>, vector<1x64xf32> -> vector<1x64xf32>
    %195 = arith.addf %193, %194 : vector<1x64xf32>
    %196 = arith.negf %192 : vector<1x64xf32>
    %197 = math.exp %196 : vector<1x64xf32>
    %cst_58 = arith.constant 1.000000e+00 : f32
    %198 = vector.broadcast %cst_58 : f32 to vector<1x64xf32>
    %199 = arith.addf %198, %197 : vector<1x64xf32>
    %200 = arith.divf %198, %199 : vector<1x64xf32>
    %201 = math.tanh %192 : vector<1x64xf32>
    %202 = vector.extract_strided_slice %200 {offsets = [0, 0], sizes = [1, 16], strides = [1, 1]} : vector<1x64xf32> to vector<1x16xf32>
    %203 = vector.extract_strided_slice %200 {offsets = [0, 16], sizes = [1, 16], strides = [1, 1]} : vector<1x64xf32> to vector<1x16xf32>
    %204 = vector.extract_strided_slice %201 {offsets = [0, 32], sizes = [1, 16], strides = [1, 1]} : vector<1x64xf32> to vector<1x16xf32>
    %205 = vector.extract_strided_slice %200 {offsets = [0, 48], sizes = [1, 16], strides = [1, 1]} : vector<1x64xf32> to vector<1x16xf32>
    %206 = arith.mulf %203, %172 : vector<1x16xf32>
    %207 = arith.mulf %202, %204 : vector<1x16xf32>
    %208 = arith.addf %206, %207 : vector<1x16xf32>
    %209 = math.tanh %208 : vector<1x16xf32>
    %210 = arith.mulf %205, %209 : vector<1x16xf32>
    %211 = arith.negf %195 : vector<1x64xf32>
    %212 = math.exp %211 : vector<1x64xf32>
    %cst_59 = arith.constant 1.000000e+00 : f32
    %213 = vector.broadcast %cst_59 : f32 to vector<1x64xf32>
    %214 = arith.addf %213, %212 : vector<1x64xf32>
    %215 = arith.divf %213, %214 : vector<1x64xf32>
    %216 = math.tanh %195 : vector<1x64xf32>
    %217 = vector.extract_strided_slice %215 {offsets = [0, 0], sizes = [1, 16], strides = [1, 1]} : vector<1x64xf32> to vector<1x16xf32>
    %218 = vector.extract_strided_slice %215 {offsets = [0, 16], sizes = [1, 16], strides = [1, 1]} : vector<1x64xf32> to vector<1x16xf32>
    %219 = vector.extract_strided_slice %216 {offsets = [0, 32], sizes = [1, 16], strides = [1, 1]} : vector<1x64xf32> to vector<1x16xf32>
    %220 = vector.extract_strided_slice %215 {offsets = [0, 48], sizes = [1, 16], strides = [1, 1]} : vector<1x64xf32> to vector<1x16xf32>
    %221 = arith.mulf %218, %187 : vector<1x16xf32>
    %222 = arith.mulf %217, %219 : vector<1x16xf32>
    %223 = arith.addf %221, %222 : vector<1x16xf32>
    %224 = math.tanh %223 : vector<1x16xf32>
    %225 = arith.mulf %220, %224 : vector<1x16xf32>
    %226 = vector.extract_strided_slice %72 {offsets = [4, 0], sizes = [1, 64], strides = [1, 1]} : vector<8x64xf32> to vector<1x64xf32>
    %cst_60 = arith.constant dense<0.000000e+00> : vector<1x64xf32>
    %227 = tpu.matmul %210, %75, %cst_60 {dimension_numbers = #tpu.dot_dimension_numbers<[1], [0], [0], [1], [0, 0, 1, 1], [], []>} : vector<1x16xf32>, vector<16x64xf32>, vector<1x64xf32> -> vector<1x64xf32>
    %228 = arith.addf %226, %227 : vector<1x64xf32>
    %229 = vector.extract_strided_slice %73 {offsets = [3, 0], sizes = [1, 64], strides = [1, 1]} : vector<8x64xf32> to vector<1x64xf32>
    %cst_61 = arith.constant dense<0.000000e+00> : vector<1x64xf32>
    %230 = tpu.matmul %225, %77, %cst_61 {dimension_numbers = #tpu.dot_dimension_numbers<[1], [0], [0], [1], [0, 0, 1, 1], [], []>} : vector<1x16xf32>, vector<16x64xf32>, vector<1x64xf32> -> vector<1x64xf32>
    %231 = arith.addf %229, %230 : vector<1x64xf32>
    %232 = arith.negf %228 : vector<1x64xf32>
    %233 = math.exp %232 : vector<1x64xf32>
    %cst_62 = arith.constant 1.000000e+00 : f32
    %234 = vector.broadcast %cst_62 : f32 to vector<1x64xf32>
    %235 = arith.addf %234, %233 : vector<1x64xf32>
    %236 = arith.divf %234, %235 : vector<1x64xf32>
    %237 = math.tanh %228 : vector<1x64xf32>
    %238 = vector.extract_strided_slice %236 {offsets = [0, 0], sizes = [1, 16], strides = [1, 1]} : vector<1x64xf32> to vector<1x16xf32>
    %239 = vector.extract_strided_slice %236 {offsets = [0, 16], sizes = [1, 16], strides = [1, 1]} : vector<1x64xf32> to vector<1x16xf32>
    %240 = vector.extract_strided_slice %237 {offsets = [0, 32], sizes = [1, 16], strides = [1, 1]} : vector<1x64xf32> to vector<1x16xf32>
    %241 = vector.extract_strided_slice %236 {offsets = [0, 48], sizes = [1, 16], strides = [1, 1]} : vector<1x64xf32> to vector<1x16xf32>
    %242 = arith.mulf %239, %208 : vector<1x16xf32>
    %243 = arith.mulf %238, %240 : vector<1x16xf32>
    %244 = arith.addf %242, %243 : vector<1x16xf32>
    %245 = math.tanh %244 : vector<1x16xf32>
    %246 = arith.mulf %241, %245 : vector<1x16xf32>
    %247 = arith.negf %231 : vector<1x64xf32>
    %248 = math.exp %247 : vector<1x64xf32>
    %cst_63 = arith.constant 1.000000e+00 : f32
    %249 = vector.broadcast %cst_63 : f32 to vector<1x64xf32>
    %250 = arith.addf %249, %248 : vector<1x64xf32>
    %251 = arith.divf %249, %250 : vector<1x64xf32>
    %252 = math.tanh %231 : vector<1x64xf32>
    %253 = vector.extract_strided_slice %251 {offsets = [0, 0], sizes = [1, 16], strides = [1, 1]} : vector<1x64xf32> to vector<1x16xf32>
    %254 = vector.extract_strided_slice %251 {offsets = [0, 16], sizes = [1, 16], strides = [1, 1]} : vector<1x64xf32> to vector<1x16xf32>
    %255 = vector.extract_strided_slice %252 {offsets = [0, 32], sizes = [1, 16], strides = [1, 1]} : vector<1x64xf32> to vector<1x16xf32>
    %256 = vector.extract_strided_slice %251 {offsets = [0, 48], sizes = [1, 16], strides = [1, 1]} : vector<1x64xf32> to vector<1x16xf32>
    %257 = arith.mulf %254, %223 : vector<1x16xf32>
    %258 = arith.mulf %253, %255 : vector<1x16xf32>
    %259 = arith.addf %257, %258 : vector<1x16xf32>
    %260 = math.tanh %259 : vector<1x16xf32>
    %261 = arith.mulf %256, %260 : vector<1x16xf32>
    %262 = vector.extract_strided_slice %72 {offsets = [5, 0], sizes = [1, 64], strides = [1, 1]} : vector<8x64xf32> to vector<1x64xf32>
    %cst_64 = arith.constant dense<0.000000e+00> : vector<1x64xf32>
    %263 = tpu.matmul %246, %75, %cst_64 {dimension_numbers = #tpu.dot_dimension_numbers<[1], [0], [0], [1], [0, 0, 1, 1], [], []>} : vector<1x16xf32>, vector<16x64xf32>, vector<1x64xf32> -> vector<1x64xf32>
    %264 = arith.addf %262, %263 : vector<1x64xf32>
    %265 = vector.extract_strided_slice %73 {offsets = [2, 0], sizes = [1, 64], strides = [1, 1]} : vector<8x64xf32> to vector<1x64xf32>
    %cst_65 = arith.constant dense<0.000000e+00> : vector<1x64xf32>
    %266 = tpu.matmul %261, %77, %cst_65 {dimension_numbers = #tpu.dot_dimension_numbers<[1], [0], [0], [1], [0, 0, 1, 1], [], []>} : vector<1x16xf32>, vector<16x64xf32>, vector<1x64xf32> -> vector<1x64xf32>
    %267 = arith.addf %265, %266 : vector<1x64xf32>
    %268 = arith.negf %264 : vector<1x64xf32>
    %269 = math.exp %268 : vector<1x64xf32>
    %cst_66 = arith.constant 1.000000e+00 : f32
    %270 = vector.broadcast %cst_66 : f32 to vector<1x64xf32>
    %271 = arith.addf %270, %269 : vector<1x64xf32>
    %272 = arith.divf %270, %271 : vector<1x64xf32>
    %273 = math.tanh %264 : vector<1x64xf32>
    %274 = vector.extract_strided_slice %272 {offsets = [0, 0], sizes = [1, 16], strides = [1, 1]} : vector<1x64xf32> to vector<1x16xf32>
    %275 = vector.extract_strided_slice %272 {offsets = [0, 16], sizes = [1, 16], strides = [1, 1]} : vector<1x64xf32> to vector<1x16xf32>
    %276 = vector.extract_strided_slice %273 {offsets = [0, 32], sizes = [1, 16], strides = [1, 1]} : vector<1x64xf32> to vector<1x16xf32>
    %277 = vector.extract_strided_slice %272 {offsets = [0, 48], sizes = [1, 16], strides = [1, 1]} : vector<1x64xf32> to vector<1x16xf32>
    %278 = arith.mulf %275, %244 : vector<1x16xf32>
    %279 = arith.mulf %274, %276 : vector<1x16xf32>
    %280 = arith.addf %278, %279 : vector<1x16xf32>
    %281 = math.tanh %280 : vector<1x16xf32>
    %282 = arith.mulf %277, %281 : vector<1x16xf32>
    %283 = arith.negf %267 : vector<1x64xf32>
    %284 = math.exp %283 : vector<1x64xf32>
    %cst_67 = arith.constant 1.000000e+00 : f32
    %285 = vector.broadcast %cst_67 : f32 to vector<1x64xf32>
    %286 = arith.addf %285, %284 : vector<1x64xf32>
    %287 = arith.divf %285, %286 : vector<1x64xf32>
    %288 = math.tanh %267 : vector<1x64xf32>
    %289 = vector.extract_strided_slice %287 {offsets = [0, 0], sizes = [1, 16], strides = [1, 1]} : vector<1x64xf32> to vector<1x16xf32>
    %290 = vector.extract_strided_slice %287 {offsets = [0, 16], sizes = [1, 16], strides = [1, 1]} : vector<1x64xf32> to vector<1x16xf32>
    %291 = vector.extract_strided_slice %288 {offsets = [0, 32], sizes = [1, 16], strides = [1, 1]} : vector<1x64xf32> to vector<1x16xf32>
    %292 = vector.extract_strided_slice %287 {offsets = [0, 48], sizes = [1, 16], strides = [1, 1]} : vector<1x64xf32> to vector<1x16xf32>
    %293 = arith.mulf %290, %259 : vector<1x16xf32>
    %294 = arith.mulf %289, %291 : vector<1x16xf32>
    %295 = arith.addf %293, %294 : vector<1x16xf32>
    %296 = math.tanh %295 : vector<1x16xf32>
    %297 = arith.mulf %292, %296 : vector<1x16xf32>
    %298 = vector.extract_strided_slice %72 {offsets = [6, 0], sizes = [1, 64], strides = [1, 1]} : vector<8x64xf32> to vector<1x64xf32>
    %cst_68 = arith.constant dense<0.000000e+00> : vector<1x64xf32>
    %299 = tpu.matmul %282, %75, %cst_68 {dimension_numbers = #tpu.dot_dimension_numbers<[1], [0], [0], [1], [0, 0, 1, 1], [], []>} : vector<1x16xf32>, vector<16x64xf32>, vector<1x64xf32> -> vector<1x64xf32>
    %300 = arith.addf %298, %299 : vector<1x64xf32>
    %301 = vector.extract_strided_slice %73 {offsets = [1, 0], sizes = [1, 64], strides = [1, 1]} : vector<8x64xf32> to vector<1x64xf32>
    %cst_69 = arith.constant dense<0.000000e+00> : vector<1x64xf32>
    %302 = tpu.matmul %297, %77, %cst_69 {dimension_numbers = #tpu.dot_dimension_numbers<[1], [0], [0], [1], [0, 0, 1, 1], [], []>} : vector<1x16xf32>, vector<16x64xf32>, vector<1x64xf32> -> vector<1x64xf32>
    %303 = arith.addf %301, %302 : vector<1x64xf32>
    %304 = arith.negf %300 : vector<1x64xf32>
    %305 = math.exp %304 : vector<1x64xf32>
    %cst_70 = arith.constant 1.000000e+00 : f32
    %306 = vector.broadcast %cst_70 : f32 to vector<1x64xf32>
    %307 = arith.addf %306, %305 : vector<1x64xf32>
    %308 = arith.divf %306, %307 : vector<1x64xf32>
    %309 = math.tanh %300 : vector<1x64xf32>
    %310 = vector.extract_strided_slice %308 {offsets = [0, 0], sizes = [1, 16], strides = [1, 1]} : vector<1x64xf32> to vector<1x16xf32>
    %311 = vector.extract_strided_slice %308 {offsets = [0, 16], sizes = [1, 16], strides = [1, 1]} : vector<1x64xf32> to vector<1x16xf32>
    %312 = vector.extract_strided_slice %309 {offsets = [0, 32], sizes = [1, 16], strides = [1, 1]} : vector<1x64xf32> to vector<1x16xf32>
    %313 = vector.extract_strided_slice %308 {offsets = [0, 48], sizes = [1, 16], strides = [1, 1]} : vector<1x64xf32> to vector<1x16xf32>
    %314 = arith.mulf %311, %280 : vector<1x16xf32>
    %315 = arith.mulf %310, %312 : vector<1x16xf32>
    %316 = arith.addf %314, %315 : vector<1x16xf32>
    %317 = math.tanh %316 : vector<1x16xf32>
    %318 = arith.mulf %313, %317 : vector<1x16xf32>
    %319 = arith.negf %303 : vector<1x64xf32>
    %320 = math.exp %319 : vector<1x64xf32>
    %cst_71 = arith.constant 1.000000e+00 : f32
    %321 = vector.broadcast %cst_71 : f32 to vector<1x64xf32>
    %322 = arith.addf %321, %320 : vector<1x64xf32>
    %323 = arith.divf %321, %322 : vector<1x64xf32>
    %324 = math.tanh %303 : vector<1x64xf32>
    %325 = vector.extract_strided_slice %323 {offsets = [0, 0], sizes = [1, 16], strides = [1, 1]} : vector<1x64xf32> to vector<1x16xf32>
    %326 = vector.extract_strided_slice %323 {offsets = [0, 16], sizes = [1, 16], strides = [1, 1]} : vector<1x64xf32> to vector<1x16xf32>
    %327 = vector.extract_strided_slice %324 {offsets = [0, 32], sizes = [1, 16], strides = [1, 1]} : vector<1x64xf32> to vector<1x16xf32>
    %328 = vector.extract_strided_slice %323 {offsets = [0, 48], sizes = [1, 16], strides = [1, 1]} : vector<1x64xf32> to vector<1x16xf32>
    %329 = arith.mulf %326, %295 : vector<1x16xf32>
    %330 = arith.mulf %325, %327 : vector<1x16xf32>
    %331 = arith.addf %329, %330 : vector<1x16xf32>
    %332 = math.tanh %331 : vector<1x16xf32>
    %333 = arith.mulf %328, %332 : vector<1x16xf32>
    %334 = vector.extract_strided_slice %72 {offsets = [7, 0], sizes = [1, 64], strides = [1, 1]} : vector<8x64xf32> to vector<1x64xf32>
    %cst_72 = arith.constant dense<0.000000e+00> : vector<1x64xf32>
    %335 = tpu.matmul %318, %75, %cst_72 {dimension_numbers = #tpu.dot_dimension_numbers<[1], [0], [0], [1], [0, 0, 1, 1], [], []>} : vector<1x16xf32>, vector<16x64xf32>, vector<1x64xf32> -> vector<1x64xf32>
    %336 = arith.addf %334, %335 : vector<1x64xf32>
    %337 = vector.extract_strided_slice %73 {offsets = [0, 0], sizes = [1, 64], strides = [1, 1]} : vector<8x64xf32> to vector<1x64xf32>
    %cst_73 = arith.constant dense<0.000000e+00> : vector<1x64xf32>
    %338 = tpu.matmul %333, %77, %cst_73 {dimension_numbers = #tpu.dot_dimension_numbers<[1], [0], [0], [1], [0, 0, 1, 1], [], []>} : vector<1x16xf32>, vector<16x64xf32>, vector<1x64xf32> -> vector<1x64xf32>
    %339 = arith.addf %337, %338 : vector<1x64xf32>
    %340 = arith.negf %336 : vector<1x64xf32>
    %341 = math.exp %340 : vector<1x64xf32>
    %cst_74 = arith.constant 1.000000e+00 : f32
    %342 = vector.broadcast %cst_74 : f32 to vector<1x64xf32>
    %343 = arith.addf %342, %341 : vector<1x64xf32>
    %344 = arith.divf %342, %343 : vector<1x64xf32>
    %345 = math.tanh %336 : vector<1x64xf32>
    %346 = vector.extract_strided_slice %344 {offsets = [0, 0], sizes = [1, 16], strides = [1, 1]} : vector<1x64xf32> to vector<1x16xf32>
    %347 = vector.extract_strided_slice %344 {offsets = [0, 16], sizes = [1, 16], strides = [1, 1]} : vector<1x64xf32> to vector<1x16xf32>
    %348 = vector.extract_strided_slice %345 {offsets = [0, 32], sizes = [1, 16], strides = [1, 1]} : vector<1x64xf32> to vector<1x16xf32>
    %349 = vector.extract_strided_slice %344 {offsets = [0, 48], sizes = [1, 16], strides = [1, 1]} : vector<1x64xf32> to vector<1x16xf32>
    %350 = arith.mulf %347, %316 : vector<1x16xf32>
    %351 = arith.mulf %346, %348 : vector<1x16xf32>
    %352 = arith.addf %350, %351 : vector<1x16xf32>
    %353 = math.tanh %352 : vector<1x16xf32>
    %354 = arith.mulf %349, %353 : vector<1x16xf32>
    %355 = arith.negf %339 : vector<1x64xf32>
    %356 = math.exp %355 : vector<1x64xf32>
    %cst_75 = arith.constant 1.000000e+00 : f32
    %357 = vector.broadcast %cst_75 : f32 to vector<1x64xf32>
    %358 = arith.addf %357, %356 : vector<1x64xf32>
    %359 = arith.divf %357, %358 : vector<1x64xf32>
    %360 = math.tanh %339 : vector<1x64xf32>
    %361 = vector.extract_strided_slice %359 {offsets = [0, 0], sizes = [1, 16], strides = [1, 1]} : vector<1x64xf32> to vector<1x16xf32>
    %362 = vector.extract_strided_slice %359 {offsets = [0, 16], sizes = [1, 16], strides = [1, 1]} : vector<1x64xf32> to vector<1x16xf32>
    %363 = vector.extract_strided_slice %360 {offsets = [0, 32], sizes = [1, 16], strides = [1, 1]} : vector<1x64xf32> to vector<1x16xf32>
    %364 = vector.extract_strided_slice %359 {offsets = [0, 48], sizes = [1, 16], strides = [1, 1]} : vector<1x64xf32> to vector<1x16xf32>
    %365 = arith.mulf %362, %331 : vector<1x16xf32>
    %366 = arith.mulf %361, %363 : vector<1x16xf32>
    %367 = arith.addf %365, %366 : vector<1x16xf32>
    %368 = math.tanh %367 : vector<1x16xf32>
    %369 = arith.mulf %364, %368 : vector<1x16xf32>
    %370 = tpu.concatenate %102, %138, %174, %210, %246, %282, %318, %354 in 0 : vector<1x16xf32>, vector<1x16xf32>, vector<1x16xf32>, vector<1x16xf32>, vector<1x16xf32>, vector<1x16xf32>, vector<1x16xf32>, vector<1x16xf32> -> vector<8x16xf32>
    %371 = tpu.concatenate %369, %333, %297, %261, %225, %189, %153, %117 in 0 : vector<1x16xf32>, vector<1x16xf32>, vector<1x16xf32>, vector<1x16xf32>, vector<1x16xf32>, vector<1x16xf32>, vector<1x16xf32>, vector<1x16xf32> -> vector<8x16xf32>
    %372 = tpu.concatenate %370, %371 in 1 : vector<8x16xf32>, vector<8x16xf32> -> vector<8x32xf32>
    %373 = arith.addf %66, %372 : vector<8x32xf32>
    %c0_76 = arith.constant 0 : index
    %c0_77 = arith.constant 0 : index
    %374 = vector.load %arg12[%c0_76, %c0_77] : memref<1x32xf32, #tpu.memory_space<vmem>>, vector<1x32xf32>
    %c0_78 = arith.constant 0 : index
    %c0_79 = arith.constant 0 : index
    %375 = vector.load %arg13[%c0_78, %c0_79] : memref<1x32xf32, #tpu.memory_space<vmem>>, vector<1x32xf32>
    %cst_80 = arith.constant dense<0.000000e+00> : vector<8xf32>
    %376 = vector.multi_reduction <add>, %373, %cst_80 [1] : vector<8x32xf32> to vector<8xf32>
    %377 = vector.shape_cast %376 : vector<8xf32> to vector<8x1xf32>
    %cst_81 = arith.constant 3.200000e+01 : f32
    %378 = vector.broadcast %cst_81 : f32 to vector<8x1xf32>
    %379 = arith.divf %377, %378 : vector<8x1xf32>
    %380 = vector.broadcast %379 : vector<8x1xf32> to vector<8x32xf32>
    %381 = arith.subf %373, %380 : vector<8x32xf32>
    %382 = arith.mulf %381, %381 : vector<8x32xf32>
    %cst_82 = arith.constant dense<0.000000e+00> : vector<8xf32>
    %383 = vector.multi_reduction <add>, %382, %cst_82 [1] : vector<8x32xf32> to vector<8xf32>
    %384 = vector.shape_cast %383 : vector<8xf32> to vector<8x1xf32>
    %cst_83 = arith.constant 3.200000e+01 : f32
    %385 = vector.broadcast %cst_83 : f32 to vector<8x1xf32>
    %386 = arith.divf %384, %385 : vector<8x1xf32>
    %cst_84 = arith.constant 9.99999974E-6 : f32
    %387 = vector.broadcast %cst_84 : f32 to vector<8x1xf32>
    %388 = arith.addf %386, %387 : vector<8x1xf32>
    %389 = math.rsqrt %388 : vector<8x1xf32>
    %390 = vector.broadcast %389 : vector<8x1xf32> to vector<8x32xf32>
    %391 = arith.mulf %381, %390 : vector<8x32xf32>
    %392 = vector.broadcast %374 : vector<1x32xf32> to vector<8x32xf32>
    %393 = arith.mulf %391, %392 : vector<8x32xf32>
    %394 = vector.broadcast %375 : vector<1x32xf32> to vector<8x32xf32>
    %395 = arith.addf %393, %394 : vector<8x32xf32>
    %c0_85 = arith.constant 0 : index
    %c0_86 = arith.constant 0 : index
    %c0_87 = arith.constant 0 : index
    %396 = vector.load %arg14[%c0_85, %c0_86, %c0_87] : memref<1x8x32xf32, #tpu.memory_space<vmem>>, vector<1x8x32xf32>
    %397 = vector.shape_cast %396 : vector<1x8x32xf32> to vector<8x32xf32>
    %398 = vector.shape_cast %395 : vector<8x32xf32> to vector<1x8x32xf32>
    tpu.vector_store %arg14[%c0_85, %c0_86, %c0_87], %398 {strides = array<i32>} : memref<1x8x32xf32, #tpu.memory_space<vmem>>, vector<1x8x32xf32>,
    %399 = tpu.concatenate %354, %369 in 0 : vector<1x16xf32>, vector<1x16xf32> -> vector<2x16xf32>
    %c0_88 = arith.constant 0 : index
    %c0_89 = arith.constant 0 : index
    %c0_90 = arith.constant 0 : index
    %400 = vector.load %arg15[%c0_88, %c0_89, %c0_90] : memref<1x2x16xf32, #tpu.memory_space<vmem>>, vector<1x2x16xf32>
    %401 = vector.shape_cast %400 : vector<1x2x16xf32> to vector<2x16xf32>
    %402 = vector.shape_cast %399 : vector<2x16xf32> to vector<1x2x16xf32>
    tpu.vector_store %arg15[%c0_88, %c0_89, %c0_90], %402 {strides = array<i32>} : memref<1x2x16xf32, #tpu.memory_space<vmem>>, vector<1x2x16xf32>,
    %403 = tpu.concatenate %352, %367 in 0 : vector<1x16xf32>, vector<1x16xf32> -> vector<2x16xf32>
    %c0_91 = arith.constant 0 : index
    %c0_92 = arith.constant 0 : index
    %c0_93 = arith.constant 0 : index
    %404 = vector.load %arg16[%c0_91, %c0_92, %c0_93] : memref<1x2x16xf32, #tpu.memory_space<vmem>>, vector<1x2x16xf32>
    %405 = vector.shape_cast %404 : vector<1x2x16xf32> to vector<2x16xf32>
    %406 = vector.shape_cast %403 : vector<2x16xf32> to vector<1x2x16xf32>
    tpu.vector_store %arg16[%c0_91, %c0_92, %c0_93], %406 {strides = array<i32>} : memref<1x2x16xf32, #tpu.memory_space<vmem>>, vector<1x2x16xf32>,
    return
  }
  func.func @transform_0(%arg0: i32) -> (i32, i32, i32) {
    %c0_i32 = arith.constant 0 : i32
    %c0_i32_0 = arith.constant 0 : i32
    %c0_i32_1 = arith.constant 0 : i32
    return %arg0, %c0_i32, %c0_i32_0 : i32, i32, i32
  }
  func.func @transform_1(%arg0: i32) -> (i32, i32, i32) {
    %c0_i32 = arith.constant 0 : i32
    %c0_i32_0 = arith.constant 0 : i32
    %c0_i32_1 = arith.constant 0 : i32
    return %arg0, %c0_i32, %c0_i32_0 : i32, i32, i32
  }
  func.func @transform_2(%arg0: i32) -> (i32, i32) {
    %c0_i32 = arith.constant 0 : i32
    %c0_i32_0 = arith.constant 0 : i32
    %c0_i32_1 = arith.constant 0 : i32
    return %c0_i32, %c0_i32_0 : i32, i32
  }
  func.func @transform_3(%arg0: i32) -> (i32, i32) {
    %c0_i32 = arith.constant 0 : i32
    %c0_i32_0 = arith.constant 0 : i32
    %c0_i32_1 = arith.constant 0 : i32
    return %c0_i32, %c0_i32_0 : i32, i32
  }
  func.func @transform_4(%arg0: i32) -> (i32, i32) {
    %c0_i32 = arith.constant 0 : i32
    %c0_i32_0 = arith.constant 0 : i32
    %c0_i32_1 = arith.constant 0 : i32
    return %c0_i32, %c0_i32_0 : i32, i32
  }
  func.func @transform_5(%arg0: i32) -> (i32, i32) {
    %c0_i32 = arith.constant 0 : i32
    %c0_i32_0 = arith.constant 0 : i32
    %c0_i32_1 = arith.constant 0 : i32
    return %c0_i32, %c0_i32_0 : i32, i32
  }
  func.func @transform_6(%arg0: i32) -> (i32, i32) {
    %c0_i32 = arith.constant 0 : i32
    %c0_i32_0 = arith.constant 0 : i32
    %c0_i32_1 = arith.constant 0 : i32
    return %c0_i32, %c0_i32_0 : i32, i32
  }
  func.func @transform_7(%arg0: i32) -> (i32, i32) {
    %c0_i32 = arith.constant 0 : i32
    %c0_i32_0 = arith.constant 0 : i32
    %c0_i32_1 = arith.constant 0 : i32
    return %c0_i32, %c0_i32_0 : i32, i32
  }
  func.func @transform_8(%arg0: i32) -> (i32, i32) {
    %c0_i32 = arith.constant 0 : i32
    %c0_i32_0 = arith.constant 0 : i32
    %c0_i32_1 = arith.constant 0 : i32
    return %c0_i32, %c0_i32_0 : i32, i32
  }
  func.func @transform_9(%arg0: i32) -> (i32, i32) {
    %c0_i32 = arith.constant 0 : i32
    %c0_i32_0 = arith.constant 0 : i32
    %c0_i32_1 = arith.constant 0 : i32
    return %c0_i32, %c0_i32_0 : i32, i32
  }
  func.func @transform_10(%arg0: i32) -> (i32, i32, i32) {
    %c0_i32 = arith.constant 0 : i32
    %c0_i32_0 = arith.constant 0 : i32
    %c0_i32_1 = arith.constant 0 : i32
    %c0_i32_2 = arith.constant 0 : i32
    return %c0_i32, %c0_i32_0, %c0_i32_1 : i32, i32, i32
  }
  func.func @transform_11(%arg0: i32) -> (i32, i32) {
    %c0_i32 = arith.constant 0 : i32
    %c0_i32_0 = arith.constant 0 : i32
    %c0_i32_1 = arith.constant 0 : i32
    return %c0_i32, %c0_i32_0 : i32, i32
  }
  func.func @transform_12(%arg0: i32) -> (i32, i32) {
    %c0_i32 = arith.constant 0 : i32
    %c0_i32_0 = arith.constant 0 : i32
    %c0_i32_1 = arith.constant 0 : i32
    return %c0_i32, %c0_i32_0 : i32, i32
  }
  func.func @transform_13(%arg0: i32) -> (i32, i32, i32) {
    %c0_i32 = arith.constant 0 : i32
    %c0_i32_0 = arith.constant 0 : i32
    %c0_i32_1 = arith.constant 0 : i32
    return %arg0, %c0_i32, %c0_i32_0 : i32, i32, i32
  }
  func.func @transform_14(%arg0: i32) -> (i32, i32, i32) {
    %c0_i32 = arith.constant 0 : i32
    %c0_i32_0 = arith.constant 0 : i32
    %c0_i32_1 = arith.constant 0 : i32
    return %arg0, %c0_i32, %c0_i32_0 : i32, i32, i32
  }
  func.func @transform_15(%arg0: i32) -> (i32, i32, i32) {
    %c0_i32 = arith.constant 0 : i32
    %c0_i32_0 = arith.constant 0 : i32
    %c0_i32_1 = arith.constant 0 : i32
    return %arg0, %c0_i32, %c0_i32_0 : i32, i32, i32
  }
}

</mosaic_0001>

<llo_original>
// kernel: lab_forward.3
$region0: #{lab_forward.3}
  #allocation0 [shape = 'u32[]', space=smem, size = 0x4, offset = 0x4, fixed_abs, tag = 'smem constant byte address 0x4 - core index']
  #allocation1 [shape = 'u32[72,128]{1,0:T(1,128)}', space=vmem, size = 0x9000, scoped, tag = 'internal scratch']
  %s0 = inlined_call_operand.vmem [shape: f32[2,8,32], index: 0, kind: input, shape index: {}]
  %s1 = inlined_call_operand.vmem [shape: s32[2,1,8], index: 1, kind: input, shape index: {}]
  %s2 = inlined_call_operand.vmem [shape: f32[32,96], index: 2, kind: input, shape index: {}]
  %s3 = inlined_call_operand.vmem [shape: f32[1,96], index: 3, kind: input, shape index: {}]
  %s4 = inlined_call_operand.vmem [shape: f32[32,32], index: 4, kind: input, shape index: {}]
  %s5 = inlined_call_operand.vmem [shape: f32[1,32], index: 5, kind: input, shape index: {}]
  %s6 = inlined_call_operand.vmem [shape: f32[1,32], index: 6, kind: input, shape index: {}]
  %s7 = inlined_call_operand.vmem [shape: f32[1,32], index: 7, kind: input, shape index: {}]
  %s8 = inlined_call_operand.vmem [shape: f32[32,128], index: 8, kind: input, shape index: {}]
  %s9 = inlined_call_operand.vmem [shape: f32[1,128], index: 9, kind: input, shape index: {}]
  %s10 = inlined_call_operand.vmem [shape: f32[2,16,64], index: 10, kind: input, shape index: {}]
  %s11 = inlined_call_operand.vmem [shape: f32[1,32], index: 11, kind: input, shape index: {}]
  %s12 = inlined_call_operand.vmem [shape: f32[1,32], index: 12, kind: input, shape index: {}]
  %s13 = inlined_call_operand.hbm [shape: f32[2,8,32], index: 13, kind: output, shape index: {0}]
  %s14 = inlined_call_operand.vmem [shape: f32[2,2,16], index: 14, kind: output, shape index: {1}]
  %s15 = inlined_call_operand.vmem [shape: f32[2,2,16], index: 15, kind: output, shape index: {2}]
  %16 = xla_tuple %s13, %s14, %s15
  %s17 = sld [smem:[#allocation0]]
  $region101: #{lab_forward.3} parent=0
    _
  %s19 = ssub.s32 1, %s17
  %s20 = scalar_select 0, %s19, %s17
  $region1: #{lab_forward.3} parent=0
    #allocation2 [shape = 'u8[8192]{0}', space=vmem, size = 0x2000, scoped, tag = 'output window, operand 0']
    #allocation3 [shape = 's32[2]{0}', space=sflag, size = 0x8, scoped, tag = 'scoped memory for lab_forward.3']
    %21 = vsyncpa [#allocation3], 0
    %s22 = scalar_lea.sflag [#allocation3], 1
    %23 = vsyncpa %s22, 0
    loop: start=0, step=1, limit=4
    $region2: #{lab_forward.3} parent=1 // loop_pre_header
      _
    $region3: #{lab_forward.3} parent=1 // loop_header
      %s25 = sphi 0, %s29
      %p26 = scmp.ge.s32.totalorder %s25, 4
      %s35 = sphi 0, %s37
      %s38 = sphi 0, %s35
      %s39 = sphi 0, %s38
      %s55 = sphi 0, %s39
      %s61 = sphi 0, %s63
      %s64 = sphi 0, %s61
      %s65 = sphi 0, %s64
      %s81 = sphi 0, %s65
      %s85 = sphi 0, %s85
      %s87 = sphi 0, %s85
      %s88 = sphi 0, %s87
      %s102 = sphi 0, %s88
      %s106 = sphi 0, %s106
      %s108 = sphi 0, %s106
      %s109 = sphi 0, %s108
      %s123 = sphi 0, %s109
      %s127 = sphi 0, %s127
      %s129 = sphi 0, %s127
      %s130 = sphi 0, %s129
      %s144 = sphi 0, %s130
      %s148 = sphi 0, %s148
      %s150 = sphi 0, %s148
      %s151 = sphi 0, %s150
      %s165 = sphi 0, %s151
      %s169 = sphi 0, %s169
      %s171 = sphi 0, %s169
      %s172 = sphi 0, %s171
      %s186 = sphi 0, %s172
      %s190 = sphi 0, %s190
      %s192 = sphi 0, %s190
      %s193 = sphi 0, %s192
      %s207 = sphi 0, %s193
      %s211 = sphi 0, %s211
      %s213 = sphi 0, %s211
      %s214 = sphi 0, %s213
      %s228 = sphi 0, %s214
      %s232 = sphi 0, %s232
      %s234 = sphi 0, %s232
      %s235 = sphi 0, %s234
      %s249 = sphi 0, %s235
      %s253 = sphi 0, %s253
      %s255 = sphi 0, %s253
      %s256 = sphi 0, %s255
      %s270 = sphi 0, %s256
      %s274 = sphi 0, %s274
      %s276 = sphi 0, %s274
      %s277 = sphi 0, %s276
      %s291 = sphi 0, %s277
      %s295 = sphi 0, %s295
      %s297 = sphi 0, %s295
      %s298 = sphi 0, %s297
      %s312 = sphi 0, %s298
      %s318 = sphi 0, %s320
      %s321 = sphi 0, %s318
      %s322 = sphi 0, %s321
      %s338 = sphi 0, %s322
      %s344 = sphi 0, %s346
      %s347 = sphi 0, %s344
      %s348 = sphi 0, %s347
      %s364 = sphi 0, %s348
      %s370 = sphi 0, %s372
      %s373 = sphi 0, %s370
      %s374 = sphi 0, %s373
      %s390 = sphi 0, %s374
    $region4: #{lab_forward.3} parent=1 // loop_header_branch
      %28 = sbr.rel (%p26) target = $region8
    $region5: #{lab_forward.3} parent=1 // loop_body
      %s30 = ssub.s32 %s25, 1
      %s31 = ssub.s32 %s25, 2
      %s32 = sadd.s32 %s25, 1
      %s33 = ssub.s32 %s25, %s32
      %p34 = scmp.eq.s32.totalorder %s33, 0
      %s36 = sadd.s32 %s35, 1
      %s37 = scalar_select %p34, %s35, %s36
      %p40 = pneg %p34
      %p41 = scmp.eq.s32.totalorder %s25, 1
      %p42 = por %p40, %p41
      %p43 = scmp.ne.s32.totalorder %s35, %s38
      %p44 = scmp.eq.s32.totalorder %s25, 0
      %p45 = por %p43, %p44
      %p46 = scmp.ne.s32.totalorder %s35, %s38
      %p47 = scmp.eq.s32.totalorder %s30, 1
      %p48 = por %p46, %p47
      %p49 = scmp.ne.s32.totalorder %s38, %s39
      %p50 = scmp.eq.s32.totalorder %s30, 0
      %p51 = por %p49, %p50
      %p52 = scmp.ne.s32.totalorder %s38, %s39
      %p53 = scmp.eq.s32.totalorder %s31, 1
      %p54 = por %p52, %p53
      %p56 = scmp.ne.s32.totalorder %s39, %s55
      %p57 = scmp.eq.s32.totalorder %s31, 0
      %p58 = por %p56, %p57
      %s59 = ssub.s32 %s25, %s32
      %p60 = scmp.eq.s32.totalorder %s59, 0
      %s62 = sadd.s32 %s61, 1
      %s63 = scalar_select %p60, %s61, %s62
      %p66 = pneg %p60
      %p67 = scmp.eq.s32.totalorder %s25, 1
      %p68 = por %p66, %p67
      %p69 = scmp.ne.s32.totalorder %s61, %s64
      %p70 = scmp.eq.s32.totalorder %s25, 0
      %p71 = por %p69, %p70
      %p72 = scmp.ne.s32.totalorder %s61, %s64
      %p73 = scmp.eq.s32.totalorder %s30, 1
      %p74 = por %p72, %p73
      %p75 = scmp.ne.s32.totalorder %s64, %s65
      %p76 = scmp.eq.s32.totalorder %s30, 0
      %p77 = por %p75, %p76
      %p78 = scmp.ne.s32.totalorder %s64, %s65
      %p79 = scmp.eq.s32.totalorder %s31, 1
      %p80 = por %p78, %p79
      %p82 = scmp.ne.s32.totalorder %s65, %s81
      %p83 = scmp.eq.s32.totalorder %s31, 0
      %p84 = por %p82, %p83
      %s86 = sadd.s32 %s85, 1
      %p89 = scmp.eq.s32.totalorder %s25, 1
      %p90 = scmp.ne.s32.totalorder %s85, %s87
      %p91 = scmp.eq.s32.totalorder %s25, 0
      %p92 = por %p90, %p91
      %p93 = scmp.ne.s32.totalorder %s85, %s87
      %p94 = scmp.eq.s32.totalorder %s30, 1
      %p95 = por %p93, %p94
      %p96 = scmp.ne.s32.totalorder %s87, %s88
      %p97 = scmp.eq.s32.totalorder %s30, 0
      %p98 = por %p96, %p97
      %p99 = scmp.ne.s32.totalorder %s87, %s88
      %p100 = scmp.eq.s32.totalorder %s31, 1
      %p101 = por %p99, %p100
      %p103 = scmp.ne.s32.totalorder %s88, %s102
      %p104 = scmp.eq.s32.totalorder %s31, 0
      %p105 = por %p103, %p104
      %s107 = sadd.s32 %s106, 1
      %p110 = scmp.eq.s32.totalorder %s25, 1
      %p111 = scmp.ne.s32.totalorder %s106, %s108
      %p112 = scmp.eq.s32.totalorder %s25, 0
      %p113 = por %p111, %p112
      %p114 = scmp.ne.s32.totalorder %s106, %s108
      %p115 = scmp.eq.s32.totalorder %s30, 1
      %p116 = por %p114, %p115
      %p117 = scmp.ne.s32.totalorder %s108, %s109
      %p118 = scmp.eq.s32.totalorder %s30, 0
      %p119 = por %p117, %p118
      %p120 = scmp.ne.s32.totalorder %s108, %s109
      %p121 = scmp.eq.s32.totalorder %s31, 1
      %p122 = por %p120, %p121
      %p124 = scmp.ne.s32.totalorder %s109, %s123
      %p125 = scmp.eq.s32.totalorder %s31, 0
      %p126 = por %p124, %p125
      %s128 = sadd.s32 %s127, 1
      %p131 = scmp.eq.s32.totalorder %s25, 1
      %p132 = scmp.ne.s32.totalorder %s127, %s129
      %p133 = scmp.eq.s32.totalorder %s25, 0
      %p134 = por %p132, %p133
      %p135 = scmp.ne.s32.totalorder %s127, %s129
      %p136 = scmp.eq.s32.totalorder %s30, 1
      %p137 = por %p135, %p136
      %p138 = scmp.ne.s32.totalorder %s129, %s130
      %p139 = scmp.eq.s32.totalorder %s30, 0
      %p140 = por %p138, %p139
      %p141 = scmp.ne.s32.totalorder %s129, %s130
      %p142 = scmp.eq.s32.totalorder %s31, 1
      %p143 = por %p141, %p142
      %p145 = scmp.ne.s32.totalorder %s130, %s144
      %p146 = scmp.eq.s32.totalorder %s31, 0
      %p147 = por %p145, %p146
      %s149 = sadd.s32 %s148, 1
      %p152 = scmp.eq.s32.totalorder %s25, 1
      %p153 = scmp.ne.s32.totalorder %s148, %s150
      %p154 = scmp.eq.s32.totalorder %s25, 0
      %p155 = por %p153, %p154
      %p156 = scmp.ne.s32.totalorder %s148, %s150
      %p157 = scmp.eq.s32.totalorder %s30, 1
      %p158 = por %p156, %p157
      %p159 = scmp.ne.s32.totalorder %s150, %s151
      %p160 = scmp.eq.s32.totalorder %s30, 0
      %p161 = por %p159, %p160
      %p162 = scmp.ne.s32.totalorder %s150, %s151
      %p163 = scmp.eq.s32.totalorder %s31, 1
      %p164 = por %p162, %p163
      %p166 = scmp.ne.s32.totalorder %s151, %s165
      %p167 = scmp.eq.s32.totalorder %s31, 0
      %p168 = por %p166, %p167
      %s170 = sadd.s32 %s169, 1
      %p173 = scmp.eq.s32.totalorder %s25, 1
      %p174 = scmp.ne.s32.totalorder %s169, %s171
      %p175 = scmp.eq.s32.totalorder %s25, 0
      %p176 = por %p174, %p175
      %p177 = scmp.ne.s32.totalorder %s169, %s171
      %p178 = scmp.eq.s32.totalorder %s30, 1
      %p179 = por %p177, %p178
      %p180 = scmp.ne.s32.totalorder %s171, %s172
      %p181 = scmp.eq.s32.totalorder %s30, 0
      %p182 = por %p180, %p181
      %p183 = scmp.ne.s32.totalorder %s171, %s172
      %p184 = scmp.eq.s32.totalorder %s31, 1
      %p185 = por %p183, %p184
      %p187 = scmp.ne.s32.totalorder %s172, %s186
      %p188 = scmp.eq.s32.totalorder %s31, 0
      %p189 = por %p187, %p188
      %s191 = sadd.s32 %s190, 1
      %p194 = scmp.eq.s32.totalorder %s25, 1
      %p195 = scmp.ne.s32.totalorder %s190, %s192
      %p196 = scmp.eq.s32.totalorder %s25, 0
      %p197 = por %p195, %p196
      %p198 = scmp.ne.s32.totalorder %s190, %s192
      %p199 = scmp.eq.s32.totalorder %s30, 1
      %p200 = por %p198, %p199
      %p201 = scmp.ne.s32.totalorder %s192, %s193
      %p202 = scmp.eq.s32.totalorder %s30, 0
      %p203 = por %p201, %p202
      %p204 = scmp.ne.s32.totalorder %s192, %s193
      %p205 = scmp.eq.s32.totalorder %s31, 1
      %p206 = por %p204, %p205
      %p208 = scmp.ne.s32.totalorder %s193, %s207
      %p209 = scmp.eq.s32.totalorder %s31, 0
      %p210 = por %p208, %p209
      %s212 = sadd.s32 %s211, 1
      %p215 = scmp.eq.s32.totalorder %s25, 1
      %p216 = scmp.ne.s32.totalorder %s211, %s213
      %p217 = scmp.eq.s32.totalorder %s25, 0
      %p218 = por %p216, %p217
      %p219 = scmp.ne.s32.totalorder %s211, %s213
      %p220 = scmp.eq.s32.totalorder %s30, 1
      %p221 = por %p219, %p220
      %p222 = scmp.ne.s32.totalorder %s213, %s214
      %p223 = scmp.eq.s32.totalorder %s30, 0
      %p224 = por %p222, %p223
      %p225 = scmp.ne.s32.totalorder %s213, %s214
      %p226 = scmp.eq.s32.totalorder %s31, 1
      %p227 = por %p225, %p226
      %p229 = scmp.ne.s32.totalorder %s214, %s228
      %p230 = scmp.eq.s32.totalorder %s31, 0
      %p231 = por %p229, %p230
      %s233 = sadd.s32 %s232, 1
      %p236 = scmp.eq.s32.totalorder %s25, 1
      %p237 = scmp.ne.s32.totalorder %s232, %s234
      %p238 = scmp.eq.s32.totalorder %s25, 0
      %p239 = por %p237, %p238
      %p240 = scmp.ne.s32.totalorder %s232, %s234
      %p241 = scmp.eq.s32.totalorder %s30, 1
      %p242 = por %p240, %p241
      %p243 = scmp.ne.s32.totalorder %s234, %s235
      %p244 = scmp.eq.s32.totalorder %s30, 0
      %p245 = por %p243, %p244
      %p246 = scmp.ne.s32.totalorder %s234, %s235
      %p247 = scmp.eq.s32.totalorder %s31, 1
      %p248 = por %p246, %p247
      %p250 = scmp.ne.s32.totalorder %s235, %s249
      %p251 = scmp.eq.s32.totalorder %s31, 0
      %p252 = por %p250, %p251
      %s254 = sadd.s32 %s253, 1
      %p257 = scmp.eq.s32.totalorder %s25, 1
      %p258 = scmp.ne.s32.totalorder %s253, %s255
      %p259 = scmp.eq.s32.totalorder %s25, 0
      %p260 = por %p258, %p259
      %p261 = scmp.ne.s32.totalorder %s253, %s255
      %p262 = scmp.eq.s32.totalorder %s30, 1
      %p263 = por %p261, %p262
      %p264 = scmp.ne.s32.totalorder %s255, %s256
      %p265 = scmp.eq.s32.totalorder %s30, 0
      %p266 = por %p264, %p265
      %p267 = scmp.ne.s32.totalorder %s255, %s256
      %p268 = scmp.eq.s32.totalorder %s31, 1
      %p269 = por %p267, %p268
      %p271 = scmp.ne.s32.totalorder %s256, %s270
      %p272 = scmp.eq.s32.totalorder %s31, 0
      %p273 = por %p271, %p272
      %s275 = sadd.s32 %s274, 1
      %p278 = scmp.eq.s32.totalorder %s25, 1
      %p279 = scmp.ne.s32.totalorder %s274, %s276
      %p280 = scmp.eq.s32.totalorder %s25, 0
      %p281 = por %p279, %p280
      %p282 = scmp.ne.s32.totalorder %s274, %s276
      %p283 = scmp.eq.s32.totalorder %s30, 1
      %p284 = por %p282, %p283
      %p285 = scmp.ne.s32.totalorder %s276, %s277
      %p286 = scmp.eq.s32.totalorder %s30, 0
      %p287 = por %p285, %p286
      %p288 = scmp.ne.s32.totalorder %s276, %s277
      %p289 = scmp.eq.s32.totalorder %s31, 1
      %p290 = por %p288, %p289
      %p292 = scmp.ne.s32.totalorder %s277, %s291
      %p293 = scmp.eq.s32.totalorder %s31, 0
      %p294 = por %p292, %p293
      %s296 = sadd.s32 %s295, 1
      %p299 = scmp.eq.s32.totalorder %s25, 1
      %p300 = scmp.ne.s32.totalorder %s295, %s297
      %p301 = scmp.eq.s32.totalorder %s25, 0
      %p302 = por %p300, %p301
      %p303 = scmp.ne.s32.totalorder %s295, %s297
      %p304 = scmp.eq.s32.totalorder %s30, 1
      %p305 = por %p303, %p304
      %p306 = scmp.ne.s32.totalorder %s297, %s298
      %p307 = scmp.eq.s32.totalorder %s30, 0
      %p308 = por %p306, %p307
      %p309 = scmp.ne.s32.totalorder %s297, %s298
      %p310 = scmp.eq.s32.totalorder %s31, 1
      %p311 = por %p309, %p310
      %p313 = scmp.ne.s32.totalorder %s298, %s312
      %p314 = scmp.eq.s32.totalorder %s31, 0
      %p315 = por %p313, %p314
      %s316 = ssub.s32 %s25, %s32
      %p317 = scmp.eq.s32.totalorder %s316, 0
      %s319 = sadd.s32 %s318, 1
      %s320 = scalar_select %p317, %s318, %s319
      %p323 = pneg %p317
      %p324 = scmp.eq.s32.totalorder %s25, 1
      %p325 = por %p323, %p324
      %p326 = scmp.ne.s32.totalorder %s318, %s321
      %p327 = scmp.eq.s32.totalorder %s25, 0
      %p328 = por %p326, %p327
      %p329 = scmp.ne.s32.totalorder %s318, %s321
      %p330 = scmp.eq.s32.totalorder %s30, 1
      %p331 = por %p329, %p330
      %p332 = scmp.ne.s32.totalorder %s321, %s322
      %p333 = scmp.eq.s32.totalorder %s30, 0
      %p334 = por %p332, %p333
      %p335 = scmp.ne.s32.totalorder %s321, %s322
      %p336 = scmp.eq.s32.totalorder %s31, 1
      %p337 = por %p335, %p336
      %p339 = scmp.ne.s32.totalorder %s322, %s338
      %p340 = scmp.eq.s32.totalorder %s31, 0
      %p341 = por %p339, %p340
      %s342 = ssub.s32 %s25, %s32
      %p343 = scmp.eq.s32.totalorder %s342, 0
      %s345 = sadd.s32 %s344, 1
      %s346 = scalar_select %p343, %s344, %s345
      %p349 = pneg %p343
      %p350 = scmp.eq.s32.totalorder %s25, 1
      %p351 = por %p349, %p350
      %p352 = scmp.ne.s32.totalorder %s344, %s347
      %p353 = scmp.eq.s32.totalorder %s25, 0
      %p354 = por %p352, %p353
      %p355 = scmp.ne.s32.totalorder %s344, %s347
      %p356 = scmp.eq.s32.totalorder %s30, 1
      %p357 = por %p355, %p356
      %p358 = scmp.ne.s32.totalorder %s347, %s348
      %p359 = scmp.eq.s32.totalorder %s30, 0
      %p360 = por %p358, %p359
      %p361 = scmp.ne.s32.totalorder %s347, %s348
      %p362 = scmp.eq.s32.totalorder %s31, 1
      %p363 = por %p361, %p362
      %p365 = scmp.ne.s32.totalorder %s348, %s364
      %p366 = scmp.eq.s32.totalorder %s31, 0
      %p367 = por %p365, %p366
      %s368 = ssub.s32 %s25, %s32
      %p369 = scmp.eq.s32.totalorder %s368, 0
      %s371 = sadd.s32 %s370, 1
      %s372 = scalar_select %p369, %s370, %s371
      %p375 = pneg %p369
      %p376 = scmp.eq.s32.totalorder %s25, 1
      %p377 = por %p375, %p376
      %p378 = scmp.ne.s32.totalorder %s370, %s373
      %p379 = scmp.eq.s32.totalorder %s25, 0
      %p380 = por %p378, %p379
      %p381 = scmp.ne.s32.totalorder %s370, %s373
      %p382 = scmp.eq.s32.totalorder %s30, 1
      %p383 = por %p381, %p382
      %p384 = scmp.ne.s32.totalorder %s373, %s374
      %p385 = scmp.eq.s32.totalorder %s30, 0
      %p386 = por %p384, %p385
      %p387 = scmp.ne.s32.totalorder %s373, %s374
      %p388 = scmp.eq.s32.totalorder %s31, 1
      %p389 = por %p387, %p388
      %p391 = scmp.ne.s32.totalorder %s374, %s390
      %p392 = scmp.eq.s32.totalorder %s31, 0
      %p393 = por %p391, %p392
      %p394 = scmp.le.s32.totalorder 1, %s25
      %p395 = scmp.lt.s32.totalorder %s25, 3
      %p396 = pnand %p394, %p395
      %p397 = pneg %p396
      // Predicated region
      $region9: #{lab_forward.3} parent=5 // pred_check
        _
      $region10: #{lab_forward.3} parent=5 // pred_check_branch
        %399 = sbr.rel (%p396) target = $region12
      $region11: #{lab_forward.3} parent=5 // pred_region
        %s400 = ssub.s32 %s25, 1
        // Predicated region
        $region13: #{lab_forward.3} parent=11 // pred_check
          %p401 = pneg %p98
        $region14: #{lab_forward.3} parent=11 // pred_check_branch
          %403 = sbr.rel (%p401) target = $region16
        $region15: #{lab_forward.3} parent=11 // pred_region
          _
        $region16: #{lab_forward.3} parent=11 // pred_fallthru
          _
        // Predicated region
        $region17: #{lab_forward.3} parent=11 // pred_check
          %p404 = pneg %p119
        $region18: #{lab_forward.3} parent=11 // pred_check_branch
          %406 = sbr.rel (%p404) target = $region20
        $region19: #{lab_forward.3} parent=11 // pred_region
          _
        $region20: #{lab_forward.3} parent=11 // pred_fallthru
          _
        // Predicated region
        $region21: #{lab_forward.3} parent=11 // pred_check
          %p407 = pneg %p140
        $region22: #{lab_forward.3} parent=11 // pred_check_branch
          %409 = sbr.rel (%p407) target = $region24
        $region23: #{lab_forward.3} parent=11 // pred_region
          _
        $region24: #{lab_forward.3} parent=11 // pred_fallthru
          _
        // Predicated region
        $region25: #{lab_forward.3} parent=11 // pred_check
          %p410 = pneg %p161
        $region26: #{lab_forward.3} parent=11 // pred_check_branch
          %412 = sbr.rel (%p410) target = $region28
        $region27: #{lab_forward.3} parent=11 // pred_region
          _
        $region28: #{lab_forward.3} parent=11 // pred_fallthru
          _
        // Predicated region
        $region29: #{lab_forward.3} parent=11 // pred_check
          %p413 = pneg %p182
        $region30: #{lab_forward.3} parent=11 // pred_check_branch
          %415 = sbr.rel (%p413) target = $region32
        $region31: #{lab_forward.3} parent=11 // pred_region
          _
        $region32: #{lab_forward.3} parent=11 // pred_fallthru
          _
        // Predicated region
        $region33: #{lab_forward.3} parent=11 // pred_check
          %p416 = pneg %p203
        $region34: #{lab_forward.3} parent=11 // pred_check_branch
          %418 = sbr.rel (%p416) target = $region36
        $region35: #{lab_forward.3} parent=11 // pred_region
          _
        $region36: #{lab_forward.3} parent=11 // pred_fallthru
          _
        // Predicated region
        $region37: #{lab_forward.3} parent=11 // pred_check
          %p419 = pneg %p224
        $region38: #{lab_forward.3} parent=11 // pred_check_branch
          %421 = sbr.rel (%p419) target = $region40
        $region39: #{lab_forward.3} parent=11 // pred_region
          _
        $region40: #{lab_forward.3} parent=11 // pred_fallthru
          _
        // Predicated region
        $region41: #{lab_forward.3} parent=11 // pred_check
          %p422 = pneg %p245
        $region42: #{lab_forward.3} parent=11 // pred_check_branch
          %424 = sbr.rel (%p422) target = $region44
        $region43: #{lab_forward.3} parent=11 // pred_region
          _
        $region44: #{lab_forward.3} parent=11 // pred_fallthru
          _
        // Predicated region
        $region45: #{lab_forward.3} parent=11 // pred_check
          %p425 = pneg %p266
        $region46: #{lab_forward.3} parent=11 // pred_check_branch
          %427 = sbr.rel (%p425) target = $region48
        $region47: #{lab_forward.3} parent=11 // pred_region
          _
        $region48: #{lab_forward.3} parent=11 // pred_fallthru
          _
        // Predicated region
        $region49: #{lab_forward.3} parent=11 // pred_check
          %p428 = pneg %p287
        $region50: #{lab_forward.3} parent=11 // pred_check_branch
          %430 = sbr.rel (%p428) target = $region52
        $region51: #{lab_forward.3} parent=11 // pred_region
          _
        $region52: #{lab_forward.3} parent=11 // pred_fallthru
          _
        // Predicated region
        $region53: #{lab_forward.3} parent=11 // pred_check
          %p431 = pneg %p308
        $region54: #{lab_forward.3} parent=11 // pred_check_branch
          %433 = sbr.rel (%p431) target = $region56
        $region55: #{lab_forward.3} parent=11 // pred_region
          _
        $region56: #{lab_forward.3} parent=11 // pred_fallthru
          _
      $region12: #{lab_forward.3} parent=5 // pred_fallthru
        _
      %p434 = scmp.lt.s32.totalorder %s25, 2
      // Predicated region
      $region57: #{lab_forward.3} parent=5 // pred_check
        %p435 = pneg %p434
      $region58: #{lab_forward.3} parent=5 // pred_check_branch
        %437 = sbr.rel (%p435) target = $region60
      $region59: #{lab_forward.3} parent=5 // pred_region
        // Predicated region
        $region61: #{lab_forward.3} parent=59 // pred_check
          %p438 = pneg %p45
        $region62: #{lab_forward.3} parent=59 // pred_check_branch
          %440 = sbr.rel (%p438) target = $region64
        $region63: #{lab_forward.3} parent=59 // pred_region
          %p441 = scmp.lt.s32.totalorder %s25, 1
          %s442 = scalar_select %p441, %s25, 1
          %s443 = smul.addr %s442, 8
          %s444 = scalar_lea.vmem %s0, %s443
        $region64: #{lab_forward.3} parent=59 // pred_fallthru
          _
        // Predicated region
        $region65: #{lab_forward.3} parent=59 // pred_check
          %p445 = pneg %p71
        $region66: #{lab_forward.3} parent=59 // pred_check_branch
          %447 = sbr.rel (%p445) target = $region68
        $region67: #{lab_forward.3} parent=59 // pred_region
          %p448 = scmp.lt.s32.totalorder %s25, 1
          %s449 = scalar_select %p448, %s25, 1
          %s450 = scalar_lea.vmem %s1, %s449
        $region68: #{lab_forward.3} parent=59 // pred_fallthru
          _
      $region60: #{lab_forward.3} parent=5 // pred_fallthru
        _
      %p451 = scmp.le.s32.totalorder 1, %s25
      %p452 = scmp.lt.s32.totalorder %s25, 3
      %p453 = pnand %p451, %p452
      %p454 = pneg %p453
      // Predicated region
      $region69: #{lab_forward.3} parent=5 // pred_check
        _
      $region70: #{lab_forward.3} parent=5 // pred_check_branch
        %456 = sbr.rel (%p453) target = $region72
      $region71: #{lab_forward.3} parent=5 // pred_region
        %s457 = ssub.s32 %s25, 1
        %p458 = scmp.lt.s32.totalorder %s30, 1
        %s459 = scalar_select %p458, %s30, 1
        %s460 = smul.addr %s459, 8
        %s461 = scalar_lea.vmem %s0, %s460
        %p462 = pneg %p51
        %p463 = pneg %p48
        %p464 = scmp.lt.s32.totalorder %s30, 1
        %s465 = scalar_select %p464, %s30, 1
        %s466 = scalar_lea.vmem %s1, %s465
        %p467 = pneg %p77
        %p468 = pneg %p74
        %p469 = pneg %p98
        %p470 = pneg %p95
        %p471 = pneg %p119
        %p472 = pneg %p116
        %p473 = pneg %p140
        %p474 = pneg %p137
        %p475 = pneg %p161
        %p476 = pneg %p158
        %p477 = pneg %p182
        %p478 = pneg %p179
        %p479 = pneg %p203
        %p480 = pneg %p200
        %p481 = pneg %p224
        %p482 = pneg %p221
        %p483 = pneg %p245
        %p484 = pneg %p242
        %p485 = pneg %p266
        %p486 = pneg %p263
        %p487 = pneg %p287
        %p488 = pneg %p284
        %p489 = pneg %p308
        %p490 = pneg %p305
        %p491 = pneg %p334
        %p492 = pneg %p331
        %s493 = sand.u32 %s321, 1
        %s494 = scalar_lea.sflag [#allocation3], %s493
        %s495 = sand.u32 %s321, 1
        %s496 = smul.addr %s495, 8
        %s497 = scalar_lea.vmem [#allocation2], %s496
        %p498 = pneg %p360
        %p499 = pneg %p357
        %p500 = scmp.lt.s32.totalorder %s30, 1
        %s501 = scalar_select %p500, %s30, 1
        %s502 = smul.addr %s501, 2
        %s503 = scalar_lea.vmem %s14, %s502
        %p504 = pneg %p386
        %p505 = pneg %p383
        %p506 = scmp.lt.s32.totalorder %s30, 1
        %s507 = scalar_select %p506, %s30, 1
        %s508 = smul.addr %s507, 2
        %s509 = scalar_lea.vmem %s15, %s508
        %p510 = scmp.lt.s32.totalorder %s30, 1
        %s511 = scalar_select %p510, %s30, 1
        %s512 = smul.addr %s511, 8
        %s513 = scalar_lea.vmem %s0, %s512
        %p514 = scmp.lt.s32.totalorder %s30, 1
        %s515 = scalar_select %p514, %s30, 1
        %s516 = scalar_lea.vmem %s1, %s515
        %p517 = scmp.lt.s32.totalorder %s30, 1
        %s518 = scalar_select %p517, %s30, 1
        %s519 = smul.addr %s518, 2
        %s520 = scalar_lea.vmem %s14, %s519
        %p521 = scmp.lt.s32.totalorder %s30, 1
        %s522 = scalar_select %p521, %s30, 1
        %s523 = smul.addr %s522, 2
        %s524 = scalar_lea.vmem %s15, %s523
        %v525 = vld [vmem:[%s513] sm:$0xff]
        %v526 = vld [vmem:[%s2] sm:$0xff]
        %v527 = vld [vmem:[%s2 + $0x8] sm:$0xff]
        %v528 = vld [vmem:[%s2 + $0x10] sm:$0xff]
        %v529 = vld [vmem:[%s2 + $0x18] sm:$0xff]
        %v530 = vld [vmem:[%s3] sm:$0x1]
        %v532 = vperm.slane %v530, 0
        %vm534 = vcmask 261120
        %v536 = vsel %vm534, %v525, 0
        %538 = vmatpush.msra.mxu0 0.0
        %539 = vmatpush.msra.mxu0 0.0
        %540 = vmatpush.msra.mxu0 0.0
        %541 = vmatpush.msra.mxu0 0.0
        %542 = vmatpush.msra.mxu0 0.0
        %543 = vmatpush.msra.mxu0 0.0
        %544 = vmatpush.msra.mxu0 0.0
        %545 = vmatpush.msra.mxu0 0.0
        %546 = vmatpush.msra.mxu0 0.0
        %547 = vmatpush.msra.mxu0 0.0
        %548 = vmatpush.msra.mxu0 0.0
        %549 = vmatpush.msra.mxu0 0.0
        %550 = vmatpush.msra.mxu0 %v529
        %551 = vmatpush.msra.mxu0 %v528
        %552 = vmatpush.msra.mxu0 %v527
        %553 = vmatpush.msra.mxu0 %v526
        %554 = vmatmul.f32.gmra.mxu0 %v536
        %v555 = vpop.f32.mrf.mxu0
        %v556 = vadd.f32 %v532, %v555
        %557 = vdwg.mxu0
        %559 = vrot.lane.b32.xlu0 %v556, 120
        %v560 = vpop.permute.xlu0 %559
        %561 = vrot.lane.b32.xlu0 %v556, 112
        %v562 = vpop.permute.xlu0 %561
        %563 = vrot.lane.b32.xlu0 %v556, 104
        %v564 = vpop.permute.xlu0 %563
        %565 = vrot.lane.b32.xlu0 %v556, 96
        %v566 = vpop.permute.xlu0 %565
        %567 = vrot.lane.b32.xlu0 %v560, 96
        %v568 = vpop.permute.xlu0 %567
        %569 = vrot.lane.b32.xlu0 %v562, 96
        %v570 = vpop.permute.xlu0 %569
        %571 = vrot.lane.b32.xlu0 %v564, 96
        %v572 = vpop.permute.xlu0 %571
        %577 = vxpose.xlu0.b32.start [1/16] %v566, 128
        %578 = vxpose.xlu0.b32.cont [2/16] 0.0, 128
        %579 = vxpose.xlu0.b32.cont [3/16] 0.0, 128
        %580 = vxpose.xlu0.b32.cont [4/16] 0.0, 128
        %581 = vxpose.xlu0.b32.cont [5/16] 0.0, 128
        %582 = vxpose.xlu0.b32.cont [6/16] 0.0, 128
        %583 = vxpose.xlu0.b32.cont [7/16] 0.0, 128
        %584 = vxpose.xlu0.b32.cont [8/16] 0.0, 128
        %585 = vxpose.xlu0.b32.cont [9/16] 0.0, 128
        %586 = vxpose.xlu0.b32.cont [10/16] 0.0, 128
        %587 = vxpose.xlu0.b32.cont [11/16] 0.0, 128
        %588 = vxpose.xlu0.b32.cont [12/16] 0.0, 128
        %589 = vxpose.xlu0.b32.cont [13/16] 0.0, 128
        %590 = vxpose.xlu0.b32.cont [14/16] 0.0, 128
        %591 = vxpose.xlu0.b32.cont [15/16] 0.0, 128
        %592 = vxpose.xlu0.b32.end [16/16] 0.0, 128
        %v593 = vpop.trf.xlu0
        %v594 = vpop.trf.xlu0
        %v595 = vpop.trf.xlu0
        %v596 = vpop.trf.xlu0
        %v597 = vpop.trf.xlu0
        %v598 = vpop.trf.xlu0
        %v599 = vpop.trf.xlu0
        %v600 = vpop.trf.xlu0
        %v601 = vpop.trf.xlu0
        %v602 = vpop.trf.xlu0
        %v603 = vpop.trf.xlu0
        %v604 = vpop.trf.xlu0
        %v605 = vpop.trf.xlu0
        %v606 = vpop.trf.xlu0
        %v607 = vpop.trf.xlu0
        %v608 = vpop.trf.xlu0
        %609 = vxpose.xlu0.b32.start [1/16] %v568, 128
        %610 = vxpose.xlu0.b32.cont [2/16] 0.0, 128
        %611 = vxpose.xlu0.b32.cont [3/16] 0.0, 128
        %612 = vxpose.xlu0.b32.cont [4/16] 0.0, 128
        %613 = vxpose.xlu0.b32.cont [5/16] 0.0, 128
        %614 = vxpose.xlu0.b32.cont [6/16] 0.0, 128
        %615 = vxpose.xlu0.b32.cont [7/16] 0.0, 128
        %616 = vxpose.xlu0.b32.cont [8/16] 0.0, 128
        %617 = vxpose.xlu0.b32.cont [9/16] 0.0, 128
        %618 = vxpose.xlu0.b32.cont [10/16] 0.0, 128
        %619 = vxpose.xlu0.b32.cont [11/16] 0.0, 128
        %620 = vxpose.xlu0.b32.cont [12/16] 0.0, 128
        %621 = vxpose.xlu0.b32.cont [13/16] 0.0, 128
        %622 = vxpose.xlu0.b32.cont [14/16] 0.0, 128
        %623 = vxpose.xlu0.b32.cont [15/16] 0.0, 128
        %624 = vxpose.xlu0.b32.end [16/16] 0.0, 128
        %v625 = vpop.trf.xlu0
        %v626 = vpop.trf.xlu0
        %v627 = vpop.trf.xlu0
        %v628 = vpop.trf.xlu0
        %v629 = vpop.trf.xlu0
        %v630 = vpop.trf.xlu0
        %v631 = vpop.trf.xlu0
        %v632 = vpop.trf.xlu0
        %v633 = vpop.trf.xlu0
        %v634 = vpop.trf.xlu0
        %v635 = vpop.trf.xlu0
        %v636 = vpop.trf.xlu0
        %v637 = vpop.trf.xlu0
        %v638 = vpop.trf.xlu0
        %v639 = vpop.trf.xlu0
        %v640 = vpop.trf.xlu0
        %641 = vxpose.xlu0.b32.start [1/16] %v570, 128
        %642 = vxpose.xlu0.b32.cont [2/16] 0.0, 128
        %643 = vxpose.xlu0.b32.cont [3/16] 0.0, 128
        %644 = vxpose.xlu0.b32.cont [4/16] 0.0, 128
        %645 = vxpose.xlu0.b32.cont [5/16] 0.0, 128
        %646 = vxpose.xlu0.b32.cont [6/16] 0.0, 128
        %647 = vxpose.xlu0.b32.cont [7/16] 0.0, 128
        %648 = vxpose.xlu0.b32.cont [8/16] 0.0, 128
        %649 = vxpose.xlu0.b32.cont [9/16] 0.0, 128
        %650 = vxpose.xlu0.b32.cont [10/16] 0.0, 128
        %651 = vxpose.xlu0.b32.cont [11/16] 0.0, 128
        %652 = vxpose.xlu0.b32.cont [12/16] 0.0, 128
        %653 = vxpose.xlu0.b32.cont [13/16] 0.0, 128
        %654 = vxpose.xlu0.b32.cont [14/16] 0.0, 128
        %655 = vxpose.xlu0.b32.cont [15/16] 0.0, 128
        %656 = vxpose.xlu0.b32.end [16/16] 0.0, 128
        %v657 = vpop.trf.xlu0
        %v658 = vpop.trf.xlu0
        %v659 = vpop.trf.xlu0
        %v660 = vpop.trf.xlu0
        %v661 = vpop.trf.xlu0
        %v662 = vpop.trf.xlu0
        %v663 = vpop.trf.xlu0
        %v664 = vpop.trf.xlu0
        %v665 = vpop.trf.xlu0
        %v666 = vpop.trf.xlu0
        %v667 = vpop.trf.xlu0
        %v668 = vpop.trf.xlu0
        %v669 = vpop.trf.xlu0
        %v670 = vpop.trf.xlu0
        %v671 = vpop.trf.xlu0
        %v672 = vpop.trf.xlu0
        %673 = vxpose.xlu0.b32.start [1/16] %v572, 128
        %674 = vxpose.xlu0.b32.cont [2/16] 0.0, 128
        %675 = vxpose.xlu0.b32.cont [3/16] 0.0, 128
        %676 = vxpose.xlu0.b32.cont [4/16] 0.0, 128
        %677 = vxpose.xlu0.b32.cont [5/16] 0.0, 128
        %678 = vxpose.xlu0.b32.cont [6/16] 0.0, 128
        %679 = vxpose.xlu0.b32.cont [7/16] 0.0, 128
        %680 = vxpose.xlu0.b32.cont [8/16] 0.0, 128
        %681 = vxpose.xlu0.b32.cont [9/16] 0.0, 128
        %682 = vxpose.xlu0.b32.cont [10/16] 0.0, 128
        %683 = vxpose.xlu0.b32.cont [11/16] 0.0, 128
        %684 = vxpose.xlu0.b32.cont [12/16] 0.0, 128
        %685 = vxpose.xlu0.b32.cont [13/16] 0.0, 128
        %686 = vxpose.xlu0.b32.cont [14/16] 0.0, 128
        %687 = vxpose.xlu0.b32.cont [15/16] 0.0, 128
        %688 = vxpose.xlu0.b32.end [16/16] 0.0, 128
        %v689 = vpop.trf.xlu0
        %v690 = vpop.trf.xlu0
        %v691 = vpop.trf.xlu0
        %v692 = vpop.trf.xlu0
        %v693 = vpop.trf.xlu0
        %v694 = vpop.trf.xlu0
        %v695 = vpop.trf.xlu0
        %v696 = vpop.trf.xlu0
        %v697 = vpop.trf.xlu0
        %v698 = vpop.trf.xlu0
        %v699 = vpop.trf.xlu0
        %v700 = vpop.trf.xlu0
        %v701 = vpop.trf.xlu0
        %v702 = vpop.trf.xlu0
        %v703 = vpop.trf.xlu0
        %v704 = vpop.trf.xlu0
        %vm705 = vcmask 64512
        %v706 = vsel %vm705, %v556, 0
        %708 = vmatpush.msra.mxu0 0.0
        %709 = vmatpush.msra.mxu0 0.0
        %710 = vmatpush.msra.mxu0 0.0
        %711 = vmatpush.msra.mxu0 0.0
        %712 = vmatpush.msra.mxu0 0.0
        %713 = vmatpush.msra.mxu0 0.0
        %714 = vmatpush.msra.mxu0 0.0
        %715 = vmatpush.msra.mxu0 0.0
        %716 = vmatpush.msra.mxu0 0.0
        %717 = vmatpush.msra.mxu0 0.0
        %718 = vmatpush.msra.mxu0 0.0
        %719 = vmatpush.msra.mxu0 0.0
        %720 = vmatpush.msra.mxu0 0.0
        %721 = vmatpush.msra.mxu0 0.0
        %722 = vmatpush.msra.mxu0 0.0
        %723 = vmatpush.msra.mxu0 %v593
        %724 = vmatmul.f32.gmra.mxu0 %v706
        %v725 = vpop.f32.mrf.mxu0
        %v726 = vadd.f32 0.0, %v725
        %727 = vdwg.mxu0
        %v728 = vsel %vm705, %v560, 0
        %730 = vmatpush.msra.mxu0 0.0
        %731 = vmatpush.msra.mxu0 0.0
        %732 = vmatpush.msra.mxu0 0.0
        %733 = vmatpush.msra.mxu0 0.0
        %734 = vmatpush.msra.mxu0 0.0
        %735 = vmatpush.msra.mxu0 0.0
        %736 = vmatpush.msra.mxu0 0.0
        %737 = vmatpush.msra.mxu0 0.0
        %738 = vmatpush.msra.mxu0 0.0
        %739 = vmatpush.msra.mxu0 0.0
        %740 = vmatpush.msra.mxu0 0.0
        %741 = vmatpush.msra.mxu0 0.0
        %742 = vmatpush.msra.mxu0 0.0
        %743 = vmatpush.msra.mxu0 0.0
        %744 = vmatpush.msra.mxu0 0.0
        %745 = vmatpush.msra.mxu0 %v625
        %746 = vmatmul.f32.gmra.mxu0 %v728
        %v747 = vpop.f32.mrf.mxu0
        %v748 = vadd.f32 0.0, %v747
        %749 = vdwg.mxu0
        %v750 = vsel %vm705, %v562, 0
        %752 = vmatpush.msra.mxu0 0.0
        %753 = vmatpush.msra.mxu0 0.0
        %754 = vmatpush.msra.mxu0 0.0
        %755 = vmatpush.msra.mxu0 0.0
        %756 = vmatpush.msra.mxu0 0.0
        %757 = vmatpush.msra.mxu0 0.0
        %758 = vmatpush.msra.mxu0 0.0
        %759 = vmatpush.msra.mxu0 0.0
        %760 = vmatpush.msra.mxu0 0.0
        %761 = vmatpush.msra.mxu0 0.0
        %762 = vmatpush.msra.mxu0 0.0
        %763 = vmatpush.msra.mxu0 0.0
        %764 = vmatpush.msra.mxu0 0.0
        %765 = vmatpush.msra.mxu0 0.0
        %766 = vmatpush.msra.mxu0 0.0
        %767 = vmatpush.msra.mxu0 %v657
        %768 = vmatmul.f32.gmra.mxu0 %v750
        %v769 = vpop.f32.mrf.mxu0
        %v770 = vadd.f32 0.0, %v769
        %771 = vdwg.mxu0
        %v772 = vsel %vm705, %v564, 0
        %774 = vmatpush.msra.mxu0 0.0
        %775 = vmatpush.msra.mxu0 0.0
        %776 = vmatpush.msra.mxu0 0.0
        %777 = vmatpush.msra.mxu0 0.0
        %778 = vmatpush.msra.mxu0 0.0
        %779 = vmatpush.msra.mxu0 0.0
        %780 = vmatpush.msra.mxu0 0.0
        %781 = vmatpush.msra.mxu0 0.0
        %782 = vmatpush.msra.mxu0 0.0
        %783 = vmatpush.msra.mxu0 0.0
        %784 = vmatpush.msra.mxu0 0.0
        %785 = vmatpush.msra.mxu0 0.0
        %786 = vmatpush.msra.mxu0 0.0
        %787 = vmatpush.msra.mxu0 0.0
        %788 = vmatpush.msra.mxu0 0.0
        %789 = vmatpush.msra.mxu0 %v689
        %790 = vmatmul.f32.gmra.mxu0 %v772
        %v791 = vpop.f32.mrf.mxu0
        %v792 = vadd.f32 0.0, %v791
        %793 = vdwg.mxu0
        %v794 = vmul.f32 %v726, 0.35355338
        %v795 = vmul.f32 %v748, 0.35355338
        %v796 = vmul.f32 %v770, 0.35355338
        %v797 = vmul.f32 %v792, 0.35355338
        %v798 = vld [vmem:[%s516] sm:$0x1]
        %vm799 = vcmp.eq.s32.totalorder %v798, 0
        %v800 = vsel %vm799, -1e+30, 0.0
        %v802 = vperm.slane %v800, 0
        %v804 = vadd.f32 %v794, %v802
        %v805 = vadd.f32 %v795, %v802
        %v806 = vadd.f32 %v796, %v802
        %v807 = vadd.f32 %v797, %v802
        %v808 = vsel %vm705, %v804, -inf
        %809 = vmax.xlane.f32.xlu0 %v808
        %v810 = vpop.xlane.xlu0 %809
        %v811 = vsel %vm705, %v805, -inf
        %812 = vmax.xlane.f32.xlu0 %v811
        %v813 = vpop.xlane.xlu0 %812
        %v814 = vsel %vm705, %v806, -inf
        %815 = vmax.xlane.f32.xlu0 %v814
        %v816 = vpop.xlane.xlu0 %815
        %v817 = vsel %vm705, %v807, -inf
        %818 = vmax.xlane.f32.xlu0 %v817
        %v819 = vpop.xlane.xlu0 %818
        %v820 = vsub.f32 %v804, %v810
        %v821 = vsub.f32 %v805, %v813
        %v822 = vsub.f32 %v806, %v816
        %v823 = vsub.f32 %v807, %v819
        %v824 = vmul.f32 %v820, 1.442695
        %v825 = vpow.pop %v824
        %v826 = vmul.f32 %v821, 1.442695
        %v827 = vpow.pop %v826
        %v828 = vmul.f32 %v822, 1.442695
        %v829 = vpow.pop %v828
        %v830 = vmul.f32 %v823, 1.442695
        %v831 = vpow.pop %v830
        %v832 = vsel %vm705, %v825, 0.0
        %833 = vadd.xlane.f32.xlu0 %v832
        %v834 = vpop.xlane.xlu0 %833
        %v835 = vsel %vm705, %v827, 0.0
        %836 = vadd.xlane.f32.xlu0 %v835
        %v837 = vpop.xlane.xlu0 %836
        %v838 = vsel %vm705, %v829, 0.0
        %839 = vadd.xlane.f32.xlu0 %v838
        %v840 = vpop.xlane.xlu0 %839
        %v841 = vsel %vm705, %v831, 0.0
        %842 = vadd.xlane.f32.xlu0 %v841
        %v843 = vpop.xlane.xlu0 %842
        %v844 = vrcp.pop %v834
        %v845 = vrcp.pop %v837
        %v846 = vrcp.pop %v840
        %v847 = vrcp.pop %v843
        %v848 = vmul.f32 %v825, %v844
        %v849 = vmul.f32 %v827, %v845
        %v850 = vmul.f32 %v829, %v846
        %v851 = vmul.f32 %v831, %v847
        %852 = vrot.lane.b32.xlu0 %v556, 64
        %v853 = vpop.permute.xlu0 %852
        %854 = vrot.lane.b32.xlu0 %v560, 64
        %v855 = vpop.permute.xlu0 %854
        %856 = vrot.lane.b32.xlu0 %v562, 64
        %v857 = vpop.permute.xlu0 %856
        %858 = vrot.lane.b32.xlu0 %v564, 64
        %v859 = vpop.permute.xlu0 %858
        %864 = vxpose.xlu0.b32.start [1/16] %v853, 128
        %865 = vxpose.xlu0.b32.cont [2/16] 0.0, 128
        %866 = vxpose.xlu0.b32.cont [3/16] 0.0, 128
        %867 = vxpose.xlu0.b32.cont [4/16] 0.0, 128
        %868 = vxpose.xlu0.b32.cont [5/16] 0.0, 128
        %869 = vxpose.xlu0.b32.cont [6/16] 0.0, 128
        %870 = vxpose.xlu0.b32.cont [7/16] 0.0, 128
        %871 = vxpose.xlu0.b32.cont [8/16] 0.0, 128
        %872 = vxpose.xlu0.b32.cont [9/16] 0.0, 128
        %873 = vxpose.xlu0.b32.cont [10/16] 0.0, 128
        %874 = vxpose.xlu0.b32.cont [11/16] 0.0, 128
        %875 = vxpose.xlu0.b32.cont [12/16] 0.0, 128
        %876 = vxpose.xlu0.b32.cont [13/16] 0.0, 128
        %877 = vxpose.xlu0.b32.cont [14/16] 0.0, 128
        %878 = vxpose.xlu0.b32.cont [15/16] 0.0, 128
        %879 = vxpose.xlu0.b32.end [16/16] 0.0, 128
        %v880 = vpop.trf.xlu0
        %v881 = vpop.trf.xlu0
        %v882 = vpop.trf.xlu0
        %v883 = vpop.trf.xlu0
        %v884 = vpop.trf.xlu0
        %v885 = vpop.trf.xlu0
        %v886 = vpop.trf.xlu0
        %v887 = vpop.trf.xlu0
        %v888 = vpop.trf.xlu0
        %v889 = vpop.trf.xlu0
        %v890 = vpop.trf.xlu0
        %v891 = vpop.trf.xlu0
        %v892 = vpop.trf.xlu0
        %v893 = vpop.trf.xlu0
        %v894 = vpop.trf.xlu0
        %v895 = vpop.trf.xlu0
        %896 = vxpose.xlu0.b32.start [1/16] %v855, 128
        %897 = vxpose.xlu0.b32.cont [2/16] 0.0, 128
        %898 = vxpose.xlu0.b32.cont [3/16] 0.0, 128
        %899 = vxpose.xlu0.b32.cont [4/16] 0.0, 128
        %900 = vxpose.xlu0.b32.cont [5/16] 0.0, 128
        %901 = vxpose.xlu0.b32.cont [6/16] 0.0, 128
        %902 = vxpose.xlu0.b32.cont [7/16] 0.0, 128
        %903 = vxpose.xlu0.b32.cont [8/16] 0.0, 128
        %904 = vxpose.xlu0.b32.cont [9/16] 0.0, 128
        %905 = vxpose.xlu0.b32.cont [10/16] 0.0, 128
        %906 = vxpose.xlu0.b32.cont [11/16] 0.0, 128
        %907 = vxpose.xlu0.b32.cont [12/16] 0.0, 128
        %908 = vxpose.xlu0.b32.cont [13/16] 0.0, 128
        %909 = vxpose.xlu0.b32.cont [14/16] 0.0, 128
        %910 = vxpose.xlu0.b32.cont [15/16] 0.0, 128
        %911 = vxpose.xlu0.b32.end [16/16] 0.0, 128
        %v912 = vpop.trf.xlu0
        %v913 = vpop.trf.xlu0
        %v914 = vpop.trf.xlu0
        %v915 = vpop.trf.xlu0
        %v916 = vpop.trf.xlu0
        %v917 = vpop.trf.xlu0
        %v918 = vpop.trf.xlu0
        %v919 = vpop.trf.xlu0
        %v920 = vpop.trf.xlu0
        %v921 = vpop.trf.xlu0
        %v922 = vpop.trf.xlu0
        %v923 = vpop.trf.xlu0
        %v924 = vpop.trf.xlu0
        %v925 = vpop.trf.xlu0
        %v926 = vpop.trf.xlu0
        %v927 = vpop.trf.xlu0
        %928 = vxpose.xlu0.b32.start [1/16] %v857, 128
        %929 = vxpose.xlu0.b32.cont [2/16] 0.0, 128
        %930 = vxpose.xlu0.b32.cont [3/16] 0.0, 128
        %931 = vxpose.xlu0.b32.cont [4/16] 0.0, 128
        %932 = vxpose.xlu0.b32.cont [5/16] 0.0, 128
        %933 = vxpose.xlu0.b32.cont [6/16] 0.0, 128
        %934 = vxpose.xlu0.b32.cont [7/16] 0.0, 128
        %935 = vxpose.xlu0.b32.cont [8/16] 0.0, 128
        %936 = vxpose.xlu0.b32.cont [9/16] 0.0, 128
        %937 = vxpose.xlu0.b32.cont [10/16] 0.0, 128
        %938 = vxpose.xlu0.b32.cont [11/16] 0.0, 128
        %939 = vxpose.xlu0.b32.cont [12/16] 0.0, 128
        %940 = vxpose.xlu0.b32.cont [13/16] 0.0, 128
        %941 = vxpose.xlu0.b32.cont [14/16] 0.0, 128
        %942 = vxpose.xlu0.b32.cont [15/16] 0.0, 128
        %943 = vxpose.xlu0.b32.end [16/16] 0.0, 128
        %v944 = vpop.trf.xlu0
        %v945 = vpop.trf.xlu0
        %v946 = vpop.trf.xlu0
        %v947 = vpop.trf.xlu0
        %v948 = vpop.trf.xlu0
        %v949 = vpop.trf.xlu0
        %v950 = vpop.trf.xlu0
        %v951 = vpop.trf.xlu0
        %v952 = vpop.trf.xlu0
        %v953 = vpop.trf.xlu0
        %v954 = vpop.trf.xlu0
        %v955 = vpop.trf.xlu0
        %v956 = vpop.trf.xlu0
        %v957 = vpop.trf.xlu0
        %v958 = vpop.trf.xlu0
        %v959 = vpop.trf.xlu0
        %960 = vxpose.xlu0.b32.start [1/16] %v859, 128
        %961 = vxpose.xlu0.b32.cont [2/16] 0.0, 128
        %962 = vxpose.xlu0.b32.cont [3/16] 0.0, 128
        %963 = vxpose.xlu0.b32.cont [4/16] 0.0, 128
        %964 = vxpose.xlu0.b32.cont [5/16] 0.0, 128
        %965 = vxpose.xlu0.b32.cont [6/16] 0.0, 128
        %966 = vxpose.xlu0.b32.cont [7/16] 0.0, 128
        %967 = vxpose.xlu0.b32.cont [8/16] 0.0, 128
        %968 = vxpose.xlu0.b32.cont [9/16] 0.0, 128
        %969 = vxpose.xlu0.b32.cont [10/16] 0.0, 128
        %970 = vxpose.xlu0.b32.cont [11/16] 0.0, 128
        %971 = vxpose.xlu0.b32.cont [12/16] 0.0, 128
        %972 = vxpose.xlu0.b32.cont [13/16] 0.0, 128
        %973 = vxpose.xlu0.b32.cont [14/16] 0.0, 128
        %974 = vxpose.xlu0.b32.cont [15/16] 0.0, 128
        %975 = vxpose.xlu0.b32.end [16/16] 0.0, 128
        %v976 = vpop.trf.xlu0
        %v977 = vpop.trf.xlu0
        %v978 = vpop.trf.xlu0
        %v979 = vpop.trf.xlu0
        %v980 = vpop.trf.xlu0
        %v981 = vpop.trf.xlu0
        %v982 = vpop.trf.xlu0
        %v983 = vpop.trf.xlu0
        %v984 = vpop.trf.xlu0
        %v985 = vpop.trf.xlu0
        %v986 = vpop.trf.xlu0
        %v987 = vpop.trf.xlu0
        %v988 = vpop.trf.xlu0
        %v989 = vpop.trf.xlu0
        %v990 = vpop.trf.xlu0
        %v991 = vpop.trf.xlu0
        %v993 = vsel %vm705, %v880, 0
        %v996 = vsel %vm705, %v848, 0
        %998 = vmatpush.xpose.msra.mxu0 0.0
        %999 = vmatpush.xpose.msra.mxu0 0.0
        %1000 = vmatpush.xpose.msra.mxu0 0.0
        %1001 = vmatpush.xpose.msra.mxu0 0.0
        %1002 = vmatpush.xpose.msra.mxu0 0.0
        %1003 = vmatpush.xpose.msra.mxu0 0.0
        %1004 = vmatpush.xpose.msra.mxu0 0.0
        %1005 = vmatpush.xpose.msra.mxu0 0.0
        %1006 = vmatpush.xpose.msra.mxu0 0.0
        %1007 = vmatpush.xpose.msra.mxu0 0.0
        %1008 = vmatpush.xpose.msra.mxu0 0.0
        %1009 = vmatpush.xpose.msra.mxu0 0.0
        %1010 = vmatpush.xpose.msra.mxu0 0.0
        %1011 = vmatpush.xpose.msra.mxu0 0.0
        %1012 = vmatpush.xpose.msra.mxu0 0.0
        %1013 = vmatpush.xpose.msra.mxu0 %v996
        %1014 = vmatmul.f32.gmra.mxu0 %v993
        %v1015 = vpop.f32.mrf.mxu0
        %v1016 = vadd.f32 0.0, %v1015
        %1017 = vdwg.mxu0
        %v1019 = vsel %vm705, %v912, 0
        %v1022 = vsel %vm705, %v849, 0
        %1024 = vmatpush.xpose.msra.mxu0 0.0
        %1025 = vmatpush.xpose.msra.mxu0 0.0
        %1026 = vmatpush.xpose.msra.mxu0 0.0
        %1027 = vmatpush.xpose.msra.mxu0 0.0
        %1028 = vmatpush.xpose.msra.mxu0 0.0
        %1029 = vmatpush.xpose.msra.mxu0 0.0
        %1030 = vmatpush.xpose.msra.mxu0 0.0
        %1031 = vmatpush.xpose.msra.mxu0 0.0
        %1032 = vmatpush.xpose.msra.mxu0 0.0
        %1033 = vmatpush.xpose.msra.mxu0 0.0
        %1034 = vmatpush.xpose.msra.mxu0 0.0
        %1035 = vmatpush.xpose.msra.mxu0 0.0
        %1036 = vmatpush.xpose.msra.mxu0 0.0
        %1037 = vmatpush.xpose.msra.mxu0 0.0
        %1038 = vmatpush.xpose.msra.mxu0 0.0
        %1039 = vmatpush.xpose.msra.mxu0 %v1022
        %1040 = vmatmul.f32.gmra.mxu0 %v1019
        %v1041 = vpop.f32.mrf.mxu0
        %v1042 = vadd.f32 0.0, %v1041
        %1043 = vdwg.mxu0
        %v1045 = vsel %vm705, %v944, 0
        %v1048 = vsel %vm705, %v850, 0
        %1050 = vmatpush.xpose.msra.mxu0 0.0
        %1051 = vmatpush.xpose.msra.mxu0 0.0
        %1052 = vmatpush.xpose.msra.mxu0 0.0
        %1053 = vmatpush.xpose.msra.mxu0 0.0
        %1054 = vmatpush.xpose.msra.mxu0 0.0
        %1055 = vmatpush.xpose.msra.mxu0 0.0
        %1056 = vmatpush.xpose.msra.mxu0 0.0
        %1057 = vmatpush.xpose.msra.mxu0 0.0
        %1058 = vmatpush.xpose.msra.mxu0 0.0
        %1059 = vmatpush.xpose.msra.mxu0 0.0
        %1060 = vmatpush.xpose.msra.mxu0 0.0
        %1061 = vmatpush.xpose.msra.mxu0 0.0
        %1062 = vmatpush.xpose.msra.mxu0 0.0
        %1063 = vmatpush.xpose.msra.mxu0 0.0
        %1064 = vmatpush.xpose.msra.mxu0 0.0
        %1065 = vmatpush.xpose.msra.mxu0 %v1048
        %1066 = vmatmul.f32.gmra.mxu0 %v1045
        %v1067 = vpop.f32.mrf.mxu0
        %v1068 = vadd.f32 0.0, %v1067
        %1069 = vdwg.mxu0
        %v1071 = vsel %vm705, %v976, 0
        %v1074 = vsel %vm705, %v851, 0
        %1076 = vmatpush.xpose.msra.mxu0 0.0
        %1077 = vmatpush.xpose.msra.mxu0 0.0
        %1078 = vmatpush.xpose.msra.mxu0 0.0
        %1079 = vmatpush.xpose.msra.mxu0 0.0
        %1080 = vmatpush.xpose.msra.mxu0 0.0
        %1081 = vmatpush.xpose.msra.mxu0 0.0
        %1082 = vmatpush.xpose.msra.mxu0 0.0
        %1083 = vmatpush.xpose.msra.mxu0 0.0
        %1084 = vmatpush.xpose.msra.mxu0 0.0
        %1085 = vmatpush.xpose.msra.mxu0 0.0
        %1086 = vmatpush.xpose.msra.mxu0 0.0
        %1087 = vmatpush.xpose.msra.mxu0 0.0
        %1088 = vmatpush.xpose.msra.mxu0 0.0
        %1089 = vmatpush.xpose.msra.mxu0 0.0
        %1090 = vmatpush.xpose.msra.mxu0 0.0
        %1091 = vmatpush.xpose.msra.mxu0 %v1074
        %1092 = vmatmul.f32.gmra.mxu0 %v1071
        %v1093 = vpop.f32.mrf.mxu0
        %v1094 = vadd.f32 0.0, %v1093
        %1095 = vdwg.mxu0
        %1096 = vxpose.xlu0.b32.start [1/16] %v1016, 128
        %1097 = vxpose.xlu0.b32.cont [2/16] 0.0, 128
        %1098 = vxpose.xlu0.b32.cont [3/16] 0.0, 128
        %1099 = vxpose.xlu0.b32.cont [4/16] 0.0, 128
        %1100 = vxpose.xlu0.b32.cont [5/16] 0.0, 128
        %1101 = vxpose.xlu0.b32.cont [6/16] 0.0, 128
        %1102 = vxpose.xlu0.b32.cont [7/16] 0.0, 128
        %1103 = vxpose.xlu0.b32.cont [8/16] 0.0, 128
        %1104 = vxpose.xlu0.b32.cont [9/16] 0.0, 128
        %1105 = vxpose.xlu0.b32.cont [10/16] 0.0, 128
        %1106 = vxpose.xlu0.b32.cont [11/16] 0.0, 128
        %1107 = vxpose.xlu0.b32.cont [12/16] 0.0, 128
        %1108 = vxpose.xlu0.b32.cont [13/16] 0.0, 128
        %1109 = vxpose.xlu0.b32.cont [14/16] 0.0, 128
        %1110 = vxpose.xlu0.b32.cont [15/16] 0.0, 128
        %1111 = vxpose.xlu0.b32.end [16/16] 0.0, 128
        %v1112 = vpop.trf.xlu0
        %v1113 = vpop.trf.xlu0
        %v1114 = vpop.trf.xlu0
        %v1115 = vpop.trf.xlu0
        %v1116 = vpop.trf.xlu0
        %v1117 = vpop.trf.xlu0
        %v1118 = vpop.trf.xlu0
        %v1119 = vpop.trf.xlu0
        %v1120 = vpop.trf.xlu0
        %v1121 = vpop.trf.xlu0
        %v1122 = vpop.trf.xlu0
        %v1123 = vpop.trf.xlu0
        %v1124 = vpop.trf.xlu0
        %v1125 = vpop.trf.xlu0
        %v1126 = vpop.trf.xlu0
        %v1127 = vpop.trf.xlu0
        %1128 = vxpose.xlu0.b32.start [1/16] %v1042, 128
        %1129 = vxpose.xlu0.b32.cont [2/16] 0.0, 128
        %1130 = vxpose.xlu0.b32.cont [3/16] 0.0, 128
        %1131 = vxpose.xlu0.b32.cont [4/16] 0.0, 128
        %1132 = vxpose.xlu0.b32.cont [5/16] 0.0, 128
        %1133 = vxpose.xlu0.b32.cont [6/16] 0.0, 128
        %1134 = vxpose.xlu0.b32.cont [7/16] 0.0, 128
        %1135 = vxpose.xlu0.b32.cont [8/16] 0.0, 128
        %1136 = vxpose.xlu0.b32.cont [9/16] 0.0, 128
        %1137 = vxpose.xlu0.b32.cont [10/16] 0.0, 128
        %1138 = vxpose.xlu0.b32.cont [11/16] 0.0, 128
        %1139 = vxpose.xlu0.b32.cont [12/16] 0.0, 128
        %1140 = vxpose.xlu0.b32.cont [13/16] 0.0, 128
        %1141 = vxpose.xlu0.b32.cont [14/16] 0.0, 128
        %1142 = vxpose.xlu0.b32.cont [15/16] 0.0, 128
        %1143 = vxpose.xlu0.b32.end [16/16] 0.0, 128
        %v1144 = vpop.trf.xlu0
        %v1145 = vpop.trf.xlu0
        %v1146 = vpop.trf.xlu0
        %v1147 = vpop.trf.xlu0
        %v1148 = vpop.trf.xlu0
        %v1149 = vpop.trf.xlu0
        %v1150 = vpop.trf.xlu0
        %v1151 = vpop.trf.xlu0
        %v1152 = vpop.trf.xlu0
        %v1153 = vpop.trf.xlu0
        %v1154 = vpop.trf.xlu0
        %v1155 = vpop.trf.xlu0
        %v1156 = vpop.trf.xlu0
        %v1157 = vpop.trf.xlu0
        %v1158 = vpop.trf.xlu0
        %v1159 = vpop.trf.xlu0
        %1160 = vxpose.xlu0.b32.start [1/16] %v1068, 128
        %1161 = vxpose.xlu0.b32.cont [2/16] 0.0, 128
        %1162 = vxpose.xlu0.b32.cont [3/16] 0.0, 128
        %1163 = vxpose.xlu0.b32.cont [4/16] 0.0, 128
        %1164 = vxpose.xlu0.b32.cont [5/16] 0.0, 128
        %1165 = vxpose.xlu0.b32.cont [6/16] 0.0, 128
        %1166 = vxpose.xlu0.b32.cont [7/16] 0.0, 128
        %1167 = vxpose.xlu0.b32.cont [8/16] 0.0, 128
        %1168 = vxpose.xlu0.b32.cont [9/16] 0.0, 128
        %1169 = vxpose.xlu0.b32.cont [10/16] 0.0, 128
        %1170 = vxpose.xlu0.b32.cont [11/16] 0.0, 128
        %1171 = vxpose.xlu0.b32.cont [12/16] 0.0, 128
        %1172 = vxpose.xlu0.b32.cont [13/16] 0.0, 128
        %1173 = vxpose.xlu0.b32.cont [14/16] 0.0, 128
        %1174 = vxpose.xlu0.b32.cont [15/16] 0.0, 128
        %1175 = vxpose.xlu0.b32.end [16/16] 0.0, 128
        %v1176 = vpop.trf.xlu0
        %v1177 = vpop.trf.xlu0
        %v1178 = vpop.trf.xlu0
        %v1179 = vpop.trf.xlu0
        %v1180 = vpop.trf.xlu0
        %v1181 = vpop.trf.xlu0
        %v1182 = vpop.trf.xlu0
        %v1183 = vpop.trf.xlu0
        %v1184 = vpop.trf.xlu0
        %v1185 = vpop.trf.xlu0
        %v1186 = vpop.trf.xlu0
        %v1187 = vpop.trf.xlu0
        %v1188 = vpop.trf.xlu0
        %v1189 = vpop.trf.xlu0
        %v1190 = vpop.trf.xlu0
        %v1191 = vpop.trf.xlu0
        %1192 = vxpose.xlu0.b32.start [1/16] %v1094, 128
        %1193 = vxpose.xlu0.b32.cont [2/16] 0.0, 128
        %1194 = vxpose.xlu0.b32.cont [3/16] 0.0, 128
        %1195 = vxpose.xlu0.b32.cont [4/16] 0.0, 128
        %1196 = vxpose.xlu0.b32.cont [5/16] 0.0, 128
        %1197 = vxpose.xlu0.b32.cont [6/16] 0.0, 128
        %1198 = vxpose.xlu0.b32.cont [7/16] 0.0, 128
        %1199 = vxpose.xlu0.b32.cont [8/16] 0.0, 128
        %1200 = vxpose.xlu0.b32.cont [9/16] 0.0, 128
        %1201 = vxpose.xlu0.b32.cont [10/16] 0.0, 128
        %1202 = vxpose.xlu0.b32.cont [11/16] 0.0, 128
        %1203 = vxpose.xlu0.b32.cont [12/16] 0.0, 128
        %1204 = vxpose.xlu0.b32.cont [13/16] 0.0, 128
        %1205 = vxpose.xlu0.b32.cont [14/16] 0.0, 128
        %1206 = vxpose.xlu0.b32.cont [15/16] 0.0, 128
        %1207 = vxpose.xlu0.b32.end [16/16] 0.0, 128
        %v1208 = vpop.trf.xlu0
        %v1209 = vpop.trf.xlu0
        %v1210 = vpop.trf.xlu0
        %v1211 = vpop.trf.xlu0
        %v1212 = vpop.trf.xlu0
        %v1213 = vpop.trf.xlu0
        %v1214 = vpop.trf.xlu0
        %v1215 = vpop.trf.xlu0
        %v1216 = vpop.trf.xlu0
        %v1217 = vpop.trf.xlu0
        %v1218 = vpop.trf.xlu0
        %v1219 = vpop.trf.xlu0
        %v1220 = vpop.trf.xlu0
        %v1221 = vpop.trf.xlu0
        %v1222 = vpop.trf.xlu0
        %v1223 = vpop.trf.xlu0
        %v1224 = vrot.slane %v1176, 4
        %vm1225 = vcmask 1047556
        %v1226 = vsel %vm1225, %v1224, %v1112
        %v1227 = vrot.slane %v1112, 4
        %v1228 = vsel %vm1225, %v1176, %v1227
        %v1230 = vunpack.c.l.s4 1983009808
        %v1231 = vunpack.c.0.s8 %v1230
        %v1232 = vperm.slane %v1226, %v1231
        %v1234 = vunpack.c.l.s4 1983009808
        %v1235 = vunpack.c.0.s8 %v1234
        %v1236 = vperm.slane %v1228, %v1235
        %v1237 = vrot.slane %v1208, 4
        %v1238 = vsel %vm1225, %v1237, %v1144
        %v1239 = vrot.slane %v1144, 4
        %v1240 = vsel %vm1225, %v1208, %v1239
        %v1242 = vunpack.c.l.s4 1983009808
        %v1243 = vunpack.c.0.s8 %v1242
        %v1244 = vperm.slane %v1238, %v1243
        %v1246 = vunpack.c.l.s4 1983009808
        %v1247 = vunpack.c.0.s8 %v1246
        %v1248 = vperm.slane %v1240, %v1247
        %v1249 = vrot.slane %v1244, 4
        %v1250 = vsel %vm1225, %v1249, %v1232
        %v1251 = vrot.slane %v1232, 4
        %v1252 = vsel %vm1225, %v1244, %v1251
        %v1254 = vunpack.c.l.s4 1934713408
        %v1255 = vunpack.c.0.s8 %v1254
        %v1256 = vperm.slane %v1250, %v1255
        %v1258 = vunpack.c.l.s4 1934713408
        %v1259 = vunpack.c.0.s8 %v1258
        %v1260 = vperm.slane %v1252, %v1259
        %v1261 = vrot.slane %v1248, 4
        %v1262 = vsel %vm1225, %v1261, %v1236
        %v1263 = vrot.slane %v1236, 4
        %v1264 = vsel %vm1225, %v1248, %v1263
        %v1266 = vunpack.c.l.s4 1934713408
        %v1267 = vunpack.c.0.s8 %v1266
        %v1268 = vperm.slane %v1262, %v1267
        %v1270 = vunpack.c.l.s4 1934713408
        %v1271 = vunpack.c.0.s8 %v1270
        %v1272 = vperm.slane %v1264, %v1271
        %v1273 = vrot.slane %v1256, 4
        %v1274 = vsel %vm1225, 0.0, %v1273
        %v1275 = vrot.slane %v1260, 4
        %v1276 = vsel %vm1225, 0.0, %v1275
        %v1277 = vrot.slane %v1268, 4
        %v1278 = vsel %vm1225, 0.0, %v1277
        %v1279 = vrot.slane %v1272, 4
        %v1280 = vsel %vm1225, 0.0, %v1279
        %v1281 = vsel %vm1225, %v1275, %v1256
        %v1283 = vunpack.c.l.s4 1983009808
        %v1284 = vunpack.c.0.s8 %v1283
        %v1285 = vperm.slane %v1281, %v1284
        %v1286 = vrot.slane %v1276, 4
        %v1287 = vsel %vm1225, %v1286, %v1274
        %v1289 = vunpack.c.l.s4 1983009808
        %v1290 = vunpack.c.0.s8 %v1289
        %v1291 = vperm.slane %v1287, %v1290
        %v1292 = vsel %vm1225, %v1279, %v1268
        %v1294 = vunpack.c.l.s4 1983009808
        %v1295 = vunpack.c.0.s8 %v1294
        %v1296 = vperm.slane %v1292, %v1295
        %v1297 = vrot.slane %v1280, 4
        %v1298 = vsel %vm1225, %v1297, %v1278
        %v1300 = vunpack.c.l.s4 1983009808
        %v1301 = vunpack.c.0.s8 %v1300
        %v1302 = vperm.slane %v1298, %v1301
        %v1303 = vrot.slane %v1291, 4
        %v1304 = vsel %vm1225, %v1303, %v1285
        %v1305 = vrot.slane %v1285, 4
        %v1306 = vsel %vm1225, %v1291, %v1305
        %v1308 = vunpack.c.l.s4 1934713408
        %v1309 = vunpack.c.0.s8 %v1308
        %v1310 = vperm.slane %v1304, %v1309
        %v1312 = vunpack.c.l.s4 1934713408
        %v1313 = vunpack.c.0.s8 %v1312
        %v1314 = vperm.slane %v1306, %v1313
        %v1315 = vrot.slane %v1302, 4
        %v1316 = vsel %vm1225, %v1315, %v1296
        %v1317 = vrot.slane %v1296, 4
        %v1318 = vsel %vm1225, %v1302, %v1317
        %v1320 = vunpack.c.l.s4 1934713408
        %v1321 = vunpack.c.0.s8 %v1320
        %v1322 = vperm.slane %v1316, %v1321
        %v1324 = vunpack.c.l.s4 1934713408
        %v1325 = vunpack.c.0.s8 %v1324
        %v1326 = vperm.slane %v1318, %v1325
        %v1327 = vrot.slane %v1322, 4
        %v1328 = vsel %vm1225, %v1327, %v1310
        %v1329 = vrot.slane %v1310, 4
        %v1330 = vsel %vm1225, %v1322, %v1329
        %v1331 = vrot.slane %v1326, 4
        %v1332 = vsel %vm1225, %v1331, %v1314
        %v1333 = vrot.slane %v1314, 4
        %v1334 = vsel %vm1225, %v1326, %v1333
        %1336 = vrot.lane.b32.xlu0 %v1330, 8
        %v1337 = vpop.permute.xlu0 %1336
        %1340 = vrot.lane.b32.xlu0 %v1332, 16
        %v1341 = vpop.permute.xlu0 %1340
        %1344 = vrot.lane.b32.xlu0 %v1334, 24
        %v1345 = vpop.permute.xlu0 %1344
        %v1347 = vsel %vm705, %v1328, %v1337
        %vm1348 = vcmask 130048
        %v1349 = vsel %vm1348, %v1347, %v1341
        %vm1350 = vcmask 195584
        %v1351 = vsel %vm1350, %v1349, %v1345
        %v1352 = vld [vmem:[%s4] sm:$0xff]
        %v1353 = vld [vmem:[%s4 + $0x8] sm:$0xff]
        %v1354 = vld [vmem:[%s4 + $0x10] sm:$0xff]
        %v1355 = vld [vmem:[%s4 + $0x18] sm:$0xff]
        %v1356 = vld [vmem:[%s5] sm:$0x1]
        %v1358 = vperm.slane %v1356, 0
        %v1361 = vsel %vm534, %v1351, 0
        %1363 = vmatpush.msra.mxu0 0.0
        %1364 = vmatpush.msra.mxu0 0.0
        %1365 = vmatpush.msra.mxu0 0.0
        %1366 = vmatpush.msra.mxu0 0.0
        %1367 = vmatpush.msra.mxu0 0.0
        %1368 = vmatpush.msra.mxu0 0.0
        %1369 = vmatpush.msra.mxu0 0.0
        %1370 = vmatpush.msra.mxu0 0.0
        %1371 = vmatpush.msra.mxu0 0.0
        %1372 = vmatpush.msra.mxu0 0.0
        %1373 = vmatpush.msra.mxu0 0.0
        %1374 = vmatpush.msra.mxu0 0.0
        %1375 = vmatpush.msra.mxu0 %v1355
        %1376 = vmatpush.msra.mxu0 %v1354
        %1377 = vmatpush.msra.mxu0 %v1353
        %1378 = vmatpush.msra.mxu0 %v1352
        %1379 = vmatmul.f32.gmra.mxu0 %v1361
        %v1380 = vpop.f32.mrf.mxu0
        %v1381 = vadd.f32 %v1358, %v1380
        %1382 = vdwg.mxu0
        %v1383 = vadd.f32 %v1381, %v525
        %v1384 = vld [vmem:[%s6] sm:$0x1]
        %v1385 = vld [vmem:[%s7] sm:$0x1]
        %v1386 = vsel %vm534, %v1383, 0.0
        %1387 = vadd.xlane.f32.xlu0 %v1386
        %v1388 = vpop.xlane.xlu0 %1387
        %v1389 = vrcp.pop 32.0
        %v1390 = vmul.f32 32.0, %v1389
        %v1391 = vsub.f32 1.0, %v1390
        %v1392 = vmul.f32 %v1389, %v1391
        %v1393 = vadd.f32 %v1389, %v1392
        %vm1394 = vweird.f32 %v1389
        %v1395 = vsel %vm1394, %v1389, %v1393
        %v1396 = vmul.f32 %v1388, %v1395
        %v1397 = vsub.f32 %v1383, %v1396
        %v1398 = vmul.f32 %v1397, %v1397
        %v1399 = vsel %vm534, %v1398, 0.0
        %1400 = vadd.xlane.f32.xlu0 %v1399
        %v1401 = vpop.xlane.xlu0 %1400
        %v1402 = vmul.f32 %v1401, %v1395
        %v1403 = vadd.f32 %v1402, 1e-05
        %v1404 = vrsqrt.pop %v1403
        %v1405 = vmul.f32 %v1404, %v1403
        %v1406 = vmul.f32 %v1405, %v1404
        %v1407 = vmul.f32 0.5, %v1406
        %v1408 = vsub.f32 1.5, %v1407
        %v1409 = vmul.f32 %v1404, %v1408
        %vm1410 = vweird.f32 %v1403
        %vm1411 = vweird.f32 %v1404
        %vm1412 = vmor %vm1410, %vm1411
        %v1413 = vsel %vm1412, %v1404, %v1409
        %v1414 = vmul.f32 %v1397, %v1413
        %v1416 = vperm.slane %v1384, 0
        %v1418 = vmul.f32 %v1414, %v1416
        %v1420 = vperm.slane %v1385, 0
        %v1422 = vadd.f32 %v1418, %v1420
        %v1423 = vld [vmem:[%s8] sm:$0xff]
        %v1424 = vld [vmem:[%s8 + $0x8] sm:$0xff]
        %v1425 = vld [vmem:[%s8 + $0x10] sm:$0xff]
        %v1426 = vld [vmem:[%s8 + $0x18] sm:$0xff]
        %v1427 = vld [vmem:[%s9] sm:$0x1]
        %v1429 = vperm.slane %v1427, 0
        %v1432 = vsel %vm534, %v1422, 0
        %1434 = vmatpush.msra.mxu0 0.0
        %1435 = vmatpush.msra.mxu0 0.0
        %1436 = vmatpush.msra.mxu0 0.0
        %1437 = vmatpush.msra.mxu0 0.0
        %1438 = vmatpush.msra.mxu0 0.0
        %1439 = vmatpush.msra.mxu0 0.0
        %1440 = vmatpush.msra.mxu0 0.0
        %1441 = vmatpush.msra.mxu0 0.0
        %1442 = vmatpush.msra.mxu0 0.0
        %1443 = vmatpush.msra.mxu0 0.0
        %1444 = vmatpush.msra.mxu0 0.0
        %1445 = vmatpush.msra.mxu0 0.0
        %1446 = vmatpush.msra.mxu0 %v1426
        %1447 = vmatpush.msra.mxu0 %v1425
        %1448 = vmatpush.msra.mxu0 %v1424
        %1449 = vmatpush.msra.mxu0 %v1423
        %1450 = vmatmul.f32.gmra.mxu0 %v1432
        %v1451 = vpop.f32.mrf.mxu0
        %v1452 = vadd.f32 %v1429, %v1451
        %1453 = vdwg.mxu0
        %v1454 = vld [vmem:[%s10] sm:$0xff]
        %v1455 = vld [vmem:[%s10 + $0x8] sm:$0xff]
        %s1456 = scalar_lea.vmem %s10, 16
        %v1457 = vld [vmem:[%s1456] sm:$0xff]
        %v1458 = vld [vmem:[%s1456 + $0x8] sm:$0xff]
        %v1460 = vsel %vm1348, 0.0, 0
        %1462 = vmatpush.msra.mxu0 0.0
        %1463 = vmatpush.msra.mxu0 0.0
        %1464 = vmatpush.msra.mxu0 0.0
        %1465 = vmatpush.msra.mxu0 0.0
        %1466 = vmatpush.msra.mxu0 0.0
        %1467 = vmatpush.msra.mxu0 0.0
        %1468 = vmatpush.msra.mxu0 0.0
        %1469 = vmatpush.msra.mxu0 0.0
        %1470 = vmatpush.msra.mxu0 0.0
        %1471 = vmatpush.msra.mxu0 0.0
        %1472 = vmatpush.msra.mxu0 0.0
        %1473 = vmatpush.msra.mxu0 0.0
        %1474 = vmatpush.msra.mxu0 0.0
        %1475 = vmatpush.msra.mxu0 0.0
        %1476 = vmatpush.msra.mxu0 %v1455
        %1477 = vmatpush.msra.mxu0 %v1454
        %1478 = vmatmul.f32.gmra.mxu0 %v1460
        %v1479 = vpop.f32.mrf.mxu0
        %v1480 = vadd.f32 0.0, %v1479
        %1481 = vdwg.mxu0
        %v1482 = vadd.f32 %v1452, %v1480
        %1483 = vmatpush.msra.mxu0 0.0
        %1484 = vmatpush.msra.mxu0 0.0
        %1485 = vmatpush.msra.mxu0 0.0
        %1486 = vmatpush.msra.mxu0 0.0
        %1487 = vmatpush.msra.mxu0 0.0
        %1488 = vmatpush.msra.mxu0 0.0
        %1489 = vmatpush.msra.mxu0 0.0
        %1490 = vmatpush.msra.mxu0 0.0
        %1491 = vmatpush.msra.mxu0 0.0
        %1492 = vmatpush.msra.mxu0 0.0
        %1493 = vmatpush.msra.mxu0 0.0
        %1494 = vmatpush.msra.mxu0 0.0
        %1495 = vmatpush.msra.mxu0 0.0
        %1496 = vmatpush.msra.mxu0 0.0
        %1497 = vmatpush.msra.mxu0 %v1458
        %1498 = vmatpush.msra.mxu0 %v1457
        %1499 = vmatmul.f32.gmra.mxu0 %v1460
        %v1500 = vpop.f32.mrf.mxu0
        %v1501 = vadd.f32 0.0, %v1500
        %1502 = vdwg.mxu0
        %v1504 = vrot.slane %v1501, 1
        %1505 = vrot.lane.b32.xlu0 %v1504, 64
        %v1506 = vpop.permute.xlu0 %1505
        %v1508 = vadd.f32 %v1452, %v1506
        %v1509 = vxor.u32 %v1482, 2147483648
        %v1510 = vmul.f32 %v1509, 1.442695
        %v1511 = vpow.pop %v1510
        %v1512 = vadd.f32 %v1511, 1.0
        %v1513 = vrcp.pop %v1512
        %v1514 = vmul.f32 %v1512, %v1513
        %v1515 = vsub.f32 1.0, %v1514
        %v1516 = vmul.f32 %v1513, %v1515
        %v1517 = vadd.f32 %v1513, %v1516
        %vm1518 = vweird.f32 %v1512
        %vm1519 = vweird.f32 %v1513
        %vm1520 = vmor %vm1518, %vm1519
        %v1521 = vsel %vm1520, %v1513, %v1517
        %v1522 = vand.u32 2147483647, %v1512
        %vm1523 = vcmp.eq.f32.partialorder %v1522, 8.507059e+37
        %v1524 = vand.u32 %v1512, 2147483648
        %v1525 = vor.u32 1.1754944e-38, %v1524
        %v1526 = vsel %vm1523, %v1525, %v1521
        %v1527 = vmul.f32 1.0, %v1526
        %v1528 = vtanh.pop %v1482
        %v1529 = vmul.f32 %v1527, 0.0
        %1531 = vrot.lane.b32.xlu0 %v1528, 96
        %v1532 = vpop.permute.xlu0 %1531
        %v1534 = vmul.f32 %v1527, %v1532
        %1536 = vrot.lane.b32.xlu0 %v1534, 16
        %v1537 = vpop.permute.xlu0 %1536
        %v1539 = vadd.f32 %v1529, %v1537
        %v1540 = vtanh.pop %v1539
        %1542 = vrot.lane.b32.xlu0 %v1540, 32
        %v1543 = vpop.permute.xlu0 %1542
        %v1545 = vmul.f32 %v1527, %v1543
        %v1546 = vxor.u32 %v1508, 2147483648
        %v1547 = vmul.f32 %v1546, 1.442695
        %v1548 = vpow.pop %v1547
        %v1549 = vadd.f32 %v1548, 1.0
        %v1550 = vrcp.pop %v1549
        %v1551 = vmul.f32 %v1549, %v1550
        %v1552 = vsub.f32 1.0, %v1551
        %v1553 = vmul.f32 %v1550, %v1552
        %v1554 = vadd.f32 %v1550, %v1553
        %vm1555 = vweird.f32 %v1549
        %vm1556 = vweird.f32 %v1550
        %vm1557 = vmor %vm1555, %vm1556
        %v1558 = vsel %vm1557, %v1550, %v1554
        %v1559 = vand.u32 2147483647, %v1549
        %vm1560 = vcmp.eq.f32.partialorder %v1559, 8.507059e+37
        %v1561 = vand.u32 %v1549, 2147483648
        %v1562 = vor.u32 1.1754944e-38, %v1561
        %v1563 = vsel %vm1560, %v1562, %v1558
        %v1564 = vmul.f32 1.0, %v1563
        %v1565 = vtanh.pop %v1508
        %v1566 = vmul.f32 %v1564, 0.0
        %1568 = vrot.lane.b32.xlu0 %v1565, 96
        %v1569 = vpop.permute.xlu0 %1568
        %v1571 = vmul.f32 %v1564, %v1569
        %1573 = vrot.lane.b32.xlu0 %v1571, 16
        %v1574 = vpop.permute.xlu0 %1573
        %v1576 = vadd.f32 %v1566, %v1574
        %v1577 = vtanh.pop %v1576
        %1579 = vrot.lane.b32.xlu0 %v1577, 32
        %v1580 = vpop.permute.xlu0 %1579
        %v1582 = vmul.f32 %v1564, %v1580
        %1584 = vrot.lane.b32.xlu0 %v1545, 80
        %v1585 = vpop.permute.xlu0 %1584
        %v1586 = vsel %vm1348, %v1585, 0
        %1588 = vmatpush.msra.mxu0 0.0
        %1589 = vmatpush.msra.mxu0 0.0
        %1590 = vmatpush.msra.mxu0 0.0
        %1591 = vmatpush.msra.mxu0 0.0
        %1592 = vmatpush.msra.mxu0 0.0
        %1593 = vmatpush.msra.mxu0 0.0
        %1594 = vmatpush.msra.mxu0 0.0
        %1595 = vmatpush.msra.mxu0 0.0
        %1596 = vmatpush.msra.mxu0 0.0
        %1597 = vmatpush.msra.mxu0 0.0
        %1598 = vmatpush.msra.mxu0 0.0
        %1599 = vmatpush.msra.mxu0 0.0
        %1600 = vmatpush.msra.mxu0 0.0
        %1601 = vmatpush.msra.mxu0 0.0
        %1602 = vmatpush.msra.mxu0 %v1455
        %1603 = vmatpush.msra.mxu0 %v1454
        %1604 = vmatmul.f32.gmra.mxu0 %v1586
        %v1605 = vpop.f32.mrf.mxu0
        %v1606 = vadd.f32 0.0, %v1605
        %1607 = vdwg.mxu0
        %v1609 = vrot.slane %v1606, 7
        %v1611 = vadd.f32 %v1452, %v1609
        %v1613 = vrot.slane %v1582, 7
        %1614 = vrot.lane.b32.xlu0 %v1613, 16
        %v1615 = vpop.permute.xlu0 %1614
        %v1616 = vsel %vm1348, %v1615, 0
        %1618 = vmatpush.msra.mxu0 0.0
        %1619 = vmatpush.msra.mxu0 0.0
        %1620 = vmatpush.msra.mxu0 0.0
        %1621 = vmatpush.msra.mxu0 0.0
        %1622 = vmatpush.msra.mxu0 0.0
        %1623 = vmatpush.msra.mxu0 0.0
        %1624 = vmatpush.msra.mxu0 0.0
        %1625 = vmatpush.msra.mxu0 0.0
        %1626 = vmatpush.msra.mxu0 0.0
        %1627 = vmatpush.msra.mxu0 0.0
        %1628 = vmatpush.msra.mxu0 0.0
        %1629 = vmatpush.msra.mxu0 0.0
        %1630 = vmatpush.msra.mxu0 0.0
        %1631 = vmatpush.msra.mxu0 0.0
        %1632 = vmatpush.msra.mxu0 %v1458
        %1633 = vmatpush.msra.mxu0 %v1457
        %1634 = vmatmul.f32.gmra.mxu0 %v1616
        %v1635 = vpop.f32.mrf.mxu0
        %v1636 = vadd.f32 0.0, %v1635
        %1637 = vdwg.mxu0
        %v1639 = vrot.slane %v1636, 2
        %1640 = vrot.lane.b32.xlu0 %v1639, 64
        %v1641 = vpop.permute.xlu0 %1640
        %v1643 = vadd.f32 %v1452, %v1641
        %v1644 = vxor.u32 %v1611, 2147483648
        %v1645 = vmul.f32 %v1644, 1.442695
        %v1646 = vpow.pop %v1645
        %v1647 = vadd.f32 %v1646, 1.0
        %v1648 = vrcp.pop %v1647
        %v1649 = vmul.f32 %v1647, %v1648
        %v1650 = vsub.f32 1.0, %v1649
        %v1651 = vmul.f32 %v1648, %v1650
        %v1652 = vadd.f32 %v1648, %v1651
        %vm1653 = vweird.f32 %v1647
        %vm1654 = vweird.f32 %v1648
        %vm1655 = vmor %vm1653, %vm1654
        %v1656 = vsel %vm1655, %v1648, %v1652
        %v1657 = vand.u32 2147483647, %v1647
        %vm1658 = vcmp.eq.f32.partialorder %v1657, 8.507059e+37
        %v1659 = vand.u32 %v1647, 2147483648
        %v1660 = vor.u32 1.1754944e-38, %v1659
        %v1661 = vsel %vm1658, %v1660, %v1656
        %v1662 = vmul.f32 1.0, %v1661
        %v1663 = vtanh.pop %v1611
        %v1665 = vrot.slane %v1539, 7
        %v1667 = vmul.f32 %v1662, %v1665
        %1669 = vrot.lane.b32.xlu0 %v1663, 96
        %v1670 = vpop.permute.xlu0 %1669
        %v1672 = vmul.f32 %v1662, %v1670
        %1674 = vrot.lane.b32.xlu0 %v1672, 16
        %v1675 = vpop.permute.xlu0 %1674
        %v1677 = vadd.f32 %v1667, %v1675
        %v1678 = vtanh.pop %v1677
        %1680 = vrot.lane.b32.xlu0 %v1678, 32
        %v1681 = vpop.permute.xlu0 %1680
        %v1683 = vmul.f32 %v1662, %v1681
        %v1684 = vxor.u32 %v1643, 2147483648
        %v1685 = vmul.f32 %v1684, 1.442695
        %v1686 = vpow.pop %v1685
        %v1687 = vadd.f32 %v1686, 1.0
        %v1688 = vrcp.pop %v1687
        %v1689 = vmul.f32 %v1687, %v1688
        %v1690 = vsub.f32 1.0, %v1689
        %v1691 = vmul.f32 %v1688, %v1690
        %v1692 = vadd.f32 %v1688, %v1691
        %vm1693 = vweird.f32 %v1687
        %vm1694 = vweird.f32 %v1688
        %vm1695 = vmor %vm1693, %vm1694
        %v1696 = vsel %vm1695, %v1688, %v1692
        %v1697 = vand.u32 2147483647, %v1687
        %vm1698 = vcmp.eq.f32.partialorder %v1697, 8.507059e+37
        %v1699 = vand.u32 %v1687, 2147483648
        %v1700 = vor.u32 1.1754944e-38, %v1699
        %v1701 = vsel %vm1698, %v1700, %v1696
        %v1702 = vmul.f32 1.0, %v1701
        %v1703 = vtanh.pop %v1643
        %v1705 = vrot.slane %v1576, 1
        %v1707 = vmul.f32 %v1702, %v1705
        %1709 = vrot.lane.b32.xlu0 %v1703, 96
        %v1710 = vpop.permute.xlu0 %1709
        %v1712 = vmul.f32 %v1702, %v1710
        %1714 = vrot.lane.b32.xlu0 %v1712, 16
        %v1715 = vpop.permute.xlu0 %1714
        %v1717 = vadd.f32 %v1707, %v1715
        %v1718 = vtanh.pop %v1717
        %1720 = vrot.lane.b32.xlu0 %v1718, 32
        %v1721 = vpop.permute.xlu0 %1720
        %v1723 = vmul.f32 %v1702, %v1721
        %v1725 = vrot.slane %v1683, 1
        %1726 = vrot.lane.b32.xlu0 %v1725, 80
        %v1727 = vpop.permute.xlu0 %1726
        %v1728 = vsel %vm1348, %v1727, 0
        %1730 = vmatpush.msra.mxu0 0.0
        %1731 = vmatpush.msra.mxu0 0.0
        %1732 = vmatpush.msra.mxu0 0.0
        %1733 = vmatpush.msra.mxu0 0.0
        %1734 = vmatpush.msra.mxu0 0.0
        %1735 = vmatpush.msra.mxu0 0.0
        %1736 = vmatpush.msra.mxu0 0.0
        %1737 = vmatpush.msra.mxu0 0.0
        %1738 = vmatpush.msra.mxu0 0.0
        %1739 = vmatpush.msra.mxu0 0.0
        %1740 = vmatpush.msra.mxu0 0.0
        %1741 = vmatpush.msra.mxu0 0.0
        %1742 = vmatpush.msra.mxu0 0.0
        %1743 = vmatpush.msra.mxu0 0.0
        %1744 = vmatpush.msra.mxu0 %v1455
        %1745 = vmatpush.msra.mxu0 %v1454
        %1746 = vmatmul.f32.gmra.mxu0 %v1728
        %v1747 = vpop.f32.mrf.mxu0
        %v1748 = vadd.f32 0.0, %v1747
        %1749 = vdwg.mxu0
        %v1751 = vrot.slane %v1748, 6
        %v1753 = vadd.f32 %v1452, %v1751
        %v1755 = vrot.slane %v1723, 6
        %1756 = vrot.lane.b32.xlu0 %v1755, 16
        %v1757 = vpop.permute.xlu0 %1756
        %v1758 = vsel %vm1348, %v1757, 0
        %1760 = vmatpush.msra.mxu0 0.0
        %1761 = vmatpush.msra.mxu0 0.0
        %1762 = vmatpush.msra.mxu0 0.0
        %1763 = vmatpush.msra.mxu0 0.0
        %1764 = vmatpush.msra.mxu0 0.0
        %1765 = vmatpush.msra.mxu0 0.0
        %1766 = vmatpush.msra.mxu0 0.0
        %1767 = vmatpush.msra.mxu0 0.0
        %1768 = vmatpush.msra.mxu0 0.0
        %1769 = vmatpush.msra.mxu0 0.0
        %1770 = vmatpush.msra.mxu0 0.0
        %1771 = vmatpush.msra.mxu0 0.0
        %1772 = vmatpush.msra.mxu0 0.0
        %1773 = vmatpush.msra.mxu0 0.0
        %1774 = vmatpush.msra.mxu0 %v1458
        %1775 = vmatpush.msra.mxu0 %v1457
        %1776 = vmatmul.f32.gmra.mxu0 %v1758
        %v1777 = vpop.f32.mrf.mxu0
        %v1778 = vadd.f32 0.0, %v1777
        %1779 = vdwg.mxu0
        %v1781 = vrot.slane %v1778, 3
        %1782 = vrot.lane.b32.xlu0 %v1781, 64
        %v1783 = vpop.permute.xlu0 %1782
        %v1785 = vadd.f32 %v1452, %v1783
        %v1786 = vxor.u32 %v1753, 2147483648
        %v1787 = vmul.f32 %v1786, 1.442695
        %v1788 = vpow.pop %v1787
        %v1789 = vadd.f32 %v1788, 1.0
        %v1790 = vrcp.pop %v1789
        %v1791 = vmul.f32 %v1789, %v1790
        %v1792 = vsub.f32 1.0, %v1791
        %v1793 = vmul.f32 %v1790, %v1792
        %v1794 = vadd.f32 %v1790, %v1793
        %vm1795 = vweird.f32 %v1789
        %vm1796 = vweird.f32 %v1790
        %vm1797 = vmor %vm1795, %vm1796
        %v1798 = vsel %vm1797, %v1790, %v1794
        %v1799 = vand.u32 2147483647, %v1789
        %vm1800 = vcmp.eq.f32.partialorder %v1799, 8.507059e+37
        %v1801 = vand.u32 %v1789, 2147483648
        %v1802 = vor.u32 1.1754944e-38, %v1801
        %v1803 = vsel %vm1800, %v1802, %v1798
        %v1804 = vmul.f32 1.0, %v1803
        %v1805 = vtanh.pop %v1753
        %v1807 = vrot.slane %v1677, 7
        %v1809 = vmul.f32 %v1804, %v1807
        %1811 = vrot.lane.b32.xlu0 %v1805, 96
        %v1812 = vpop.permute.xlu0 %1811
        %v1814 = vmul.f32 %v1804, %v1812
        %1816 = vrot.lane.b32.xlu0 %v1814, 16
        %v1817 = vpop.permute.xlu0 %1816
        %v1819 = vadd.f32 %v1809, %v1817
        %v1820 = vtanh.pop %v1819
        %1822 = vrot.lane.b32.xlu0 %v1820, 32
        %v1823 = vpop.permute.xlu0 %1822
        %v1825 = vmul.f32 %v1804, %v1823
        %v1826 = vxor.u32 %v1785, 2147483648
        %v1827 = vmul.f32 %v1826, 1.442695
        %v1828 = vpow.pop %v1827
        %v1829 = vadd.f32 %v1828, 1.0
        %v1830 = vrcp.pop %v1829
        %v1831 = vmul.f32 %v1829, %v1830
        %v1832 = vsub.f32 1.0, %v1831
        %v1833 = vmul.f32 %v1830, %v1832
        %v1834 = vadd.f32 %v1830, %v1833
        %vm1835 = vweird.f32 %v1829
        %vm1836 = vweird.f32 %v1830
        %vm1837 = vmor %vm1835, %vm1836
        %v1838 = vsel %vm1837, %v1830, %v1834
        %v1839 = vand.u32 2147483647, %v1829
        %vm1840 = vcmp.eq.f32.partialorder %v1839, 8.507059e+37
        %v1841 = vand.u32 %v1829, 2147483648
        %v1842 = vor.u32 1.1754944e-38, %v1841
        %v1843 = vsel %vm1840, %v1842, %v1838
        %v1844 = vmul.f32 1.0, %v1843
        %v1845 = vtanh.pop %v1785
        %v1847 = vrot.slane %v1717, 1
        %v1849 = vmul.f32 %v1844, %v1847
        %1851 = vrot.lane.b32.xlu0 %v1845, 96
        %v1852 = vpop.permute.xlu0 %1851
        %v1854 = vmul.f32 %v1844, %v1852
        %1856 = vrot.lane.b32.xlu0 %v1854, 16
        %v1857 = vpop.permute.xlu0 %1856
        %v1859 = vadd.f32 %v1849, %v1857
        %v1860 = vtanh.pop %v1859
        %1862 = vrot.lane.b32.xlu0 %v1860, 32
        %v1863 = vpop.permute.xlu0 %1862
        %v1865 = vmul.f32 %v1844, %v1863
        %v1867 = vrot.slane %v1825, 2
        %1868 = vrot.lane.b32.xlu0 %v1867, 80
        %v1869 = vpop.permute.xlu0 %1868
        %v1870 = vsel %vm1348, %v1869, 0
        %1872 = vmatpush.msra.mxu0 0.0
        %1873 = vmatpush.msra.mxu0 0.0
        %1874 = vmatpush.msra.mxu0 0.0
        %1875 = vmatpush.msra.mxu0 0.0
        %1876 = vmatpush.msra.mxu0 0.0
        %1877 = vmatpush.msra.mxu0 0.0
        %1878 = vmatpush.msra.mxu0 0.0
        %1879 = vmatpush.msra.mxu0 0.0
        %1880 = vmatpush.msra.mxu0 0.0
        %1881 = vmatpush.msra.mxu0 0.0
        %1882 = vmatpush.msra.mxu0 0.0
        %1883 = vmatpush.msra.mxu0 0.0
        %1884 = vmatpush.msra.mxu0 0.0
        %1885 = vmatpush.msra.mxu0 0.0
        %1886 = vmatpush.msra.mxu0 %v1455
        %1887 = vmatpush.msra.mxu0 %v1454
        %1888 = vmatmul.f32.gmra.mxu0 %v1870
        %v1889 = vpop.f32.mrf.mxu0
        %v1890 = vadd.f32 0.0, %v1889
        %1891 = vdwg.mxu0
        %v1893 = vrot.slane %v1890, 5
        %v1895 = vadd.f32 %v1452, %v1893
        %v1897 = vrot.slane %v1865, 5
        %1898 = vrot.lane.b32.xlu0 %v1897, 16
        %v1899 = vpop.permute.xlu0 %1898
        %v1900 = vsel %vm1348, %v1899, 0
        %1902 = vmatpush.msra.mxu0 0.0
        %1903 = vmatpush.msra.mxu0 0.0
        %1904 = vmatpush.msra.mxu0 0.0
        %1905 = vmatpush.msra.mxu0 0.0
        %1906 = vmatpush.msra.mxu0 0.0
        %1907 = vmatpush.msra.mxu0 0.0
        %1908 = vmatpush.msra.mxu0 0.0
        %1909 = vmatpush.msra.mxu0 0.0
        %1910 = vmatpush.msra.mxu0 0.0
        %1911 = vmatpush.msra.mxu0 0.0
        %1912 = vmatpush.msra.mxu0 0.0
        %1913 = vmatpush.msra.mxu0 0.0
        %1914 = vmatpush.msra.mxu0 0.0
        %1915 = vmatpush.msra.mxu0 0.0
        %1916 = vmatpush.msra.mxu0 %v1458
        %1917 = vmatpush.msra.mxu0 %v1457
        %1918 = vmatmul.f32.gmra.mxu0 %v1900
        %v1919 = vpop.f32.mrf.mxu0
        %v1920 = vadd.f32 0.0, %v1919
        %1921 = vdwg.mxu0
        %v1923 = vrot.slane %v1920, 4
        %1924 = vrot.lane.b32.xlu0 %v1923, 64
        %v1925 = vpop.permute.xlu0 %1924
        %v1927 = vadd.f32 %v1452, %v1925
        %v1928 = vxor.u32 %v1895, 2147483648
        %v1929 = vmul.f32 %v1928, 1.442695
        %v1930 = vpow.pop %v1929
        %v1931 = vadd.f32 %v1930, 1.0
        %v1932 = vrcp.pop %v1931
        %v1933 = vmul.f32 %v1931, %v1932
        %v1934 = vsub.f32 1.0, %v1933
        %v1935 = vmul.f32 %v1932, %v1934
        %v1936 = vadd.f32 %v1932, %v1935
        %vm1937 = vweird.f32 %v1931
        %vm1938 = vweird.f32 %v1932
        %vm1939 = vmor %vm1937, %vm1938
        %v1940 = vsel %vm1939, %v1932, %v1936
        %v1941 = vand.u32 2147483647, %v1931
        %vm1942 = vcmp.eq.f32.partialorder %v1941, 8.507059e+37
        %v1943 = vand.u32 %v1931, 2147483648
        %v1944 = vor.u32 1.1754944e-38, %v1943
        %v1945 = vsel %vm1942, %v1944, %v1940
        %v1946 = vmul.f32 1.0, %v1945
        %v1947 = vtanh.pop %v1895
        %v1949 = vrot.slane %v1819, 7
        %v1951 = vmul.f32 %v1946, %v1949
        %1953 = vrot.lane.b32.xlu0 %v1947, 96
        %v1954 = vpop.permute.xlu0 %1953
        %v1956 = vmul.f32 %v1946, %v1954
        %1958 = vrot.lane.b32.xlu0 %v1956, 16
        %v1959 = vpop.permute.xlu0 %1958
        %v1961 = vadd.f32 %v1951, %v1959
        %v1962 = vtanh.pop %v1961
        %1964 = vrot.lane.b32.xlu0 %v1962, 32
        %v1965 = vpop.permute.xlu0 %1964
        %v1967 = vmul.f32 %v1946, %v1965
        %v1968 = vxor.u32 %v1927, 2147483648
        %v1969 = vmul.f32 %v1968, 1.442695
        %v1970 = vpow.pop %v1969
        %v1971 = vadd.f32 %v1970, 1.0
        %v1972 = vrcp.pop %v1971
        %v1973 = vmul.f32 %v1971, %v1972
        %v1974 = vsub.f32 1.0, %v1973
        %v1975 = vmul.f32 %v1972, %v1974
        %v1976 = vadd.f32 %v1972, %v1975
        %vm1977 = vweird.f32 %v1971
        %vm1978 = vweird.f32 %v1972
        %vm1979 = vmor %vm1977, %vm1978
        %v1980 = vsel %vm1979, %v1972, %v1976
        %v1981 = vand.u32 2147483647, %v1971
        %vm1982 = vcmp.eq.f32.partialorder %v1981, 8.507059e+37
        %v1983 = vand.u32 %v1971, 2147483648
        %v1984 = vor.u32 1.1754944e-38, %v1983
        %v1985 = vsel %vm1982, %v1984, %v1980
        %v1986 = vmul.f32 1.0, %v1985
        %v1987 = vtanh.pop %v1927
        %v1989 = vrot.slane %v1859, 1
        %v1991 = vmul.f32 %v1986, %v1989
        %1993 = vrot.lane.b32.xlu0 %v1987, 96
        %v1994 = vpop.permute.xlu0 %1993
        %v1996 = vmul.f32 %v1986, %v1994
        %1998 = vrot.lane.b32.xlu0 %v1996, 16
        %v1999 = vpop.permute.xlu0 %1998
        %v2001 = vadd.f32 %v1991, %v1999
        %v2002 = vtanh.pop %v2001
        %2004 = vrot.lane.b32.xlu0 %v2002, 32
        %v2005 = vpop.permute.xlu0 %2004
        %v2007 = vmul.f32 %v1986, %v2005
        %v2009 = vrot.slane %v1967, 3
        %2010 = vrot.lane.b32.xlu0 %v2009, 80
        %v2011 = vpop.permute.xlu0 %2010
        %v2012 = vsel %vm1348, %v2011, 0
        %2014 = vmatpush.msra.mxu0 0.0
        %2015 = vmatpush.msra.mxu0 0.0
        %2016 = vmatpush.msra.mxu0 0.0
        %2017 = vmatpush.msra.mxu0 0.0
        %2018 = vmatpush.msra.mxu0 0.0
        %2019 = vmatpush.msra.mxu0 0.0
        %2020 = vmatpush.msra.mxu0 0.0
        %2021 = vmatpush.msra.mxu0 0.0
        %2022 = vmatpush.msra.mxu0 0.0
        %2023 = vmatpush.msra.mxu0 0.0
        %2024 = vmatpush.msra.mxu0 0.0
        %2025 = vmatpush.msra.mxu0 0.0
        %2026 = vmatpush.msra.mxu0 0.0
        %2027 = vmatpush.msra.mxu0 0.0
        %2028 = vmatpush.msra.mxu0 %v1455
        %2029 = vmatpush.msra.mxu0 %v1454
        %2030 = vmatmul.f32.gmra.mxu0 %v2012
        %v2031 = vpop.f32.mrf.mxu0
        %v2032 = vadd.f32 0.0, %v2031
        %2033 = vdwg.mxu0
        %v2035 = vrot.slane %v2032, 4
        %v2037 = vadd.f32 %v1452, %v2035
        %v2039 = vrot.slane %v2007, 4
        %2040 = vrot.lane.b32.xlu0 %v2039, 16
        %v2041 = vpop.permute.xlu0 %2040
        %v2042 = vsel %vm1348, %v2041, 0
        %2044 = vmatpush.msra.mxu0 0.0
        %2045 = vmatpush.msra.mxu0 0.0
        %2046 = vmatpush.msra.mxu0 0.0
        %2047 = vmatpush.msra.mxu0 0.0
        %2048 = vmatpush.msra.mxu0 0.0
        %2049 = vmatpush.msra.mxu0 0.0
        %2050 = vmatpush.msra.mxu0 0.0
        %2051 = vmatpush.msra.mxu0 0.0
        %2052 = vmatpush.msra.mxu0 0.0
        %2053 = vmatpush.msra.mxu0 0.0
        %2054 = vmatpush.msra.mxu0 0.0
        %2055 = vmatpush.msra.mxu0 0.0
        %2056 = vmatpush.msra.mxu0 0.0
        %2057 = vmatpush.msra.mxu0 0.0
        %2058 = vmatpush.msra.mxu0 %v1458
        %2059 = vmatpush.msra.mxu0 %v1457
        %2060 = vmatmul.f32.gmra.mxu0 %v2042
        %v2061 = vpop.f32.mrf.mxu0
        %v2062 = vadd.f32 0.0, %v2061
        %2063 = vdwg.mxu0
        %v2065 = vrot.slane %v2062, 5
        %2066 = vrot.lane.b32.xlu0 %v2065, 64
        %v2067 = vpop.permute.xlu0 %2066
        %v2069 = vadd.f32 %v1452, %v2067
        %v2070 = vxor.u32 %v2037, 2147483648
        %v2071 = vmul.f32 %v2070, 1.442695
        %v2072 = vpow.pop %v2071
        %v2073 = vadd.f32 %v2072, 1.0
        %v2074 = vrcp.pop %v2073
        %v2075 = vmul.f32 %v2073, %v2074
        %v2076 = vsub.f32 1.0, %v2075
        %v2077 = vmul.f32 %v2074, %v2076
        %v2078 = vadd.f32 %v2074, %v2077
        %vm2079 = vweird.f32 %v2073
        %vm2080 = vweird.f32 %v2074
        %vm2081 = vmor %vm2079, %vm2080
        %v2082 = vsel %vm2081, %v2074, %v2078
        %v2083 = vand.u32 2147483647, %v2073
        %vm2084 = vcmp.eq.f32.partialorder %v2083, 8.507059e+37
        %v2085 = vand.u32 %v2073, 2147483648
        %v2086 = vor.u32 1.1754944e-38, %v2085
        %v2087 = vsel %vm2084, %v2086, %v2082
        %v2088 = vmul.f32 1.0, %v2087
        %v2089 = vtanh.pop %v2037
        %v2091 = vrot.slane %v1961, 7
        %v2093 = vmul.f32 %v2088, %v2091
        %2095 = vrot.lane.b32.xlu0 %v2089, 96
        %v2096 = vpop.permute.xlu0 %2095
        %v2098 = vmul.f32 %v2088, %v2096
        %2100 = vrot.lane.b32.xlu0 %v2098, 16
        %v2101 = vpop.permute.xlu0 %2100
        %v2103 = vadd.f32 %v2093, %v2101
        %v2104 = vtanh.pop %v2103
        %2106 = vrot.lane.b32.xlu0 %v2104, 32
        %v2107 = vpop.permute.xlu0 %2106
        %v2109 = vmul.f32 %v2088, %v2107
        %v2110 = vxor.u32 %v2069, 2147483648
        %v2111 = vmul.f32 %v2110, 1.442695
        %v2112 = vpow.pop %v2111
        %v2113 = vadd.f32 %v2112, 1.0
        %v2114 = vrcp.pop %v2113
        %v2115 = vmul.f32 %v2113, %v2114
        %v2116 = vsub.f32 1.0, %v2115
        %v2117 = vmul.f32 %v2114, %v2116
        %v2118 = vadd.f32 %v2114, %v2117
        %vm2119 = vweird.f32 %v2113
        %vm2120 = vweird.f32 %v2114
        %vm2121 = vmor %vm2119, %vm2120
        %v2122 = vsel %vm2121, %v2114, %v2118
        %v2123 = vand.u32 2147483647, %v2113
        %vm2124 = vcmp.eq.f32.partialorder %v2123, 8.507059e+37
        %v2125 = vand.u32 %v2113, 2147483648
        %v2126 = vor.u32 1.1754944e-38, %v2125
        %v2127 = vsel %vm2124, %v2126, %v2122
        %v2128 = vmul.f32 1.0, %v2127
        %v2129 = vtanh.pop %v2069
        %v2131 = vrot.slane %v2001, 1
        %v2133 = vmul.f32 %v2128, %v2131
        %2135 = vrot.lane.b32.xlu0 %v2129, 96
        %v2136 = vpop.permute.xlu0 %2135
        %v2138 = vmul.f32 %v2128, %v2136
        %2140 = vrot.lane.b32.xlu0 %v2138, 16
        %v2141 = vpop.permute.xlu0 %2140
        %v2143 = vadd.f32 %v2133, %v2141
        %v2144 = vtanh.pop %v2143
        %2146 = vrot.lane.b32.xlu0 %v2144, 32
        %v2147 = vpop.permute.xlu0 %2146
        %v2149 = vmul.f32 %v2128, %v2147
        %v2151 = vrot.slane %v2109, 4
        %2152 = vrot.lane.b32.xlu0 %v2151, 80
        %v2153 = vpop.permute.xlu0 %2152
        %v2154 = vsel %vm1348, %v2153, 0
        %2156 = vmatpush.msra.mxu0 0.0
        %2157 = vmatpush.msra.mxu0 0.0
        %2158 = vmatpush.msra.mxu0 0.0
        %2159 = vmatpush.msra.mxu0 0.0
        %2160 = vmatpush.msra.mxu0 0.0
        %2161 = vmatpush.msra.mxu0 0.0
        %2162 = vmatpush.msra.mxu0 0.0
        %2163 = vmatpush.msra.mxu0 0.0
        %2164 = vmatpush.msra.mxu0 0.0
        %2165 = vmatpush.msra.mxu0 0.0
        %2166 = vmatpush.msra.mxu0 0.0
        %2167 = vmatpush.msra.mxu0 0.0
        %2168 = vmatpush.msra.mxu0 0.0
        %2169 = vmatpush.msra.mxu0 0.0
        %2170 = vmatpush.msra.mxu0 %v1455
        %2171 = vmatpush.msra.mxu0 %v1454
        %2172 = vmatmul.f32.gmra.mxu0 %v2154
        %v2173 = vpop.f32.mrf.mxu0
        %v2174 = vadd.f32 0.0, %v2173
        %2175 = vdwg.mxu0
        %v2177 = vrot.slane %v2174, 3
        %v2179 = vadd.f32 %v1452, %v2177
        %v2181 = vrot.slane %v2149, 3
        %2182 = vrot.lane.b32.xlu0 %v2181, 16
        %v2183 = vpop.permute.xlu0 %2182
        %v2184 = vsel %vm1348, %v2183, 0
        %2186 = vmatpush.msra.mxu0 0.0
        %2187 = vmatpush.msra.mxu0 0.0
        %2188 = vmatpush.msra.mxu0 0.0
        %2189 = vmatpush.msra.mxu0 0.0
        %2190 = vmatpush.msra.mxu0 0.0
        %2191 = vmatpush.msra.mxu0 0.0
        %2192 = vmatpush.msra.mxu0 0.0
        %2193 = vmatpush.msra.mxu0 0.0
        %2194 = vmatpush.msra.mxu0 0.0
        %2195 = vmatpush.msra.mxu0 0.0
        %2196 = vmatpush.msra.mxu0 0.0
        %2197 = vmatpush.msra.mxu0 0.0
        %2198 = vmatpush.msra.mxu0 0.0
        %2199 = vmatpush.msra.mxu0 0.0
        %2200 = vmatpush.msra.mxu0 %v1458
        %2201 = vmatpush.msra.mxu0 %v1457
        %2202 = vmatmul.f32.gmra.mxu0 %v2184
        %v2203 = vpop.f32.mrf.mxu0
        %v2204 = vadd.f32 0.0, %v2203
        %2205 = vdwg.mxu0
        %v2207 = vrot.slane %v2204, 6
        %2208 = vrot.lane.b32.xlu0 %v2207, 64
        %v2209 = vpop.permute.xlu0 %2208
        %v2211 = vadd.f32 %v1452, %v2209
        %v2212 = vxor.u32 %v2179, 2147483648
        %v2213 = vmul.f32 %v2212, 1.442695
        %v2214 = vpow.pop %v2213
        %v2215 = vadd.f32 %v2214, 1.0
        %v2216 = vrcp.pop %v2215
        %v2217 = vmul.f32 %v2215, %v2216
        %v2218 = vsub.f32 1.0, %v2217
        %v2219 = vmul.f32 %v2216, %v2218
        %v2220 = vadd.f32 %v2216, %v2219
        %vm2221 = vweird.f32 %v2215
        %vm2222 = vweird.f32 %v2216
        %vm2223 = vmor %vm2221, %vm2222
        %v2224 = vsel %vm2223, %v2216, %v2220
        %v2225 = vand.u32 2147483647, %v2215
        %vm2226 = vcmp.eq.f32.partialorder %v2225, 8.507059e+37
        %v2227 = vand.u32 %v2215, 2147483648
        %v2228 = vor.u32 1.1754944e-38, %v2227
        %v2229 = vsel %vm2226, %v2228, %v2224
        %v2230 = vmul.f32 1.0, %v2229
        %v2231 = vtanh.pop %v2179
        %v2233 = vrot.slane %v2103, 7
        %v2235 = vmul.f32 %v2230, %v2233
        %2237 = vrot.lane.b32.xlu0 %v2231, 96
        %v2238 = vpop.permute.xlu0 %2237
        %v2240 = vmul.f32 %v2230, %v2238
        %2242 = vrot.lane.b32.xlu0 %v2240, 16
        %v2243 = vpop.permute.xlu0 %2242
        %v2245 = vadd.f32 %v2235, %v2243
        %v2246 = vtanh.pop %v2245
        %2248 = vrot.lane.b32.xlu0 %v2246, 32
        %v2249 = vpop.permute.xlu0 %2248
        %v2251 = vmul.f32 %v2230, %v2249
        %v2252 = vxor.u32 %v2211, 2147483648
        %v2253 = vmul.f32 %v2252, 1.442695
        %v2254 = vpow.pop %v2253
        %v2255 = vadd.f32 %v2254, 1.0
        %v2256 = vrcp.pop %v2255
        %v2257 = vmul.f32 %v2255, %v2256
        %v2258 = vsub.f32 1.0, %v2257
        %v2259 = vmul.f32 %v2256, %v2258
        %v2260 = vadd.f32 %v2256, %v2259
        %vm2261 = vweird.f32 %v2255
        %vm2262 = vweird.f32 %v2256
        %vm2263 = vmor %vm2261, %vm2262
        %v2264 = vsel %vm2263, %v2256, %v2260
        %v2265 = vand.u32 2147483647, %v2255
        %vm2266 = vcmp.eq.f32.partialorder %v2265, 8.507059e+37
        %v2267 = vand.u32 %v2255, 2147483648
        %v2268 = vor.u32 1.1754944e-38, %v2267
        %v2269 = vsel %vm2266, %v2268, %v2264
        %v2270 = vmul.f32 1.0, %v2269
        %v2271 = vtanh.pop %v2211
        %v2273 = vrot.slane %v2143, 1
        %v2275 = vmul.f32 %v2270, %v2273
        %2277 = vrot.lane.b32.xlu0 %v2271, 96
        %v2278 = vpop.permute.xlu0 %2277
        %v2280 = vmul.f32 %v2270, %v2278
        %2282 = vrot.lane.b32.xlu0 %v2280, 16
        %v2283 = vpop.permute.xlu0 %2282
        %v2285 = vadd.f32 %v2275, %v2283
        %v2286 = vtanh.pop %v2285
        %2288 = vrot.lane.b32.xlu0 %v2286, 32
        %v2289 = vpop.permute.xlu0 %2288
        %v2291 = vmul.f32 %v2270, %v2289
        %v2293 = vrot.slane %v2251, 5
        %2294 = vrot.lane.b32.xlu0 %v2293, 80
        %v2295 = vpop.permute.xlu0 %2294
        %v2296 = vsel %vm1348, %v2295, 0
        %2298 = vmatpush.msra.mxu0 0.0
        %2299 = vmatpush.msra.mxu0 0.0
        %2300 = vmatpush.msra.mxu0 0.0
        %2301 = vmatpush.msra.mxu0 0.0
        %2302 = vmatpush.msra.mxu0 0.0
        %2303 = vmatpush.msra.mxu0 0.0
        %2304 = vmatpush.msra.mxu0 0.0
        %2305 = vmatpush.msra.mxu0 0.0
        %2306 = vmatpush.msra.mxu0 0.0
        %2307 = vmatpush.msra.mxu0 0.0
        %2308 = vmatpush.msra.mxu0 0.0
        %2309 = vmatpush.msra.mxu0 0.0
        %2310 = vmatpush.msra.mxu0 0.0
        %2311 = vmatpush.msra.mxu0 0.0
        %2312 = vmatpush.msra.mxu0 %v1455
        %2313 = vmatpush.msra.mxu0 %v1454
        %2314 = vmatmul.f32.gmra.mxu0 %v2296
        %v2315 = vpop.f32.mrf.mxu0
        %v2316 = vadd.f32 0.0, %v2315
        %2317 = vdwg.mxu0
        %v2319 = vrot.slane %v2316, 2
        %v2321 = vadd.f32 %v1452, %v2319
        %v2323 = vrot.slane %v2291, 2
        %2324 = vrot.lane.b32.xlu0 %v2323, 16
        %v2325 = vpop.permute.xlu0 %2324
        %v2326 = vsel %vm1348, %v2325, 0
        %2328 = vmatpush.msra.mxu0 0.0
        %2329 = vmatpush.msra.mxu0 0.0
        %2330 = vmatpush.msra.mxu0 0.0
        %2331 = vmatpush.msra.mxu0 0.0
        %2332 = vmatpush.msra.mxu0 0.0
        %2333 = vmatpush.msra.mxu0 0.0
        %2334 = vmatpush.msra.mxu0 0.0
        %2335 = vmatpush.msra.mxu0 0.0
        %2336 = vmatpush.msra.mxu0 0.0
        %2337 = vmatpush.msra.mxu0 0.0
        %2338 = vmatpush.msra.mxu0 0.0
        %2339 = vmatpush.msra.mxu0 0.0
        %2340 = vmatpush.msra.mxu0 0.0
        %2341 = vmatpush.msra.mxu0 0.0
        %2342 = vmatpush.msra.mxu0 %v1458
        %2343 = vmatpush.msra.mxu0 %v1457
        %2344 = vmatmul.f32.gmra.mxu0 %v2326
        %v2345 = vpop.f32.mrf.mxu0
        %v2346 = vadd.f32 0.0, %v2345
        %2347 = vdwg.mxu0
        %v2349 = vrot.slane %v2346, 7
        %2350 = vrot.lane.b32.xlu0 %v2349, 64
        %v2351 = vpop.permute.xlu0 %2350
        %v2353 = vadd.f32 %v1452, %v2351
        %v2354 = vxor.u32 %v2321, 2147483648
        %v2355 = vmul.f32 %v2354, 1.442695
        %v2356 = vpow.pop %v2355
        %v2357 = vadd.f32 %v2356, 1.0
        %v2358 = vrcp.pop %v2357
        %v2359 = vmul.f32 %v2357, %v2358
        %v2360 = vsub.f32 1.0, %v2359
        %v2361 = vmul.f32 %v2358, %v2360
        %v2362 = vadd.f32 %v2358, %v2361
        %vm2363 = vweird.f32 %v2357
        %vm2364 = vweird.f32 %v2358
        %vm2365 = vmor %vm2363, %vm2364
        %v2366 = vsel %vm2365, %v2358, %v2362
        %v2367 = vand.u32 2147483647, %v2357
        %vm2368 = vcmp.eq.f32.partialorder %v2367, 8.507059e+37
        %v2369 = vand.u32 %v2357, 2147483648
        %v2370 = vor.u32 1.1754944e-38, %v2369
        %v2371 = vsel %vm2368, %v2370, %v2366
        %v2372 = vmul.f32 1.0, %v2371
        %v2373 = vtanh.pop %v2321
        %v2375 = vrot.slane %v2245, 7
        %v2377 = vmul.f32 %v2372, %v2375
        %2379 = vrot.lane.b32.xlu0 %v2373, 96
        %v2380 = vpop.permute.xlu0 %2379
        %v2382 = vmul.f32 %v2372, %v2380
        %2384 = vrot.lane.b32.xlu0 %v2382, 16
        %v2385 = vpop.permute.xlu0 %2384
        %v2387 = vadd.f32 %v2377, %v2385
        %v2388 = vtanh.pop %v2387
        %2390 = vrot.lane.b32.xlu0 %v2388, 32
        %v2391 = vpop.permute.xlu0 %2390
        %v2393 = vmul.f32 %v2372, %v2391
        %v2394 = vxor.u32 %v2353, 2147483648
        %v2395 = vmul.f32 %v2394, 1.442695
        %v2396 = vpow.pop %v2395
        %v2397 = vadd.f32 %v2396, 1.0
        %v2398 = vrcp.pop %v2397
        %v2399 = vmul.f32 %v2397, %v2398
        %v2400 = vsub.f32 1.0, %v2399
        %v2401 = vmul.f32 %v2398, %v2400
        %v2402 = vadd.f32 %v2398, %v2401
        %vm2403 = vweird.f32 %v2397
        %vm2404 = vweird.f32 %v2398
        %vm2405 = vmor %vm2403, %vm2404
        %v2406 = vsel %vm2405, %v2398, %v2402
        %v2407 = vand.u32 2147483647, %v2397
        %vm2408 = vcmp.eq.f32.partialorder %v2407, 8.507059e+37
        %v2409 = vand.u32 %v2397, 2147483648
        %v2410 = vor.u32 1.1754944e-38, %v2409
        %v2411 = vsel %vm2408, %v2410, %v2406
        %v2412 = vmul.f32 1.0, %v2411
        %v2413 = vtanh.pop %v2353
        %v2415 = vrot.slane %v2285, 1
        %v2417 = vmul.f32 %v2412, %v2415
        %2419 = vrot.lane.b32.xlu0 %v2413, 96
        %v2420 = vpop.permute.xlu0 %2419
        %v2422 = vmul.f32 %v2412, %v2420
        %2424 = vrot.lane.b32.xlu0 %v2422, 16
        %v2425 = vpop.permute.xlu0 %2424
        %v2427 = vadd.f32 %v2417, %v2425
        %v2428 = vtanh.pop %v2427
        %2430 = vrot.lane.b32.xlu0 %v2428, 32
        %v2431 = vpop.permute.xlu0 %2430
        %v2433 = vmul.f32 %v2412, %v2431
        %v2435 = vrot.slane %v2393, 6
        %2436 = vrot.lane.b32.xlu0 %v2435, 80
        %v2437 = vpop.permute.xlu0 %2436
        %v2438 = vsel %vm1348, %v2437, 0
        %2440 = vmatpush.msra.mxu0 0.0
        %2441 = vmatpush.msra.mxu0 0.0
        %2442 = vmatpush.msra.mxu0 0.0
        %2443 = vmatpush.msra.mxu0 0.0
        %2444 = vmatpush.msra.mxu0 0.0
        %2445 = vmatpush.msra.mxu0 0.0
        %2446 = vmatpush.msra.mxu0 0.0
        %2447 = vmatpush.msra.mxu0 0.0
        %2448 = vmatpush.msra.mxu0 0.0
        %2449 = vmatpush.msra.mxu0 0.0
        %2450 = vmatpush.msra.mxu0 0.0
        %2451 = vmatpush.msra.mxu0 0.0
        %2452 = vmatpush.msra.mxu0 0.0
        %2453 = vmatpush.msra.mxu0 0.0
        %2454 = vmatpush.msra.mxu0 %v1455
        %2455 = vmatpush.msra.mxu0 %v1454
        %2456 = vmatmul.f32.gmra.mxu0 %v2438
        %v2457 = vpop.f32.mrf.mxu0
        %v2458 = vadd.f32 0.0, %v2457
        %2459 = vdwg.mxu0
        %v2461 = vrot.slane %v2458, 1
        %v2463 = vadd.f32 %v1452, %v2461
        %v2465 = vrot.slane %v2433, 1
        %2466 = vrot.lane.b32.xlu0 %v2465, 16
        %v2467 = vpop.permute.xlu0 %2466
        %v2468 = vsel %vm1348, %v2467, 0
        %2470 = vmatpush.msra.mxu0 0.0
        %2471 = vmatpush.msra.mxu0 0.0
        %2472 = vmatpush.msra.mxu0 0.0
        %2473 = vmatpush.msra.mxu0 0.0
        %2474 = vmatpush.msra.mxu0 0.0
        %2475 = vmatpush.msra.mxu0 0.0
        %2476 = vmatpush.msra.mxu0 0.0
        %2477 = vmatpush.msra.mxu0 0.0
        %2478 = vmatpush.msra.mxu0 0.0
        %2479 = vmatpush.msra.mxu0 0.0
        %2480 = vmatpush.msra.mxu0 0.0
        %2481 = vmatpush.msra.mxu0 0.0
        %2482 = vmatpush.msra.mxu0 0.0
        %2483 = vmatpush.msra.mxu0 0.0
        %2484 = vmatpush.msra.mxu0 %v1458
        %2485 = vmatpush.msra.mxu0 %v1457
        %2486 = vmatmul.f32.gmra.mxu0 %v2468
        %v2487 = vpop.f32.mrf.mxu0
        %v2488 = vadd.f32 0.0, %v2487
        %2489 = vdwg.mxu0
        %2491 = vrot.lane.b32.xlu0 %v2488, 64
        %v2492 = vpop.permute.xlu0 %2491
        %v2494 = vadd.f32 %v1452, %v2492
        %v2495 = vxor.u32 %v2463, 2147483648
        %v2496 = vmul.f32 %v2495, 1.442695
        %v2497 = vpow.pop %v2496
        %v2498 = vadd.f32 %v2497, 1.0
        %v2499 = vrcp.pop %v2498
        %v2500 = vmul.f32 %v2498, %v2499
        %v2501 = vsub.f32 1.0, %v2500
        %v2502 = vmul.f32 %v2499, %v2501
        %v2503 = vadd.f32 %v2499, %v2502
        %vm2504 = vweird.f32 %v2498
        %vm2505 = vweird.f32 %v2499
        %vm2506 = vmor %vm2504, %vm2505
        %v2507 = vsel %vm2506, %v2499, %v2503
        %v2508 = vand.u32 2147483647, %v2498
        %vm2509 = vcmp.eq.f32.partialorder %v2508, 8.507059e+37
        %v2510 = vand.u32 %v2498, 2147483648
        %v2511 = vor.u32 1.1754944e-38, %v2510
        %v2512 = vsel %vm2509, %v2511, %v2507
        %v2513 = vmul.f32 1.0, %v2512
        %v2514 = vtanh.pop %v2463
        %v2516 = vrot.slane %v2387, 7
        %v2518 = vmul.f32 %v2513, %v2516
        %2520 = vrot.lane.b32.xlu0 %v2514, 96
        %v2521 = vpop.permute.xlu0 %2520
        %v2523 = vmul.f32 %v2513, %v2521
        %2525 = vrot.lane.b32.xlu0 %v2523, 16
        %v2526 = vpop.permute.xlu0 %2525
        %v2528 = vadd.f32 %v2518, %v2526
        %v2529 = vtanh.pop %v2528
        %2531 = vrot.lane.b32.xlu0 %v2529, 32
        %v2532 = vpop.permute.xlu0 %2531
        %v2534 = vmul.f32 %v2513, %v2532
        %v2535 = vxor.u32 %v2494, 2147483648
        %v2536 = vmul.f32 %v2535, 1.442695
        %v2537 = vpow.pop %v2536
        %v2538 = vadd.f32 %v2537, 1.0
        %v2539 = vrcp.pop %v2538
        %v2540 = vmul.f32 %v2538, %v2539
        %v2541 = vsub.f32 1.0, %v2540
        %v2542 = vmul.f32 %v2539, %v2541
        %v2543 = vadd.f32 %v2539, %v2542
        %vm2544 = vweird.f32 %v2538
        %vm2545 = vweird.f32 %v2539
        %vm2546 = vmor %vm2544, %vm2545
        %v2547 = vsel %vm2546, %v2539, %v2543
        %v2548 = vand.u32 2147483647, %v2538
        %vm2549 = vcmp.eq.f32.partialorder %v2548, 8.507059e+37
        %v2550 = vand.u32 %v2538, 2147483648
        %v2551 = vor.u32 1.1754944e-38, %v2550
        %v2552 = vsel %vm2549, %v2551, %v2547
        %v2553 = vmul.f32 1.0, %v2552
        %v2554 = vtanh.pop %v2494
        %v2556 = vrot.slane %v2427, 1
        %v2558 = vmul.f32 %v2553, %v2556
        %2560 = vrot.lane.b32.xlu0 %v2554, 96
        %v2561 = vpop.permute.xlu0 %2560
        %v2563 = vmul.f32 %v2553, %v2561
        %2565 = vrot.lane.b32.xlu0 %v2563, 16
        %v2566 = vpop.permute.xlu0 %2565
        %v2568 = vadd.f32 %v2558, %v2566
        %v2569 = vtanh.pop %v2568
        %2571 = vrot.lane.b32.xlu0 %v2569, 32
        %v2572 = vpop.permute.xlu0 %2571
        %v2574 = vmul.f32 %v2553, %v2572
        %vm2575 = vcmask 1040384
        %v2576 = vsel %vm2575, %v1545, %v1683
        %vm2577 = vcmask 1041408
        %v2578 = vsel %vm2577, %v2576, %v1825
        %vm2579 = vcmask 1042432
        %v2580 = vsel %vm2579, %v2578, %v1967
        %vm2581 = vcmask 1043456
        %v2582 = vsel %vm2581, %v2580, %v2109
        %vm2583 = vcmask 1044480
        %v2584 = vsel %vm2583, %v2582, %v2251
        %vm2585 = vcmask 1045504
        %v2586 = vsel %vm2585, %v2584, %v2393
        %vm2587 = vcmask 1046528
        %v2588 = vsel %vm2587, %v2586, %v2534
        %v2589 = vsel %vm2575, %v2574, %v2433
        %v2590 = vsel %vm2577, %v2589, %v2291
        %v2591 = vsel %vm2579, %v2590, %v2149
        %v2592 = vsel %vm2581, %v2591, %v2007
        %v2593 = vsel %vm2583, %v2592, %v1865
        %v2594 = vsel %vm2585, %v2593, %v1723
        %v2595 = vsel %vm2587, %v2594, %v1582
        %2597 = vrot.lane.b32.xlu0 %v2588, 80
        %v2598 = vpop.permute.xlu0 %2597
        %2601 = vrot.lane.b32.xlu0 %v2595, 32
        %v2602 = vpop.permute.xlu0 %2601
        %v2604 = vsel %vm1348, %v2598, %v2602
        %v2605 = vadd.f32 %v1422, %v2604
        %v2606 = vld [vmem:[%s11] sm:$0x1]
        %v2607 = vld [vmem:[%s12] sm:$0x1]
        %v2608 = vsel %vm534, %v2605, 0.0
        %2609 = vadd.xlane.f32.xlu0 %v2608
        %v2610 = vpop.xlane.xlu0 %2609
        %v2611 = vmul.f32 %v2610, %v1395
        %v2612 = vsub.f32 %v2605, %v2611
        %v2613 = vmul.f32 %v2612, %v2612
        %v2614 = vsel %vm534, %v2613, 0.0
        %2615 = vadd.xlane.f32.xlu0 %v2614
        %v2616 = vpop.xlane.xlu0 %2615
        %v2617 = vmul.f32 %v2616, %v1395
        %v2618 = vadd.f32 %v2617, 1e-05
        %v2619 = vrsqrt.pop %v2618
        %v2620 = vmul.f32 %v2619, %v2618
        %v2621 = vmul.f32 %v2620, %v2619
        %v2622 = vmul.f32 0.5, %v2621
        %v2623 = vsub.f32 1.5, %v2622
        %v2624 = vmul.f32 %v2619, %v2623
        %vm2625 = vweird.f32 %v2618
        %vm2626 = vweird.f32 %v2619
        %vm2627 = vmor %vm2625, %vm2626
        %v2628 = vsel %vm2627, %v2619, %v2624
        %v2629 = vmul.f32 %v2612, %v2628
        %v2631 = vperm.slane %v2606, 0
        %v2633 = vmul.f32 %v2629, %v2631
        %v2635 = vperm.slane %v2607, 0
        %v2637 = vadd.f32 %v2633, %v2635
        %2638 = vst.msk [vmem:[%s497] sm:$0xff] %vm534, %v2637
        %v2640 = vrot.slane %v2534, 7
        %v2643 = vrot.slane %v2574, 7
        %2644 = vrot.lane.b32.xlu0 %v2643, 64
        %v2645 = vpop.permute.xlu0 %2644
        %v2647 = vsel %vm2575, %v2640, %v2645
        %2649 = vrot.lane.b32.xlu0 %v2647, 80
        %v2650 = vpop.permute.xlu0 %2649
        %vm2652 = vcmask 123904
        %2653 = vst.msk [vmem:[%s520] sm:$0x3] %vm2652, %v2650
        %v2655 = vrot.slane %v2528, 7
        %v2658 = vrot.slane %v2568, 7
        %2659 = vrot.lane.b32.xlu0 %v2658, 64
        %v2660 = vpop.permute.xlu0 %2659
        %v2662 = vsel %vm2575, %v2655, %v2660
        %2664 = vrot.lane.b32.xlu0 %v2662, 112
        %v2665 = vpop.permute.xlu0 %2664
        %2667 = vst.msk [vmem:[%s524] sm:$0x3] %vm2652, %v2665
        %s2668 = sand.u32 %s321, 1
        %s2669 = scalar_lea.sflag [#allocation3], %s2668
        %s2670 = sand.u32 %s321, 1
        %s2671 = smul.addr %s2670, 8
        %s2672 = scalar_lea.vmem [#allocation2], %s2671
        %p2673 = scmp.lt.s32.totalorder %s30, 1
        %s2674 = scalar_select %p2673, %s30, 1
        %s2675 = smul.addr %s2674, 2
        %s2676 = scalar_lea.vmem %s14, %s2675
        %p2677 = scmp.lt.s32.totalorder %s30, 1
        %s2678 = scalar_select %p2677, %s30, 1
        %s2679 = smul.addr %s2678, 2
        %s2680 = scalar_lea.vmem %s15, %s2679
        // Predicated region
        $region73: #{lab_forward.3} parent=71 // pred_check
          %p2681 = pneg %p331
        $region74: #{lab_forward.3} parent=71 // pred_check_branch
          %2683 = sbr.rel (%p2681) target = $region76
        $region75: #{lab_forward.3} parent=71 // pred_region
          %2685 = vsyncadd %s2669, 0
          %s2686 = smul.addr %s30, 8
          %s2687 = scalar_lea.hbm %s13, %s2686
          %s2689 = sshll.u32 %s2672, 4
          %s2690 = int_to_ptr.vmem [resolvable:$true] %s2689
          %s2691 = sshll.u32 %s2687, 4
          %s2692 = int_to_ptr.hbm [resolvable:$true] %s2691
          %2694 = dma.vmem_to_hbm [thread:$0]  %s2690, 128, %s2692, %s2669
        $region76: #{lab_forward.3} parent=71 // pred_fallthru
          _
        // Predicated region
        $region77: #{lab_forward.3} parent=71 // pred_check
          %p2695 = pneg %p357
        $region78: #{lab_forward.3} parent=71 // pred_check_branch
          %2697 = sbr.rel (%p2695) target = $region80
        $region79: #{lab_forward.3} parent=71 // pred_region
          _
        $region80: #{lab_forward.3} parent=71 // pred_fallthru
          _
        // Predicated region
        $region81: #{lab_forward.3} parent=71 // pred_check
          %p2698 = pneg %p383
        $region82: #{lab_forward.3} parent=71 // pred_check_branch
          %2700 = sbr.rel (%p2698) target = $region84
        $region83: #{lab_forward.3} parent=71 // pred_region
          _
        $region84: #{lab_forward.3} parent=71 // pred_fallthru
          _
      $region72: #{lab_forward.3} parent=5 // pred_fallthru
        _
      %p2701 = scmp.le.s32.totalorder 2, %s25
      // Predicated region
      $region85: #{lab_forward.3} parent=5 // pred_check
        %p2702 = pneg %p2701
      $region86: #{lab_forward.3} parent=5 // pred_check_branch
        %2704 = sbr.rel (%p2702) target = $region88
      $region87: #{lab_forward.3} parent=5 // pred_region
        %s2705 = ssub.s32 %s25, 2
        // Predicated region
        $region89: #{lab_forward.3} parent=87 // pred_check
          %p2706 = pneg %p337
        $region90: #{lab_forward.3} parent=87 // pred_check_branch
          %2708 = sbr.rel (%p2706) target = $region92
        $region91: #{lab_forward.3} parent=87 // pred_region
          %s2709 = sand.u32 %s322, 1
          %s2710 = scalar_lea.sflag [#allocation3], %s2709
          %s2711 = sand.u32 %s322, 1
          %s2712 = smul.addr %s2711, 8
          %s2713 = scalar_lea.vmem [#allocation2], %s2712
          %2715 = dma.done %s2710, 128
        $region92: #{lab_forward.3} parent=87 // pred_fallthru
          _
        // Predicated region
        $region93: #{lab_forward.3} parent=87 // pred_check
          %p2716 = pneg %p363
        $region94: #{lab_forward.3} parent=87 // pred_check_branch
          %2718 = sbr.rel (%p2716) target = $region96
        $region95: #{lab_forward.3} parent=87 // pred_region
          %p2719 = scmp.lt.s32.totalorder %s31, 1
          %s2720 = scalar_select %p2719, %s31, 1
          %s2721 = smul.addr %s2720, 2
          %s2722 = scalar_lea.vmem %s14, %s2721
        $region96: #{lab_forward.3} parent=87 // pred_fallthru
          _
        // Predicated region
        $region97: #{lab_forward.3} parent=87 // pred_check
          %p2723 = pneg %p389
        $region98: #{lab_forward.3} parent=87 // pred_check_branch
          %2725 = sbr.rel (%p2723) target = $region100
        $region99: #{lab_forward.3} parent=87 // pred_region
          %p2726 = scmp.lt.s32.totalorder %s31, 1
          %s2727 = scalar_select %p2726, %s31, 1
          %s2728 = smul.addr %s2727, 2
          %s2729 = scalar_lea.vmem %s15, %s2728
        $region100: #{lab_forward.3} parent=87 // pred_fallthru
          _
      $region88: #{lab_forward.3} parent=5 // pred_fallthru
        _
    $region6: #{lab_forward.3} parent=1 // loop_footer
      %s29 = sadd.s32 1, %s25
    $region7: #{lab_forward.3} parent=1 // loop_footer_branch
      %24 = sbr.rel target = $region3
    $region8: #{lab_forward.3} parent=1 // loop_exit
      _
    %2730 = vsyncpa [#allocation3], 1
    %s2731 = scalar_lea.sflag [#allocation3], 1
    %2732 = vsyncpa %s2731, 1

// kernel: lab_forward.2
$region0: #{lab_forward.2}
  #allocation0 [shape = 'u32[]', space=smem, size = 0x4, offset = 0x4, fixed_abs, tag = 'smem constant byte address 0x4 - core index']
  #allocation1 [shape = 'u32[72,128]{1,0:T(1,128)}', space=vmem, size = 0x9000, scoped, tag = 'internal scratch']
  %s0 = inlined_call_operand.vmem [shape: f32[2,8,32], index: 0, kind: input, shape index: {}]
  %s1 = inlined_call_operand.vmem [shape: s32[2,1,8], index: 1, kind: input, shape index: {}]
  %s2 = inlined_call_operand.vmem [shape: f32[32,96], index: 2, kind: input, shape index: {}]
  %s3 = inlined_call_operand.vmem [shape: f32[1,96], index: 3, kind: input, shape index: {}]
  %s4 = inlined_call_operand.vmem [shape: f32[32,32], index: 4, kind: input, shape index: {}]
  %s5 = inlined_call_operand.vmem [shape: f32[1,32], index: 5, kind: input, shape index: {}]
  %s6 = inlined_call_operand.vmem [shape: f32[1,32], index: 6, kind: input, shape index: {}]
  %s7 = inlined_call_operand.vmem [shape: f32[1,32], index: 7, kind: input, shape index: {}]
  %s8 = inlined_call_operand.vmem [shape: f32[32,128], index: 8, kind: input, shape index: {}]
  %s9 = inlined_call_operand.vmem [shape: f32[1,128], index: 9, kind: input, shape index: {}]
  %s10 = inlined_call_operand.vmem [shape: f32[2,16,64], index: 10, kind: input, shape index: {}]
  %s11 = inlined_call_operand.vmem [shape: f32[1,32], index: 11, kind: input, shape index: {}]
  %s12 = inlined_call_operand.vmem [shape: f32[1,32], index: 12, kind: input, shape index: {}]
  %s13 = inlined_call_operand.vmem [shape: f32[2,8,32], index: 13, kind: output, shape index: {0}]
  %s14 = inlined_call_operand.hbm [shape: f32[2,2,16], index: 14, kind: output, shape index: {1}]
  %s15 = inlined_call_operand.hbm [shape: f32[2,2,16], index: 15, kind: output, shape index: {2}]
  %16 = xla_tuple %s13, %s14, %s15
  %s17 = sld [smem:[#allocation0]]
  $region101: #{lab_forward.2} parent=0
    _
  %s19 = ssub.s32 1, %s17
  %s20 = scalar_select 0, %s19, %s17
  $region1: #{lab_forward.2} parent=0
    #allocation2 [shape = 'u8[2048]{0}', space=vmem, size = 0x800, scoped, tag = 'output window, operand 1']
    #allocation3 [shape = 's32[2]{0}', space=sflag, size = 0x8, scoped, tag = 'scoped memory for lab_forward.2']
    #allocation4 [shape = 'u8[2048]{0}', space=vmem, size = 0x800, scoped, tag = 'output window, operand 2']
    #allocation5 [shape = 's32[2]{0}', space=sflag, size = 0x8, scoped, tag = 'scoped memory for lab_forward.2']
    %21 = vsyncpa [#allocation3], 0
    %s22 = scalar_lea.sflag [#allocation3], 1
    %23 = vsyncpa %s22, 0
    %24 = vsyncpa [#allocation5], 0
    %s25 = scalar_lea.sflag [#allocation5], 1
    %26 = vsyncpa %s25, 0
    loop: start=0, step=1, limit=4
    $region2: #{lab_forward.2} parent=1 // loop_pre_header
      _
    $region3: #{lab_forward.2} parent=1 // loop_header
      %s28 = sphi 0, %s32
      %p29 = scmp.ge.s32.totalorder %s28, 4
      %s38 = sphi 0, %s40
      %s41 = sphi 0, %s38
      %s42 = sphi 0, %s41
      %s58 = sphi 0, %s42
      %s64 = sphi 0, %s66
      %s67 = sphi 0, %s64
      %s68 = sphi 0, %s67
      %s84 = sphi 0, %s68
      %s88 = sphi 0, %s88
      %s90 = sphi 0, %s88
      %s91 = sphi 0, %s90
      %s105 = sphi 0, %s91
      %s109 = sphi 0, %s109
      %s111 = sphi 0, %s109
      %s112 = sphi 0, %s111
      %s126 = sphi 0, %s112
      %s130 = sphi 0, %s130
      %s132 = sphi 0, %s130
      %s133 = sphi 0, %s132
      %s147 = sphi 0, %s133
      %s151 = sphi 0, %s151
      %s153 = sphi 0, %s151
      %s154 = sphi 0, %s153
      %s168 = sphi 0, %s154
      %s172 = sphi 0, %s172
      %s174 = sphi 0, %s172
      %s175 = sphi 0, %s174
      %s189 = sphi 0, %s175
      %s193 = sphi 0, %s193
      %s195 = sphi 0, %s193
      %s196 = sphi 0, %s195
      %s210 = sphi 0, %s196
      %s214 = sphi 0, %s214
      %s216 = sphi 0, %s214
      %s217 = sphi 0, %s216
      %s231 = sphi 0, %s217
      %s235 = sphi 0, %s235
      %s237 = sphi 0, %s235
      %s238 = sphi 0, %s237
      %s252 = sphi 0, %s238
      %s256 = sphi 0, %s256
      %s258 = sphi 0, %s256
      %s259 = sphi 0, %s258
      %s273 = sphi 0, %s259
      %s277 = sphi 0, %s277
      %s279 = sphi 0, %s277
      %s280 = sphi 0, %s279
      %s294 = sphi 0, %s280
      %s298 = sphi 0, %s298
      %s300 = sphi 0, %s298
      %s301 = sphi 0, %s300
      %s315 = sphi 0, %s301
      %s321 = sphi 0, %s323
      %s324 = sphi 0, %s321
      %s325 = sphi 0, %s324
      %s341 = sphi 0, %s325
      %s347 = sphi 0, %s349
      %s350 = sphi 0, %s347
      %s351 = sphi 0, %s350
      %s367 = sphi 0, %s351
      %s373 = sphi 0, %s375
      %s376 = sphi 0, %s373
      %s377 = sphi 0, %s376
      %s393 = sphi 0, %s377
    $region4: #{lab_forward.2} parent=1 // loop_header_branch
      %31 = sbr.rel (%p29) target = $region8
    $region5: #{lab_forward.2} parent=1 // loop_body
      %s33 = ssub.s32 %s28, 1
      %s34 = ssub.s32 %s28, 2
      %s35 = sadd.s32 %s28, 1
      %s36 = ssub.s32 %s28, %s35
      %p37 = scmp.eq.s32.totalorder %s36, 0
      %s39 = sadd.s32 %s38, 1
      %s40 = scalar_select %p37, %s38, %s39
      %p43 = pneg %p37
      %p44 = scmp.eq.s32.totalorder %s28, 1
      %p45 = por %p43, %p44
      %p46 = scmp.ne.s32.totalorder %s38, %s41
      %p47 = scmp.eq.s32.totalorder %s28, 0
      %p48 = por %p46, %p47
      %p49 = scmp.ne.s32.totalorder %s38, %s41
      %p50 = scmp.eq.s32.totalorder %s33, 1
      %p51 = por %p49, %p50
      %p52 = scmp.ne.s32.totalorder %s41, %s42
      %p53 = scmp.eq.s32.totalorder %s33, 0
      %p54 = por %p52, %p53
      %p55 = scmp.ne.s32.totalorder %s41, %s42
      %p56 = scmp.eq.s32.totalorder %s34, 1
      %p57 = por %p55, %p56
      %p59 = scmp.ne.s32.totalorder %s42, %s58
      %p60 = scmp.eq.s32.totalorder %s34, 0
      %p61 = por %p59, %p60
      %s62 = ssub.s32 %s28, %s35
      %p63 = scmp.eq.s32.totalorder %s62, 0
      %s65 = sadd.s32 %s64, 1
      %s66 = scalar_select %p63, %s64, %s65
      %p69 = pneg %p63
      %p70 = scmp.eq.s32.totalorder %s28, 1
      %p71 = por %p69, %p70
      %p72 = scmp.ne.s32.totalorder %s64, %s67
      %p73 = scmp.eq.s32.totalorder %s28, 0
      %p74 = por %p72, %p73
      %p75 = scmp.ne.s32.totalorder %s64, %s67
      %p76 = scmp.eq.s32.totalorder %s33, 1
      %p77 = por %p75, %p76
      %p78 = scmp.ne.s32.totalorder %s67, %s68
      %p79 = scmp.eq.s32.totalorder %s33, 0
      %p80 = por %p78, %p79
      %p81 = scmp.ne.s32.totalorder %s67, %s68
      %p82 = scmp.eq.s32.totalorder %s34, 1
      %p83 = por %p81, %p82
      %p85 = scmp.ne.s32.totalorder %s68, %s84
      %p86 = scmp.eq.s32.totalorder %s34, 0
      %p87 = por %p85, %p86
      %s89 = sadd.s32 %s88, 1
      %p92 = scmp.eq.s32.totalorder %s28, 1
      %p93 = scmp.ne.s32.totalorder %s88, %s90
      %p94 = scmp.eq.s32.totalorder %s28, 0
      %p95 = por %p93, %p94
      %p96 = scmp.ne.s32.totalorder %s88, %s90
      %p97 = scmp.eq.s32.totalorder %s33, 1
      %p98 = por %p96, %p97
      %p99 = scmp.ne.s32.totalorder %s90, %s91
      %p100 = scmp.eq.s32.totalorder %s33, 0
      %p101 = por %p99, %p100
      %p102 = scmp.ne.s32.totalorder %s90, %s91
      %p103 = scmp.eq.s32.totalorder %s34, 1
      %p104 = por %p102, %p103
      %p106 = scmp.ne.s32.totalorder %s91, %s105
      %p107 = scmp.eq.s32.totalorder %s34, 0
      %p108 = por %p106, %p107
      %s110 = sadd.s32 %s109, 1
      %p113 = scmp.eq.s32.totalorder %s28, 1
      %p114 = scmp.ne.s32.totalorder %s109, %s111
      %p115 = scmp.eq.s32.totalorder %s28, 0
      %p116 = por %p114, %p115
      %p117 = scmp.ne.s32.totalorder %s109, %s111
      %p118 = scmp.eq.s32.totalorder %s33, 1
      %p119 = por %p117, %p118
      %p120 = scmp.ne.s32.totalorder %s111, %s112
      %p121 = scmp.eq.s32.totalorder %s33, 0
      %p122 = por %p120, %p121
      %p123 = scmp.ne.s32.totalorder %s111, %s112
      %p124 = scmp.eq.s32.totalorder %s34, 1
      %p125 = por %p123, %p124
      %p127 = scmp.ne.s32.totalorder %s112, %s126
      %p128 = scmp.eq.s32.totalorder %s34, 0
      %p129 = por %p127, %p128
      %s131 = sadd.s32 %s130, 1
      %p134 = scmp.eq.s32.totalorder %s28, 1
      %p135 = scmp.ne.s32.totalorder %s130, %s132
      %p136 = scmp.eq.s32.totalorder %s28, 0
      %p137 = por %p135, %p136
      %p138 = scmp.ne.s32.totalorder %s130, %s132
      %p139 = scmp.eq.s32.totalorder %s33, 1
      %p140 = por %p138, %p139
      %p141 = scmp.ne.s32.totalorder %s132, %s133
      %p142 = scmp.eq.s32.totalorder %s33, 0
      %p143 = por %p141, %p142
      %p144 = scmp.ne.s32.totalorder %s132, %s133
      %p145 = scmp.eq.s32.totalorder %s34, 1
      %p146 = por %p144, %p145
      %p148 = scmp.ne.s32.totalorder %s133, %s147
      %p149 = scmp.eq.s32.totalorder %s34, 0
      %p150 = por %p148, %p149
      %s152 = sadd.s32 %s151, 1
      %p155 = scmp.eq.s32.totalorder %s28, 1
      %p156 = scmp.ne.s32.totalorder %s151, %s153
      %p157 = scmp.eq.s32.totalorder %s28, 0
      %p158 = por %p156, %p157
      %p159 = scmp.ne.s32.totalorder %s151, %s153
      %p160 = scmp.eq.s32.totalorder %s33, 1
      %p161 = por %p159, %p160
      %p162 = scmp.ne.s32.totalorder %s153, %s154
      %p163 = scmp.eq.s32.totalorder %s33, 0
      %p164 = por %p162, %p163
      %p165 = scmp.ne.s32.totalorder %s153, %s154
      %p166 = scmp.eq.s32.totalorder %s34, 1
      %p167 = por %p165, %p166
      %p169 = scmp.ne.s32.totalorder %s154, %s168
      %p170 = scmp.eq.s32.totalorder %s34, 0
      %p171 = por %p169, %p170
      %s173 = sadd.s32 %s172, 1
      %p176 = scmp.eq.s32.totalorder %s28, 1
      %p177 = scmp.ne.s32.totalorder %s172, %s174
      %p178 = scmp.eq.s32.totalorder %s28, 0
      %p179 = por %p177, %p178
      %p180 = scmp.ne.s32.totalorder %s172, %s174
      %p181 = scmp.eq.s32.totalorder %s33, 1
      %p182 = por %p180, %p181
      %p183 = scmp.ne.s32.totalorder %s174, %s175
      %p184 = scmp.eq.s32.totalorder %s33, 0
      %p185 = por %p183, %p184
      %p186 = scmp.ne.s32.totalorder %s174, %s175
      %p187 = scmp.eq.s32.totalorder %s34, 1
      %p188 = por %p186, %p187
      %p190 = scmp.ne.s32.totalorder %s175, %s189
      %p191 = scmp.eq.s32.totalorder %s34, 0
      %p192 = por %p190, %p191
      %s194 = sadd.s32 %s193, 1
      %p197 = scmp.eq.s32.totalorder %s28, 1
      %p198 = scmp.ne.s32.totalorder %s193, %s195
      %p199 = scmp.eq.s32.totalorder %s28, 0
      %p200 = por %p198, %p199
      %p201 = scmp.ne.s32.totalorder %s193, %s195
      %p202 = scmp.eq.s32.totalorder %s33, 1
      %p203 = por %p201, %p202
      %p204 = scmp.ne.s32.totalorder %s195, %s196
      %p205 = scmp.eq.s32.totalorder %s33, 0
      %p206 = por %p204, %p205
      %p207 = scmp.ne.s32.totalorder %s195, %s196
      %p208 = scmp.eq.s32.totalorder %s34, 1
      %p209 = por %p207, %p208
      %p211 = scmp.ne.s32.totalorder %s196, %s210
      %p212 = scmp.eq.s32.totalorder %s34, 0
      %p213 = por %p211, %p212
      %s215 = sadd.s32 %s214, 1
      %p218 = scmp.eq.s32.totalorder %s28, 1
      %p219 = scmp.ne.s32.totalorder %s214, %s216
      %p220 = scmp.eq.s32.totalorder %s28, 0
      %p221 = por %p219, %p220
      %p222 = scmp.ne.s32.totalorder %s214, %s216
      %p223 = scmp.eq.s32.totalorder %s33, 1
      %p224 = por %p222, %p223
      %p225 = scmp.ne.s32.totalorder %s216, %s217
      %p226 = scmp.eq.s32.totalorder %s33, 0
      %p227 = por %p225, %p226
      %p228 = scmp.ne.s32.totalorder %s216, %s217
      %p229 = scmp.eq.s32.totalorder %s34, 1
      %p230 = por %p228, %p229
      %p232 = scmp.ne.s32.totalorder %s217, %s231
      %p233 = scmp.eq.s32.totalorder %s34, 0
      %p234 = por %p232, %p233
      %s236 = sadd.s32 %s235, 1
      %p239 = scmp.eq.s32.totalorder %s28, 1
      %p240 = scmp.ne.s32.totalorder %s235, %s237
      %p241 = scmp.eq.s32.totalorder %s28, 0
      %p242 = por %p240, %p241
      %p243 = scmp.ne.s32.totalorder %s235, %s237
      %p244 = scmp.eq.s32.totalorder %s33, 1
      %p245 = por %p243, %p244
      %p246 = scmp.ne.s32.totalorder %s237, %s238
      %p247 = scmp.eq.s32.totalorder %s33, 0
      %p248 = por %p246, %p247
      %p249 = scmp.ne.s32.totalorder %s237, %s238
      %p250 = scmp.eq.s32.totalorder %s34, 1
      %p251 = por %p249, %p250
      %p253 = scmp.ne.s32.totalorder %s238, %s252
      %p254 = scmp.eq.s32.totalorder %s34, 0
      %p255 = por %p253, %p254
      %s257 = sadd.s32 %s256, 1
      %p260 = scmp.eq.s32.totalorder %s28, 1
      %p261 = scmp.ne.s32.totalorder %s256, %s258
      %p262 = scmp.eq.s32.totalorder %s28, 0
      %p263 = por %p261, %p262
      %p264 = scmp.ne.s32.totalorder %s256, %s258
      %p265 = scmp.eq.s32.totalorder %s33, 1
      %p266 = por %p264, %p265
      %p267 = scmp.ne.s32.totalorder %s258, %s259
      %p268 = scmp.eq.s32.totalorder %s33, 0
      %p269 = por %p267, %p268
      %p270 = scmp.ne.s32.totalorder %s258, %s259
      %p271 = scmp.eq.s32.totalorder %s34, 1
      %p272 = por %p270, %p271
      %p274 = scmp.ne.s32.totalorder %s259, %s273
      %p275 = scmp.eq.s32.totalorder %s34, 0
      %p276 = por %p274, %p275
      %s278 = sadd.s32 %s277, 1
      %p281 = scmp.eq.s32.totalorder %s28, 1
      %p282 = scmp.ne.s32.totalorder %s277, %s279
      %p283 = scmp.eq.s32.totalorder %s28, 0
      %p284 = por %p282, %p283
      %p285 = scmp.ne.s32.totalorder %s277, %s279
      %p286 = scmp.eq.s32.totalorder %s33, 1
      %p287 = por %p285, %p286
      %p288 = scmp.ne.s32.totalorder %s279, %s280
      %p289 = scmp.eq.s32.totalorder %s33, 0
      %p290 = por %p288, %p289
      %p291 = scmp.ne.s32.totalorder %s279, %s280
      %p292 = scmp.eq.s32.totalorder %s34, 1
      %p293 = por %p291, %p292
      %p295 = scmp.ne.s32.totalorder %s280, %s294
      %p296 = scmp.eq.s32.totalorder %s34, 0
      %p297 = por %p295, %p296
      %s299 = sadd.s32 %s298, 1
      %p302 = scmp.eq.s32.totalorder %s28, 1
      %p303 = scmp.ne.s32.totalorder %s298, %s300
      %p304 = scmp.eq.s32.totalorder %s28, 0
      %p305 = por %p303, %p304
      %p306 = scmp.ne.s32.totalorder %s298, %s300
      %p307 = scmp.eq.s32.totalorder %s33, 1
      %p308 = por %p306, %p307
      %p309 = scmp.ne.s32.totalorder %s300, %s301
      %p310 = scmp.eq.s32.totalorder %s33, 0
      %p311 = por %p309, %p310
      %p312 = scmp.ne.s32.totalorder %s300, %s301
      %p313 = scmp.eq.s32.totalorder %s34, 1
      %p314 = por %p312, %p313
      %p316 = scmp.ne.s32.totalorder %s301, %s315
      %p317 = scmp.eq.s32.totalorder %s34, 0
      %p318 = por %p316, %p317
      %s319 = ssub.s32 %s28, %s35
      %p320 = scmp.eq.s32.totalorder %s319, 0
      %s322 = sadd.s32 %s321, 1
      %s323 = scalar_select %p320, %s321, %s322
      %p326 = pneg %p320
      %p327 = scmp.eq.s32.totalorder %s28, 1
      %p328 = por %p326, %p327
      %p329 = scmp.ne.s32.totalorder %s321, %s324
      %p330 = scmp.eq.s32.totalorder %s28, 0
      %p331 = por %p329, %p330
      %p332 = scmp.ne.s32.totalorder %s321, %s324
      %p333 = scmp.eq.s32.totalorder %s33, 1
      %p334 = por %p332, %p333
      %p335 = scmp.ne.s32.totalorder %s324, %s325
      %p336 = scmp.eq.s32.totalorder %s33, 0
      %p337 = por %p335, %p336
      %p338 = scmp.ne.s32.totalorder %s324, %s325
      %p339 = scmp.eq.s32.totalorder %s34, 1
      %p340 = por %p338, %p339
      %p342 = scmp.ne.s32.totalorder %s325, %s341
      %p343 = scmp.eq.s32.totalorder %s34, 0
      %p344 = por %p342, %p343
      %s345 = ssub.s32 %s28, %s35
      %p346 = scmp.eq.s32.totalorder %s345, 0
      %s348 = sadd.s32 %s347, 1
      %s349 = scalar_select %p346, %s347, %s348
      %p352 = pneg %p346
      %p353 = scmp.eq.s32.totalorder %s28, 1
      %p354 = por %p352, %p353
      %p355 = scmp.ne.s32.totalorder %s347, %s350
      %p356 = scmp.eq.s32.totalorder %s28, 0
      %p357 = por %p355, %p356
      %p358 = scmp.ne.s32.totalorder %s347, %s350
      %p359 = scmp.eq.s32.totalorder %s33, 1
      %p360 = por %p358, %p359
      %p361 = scmp.ne.s32.totalorder %s350, %s351
      %p362 = scmp.eq.s32.totalorder %s33, 0
      %p363 = por %p361, %p362
      %p364 = scmp.ne.s32.totalorder %s350, %s351
      %p365 = scmp.eq.s32.totalorder %s34, 1
      %p366 = por %p364, %p365
      %p368 = scmp.ne.s32.totalorder %s351, %s367
      %p369 = scmp.eq.s32.totalorder %s34, 0
      %p370 = por %p368, %p369
      %s371 = ssub.s32 %s28, %s35
      %p372 = scmp.eq.s32.totalorder %s371, 0
      %s374 = sadd.s32 %s373, 1
      %s375 = scalar_select %p372, %s373, %s374
      %p378 = pneg %p372
      %p379 = scmp.eq.s32.totalorder %s28, 1
      %p380 = por %p378, %p379
      %p381 = scmp.ne.s32.totalorder %s373, %s376
      %p382 = scmp.eq.s32.totalorder %s28, 0
      %p383 = por %p381, %p382
      %p384 = scmp.ne.s32.totalorder %s373, %s376
      %p385 = scmp.eq.s32.totalorder %s33, 1
      %p386 = por %p384, %p385
      %p387 = scmp.ne.s32.totalorder %s376, %s377
      %p388 = scmp.eq.s32.totalorder %s33, 0
      %p389 = por %p387, %p388
      %p390 = scmp.ne.s32.totalorder %s376, %s377
      %p391 = scmp.eq.s32.totalorder %s34, 1
      %p392 = por %p390, %p391
      %p394 = scmp.ne.s32.totalorder %s377, %s393
      %p395 = scmp.eq.s32.totalorder %s34, 0
      %p396 = por %p394, %p395
      %p397 = scmp.le.s32.totalorder 1, %s28
      %p398 = scmp.lt.s32.totalorder %s28, 3
      %p399 = pnand %p397, %p398
      %p400 = pneg %p399
      // Predicated region
      $region9: #{lab_forward.2} parent=5 // pred_check
        _
      $region10: #{lab_forward.2} parent=5 // pred_check_branch
        %402 = sbr.rel (%p399) target = $region12
      $region11: #{lab_forward.2} parent=5 // pred_region
        %s403 = ssub.s32 %s28, 1
        // Predicated region
        $region13: #{lab_forward.2} parent=11 // pred_check
          %p404 = pneg %p101
        $region14: #{lab_forward.2} parent=11 // pred_check_branch
          %406 = sbr.rel (%p404) target = $region16
        $region15: #{lab_forward.2} parent=11 // pred_region
          _
        $region16: #{lab_forward.2} parent=11 // pred_fallthru
          _
        // Predicated region
        $region17: #{lab_forward.2} parent=11 // pred_check
          %p407 = pneg %p122
        $region18: #{lab_forward.2} parent=11 // pred_check_branch
          %409 = sbr.rel (%p407) target = $region20
        $region19: #{lab_forward.2} parent=11 // pred_region
          _
        $region20: #{lab_forward.2} parent=11 // pred_fallthru
          _
        // Predicated region
        $region21: #{lab_forward.2} parent=11 // pred_check
          %p410 = pneg %p143
        $region22: #{lab_forward.2} parent=11 // pred_check_branch
          %412 = sbr.rel (%p410) target = $region24
        $region23: #{lab_forward.2} parent=11 // pred_region
          _
        $region24: #{lab_forward.2} parent=11 // pred_fallthru
          _
        // Predicated region
        $region25: #{lab_forward.2} parent=11 // pred_check
          %p413 = pneg %p164
        $region26: #{lab_forward.2} parent=11 // pred_check_branch
          %415 = sbr.rel (%p413) target = $region28
        $region27: #{lab_forward.2} parent=11 // pred_region
          _
        $region28: #{lab_forward.2} parent=11 // pred_fallthru
          _
        // Predicated region
        $region29: #{lab_forward.2} parent=11 // pred_check
          %p416 = pneg %p185
        $region30: #{lab_forward.2} parent=11 // pred_check_branch
          %418 = sbr.rel (%p416) target = $region32
        $region31: #{lab_forward.2} parent=11 // pred_region
          _
        $region32: #{lab_forward.2} parent=11 // pred_fallthru
          _
        // Predicated region
        $region33: #{lab_forward.2} parent=11 // pred_check
          %p419 = pneg %p206
        $region34: #{lab_forward.2} parent=11 // pred_check_branch
          %421 = sbr.rel (%p419) target = $region36
        $region35: #{lab_forward.2} parent=11 // pred_region
          _
        $region36: #{lab_forward.2} parent=11 // pred_fallthru
          _
        // Predicated region
        $region37: #{lab_forward.2} parent=11 // pred_check
          %p422 = pneg %p227
        $region38: #{lab_forward.2} parent=11 // pred_check_branch
          %424 = sbr.rel (%p422) target = $region40
        $region39: #{lab_forward.2} parent=11 // pred_region
          _
        $region40: #{lab_forward.2} parent=11 // pred_fallthru
          _
        // Predicated region
        $region41: #{lab_forward.2} parent=11 // pred_check
          %p425 = pneg %p248
        $region42: #{lab_forward.2} parent=11 // pred_check_branch
          %427 = sbr.rel (%p425) target = $region44
        $region43: #{lab_forward.2} parent=11 // pred_region
          _
        $region44: #{lab_forward.2} parent=11 // pred_fallthru
          _
        // Predicated region
        $region45: #{lab_forward.2} parent=11 // pred_check
          %p428 = pneg %p269
        $region46: #{lab_forward.2} parent=11 // pred_check_branch
          %430 = sbr.rel (%p428) target = $region48
        $region47: #{lab_forward.2} parent=11 // pred_region
          _
        $region48: #{lab_forward.2} parent=11 // pred_fallthru
          _
        // Predicated region
        $region49: #{lab_forward.2} parent=11 // pred_check
          %p431 = pneg %p290
        $region50: #{lab_forward.2} parent=11 // pred_check_branch
          %433 = sbr.rel (%p431) target = $region52
        $region51: #{lab_forward.2} parent=11 // pred_region
          _
        $region52: #{lab_forward.2} parent=11 // pred_fallthru
          _
        // Predicated region
        $region53: #{lab_forward.2} parent=11 // pred_check
          %p434 = pneg %p311
        $region54: #{lab_forward.2} parent=11 // pred_check_branch
          %436 = sbr.rel (%p434) target = $region56
        $region55: #{lab_forward.2} parent=11 // pred_region
          _
        $region56: #{lab_forward.2} parent=11 // pred_fallthru
          _
      $region12: #{lab_forward.2} parent=5 // pred_fallthru
        _
      %p437 = scmp.lt.s32.totalorder %s28, 2
      // Predicated region
      $region57: #{lab_forward.2} parent=5 // pred_check
        %p438 = pneg %p437
      $region58: #{lab_forward.2} parent=5 // pred_check_branch
        %440 = sbr.rel (%p438) target = $region60
      $region59: #{lab_forward.2} parent=5 // pred_region
        // Predicated region
        $region61: #{lab_forward.2} parent=59 // pred_check
          %p441 = pneg %p48
        $region62: #{lab_forward.2} parent=59 // pred_check_branch
          %443 = sbr.rel (%p441) target = $region64
        $region63: #{lab_forward.2} parent=59 // pred_region
          %p444 = scmp.lt.s32.totalorder %s28, 1
          %s445 = scalar_select %p444, %s28, 1
          %s446 = smul.addr %s445, 8
          %s447 = scalar_lea.vmem %s0, %s446
        $region64: #{lab_forward.2} parent=59 // pred_fallthru
          _
        // Predicated region
        $region65: #{lab_forward.2} parent=59 // pred_check
          %p448 = pneg %p74
        $region66: #{lab_forward.2} parent=59 // pred_check_branch
          %450 = sbr.rel (%p448) target = $region68
        $region67: #{lab_forward.2} parent=59 // pred_region
          %p451 = scmp.lt.s32.totalorder %s28, 1
          %s452 = scalar_select %p451, %s28, 1
          %s453 = scalar_lea.vmem %s1, %s452
        $region68: #{lab_forward.2} parent=59 // pred_fallthru
          _
      $region60: #{lab_forward.2} parent=5 // pred_fallthru
        _
      %p454 = scmp.le.s32.totalorder 1, %s28
      %p455 = scmp.lt.s32.totalorder %s28, 3
      %p456 = pnand %p454, %p455
      %p457 = pneg %p456
      // Predicated region
      $region69: #{lab_forward.2} parent=5 // pred_check
        _
      $region70: #{lab_forward.2} parent=5 // pred_check_branch
        %459 = sbr.rel (%p456) target = $region72
      $region71: #{lab_forward.2} parent=5 // pred_region
        %s460 = ssub.s32 %s28, 1
        %p461 = scmp.lt.s32.totalorder %s33, 1
        %s462 = scalar_select %p461, %s33, 1
        %s463 = smul.addr %s462, 8
        %s464 = scalar_lea.vmem %s0, %s463
        %p465 = pneg %p54
        %p466 = pneg %p51
        %p467 = scmp.lt.s32.totalorder %s33, 1
        %s468 = scalar_select %p467, %s33, 1
        %s469 = scalar_lea.vmem %s1, %s468
        %p470 = pneg %p80
        %p471 = pneg %p77
        %p472 = pneg %p101
        %p473 = pneg %p98
        %p474 = pneg %p122
        %p475 = pneg %p119
        %p476 = pneg %p143
        %p477 = pneg %p140
        %p478 = pneg %p164
        %p479 = pneg %p161
        %p480 = pneg %p185
        %p481 = pneg %p182
        %p482 = pneg %p206
        %p483 = pneg %p203
        %p484 = pneg %p227
        %p485 = pneg %p224
        %p486 = pneg %p248
        %p487 = pneg %p245
        %p488 = pneg %p269
        %p489 = pneg %p266
        %p490 = pneg %p290
        %p491 = pneg %p287
        %p492 = pneg %p311
        %p493 = pneg %p308
        %p494 = pneg %p337
        %p495 = pneg %p334
        %p496 = scmp.lt.s32.totalorder %s33, 1
        %s497 = scalar_select %p496, %s33, 1
        %s498 = smul.addr %s497, 8
        %s499 = scalar_lea.vmem %s13, %s498
        %p500 = pneg %p363
        %p501 = pneg %p360
        %s502 = sand.u32 %s350, 1
        %s503 = scalar_lea.sflag [#allocation3], %s502
        %s504 = sand.u32 %s350, 1
        %s505 = smul.addr %s504, 2
        %s506 = scalar_lea.vmem [#allocation2], %s505
        %p507 = pneg %p389
        %p508 = pneg %p386
        %s509 = sand.u32 %s376, 1
        %s510 = scalar_lea.sflag [#allocation5], %s509
        %s511 = sand.u32 %s376, 1
        %s512 = smul.addr %s511, 2
        %s513 = scalar_lea.vmem [#allocation4], %s512
        %p514 = scmp.lt.s32.totalorder %s33, 1
        %s515 = scalar_select %p514, %s33, 1
        %s516 = smul.addr %s515, 8
        %s517 = scalar_lea.vmem %s0, %s516
        %p518 = scmp.lt.s32.totalorder %s33, 1
        %s519 = scalar_select %p518, %s33, 1
        %s520 = scalar_lea.vmem %s1, %s519
        %p521 = scmp.lt.s32.totalorder %s33, 1
        %s522 = scalar_select %p521, %s33, 1
        %s523 = smul.addr %s522, 8
        %s524 = scalar_lea.vmem %s13, %s523
        %v525 = vld [vmem:[%s517] sm:$0xff]
        %v526 = vld [vmem:[%s2] sm:$0xff]
        %v527 = vld [vmem:[%s2 + $0x8] sm:$0xff]
        %v528 = vld [vmem:[%s2 + $0x10] sm:$0xff]
        %v529 = vld [vmem:[%s2 + $0x18] sm:$0xff]
        %v530 = vld [vmem:[%s3] sm:$0x1]
        %v532 = vperm.slane %v530, 0
        %vm534 = vcmask 261120
        %v536 = vsel %vm534, %v525, 0
        %538 = vmatpush.msra.mxu0 0.0
        %539 = vmatpush.msra.mxu0 0.0
        %540 = vmatpush.msra.mxu0 0.0
        %541 = vmatpush.msra.mxu0 0.0
        %542 = vmatpush.msra.mxu0 0.0
        %543 = vmatpush.msra.mxu0 0.0
        %544 = vmatpush.msra.mxu0 0.0
        %545 = vmatpush.msra.mxu0 0.0
        %546 = vmatpush.msra.mxu0 0.0
        %547 = vmatpush.msra.mxu0 0.0
        %548 = vmatpush.msra.mxu0 0.0
        %549 = vmatpush.msra.mxu0 0.0
        %550 = vmatpush.msra.mxu0 %v529
        %551 = vmatpush.msra.mxu0 %v528
        %552 = vmatpush.msra.mxu0 %v527
        %553 = vmatpush.msra.mxu0 %v526
        %554 = vmatmul.f32.gmra.mxu0 %v536
        %v555 = vpop.f32.mrf.mxu0
        %v556 = vadd.f32 %v532, %v555
        %557 = vdwg.mxu0
        %559 = vrot.lane.b32.xlu0 %v556, 120
        %v560 = vpop.permute.xlu0 %559
        %561 = vrot.lane.b32.xlu0 %v556, 112
        %v562 = vpop.permute.xlu0 %561
        %563 = vrot.lane.b32.xlu0 %v556, 104
        %v564 = vpop.permute.xlu0 %563
        %565 = vrot.lane.b32.xlu0 %v556, 96
        %v566 = vpop.permute.xlu0 %565
        %567 = vrot.lane.b32.xlu0 %v560, 96
        %v568 = vpop.permute.xlu0 %567
        %569 = vrot.lane.b32.xlu0 %v562, 96
        %v570 = vpop.permute.xlu0 %569
        %571 = vrot.lane.b32.xlu0 %v564, 96
        %v572 = vpop.permute.xlu0 %571
        %577 = vxpose.xlu0.b32.start [1/16] %v566, 128
        %578 = vxpose.xlu0.b32.cont [2/16] 0.0, 128
        %579 = vxpose.xlu0.b32.cont [3/16] 0.0, 128
        %580 = vxpose.xlu0.b32.cont [4/16] 0.0, 128
        %581 = vxpose.xlu0.b32.cont [5/16] 0.0, 128
        %582 = vxpose.xlu0.b32.cont [6/16] 0.0, 128
        %583 = vxpose.xlu0.b32.cont [7/16] 0.0, 128
        %584 = vxpose.xlu0.b32.cont [8/16] 0.0, 128
        %585 = vxpose.xlu0.b32.cont [9/16] 0.0, 128
        %586 = vxpose.xlu0.b32.cont [10/16] 0.0, 128
        %587 = vxpose.xlu0.b32.cont [11/16] 0.0, 128
        %588 = vxpose.xlu0.b32.cont [12/16] 0.0, 128
        %589 = vxpose.xlu0.b32.cont [13/16] 0.0, 128
        %590 = vxpose.xlu0.b32.cont [14/16] 0.0, 128
        %591 = vxpose.xlu0.b32.cont [15/16] 0.0, 128
        %592 = vxpose.xlu0.b32.end [16/16] 0.0, 128
        %v593 = vpop.trf.xlu0
        %v594 = vpop.trf.xlu0
        %v595 = vpop.trf.xlu0
        %v596 = vpop.trf.xlu0
        %v597 = vpop.trf.xlu0
        %v598 = vpop.trf.xlu0
        %v599 = vpop.trf.xlu0
        %v600 = vpop.trf.xlu0
        %v601 = vpop.trf.xlu0
        %v602 = vpop.trf.xlu0
        %v603 = vpop.trf.xlu0
        %v604 = vpop.trf.xlu0
        %v605 = vpop.trf.xlu0
        %v606 = vpop.trf.xlu0
        %v607 = vpop.trf.xlu0
        %v608 = vpop.trf.xlu0
        %609 = vxpose.xlu0.b32.start [1/16] %v568, 128
        %610 = vxpose.xlu0.b32.cont [2/16] 0.0, 128
        %611 = vxpose.xlu0.b32.cont [3/16] 0.0, 128
        %612 = vxpose.xlu0.b32.cont [4/16] 0.0, 128
        %613 = vxpose.xlu0.b32.cont [5/16] 0.0, 128
        %614 = vxpose.xlu0.b32.cont [6/16] 0.0, 128
        %615 = vxpose.xlu0.b32.cont [7/16] 0.0, 128
        %616 = vxpose.xlu0.b32.cont [8/16] 0.0, 128
        %617 = vxpose.xlu0.b32.cont [9/16] 0.0, 128
        %618 = vxpose.xlu0.b32.cont [10/16] 0.0, 128
        %619 = vxpose.xlu0.b32.cont [11/16] 0.0, 128
        %620 = vxpose.xlu0.b32.cont [12/16] 0.0, 128
        %621 = vxpose.xlu0.b32.cont [13/16] 0.0, 128
        %622 = vxpose.xlu0.b32.cont [14/16] 0.0, 128
        %623 = vxpose.xlu0.b32.cont [15/16] 0.0, 128
        %624 = vxpose.xlu0.b32.end [16/16] 0.0, 128
        %v625 = vpop.trf.xlu0
        %v626 = vpop.trf.xlu0
        %v627 = vpop.trf.xlu0
        %v628 = vpop.trf.xlu0
        %v629 = vpop.trf.xlu0
        %v630 = vpop.trf.xlu0
        %v631 = vpop.trf.xlu0
        %v632 = vpop.trf.xlu0
        %v633 = vpop.trf.xlu0
        %v634 = vpop.trf.xlu0
        %v635 = vpop.trf.xlu0
        %v636 = vpop.trf.xlu0
        %v637 = vpop.trf.xlu0
        %v638 = vpop.trf.xlu0
        %v639 = vpop.trf.xlu0
        %v640 = vpop.trf.xlu0
        %641 = vxpose.xlu0.b32.start [1/16] %v570, 128
        %642 = vxpose.xlu0.b32.cont [2/16] 0.0, 128
        %643 = vxpose.xlu0.b32.cont [3/16] 0.0, 128
        %644 = vxpose.xlu0.b32.cont [4/16] 0.0, 128
        %645 = vxpose.xlu0.b32.cont [5/16] 0.0, 128
        %646 = vxpose.xlu0.b32.cont [6/16] 0.0, 128
        %647 = vxpose.xlu0.b32.cont [7/16] 0.0, 128
        %648 = vxpose.xlu0.b32.cont [8/16] 0.0, 128
        %649 = vxpose.xlu0.b32.cont [9/16] 0.0, 128
        %650 = vxpose.xlu0.b32.cont [10/16] 0.0, 128
        %651 = vxpose.xlu0.b32.cont [11/16] 0.0, 128
        %652 = vxpose.xlu0.b32.cont [12/16] 0.0, 128
        %653 = vxpose.xlu0.b32.cont [13/16] 0.0, 128
        %654 = vxpose.xlu0.b32.cont [14/16] 0.0, 128
        %655 = vxpose.xlu0.b32.cont [15/16] 0.0, 128
        %656 = vxpose.xlu0.b32.end [16/16] 0.0, 128
        %v657 = vpop.trf.xlu0
        %v658 = vpop.trf.xlu0
        %v659 = vpop.trf.xlu0
        %v660 = vpop.trf.xlu0
        %v661 = vpop.trf.xlu0
        %v662 = vpop.trf.xlu0
        %v663 = vpop.trf.xlu0
        %v664 = vpop.trf.xlu0
        %v665 = vpop.trf.xlu0
        %v666 = vpop.trf.xlu0
        %v667 = vpop.trf.xlu0
        %v668 = vpop.trf.xlu0
        %v669 = vpop.trf.xlu0
        %v670 = vpop.trf.xlu0
        %v671 = vpop.trf.xlu0
        %v672 = vpop.trf.xlu0
        %673 = vxpose.xlu0.b32.start [1/16] %v572, 128
        %674 = vxpose.xlu0.b32.cont [2/16] 0.0, 128
        %675 = vxpose.xlu0.b32.cont [3/16] 0.0, 128
        %676 = vxpose.xlu0.b32.cont [4/16] 0.0, 128
        %677 = vxpose.xlu0.b32.cont [5/16] 0.0, 128
        %678 = vxpose.xlu0.b32.cont [6/16] 0.0, 128
        %679 = vxpose.xlu0.b32.cont [7/16] 0.0, 128
        %680 = vxpose.xlu0.b32.cont [8/16] 0.0, 128
        %681 = vxpose.xlu0.b32.cont [9/16] 0.0, 128
        %682 = vxpose.xlu0.b32.cont [10/16] 0.0, 128
        %683 = vxpose.xlu0.b32.cont [11/16] 0.0, 128
        %684 = vxpose.xlu0.b32.cont [12/16] 0.0, 128
        %685 = vxpose.xlu0.b32.cont [13/16] 0.0, 128
        %686 = vxpose.xlu0.b32.cont [14/16] 0.0, 128
        %687 = vxpose.xlu0.b32.cont [15/16] 0.0, 128
        %688 = vxpose.xlu0.b32.end [16/16] 0.0, 128
        %v689 = vpop.trf.xlu0
        %v690 = vpop.trf.xlu0
        %v691 = vpop.trf.xlu0
        %v692 = vpop.trf.xlu0
        %v693 = vpop.trf.xlu0
        %v694 = vpop.trf.xlu0
        %v695 = vpop.trf.xlu0
        %v696 = vpop.trf.xlu0
        %v697 = vpop.trf.xlu0
        %v698 = vpop.trf.xlu0
        %v699 = vpop.trf.xlu0
        %v700 = vpop.trf.xlu0
        %v701 = vpop.trf.xlu0
        %v702 = vpop.trf.xlu0
        %v703 = vpop.trf.xlu0
        %v704 = vpop.trf.xlu0
        %vm705 = vcmask 64512
        %v706 = vsel %vm705, %v556, 0
        %708 = vmatpush.msra.mxu0 0.0
        %709 = vmatpush.msra.mxu0 0.0
        %710 = vmatpush.msra.mxu0 0.0
        %711 = vmatpush.msra.mxu0 0.0
        %712 = vmatpush.msra.mxu0 0.0
        %713 = vmatpush.msra.mxu0 0.0
        %714 = vmatpush.msra.mxu0 0.0
        %715 = vmatpush.msra.mxu0 0.0
        %716 = vmatpush.msra.mxu0 0.0
        %717 = vmatpush.msra.mxu0 0.0
        %718 = vmatpush.msra.mxu0 0.0
        %719 = vmatpush.msra.mxu0 0.0
        %720 = vmatpush.msra.mxu0 0.0
        %721 = vmatpush.msra.mxu0 0.0
        %722 = vmatpush.msra.mxu0 0.0
        %723 = vmatpush.msra.mxu0 %v593
        %724 = vmatmul.f32.gmra.mxu0 %v706
        %v725 = vpop.f32.mrf.mxu0
        %v726 = vadd.f32 0.0, %v725
        %727 = vdwg.mxu0
        %v728 = vsel %vm705, %v560, 0
        %730 = vmatpush.msra.mxu0 0.0
        %731 = vmatpush.msra.mxu0 0.0
        %732 = vmatpush.msra.mxu0 0.0
        %733 = vmatpush.msra.mxu0 0.0
        %734 = vmatpush.msra.mxu0 0.0
        %735 = vmatpush.msra.mxu0 0.0
        %736 = vmatpush.msra.mxu0 0.0
        %737 = vmatpush.msra.mxu0 0.0
        %738 = vmatpush.msra.mxu0 0.0
        %739 = vmatpush.msra.mxu0 0.0
        %740 = vmatpush.msra.mxu0 0.0
        %741 = vmatpush.msra.mxu0 0.0
        %742 = vmatpush.msra.mxu0 0.0
        %743 = vmatpush.msra.mxu0 0.0
        %744 = vmatpush.msra.mxu0 0.0
        %745 = vmatpush.msra.mxu0 %v625
        %746 = vmatmul.f32.gmra.mxu0 %v728
        %v747 = vpop.f32.mrf.mxu0
        %v748 = vadd.f32 0.0, %v747
        %749 = vdwg.mxu0
        %v750 = vsel %vm705, %v562, 0
        %752 = vmatpush.msra.mxu0 0.0
        %753 = vmatpush.msra.mxu0 0.0
        %754 = vmatpush.msra.mxu0 0.0
        %755 = vmatpush.msra.mxu0 0.0
        %756 = vmatpush.msra.mxu0 0.0
        %757 = vmatpush.msra.mxu0 0.0
        %758 = vmatpush.msra.mxu0 0.0
        %759 = vmatpush.msra.mxu0 0.0
        %760 = vmatpush.msra.mxu0 0.0
        %761 = vmatpush.msra.mxu0 0.0
        %762 = vmatpush.msra.mxu0 0.0
        %763 = vmatpush.msra.mxu0 0.0
        %764 = vmatpush.msra.mxu0 0.0
        %765 = vmatpush.msra.mxu0 0.0
        %766 = vmatpush.msra.mxu0 0.0
        %767 = vmatpush.msra.mxu0 %v657
        %768 = vmatmul.f32.gmra.mxu0 %v750
        %v769 = vpop.f32.mrf.mxu0
        %v770 = vadd.f32 0.0, %v769
        %771 = vdwg.mxu0
        %v772 = vsel %vm705, %v564, 0
        %774 = vmatpush.msra.mxu0 0.0
        %775 = vmatpush.msra.mxu0 0.0
        %776 = vmatpush.msra.mxu0 0.0
        %777 = vmatpush.msra.mxu0 0.0
        %778 = vmatpush.msra.mxu0 0.0
        %779 = vmatpush.msra.mxu0 0.0
        %780 = vmatpush.msra.mxu0 0.0
        %781 = vmatpush.msra.mxu0 0.0
        %782 = vmatpush.msra.mxu0 0.0
        %783 = vmatpush.msra.mxu0 0.0
        %784 = vmatpush.msra.mxu0 0.0
        %785 = vmatpush.msra.mxu0 0.0
        %786 = vmatpush.msra.mxu0 0.0
        %787 = vmatpush.msra.mxu0 0.0
        %788 = vmatpush.msra.mxu0 0.0
        %789 = vmatpush.msra.mxu0 %v689
        %790 = vmatmul.f32.gmra.mxu0 %v772
        %v791 = vpop.f32.mrf.mxu0
        %v792 = vadd.f32 0.0, %v791
        %793 = vdwg.mxu0
        %v794 = vmul.f32 %v726, 0.35355338
        %v795 = vmul.f32 %v748, 0.35355338
        %v796 = vmul.f32 %v770, 0.35355338
        %v797 = vmul.f32 %v792, 0.35355338
        %v798 = vld [vmem:[%s520] sm:$0x1]
        %vm799 = vcmp.eq.s32.totalorder %v798, 0
        %v800 = vsel %vm799, -1e+30, 0.0
        %v802 = vperm.slane %v800, 0
        %v804 = vadd.f32 %v794, %v802
        %v805 = vadd.f32 %v795, %v802
        %v806 = vadd.f32 %v796, %v802
        %v807 = vadd.f32 %v797, %v802
        %v808 = vsel %vm705, %v804, -inf
        %809 = vmax.xlane.f32.xlu0 %v808
        %v810 = vpop.xlane.xlu0 %809
        %v811 = vsel %vm705, %v805, -inf
        %812 = vmax.xlane.f32.xlu0 %v811
        %v813 = vpop.xlane.xlu0 %812
        %v814 = vsel %vm705, %v806, -inf
        %815 = vmax.xlane.f32.xlu0 %v814
        %v816 = vpop.xlane.xlu0 %815
        %v817 = vsel %vm705, %v807, -inf
        %818 = vmax.xlane.f32.xlu0 %v817
        %v819 = vpop.xlane.xlu0 %818
        %v820 = vsub.f32 %v804, %v810
        %v821 = vsub.f32 %v805, %v813
        %v822 = vsub.f32 %v806, %v816
        %v823 = vsub.f32 %v807, %v819
        %v824 = vmul.f32 %v820, 1.442695
        %v825 = vpow.pop %v824
        %v826 = vmul.f32 %v821, 1.442695
        %v827 = vpow.pop %v826
        %v828 = vmul.f32 %v822, 1.442695
        %v829 = vpow.pop %v828
        %v830 = vmul.f32 %v823, 1.442695
        %v831 = vpow.pop %v830
        %v832 = vsel %vm705, %v825, 0.0
        %833 = vadd.xlane.f32.xlu0 %v832
        %v834 = vpop.xlane.xlu0 %833
        %v835 = vsel %vm705, %v827, 0.0
        %836 = vadd.xlane.f32.xlu0 %v835
        %v837 = vpop.xlane.xlu0 %836
        %v838 = vsel %vm705, %v829, 0.0
        %839 = vadd.xlane.f32.xlu0 %v838
        %v840 = vpop.xlane.xlu0 %839
        %v841 = vsel %vm705, %v831, 0.0
        %842 = vadd.xlane.f32.xlu0 %v841
        %v843 = vpop.xlane.xlu0 %842
        %v844 = vrcp.pop %v834
        %v845 = vrcp.pop %v837
        %v846 = vrcp.pop %v840
        %v847 = vrcp.pop %v843
        %v848 = vmul.f32 %v825, %v844
        %v849 = vmul.f32 %v827, %v845
        %v850 = vmul.f32 %v829, %v846
        %v851 = vmul.f32 %v831, %v847
        %852 = vrot.lane.b32.xlu0 %v556, 64
        %v853 = vpop.permute.xlu0 %852
        %854 = vrot.lane.b32.xlu0 %v560, 64
        %v855 = vpop.permute.xlu0 %854
        %856 = vrot.lane.b32.xlu0 %v562, 64
        %v857 = vpop.permute.xlu0 %856
        %858 = vrot.lane.b32.xlu0 %v564, 64
        %v859 = vpop.permute.xlu0 %858
        %864 = vxpose.xlu0.b32.start [1/16] %v853, 128
        %865 = vxpose.xlu0.b32.cont [2/16] 0.0, 128
        %866 = vxpose.xlu0.b32.cont [3/16] 0.0, 128
        %867 = vxpose.xlu0.b32.cont [4/16] 0.0, 128
        %868 = vxpose.xlu0.b32.cont [5/16] 0.0, 128
        %869 = vxpose.xlu0.b32.cont [6/16] 0.0, 128
        %870 = vxpose.xlu0.b32.cont [7/16] 0.0, 128
        %871 = vxpose.xlu0.b32.cont [8/16] 0.0, 128
        %872 = vxpose.xlu0.b32.cont [9/16] 0.0, 128
        %873 = vxpose.xlu0.b32.cont [10/16] 0.0, 128
        %874 = vxpose.xlu0.b32.cont [11/16] 0.0, 128
        %875 = vxpose.xlu0.b32.cont [12/16] 0.0, 128
        %876 = vxpose.xlu0.b32.cont [13/16] 0.0, 128
        %877 = vxpose.xlu0.b32.cont [14/16] 0.0, 128
        %878 = vxpose.xlu0.b32.cont [15/16] 0.0, 128
        %879 = vxpose.xlu0.b32.end [16/16] 0.0, 128
        %v880 = vpop.trf.xlu0
        %v881 = vpop.trf.xlu0
        %v882 = vpop.trf.xlu0
        %v883 = vpop.trf.xlu0
        %v884 = vpop.trf.xlu0
        %v885 = vpop.trf.xlu0
        %v886 = vpop.trf.xlu0
        %v887 = vpop.trf.xlu0
        %v888 = vpop.trf.xlu0
        %v889 = vpop.trf.xlu0
        %v890 = vpop.trf.xlu0
        %v891 = vpop.trf.xlu0
        %v892 = vpop.trf.xlu0
        %v893 = vpop.trf.xlu0
        %v894 = vpop.trf.xlu0
        %v895 = vpop.trf.xlu0
        %896 = vxpose.xlu0.b32.start [1/16] %v855, 128
        %897 = vxpose.xlu0.b32.cont [2/16] 0.0, 128
        %898 = vxpose.xlu0.b32.cont [3/16] 0.0, 128
        %899 = vxpose.xlu0.b32.cont [4/16] 0.0, 128
        %900 = vxpose.xlu0.b32.cont [5/16] 0.0, 128
        %901 = vxpose.xlu0.b32.cont [6/16] 0.0, 128
        %902 = vxpose.xlu0.b32.cont [7/16] 0.0, 128
        %903 = vxpose.xlu0.b32.cont [8/16] 0.0, 128
        %904 = vxpose.xlu0.b32.cont [9/16] 0.0, 128
        %905 = vxpose.xlu0.b32.cont [10/16] 0.0, 128
        %906 = vxpose.xlu0.b32.cont [11/16] 0.0, 128
        %907 = vxpose.xlu0.b32.cont [12/16] 0.0, 128
        %908 = vxpose.xlu0.b32.cont [13/16] 0.0, 128
        %909 = vxpose.xlu0.b32.cont [14/16] 0.0, 128
        %910 = vxpose.xlu0.b32.cont [15/16] 0.0, 128
        %911 = vxpose.xlu0.b32.end [16/16] 0.0, 128
        %v912 = vpop.trf.xlu0
        %v913 = vpop.trf.xlu0
        %v914 = vpop.trf.xlu0
        %v915 = vpop.trf.xlu0
        %v916 = vpop.trf.xlu0
        %v917 = vpop.trf.xlu0
        %v918 = vpop.trf.xlu0
        %v919 = vpop.trf.xlu0
        %v920 = vpop.trf.xlu0
        %v921 = vpop.trf.xlu0
        %v922 = vpop.trf.xlu0
        %v923 = vpop.trf.xlu0
        %v924 = vpop.trf.xlu0
        %v925 = vpop.trf.xlu0
        %v926 = vpop.trf.xlu0
        %v927 = vpop.trf.xlu0
        %928 = vxpose.xlu0.b32.start [1/16] %v857, 128
        %929 = vxpose.xlu0.b32.cont [2/16] 0.0, 128
        %930 = vxpose.xlu0.b32.cont [3/16] 0.0, 128
        %931 = vxpose.xlu0.b32.cont [4/16] 0.0, 128
        %932 = vxpose.xlu0.b32.cont [5/16] 0.0, 128
        %933 = vxpose.xlu0.b32.cont [6/16] 0.0, 128
        %934 = vxpose.xlu0.b32.cont [7/16] 0.0, 128
        %935 = vxpose.xlu0.b32.cont [8/16] 0.0, 128
        %936 = vxpose.xlu0.b32.cont [9/16] 0.0, 128
        %937 = vxpose.xlu0.b32.cont [10/16] 0.0, 128
        %938 = vxpose.xlu0.b32.cont [11/16] 0.0, 128
        %939 = vxpose.xlu0.b32.cont [12/16] 0.0, 128
        %940 = vxpose.xlu0.b32.cont [13/16] 0.0, 128
        %941 = vxpose.xlu0.b32.cont [14/16] 0.0, 128
        %942 = vxpose.xlu0.b32.cont [15/16] 0.0, 128
        %943 = vxpose.xlu0.b32.end [16/16] 0.0, 128
        %v944 = vpop.trf.xlu0
        %v945 = vpop.trf.xlu0
        %v946 = vpop.trf.xlu0
        %v947 = vpop.trf.xlu0
        %v948 = vpop.trf.xlu0
        %v949 = vpop.trf.xlu0
        %v950 = vpop.trf.xlu0
        %v951 = vpop.trf.xlu0
        %v952 = vpop.trf.xlu0
        %v953 = vpop.trf.xlu0
        %v954 = vpop.trf.xlu0
        %v955 = vpop.trf.xlu0
        %v956 = vpop.trf.xlu0
        %v957 = vpop.trf.xlu0
        %v958 = vpop.trf.xlu0
        %v959 = vpop.trf.xlu0
        %960 = vxpose.xlu0.b32.start [1/16] %v859, 128
        %961 = vxpose.xlu0.b32.cont [2/16] 0.0, 128
        %962 = vxpose.xlu0.b32.cont [3/16] 0.0, 128
        %963 = vxpose.xlu0.b32.cont [4/16] 0.0, 128
        %964 = vxpose.xlu0.b32.cont [5/16] 0.0, 128
        %965 = vxpose.xlu0.b32.cont [6/16] 0.0, 128
        %966 = vxpose.xlu0.b32.cont [7/16] 0.0, 128
        %967 = vxpose.xlu0.b32.cont [8/16] 0.0, 128
        %968 = vxpose.xlu0.b32.cont [9/16] 0.0, 128
        %969 = vxpose.xlu0.b32.cont [10/16] 0.0, 128
        %970 = vxpose.xlu0.b32.cont [11/16] 0.0, 128
        %971 = vxpose.xlu0.b32.cont [12/16] 0.0, 128
        %972 = vxpose.xlu0.b32.cont [13/16] 0.0, 128
        %973 = vxpose.xlu0.b32.cont [14/16] 0.0, 128
        %974 = vxpose.xlu0.b32.cont [15/16] 0.0, 128
        %975 = vxpose.xlu0.b32.end [16/16] 0.0, 128
        %v976 = vpop.trf.xlu0
        %v977 = vpop.trf.xlu0
        %v978 = vpop.trf.xlu0
        %v979 = vpop.trf.xlu0
        %v980 = vpop.trf.xlu0
        %v981 = vpop.trf.xlu0
        %v982 = vpop.trf.xlu0
        %v983 = vpop.trf.xlu0
        %v984 = vpop.trf.xlu0
        %v985 = vpop.trf.xlu0
        %v986 = vpop.trf.xlu0
        %v987 = vpop.trf.xlu0
        %v988 = vpop.trf.xlu0
        %v989 = vpop.trf.xlu0
        %v990 = vpop.trf.xlu0
        %v991 = vpop.trf.xlu0
        %v993 = vsel %vm705, %v880, 0
        %v996 = vsel %vm705, %v848, 0
        %998 = vmatpush.xpose.msra.mxu0 0.0
        %999 = vmatpush.xpose.msra.mxu0 0.0
        %1000 = vmatpush.xpose.msra.mxu0 0.0
        %1001 = vmatpush.xpose.msra.mxu0 0.0
        %1002 = vmatpush.xpose.msra.mxu0 0.0
        %1003 = vmatpush.xpose.msra.mxu0 0.0
        %1004 = vmatpush.xpose.msra.mxu0 0.0
        %1005 = vmatpush.xpose.msra.mxu0 0.0
        %1006 = vmatpush.xpose.msra.mxu0 0.0
        %1007 = vmatpush.xpose.msra.mxu0 0.0
        %1008 = vmatpush.xpose.msra.mxu0 0.0
        %1009 = vmatpush.xpose.msra.mxu0 0.0
        %1010 = vmatpush.xpose.msra.mxu0 0.0
        %1011 = vmatpush.xpose.msra.mxu0 0.0
        %1012 = vmatpush.xpose.msra.mxu0 0.0
        %1013 = vmatpush.xpose.msra.mxu0 %v996
        %1014 = vmatmul.f32.gmra.mxu0 %v993
        %v1015 = vpop.f32.mrf.mxu0
        %v1016 = vadd.f32 0.0, %v1015
        %1017 = vdwg.mxu0
        %v1019 = vsel %vm705, %v912, 0
        %v1022 = vsel %vm705, %v849, 0
        %1024 = vmatpush.xpose.msra.mxu0 0.0
        %1025 = vmatpush.xpose.msra.mxu0 0.0
        %1026 = vmatpush.xpose.msra.mxu0 0.0
        %1027 = vmatpush.xpose.msra.mxu0 0.0
        %1028 = vmatpush.xpose.msra.mxu0 0.0
        %1029 = vmatpush.xpose.msra.mxu0 0.0
        %1030 = vmatpush.xpose.msra.mxu0 0.0
        %1031 = vmatpush.xpose.msra.mxu0 0.0
        %1032 = vmatpush.xpose.msra.mxu0 0.0
        %1033 = vmatpush.xpose.msra.mxu0 0.0
        %1034 = vmatpush.xpose.msra.mxu0 0.0
        %1035 = vmatpush.xpose.msra.mxu0 0.0
        %1036 = vmatpush.xpose.msra.mxu0 0.0
        %1037 = vmatpush.xpose.msra.mxu0 0.0
        %1038 = vmatpush.xpose.msra.mxu0 0.0
        %1039 = vmatpush.xpose.msra.mxu0 %v1022
        %1040 = vmatmul.f32.gmra.mxu0 %v1019
        %v1041 = vpop.f32.mrf.mxu0
        %v1042 = vadd.f32 0.0, %v1041
        %1043 = vdwg.mxu0
        %v1045 = vsel %vm705, %v944, 0
        %v1048 = vsel %vm705, %v850, 0
        %1050 = vmatpush.xpose.msra.mxu0 0.0
        %1051 = vmatpush.xpose.msra.mxu0 0.0
        %1052 = vmatpush.xpose.msra.mxu0 0.0
        %1053 = vmatpush.xpose.msra.mxu0 0.0
        %1054 = vmatpush.xpose.msra.mxu0 0.0
        %1055 = vmatpush.xpose.msra.mxu0 0.0
        %1056 = vmatpush.xpose.msra.mxu0 0.0
        %1057 = vmatpush.xpose.msra.mxu0 0.0
        %1058 = vmatpush.xpose.msra.mxu0 0.0
        %1059 = vmatpush.xpose.msra.mxu0 0.0
        %1060 = vmatpush.xpose.msra.mxu0 0.0
        %1061 = vmatpush.xpose.msra.mxu0 0.0
        %1062 = vmatpush.xpose.msra.mxu0 0.0
        %1063 = vmatpush.xpose.msra.mxu0 0.0
        %1064 = vmatpush.xpose.msra.mxu0 0.0
        %1065 = vmatpush.xpose.msra.mxu0 %v1048
        %1066 = vmatmul.f32.gmra.mxu0 %v1045
        %v1067 = vpop.f32.mrf.mxu0
        %v1068 = vadd.f32 0.0, %v1067
        %1069 = vdwg.mxu0
        %v1071 = vsel %vm705, %v976, 0
        %v1074 = vsel %vm705, %v851, 0
        %1076 = vmatpush.xpose.msra.mxu0 0.0
        %1077 = vmatpush.xpose.msra.mxu0 0.0
        %1078 = vmatpush.xpose.msra.mxu0 0.0
        %1079 = vmatpush.xpose.msra.mxu0 0.0
        %1080 = vmatpush.xpose.msra.mxu0 0.0
        %1081 = vmatpush.xpose.msra.mxu0 0.0
        %1082 = vmatpush.xpose.msra.mxu0 0.0
        %1083 = vmatpush.xpose.msra.mxu0 0.0
        %1084 = vmatpush.xpose.msra.mxu0 0.0
        %1085 = vmatpush.xpose.msra.mxu0 0.0
        %1086 = vmatpush.xpose.msra.mxu0 0.0
        %1087 = vmatpush.xpose.msra.mxu0 0.0
        %1088 = vmatpush.xpose.msra.mxu0 0.0
        %1089 = vmatpush.xpose.msra.mxu0 0.0
        %1090 = vmatpush.xpose.msra.mxu0 0.0
        %1091 = vmatpush.xpose.msra.mxu0 %v1074
        %1092 = vmatmul.f32.gmra.mxu0 %v1071
        %v1093 = vpop.f32.mrf.mxu0
        %v1094 = vadd.f32 0.0, %v1093
        %1095 = vdwg.mxu0
        %1096 = vxpose.xlu0.b32.start [1/16] %v1016, 128
        %1097 = vxpose.xlu0.b32.cont [2/16] 0.0, 128
        %1098 = vxpose.xlu0.b32.cont [3/16] 0.0, 128
        %1099 = vxpose.xlu0.b32.cont [4/16] 0.0, 128
        %1100 = vxpose.xlu0.b32.cont [5/16] 0.0, 128
        %1101 = vxpose.xlu0.b32.cont [6/16] 0.0, 128
        %1102 = vxpose.xlu0.b32.cont [7/16] 0.0, 128
        %1103 = vxpose.xlu0.b32.cont [8/16] 0.0, 128
        %1104 = vxpose.xlu0.b32.cont [9/16] 0.0, 128
        %1105 = vxpose.xlu0.b32.cont [10/16] 0.0, 128
        %1106 = vxpose.xlu0.b32.cont [11/16] 0.0, 128
        %1107 = vxpose.xlu0.b32.cont [12/16] 0.0, 128
        %1108 = vxpose.xlu0.b32.cont [13/16] 0.0, 128
        %1109 = vxpose.xlu0.b32.cont [14/16] 0.0, 128
        %1110 = vxpose.xlu0.b32.cont [15/16] 0.0, 128
        %1111 = vxpose.xlu0.b32.end [16/16] 0.0, 128
        %v1112 = vpop.trf.xlu0
        %v1113 = vpop.trf.xlu0
        %v1114 = vpop.trf.xlu0
        %v1115 = vpop.trf.xlu0
        %v1116 = vpop.trf.xlu0
        %v1117 = vpop.trf.xlu0
        %v1118 = vpop.trf.xlu0
        %v1119 = vpop.trf.xlu0
        %v1120 = vpop.trf.xlu0
        %v1121 = vpop.trf.xlu0
        %v1122 = vpop.trf.xlu0
        %v1123 = vpop.trf.xlu0
        %v1124 = vpop.trf.xlu0
        %v1125 = vpop.trf.xlu0
        %v1126 = vpop.trf.xlu0
        %v1127 = vpop.trf.xlu0
        %1128 = vxpose.xlu0.b32.start [1/16] %v1042, 128
        %1129 = vxpose.xlu0.b32.cont [2/16] 0.0, 128
        %1130 = vxpose.xlu0.b32.cont [3/16] 0.0, 128
        %1131 = vxpose.xlu0.b32.cont [4/16] 0.0, 128
        %1132 = vxpose.xlu0.b32.cont [5/16] 0.0, 128
        %1133 = vxpose.xlu0.b32.cont [6/16] 0.0, 128
        %1134 = vxpose.xlu0.b32.cont [7/16] 0.0, 128
        %1135 = vxpose.xlu0.b32.cont [8/16] 0.0, 128
        %1136 = vxpose.xlu0.b32.cont [9/16] 0.0, 128
        %1137 = vxpose.xlu0.b32.cont [10/16] 0.0, 128
        %1138 = vxpose.xlu0.b32.cont [11/16] 0.0, 128
        %1139 = vxpose.xlu0.b32.cont [12/16] 0.0, 128
        %1140 = vxpose.xlu0.b32.cont [13/16] 0.0, 128
        %1141 = vxpose.xlu0.b32.cont [14/16] 0.0, 128
        %1142 = vxpose.xlu0.b32.cont [15/16] 0.0, 128
        %1143 = vxpose.xlu0.b32.end [16/16] 0.0, 128
        %v1144 = vpop.trf.xlu0
        %v1145 = vpop.trf.xlu0
        %v1146 = vpop.trf.xlu0
        %v1147 = vpop.trf.xlu0
        %v1148 = vpop.trf.xlu0
        %v1149 = vpop.trf.xlu0
        %v1150 = vpop.trf.xlu0
        %v1151 = vpop.trf.xlu0
        %v1152 = vpop.trf.xlu0
        %v1153 = vpop.trf.xlu0
        %v1154 = vpop.trf.xlu0
        %v1155 = vpop.trf.xlu0
        %v1156 = vpop.trf.xlu0
        %v1157 = vpop.trf.xlu0
        %v1158 = vpop.trf.xlu0
        %v1159 = vpop.trf.xlu0
        %1160 = vxpose.xlu0.b32.start [1/16] %v1068, 128
        %1161 = vxpose.xlu0.b32.cont [2/16] 0.0, 128
        %1162 = vxpose.xlu0.b32.cont [3/16] 0.0, 128
        %1163 = vxpose.xlu0.b32.cont [4/16] 0.0, 128
        %1164 = vxpose.xlu0.b32.cont [5/16] 0.0, 128
        %1165 = vxpose.xlu0.b32.cont [6/16] 0.0, 128
        %1166 = vxpose.xlu0.b32.cont [7/16] 0.0, 128
        %1167 = vxpose.xlu0.b32.cont [8/16] 0.0, 128
        %1168 = vxpose.xlu0.b32.cont [9/16] 0.0, 128
        %1169 = vxpose.xlu0.b32.cont [10/16] 0.0, 128
        %1170 = vxpose.xlu0.b32.cont [11/16] 0.0, 128
        %1171 = vxpose.xlu0.b32.cont [12/16] 0.0, 128
        %1172 = vxpose.xlu0.b32.cont [13/16] 0.0, 128
        %1173 = vxpose.xlu0.b32.cont [14/16] 0.0, 128
        %1174 = vxpose.xlu0.b32.cont [15/16] 0.0, 128
        %1175 = vxpose.xlu0.b32.end [16/16] 0.0, 128
        %v1176 = vpop.trf.xlu0
        %v1177 = vpop.trf.xlu0
        %v1178 = vpop.trf.xlu0
        %v1179 = vpop.trf.xlu0
        %v1180 = vpop.trf.xlu0
        %v1181 = vpop.trf.xlu0
        %v1182 = vpop.trf.xlu0
        %v1183 = vpop.trf.xlu0
        %v1184 = vpop.trf.xlu0
        %v1185 = vpop.trf.xlu0
        %v1186 = vpop.trf.xlu0
        %v1187 = vpop.trf.xlu0
        %v1188 = vpop.trf.xlu0
        %v1189 = vpop.trf.xlu0
        %v1190 = vpop.trf.xlu0
        %v1191 = vpop.trf.xlu0
        %1192 = vxpose.xlu0.b32.start [1/16] %v1094, 128
        %1193 = vxpose.xlu0.b32.cont [2/16] 0.0, 128
        %1194 = vxpose.xlu0.b32.cont [3/16] 0.0, 128
        %1195 = vxpose.xlu0.b32.cont [4/16] 0.0, 128
        %1196 = vxpose.xlu0.b32.cont [5/16] 0.0, 128
        %1197 = vxpose.xlu0.b32.cont [6/16] 0.0, 128
        %1198 = vxpose.xlu0.b32.cont [7/16] 0.0, 128
        %1199 = vxpose.xlu0.b32.cont [8/16] 0.0, 128
        %1200 = vxpose.xlu0.b32.cont [9/16] 0.0, 128
        %1201 = vxpose.xlu0.b32.cont [10/16] 0.0, 128
        %1202 = vxpose.xlu0.b32.cont [11/16] 0.0, 128
        %1203 = vxpose.xlu0.b32.cont [12/16] 0.0, 128
        %1204 = vxpose.xlu0.b32.cont [13/16] 0.0, 128
        %1205 = vxpose.xlu0.b32.cont [14/16] 0.0, 128
        %1206 = vxpose.xlu0.b32.cont [15/16] 0.0, 128
        %1207 = vxpose.xlu0.b32.end [16/16] 0.0, 128
        %v1208 = vpop.trf.xlu0
        %v1209 = vpop.trf.xlu0
        %v1210 = vpop.trf.xlu0
        %v1211 = vpop.trf.xlu0
        %v1212 = vpop.trf.xlu0
        %v1213 = vpop.trf.xlu0
        %v1214 = vpop.trf.xlu0
        %v1215 = vpop.trf.xlu0
        %v1216 = vpop.trf.xlu0
        %v1217 = vpop.trf.xlu0
        %v1218 = vpop.trf.xlu0
        %v1219 = vpop.trf.xlu0
        %v1220 = vpop.trf.xlu0
        %v1221 = vpop.trf.xlu0
        %v1222 = vpop.trf.xlu0
        %v1223 = vpop.trf.xlu0
        %v1224 = vrot.slane %v1176, 4
        %vm1225 = vcmask 1047556
        %v1226 = vsel %vm1225, %v1224, %v1112
        %v1227 = vrot.slane %v1112, 4
        %v1228 = vsel %vm1225, %v1176, %v1227
        %v1230 = vunpack.c.l.s4 1983009808
        %v1231 = vunpack.c.0.s8 %v1230
        %v1232 = vperm.slane %v1226, %v1231
        %v1234 = vunpack.c.l.s4 1983009808
        %v1235 = vunpack.c.0.s8 %v1234
        %v1236 = vperm.slane %v1228, %v1235
        %v1237 = vrot.slane %v1208, 4
        %v1238 = vsel %vm1225, %v1237, %v1144
        %v1239 = vrot.slane %v1144, 4
        %v1240 = vsel %vm1225, %v1208, %v1239
        %v1242 = vunpack.c.l.s4 1983009808
        %v1243 = vunpack.c.0.s8 %v1242
        %v1244 = vperm.slane %v1238, %v1243
        %v1246 = vunpack.c.l.s4 1983009808
        %v1247 = vunpack.c.0.s8 %v1246
        %v1248 = vperm.slane %v1240, %v1247
        %v1249 = vrot.slane %v1244, 4
        %v1250 = vsel %vm1225, %v1249, %v1232
        %v1251 = vrot.slane %v1232, 4
        %v1252 = vsel %vm1225, %v1244, %v1251
        %v1254 = vunpack.c.l.s4 1934713408
        %v1255 = vunpack.c.0.s8 %v1254
        %v1256 = vperm.slane %v1250, %v1255
        %v1258 = vunpack.c.l.s4 1934713408
        %v1259 = vunpack.c.0.s8 %v1258
        %v1260 = vperm.slane %v1252, %v1259
        %v1261 = vrot.slane %v1248, 4
        %v1262 = vsel %vm1225, %v1261, %v1236
        %v1263 = vrot.slane %v1236, 4
        %v1264 = vsel %vm1225, %v1248, %v1263
        %v1266 = vunpack.c.l.s4 1934713408
        %v1267 = vunpack.c.0.s8 %v1266
        %v1268 = vperm.slane %v1262, %v1267
        %v1270 = vunpack.c.l.s4 1934713408
        %v1271 = vunpack.c.0.s8 %v1270
        %v1272 = vperm.slane %v1264, %v1271
        %v1273 = vrot.slane %v1256, 4
        %v1274 = vsel %vm1225, 0.0, %v1273
        %v1275 = vrot.slane %v1260, 4
        %v1276 = vsel %vm1225, 0.0, %v1275
        %v1277 = vrot.slane %v1268, 4
        %v1278 = vsel %vm1225, 0.0, %v1277
        %v1279 = vrot.slane %v1272, 4
        %v1280 = vsel %vm1225, 0.0, %v1279
        %v1281 = vsel %vm1225, %v1275, %v1256
        %v1283 = vunpack.c.l.s4 1983009808
        %v1284 = vunpack.c.0.s8 %v1283
        %v1285 = vperm.slane %v1281, %v1284
        %v1286 = vrot.slane %v1276, 4
        %v1287 = vsel %vm1225, %v1286, %v1274
        %v1289 = vunpack.c.l.s4 1983009808
        %v1290 = vunpack.c.0.s8 %v1289
        %v1291 = vperm.slane %v1287, %v1290
        %v1292 = vsel %vm1225, %v1279, %v1268
        %v1294 = vunpack.c.l.s4 1983009808
        %v1295 = vunpack.c.0.s8 %v1294
        %v1296 = vperm.slane %v1292, %v1295
        %v1297 = vrot.slane %v1280, 4
        %v1298 = vsel %vm1225, %v1297, %v1278
        %v1300 = vunpack.c.l.s4 1983009808
        %v1301 = vunpack.c.0.s8 %v1300
        %v1302 = vperm.slane %v1298, %v1301
        %v1303 = vrot.slane %v1291, 4
        %v1304 = vsel %vm1225, %v1303, %v1285
        %v1305 = vrot.slane %v1285, 4
        %v1306 = vsel %vm1225, %v1291, %v1305
        %v1308 = vunpack.c.l.s4 1934713408
        %v1309 = vunpack.c.0.s8 %v1308
        %v1310 = vperm.slane %v1304, %v1309
        %v1312 = vunpack.c.l.s4 1934713408
        %v1313 = vunpack.c.0.s8 %v1312
        %v1314 = vperm.slane %v1306, %v1313
        %v1315 = vrot.slane %v1302, 4
        %v1316 = vsel %vm1225, %v1315, %v1296
        %v1317 = vrot.slane %v1296, 4
        %v1318 = vsel %vm1225, %v1302, %v1317
        %v1320 = vunpack.c.l.s4 1934713408
        %v1321 = vunpack.c.0.s8 %v1320
        %v1322 = vperm.slane %v1316, %v1321
        %v1324 = vunpack.c.l.s4 1934713408
        %v1325 = vunpack.c.0.s8 %v1324
        %v1326 = vperm.slane %v1318, %v1325
        %v1327 = vrot.slane %v1322, 4
        %v1328 = vsel %vm1225, %v1327, %v1310
        %v1329 = vrot.slane %v1310, 4
        %v1330 = vsel %vm1225, %v1322, %v1329
        %v1331 = vrot.slane %v1326, 4
        %v1332 = vsel %vm1225, %v1331, %v1314
        %v1333 = vrot.slane %v1314, 4
        %v1334 = vsel %vm1225, %v1326, %v1333
        %1336 = vrot.lane.b32.xlu0 %v1330, 8
        %v1337 = vpop.permute.xlu0 %1336
        %1340 = vrot.lane.b32.xlu0 %v1332, 16
        %v1341 = vpop.permute.xlu0 %1340
        %1344 = vrot.lane.b32.xlu0 %v1334, 24
        %v1345 = vpop.permute.xlu0 %1344
        %v1347 = vsel %vm705, %v1328, %v1337
        %vm1348 = vcmask 130048
        %v1349 = vsel %vm1348, %v1347, %v1341
        %vm1350 = vcmask 195584
        %v1351 = vsel %vm1350, %v1349, %v1345
        %v1352 = vld [vmem:[%s4] sm:$0xff]
        %v1353 = vld [vmem:[%s4 + $0x8] sm:$0xff]
        %v1354 = vld [vmem:[%s4 + $0x10] sm:$0xff]
        %v1355 = vld [vmem:[%s4 + $0x18] sm:$0xff]
        %v1356 = vld [vmem:[%s5] sm:$0x1]
        %v1358 = vperm.slane %v1356, 0
        %v1361 = vsel %vm534, %v1351, 0
        %1363 = vmatpush.msra.mxu0 0.0
        %1364 = vmatpush.msra.mxu0 0.0
        %1365 = vmatpush.msra.mxu0 0.0
        %1366 = vmatpush.msra.mxu0 0.0
        %1367 = vmatpush.msra.mxu0 0.0
        %1368 = vmatpush.msra.mxu0 0.0
        %1369 = vmatpush.msra.mxu0 0.0
        %1370 = vmatpush.msra.mxu0 0.0
        %1371 = vmatpush.msra.mxu0 0.0
        %1372 = vmatpush.msra.mxu0 0.0
        %1373 = vmatpush.msra.mxu0 0.0
        %1374 = vmatpush.msra.mxu0 0.0
        %1375 = vmatpush.msra.mxu0 %v1355
        %1376 = vmatpush.msra.mxu0 %v1354
        %1377 = vmatpush.msra.mxu0 %v1353
        %1378 = vmatpush.msra.mxu0 %v1352
        %1379 = vmatmul.f32.gmra.mxu0 %v1361
        %v1380 = vpop.f32.mrf.mxu0
        %v1381 = vadd.f32 %v1358, %v1380
        %1382 = vdwg.mxu0
        %v1383 = vadd.f32 %v1381, %v525
        %v1384 = vld [vmem:[%s6] sm:$0x1]
        %v1385 = vld [vmem:[%s7] sm:$0x1]
        %v1386 = vsel %vm534, %v1383, 0.0
        %1387 = vadd.xlane.f32.xlu0 %v1386
        %v1388 = vpop.xlane.xlu0 %1387
        %v1389 = vrcp.pop 32.0
        %v1390 = vmul.f32 32.0, %v1389
        %v1391 = vsub.f32 1.0, %v1390
        %v1392 = vmul.f32 %v1389, %v1391
        %v1393 = vadd.f32 %v1389, %v1392
        %vm1394 = vweird.f32 %v1389
        %v1395 = vsel %vm1394, %v1389, %v1393
        %v1396 = vmul.f32 %v1388, %v1395
        %v1397 = vsub.f32 %v1383, %v1396
        %v1398 = vmul.f32 %v1397, %v1397
        %v1399 = vsel %vm534, %v1398, 0.0
        %1400 = vadd.xlane.f32.xlu0 %v1399
        %v1401 = vpop.xlane.xlu0 %1400
        %v1402 = vmul.f32 %v1401, %v1395
        %v1403 = vadd.f32 %v1402, 1e-05
        %v1404 = vrsqrt.pop %v1403
        %v1405 = vmul.f32 %v1404, %v1403
        %v1406 = vmul.f32 %v1405, %v1404
        %v1407 = vmul.f32 0.5, %v1406
        %v1408 = vsub.f32 1.5, %v1407
        %v1409 = vmul.f32 %v1404, %v1408
        %vm1410 = vweird.f32 %v1403
        %vm1411 = vweird.f32 %v1404
        %vm1412 = vmor %vm1410, %vm1411
        %v1413 = vsel %vm1412, %v1404, %v1409
        %v1414 = vmul.f32 %v1397, %v1413
        %v1416 = vperm.slane %v1384, 0
        %v1418 = vmul.f32 %v1414, %v1416
        %v1420 = vperm.slane %v1385, 0
        %v1422 = vadd.f32 %v1418, %v1420
        %v1423 = vld [vmem:[%s8] sm:$0xff]
        %v1424 = vld [vmem:[%s8 + $0x8] sm:$0xff]
        %v1425 = vld [vmem:[%s8 + $0x10] sm:$0xff]
        %v1426 = vld [vmem:[%s8 + $0x18] sm:$0xff]
        %v1427 = vld [vmem:[%s9] sm:$0x1]
        %v1429 = vperm.slane %v1427, 0
        %v1432 = vsel %vm534, %v1422, 0
        %1434 = vmatpush.msra.mxu0 0.0
        %1435 = vmatpush.msra.mxu0 0.0
        %1436 = vmatpush.msra.mxu0 0.0
        %1437 = vmatpush.msra.mxu0 0.0
        %1438 = vmatpush.msra.mxu0 0.0
        %1439 = vmatpush.msra.mxu0 0.0
        %1440 = vmatpush.msra.mxu0 0.0
        %1441 = vmatpush.msra.mxu0 0.0
        %1442 = vmatpush.msra.mxu0 0.0
        %1443 = vmatpush.msra.mxu0 0.0
        %1444 = vmatpush.msra.mxu0 0.0
        %1445 = vmatpush.msra.mxu0 0.0
        %1446 = vmatpush.msra.mxu0 %v1426
        %1447 = vmatpush.msra.mxu0 %v1425
        %1448 = vmatpush.msra.mxu0 %v1424
        %1449 = vmatpush.msra.mxu0 %v1423
        %1450 = vmatmul.f32.gmra.mxu0 %v1432
        %v1451 = vpop.f32.mrf.mxu0
        %v1452 = vadd.f32 %v1429, %v1451
        %1453 = vdwg.mxu0
        %v1454 = vld [vmem:[%s10] sm:$0xff]
        %v1455 = vld [vmem:[%s10 + $0x8] sm:$0xff]
        %s1456 = scalar_lea.vmem %s10, 16
        %v1457 = vld [vmem:[%s1456] sm:$0xff]
        %v1458 = vld [vmem:[%s1456 + $0x8] sm:$0xff]
        %v1460 = vsel %vm1348, 0.0, 0
        %1462 = vmatpush.msra.mxu0 0.0
        %1463 = vmatpush.msra.mxu0 0.0
        %1464 = vmatpush.msra.mxu0 0.0
        %1465 = vmatpush.msra.mxu0 0.0
        %1466 = vmatpush.msra.mxu0 0.0
        %1467 = vmatpush.msra.mxu0 0.0
        %1468 = vmatpush.msra.mxu0 0.0
        %1469 = vmatpush.msra.mxu0 0.0
        %1470 = vmatpush.msra.mxu0 0.0
        %1471 = vmatpush.msra.mxu0 0.0
        %1472 = vmatpush.msra.mxu0 0.0
        %1473 = vmatpush.msra.mxu0 0.0
        %1474 = vmatpush.msra.mxu0 0.0
        %1475 = vmatpush.msra.mxu0 0.0
        %1476 = vmatpush.msra.mxu0 %v1455
        %1477 = vmatpush.msra.mxu0 %v1454
        %1478 = vmatmul.f32.gmra.mxu0 %v1460
        %v1479 = vpop.f32.mrf.mxu0
        %v1480 = vadd.f32 0.0, %v1479
        %1481 = vdwg.mxu0
        %v1482 = vadd.f32 %v1452, %v1480
        %1483 = vmatpush.msra.mxu0 0.0
        %1484 = vmatpush.msra.mxu0 0.0
        %1485 = vmatpush.msra.mxu0 0.0
        %1486 = vmatpush.msra.mxu0 0.0
        %1487 = vmatpush.msra.mxu0 0.0
        %1488 = vmatpush.msra.mxu0 0.0
        %1489 = vmatpush.msra.mxu0 0.0
        %1490 = vmatpush.msra.mxu0 0.0
        %1491 = vmatpush.msra.mxu0 0.0
        %1492 = vmatpush.msra.mxu0 0.0
        %1493 = vmatpush.msra.mxu0 0.0
        %1494 = vmatpush.msra.mxu0 0.0
        %1495 = vmatpush.msra.mxu0 0.0
        %1496 = vmatpush.msra.mxu0 0.0
        %1497 = vmatpush.msra.mxu0 %v1458
        %1498 = vmatpush.msra.mxu0 %v1457
        %1499 = vmatmul.f32.gmra.mxu0 %v1460
        %v1500 = vpop.f32.mrf.mxu0
        %v1501 = vadd.f32 0.0, %v1500
        %1502 = vdwg.mxu0
        %v1504 = vrot.slane %v1501, 1
        %1505 = vrot.lane.b32.xlu0 %v1504, 64
        %v1506 = vpop.permute.xlu0 %1505
        %v1508 = vadd.f32 %v1452, %v1506
        %v1509 = vxor.u32 %v1482, 2147483648
        %v1510 = vmul.f32 %v1509, 1.442695
        %v1511 = vpow.pop %v1510
        %v1512 = vadd.f32 %v1511, 1.0
        %v1513 = vrcp.pop %v1512
        %v1514 = vmul.f32 %v1512, %v1513
        %v1515 = vsub.f32 1.0, %v1514
        %v1516 = vmul.f32 %v1513, %v1515
        %v1517 = vadd.f32 %v1513, %v1516
        %vm1518 = vweird.f32 %v1512
        %vm1519 = vweird.f32 %v1513
        %vm1520 = vmor %vm1518, %vm1519
        %v1521 = vsel %vm1520, %v1513, %v1517
        %v1522 = vand.u32 2147483647, %v1512
        %vm1523 = vcmp.eq.f32.partialorder %v1522, 8.507059e+37
        %v1524 = vand.u32 %v1512, 2147483648
        %v1525 = vor.u32 1.1754944e-38, %v1524
        %v1526 = vsel %vm1523, %v1525, %v1521
        %v1527 = vmul.f32 1.0, %v1526
        %v1528 = vtanh.pop %v1482
        %v1529 = vmul.f32 %v1527, 0.0
        %1531 = vrot.lane.b32.xlu0 %v1528, 96
        %v1532 = vpop.permute.xlu0 %1531
        %v1534 = vmul.f32 %v1527, %v1532
        %1536 = vrot.lane.b32.xlu0 %v1534, 16
        %v1537 = vpop.permute.xlu0 %1536
        %v1539 = vadd.f32 %v1529, %v1537
        %v1540 = vtanh.pop %v1539
        %1542 = vrot.lane.b32.xlu0 %v1540, 32
        %v1543 = vpop.permute.xlu0 %1542
        %v1545 = vmul.f32 %v1527, %v1543
        %v1546 = vxor.u32 %v1508, 2147483648
        %v1547 = vmul.f32 %v1546, 1.442695
        %v1548 = vpow.pop %v1547
        %v1549 = vadd.f32 %v1548, 1.0
        %v1550 = vrcp.pop %v1549
        %v1551 = vmul.f32 %v1549, %v1550
        %v1552 = vsub.f32 1.0, %v1551
        %v1553 = vmul.f32 %v1550, %v1552
        %v1554 = vadd.f32 %v1550, %v1553
        %vm1555 = vweird.f32 %v1549
        %vm1556 = vweird.f32 %v1550
        %vm1557 = vmor %vm1555, %vm1556
        %v1558 = vsel %vm1557, %v1550, %v1554
        %v1559 = vand.u32 2147483647, %v1549
        %vm1560 = vcmp.eq.f32.partialorder %v1559, 8.507059e+37
        %v1561 = vand.u32 %v1549, 2147483648
        %v1562 = vor.u32 1.1754944e-38, %v1561
        %v1563 = vsel %vm1560, %v1562, %v1558
        %v1564 = vmul.f32 1.0, %v1563
        %v1565 = vtanh.pop %v1508
        %v1566 = vmul.f32 %v1564, 0.0
        %1568 = vrot.lane.b32.xlu0 %v1565, 96
        %v1569 = vpop.permute.xlu0 %1568
        %v1571 = vmul.f32 %v1564, %v1569
        %1573 = vrot.lane.b32.xlu0 %v1571, 16
        %v1574 = vpop.permute.xlu0 %1573
        %v1576 = vadd.f32 %v1566, %v1574
        %v1577 = vtanh.pop %v1576
        %1579 = vrot.lane.b32.xlu0 %v1577, 32
        %v1580 = vpop.permute.xlu0 %1579
        %v1582 = vmul.f32 %v1564, %v1580
        %1584 = vrot.lane.b32.xlu0 %v1545, 80
        %v1585 = vpop.permute.xlu0 %1584
        %v1586 = vsel %vm1348, %v1585, 0
        %1588 = vmatpush.msra.mxu0 0.0
        %1589 = vmatpush.msra.mxu0 0.0
        %1590 = vmatpush.msra.mxu0 0.0
        %1591 = vmatpush.msra.mxu0 0.0
        %1592 = vmatpush.msra.mxu0 0.0
        %1593 = vmatpush.msra.mxu0 0.0
        %1594 = vmatpush.msra.mxu0 0.0
        %1595 = vmatpush.msra.mxu0 0.0
        %1596 = vmatpush.msra.mxu0 0.0
        %1597 = vmatpush.msra.mxu0 0.0
        %1598 = vmatpush.msra.mxu0 0.0
        %1599 = vmatpush.msra.mxu0 0.0
        %1600 = vmatpush.msra.mxu0 0.0
        %1601 = vmatpush.msra.mxu0 0.0
        %1602 = vmatpush.msra.mxu0 %v1455
        %1603 = vmatpush.msra.mxu0 %v1454
        %1604 = vmatmul.f32.gmra.mxu0 %v1586
        %v1605 = vpop.f32.mrf.mxu0
        %v1606 = vadd.f32 0.0, %v1605
        %1607 = vdwg.mxu0
        %v1609 = vrot.slane %v1606, 7
        %v1611 = vadd.f32 %v1452, %v1609
        %v1613 = vrot.slane %v1582, 7
        %1614 = vrot.lane.b32.xlu0 %v1613, 16
        %v1615 = vpop.permute.xlu0 %1614
        %v1616 = vsel %vm1348, %v1615, 0
        %1618 = vmatpush.msra.mxu0 0.0
        %1619 = vmatpush.msra.mxu0 0.0
        %1620 = vmatpush.msra.mxu0 0.0
        %1621 = vmatpush.msra.mxu0 0.0
        %1622 = vmatpush.msra.mxu0 0.0
        %1623 = vmatpush.msra.mxu0 0.0
        %1624 = vmatpush.msra.mxu0 0.0
        %1625 = vmatpush.msra.mxu0 0.0
        %1626 = vmatpush.msra.mxu0 0.0
        %1627 = vmatpush.msra.mxu0 0.0
        %1628 = vmatpush.msra.mxu0 0.0
        %1629 = vmatpush.msra.mxu0 0.0
        %1630 = vmatpush.msra.mxu0 0.0
        %1631 = vmatpush.msra.mxu0 0.0
        %1632 = vmatpush.msra.mxu0 %v1458
        %1633 = vmatpush.msra.mxu0 %v1457
        %1634 = vmatmul.f32.gmra.mxu0 %v1616
        %v1635 = vpop.f32.mrf.mxu0
        %v1636 = vadd.f32 0.0, %v1635
        %1637 = vdwg.mxu0
        %v1639 = vrot.slane %v1636, 2
        %1640 = vrot.lane.b32.xlu0 %v1639, 64
        %v1641 = vpop.permute.xlu0 %1640
        %v1643 = vadd.f32 %v1452, %v1641
        %v1644 = vxor.u32 %v1611, 2147483648
        %v1645 = vmul.f32 %v1644, 1.442695
        %v1646 = vpow.pop %v1645
        %v1647 = vadd.f32 %v1646, 1.0
        %v1648 = vrcp.pop %v1647
        %v1649 = vmul.f32 %v1647, %v1648
        %v1650 = vsub.f32 1.0, %v1649
        %v1651 = vmul.f32 %v1648, %v1650
        %v1652 = vadd.f32 %v1648, %v1651
        %vm1653 = vweird.f32 %v1647
        %vm1654 = vweird.f32 %v1648
        %vm1655 = vmor %vm1653, %vm1654
        %v1656 = vsel %vm1655, %v1648, %v1652
        %v1657 = vand.u32 2147483647, %v1647
        %vm1658 = vcmp.eq.f32.partialorder %v1657, 8.507059e+37
        %v1659 = vand.u32 %v1647, 2147483648
        %v1660 = vor.u32 1.1754944e-38, %v1659
        %v1661 = vsel %vm1658, %v1660, %v1656
        %v1662 = vmul.f32 1.0, %v1661
        %v1663 = vtanh.pop %v1611
        %v1665 = vrot.slane %v1539, 7
        %v1667 = vmul.f32 %v1662, %v1665
        %1669 = vrot.lane.b32.xlu0 %v1663, 96
        %v1670 = vpop.permute.xlu0 %1669
        %v1672 = vmul.f32 %v1662, %v1670
        %1674 = vrot.lane.b32.xlu0 %v1672, 16
        %v1675 = vpop.permute.xlu0 %1674
        %v1677 = vadd.f32 %v1667, %v1675
        %v1678 = vtanh.pop %v1677
        %1680 = vrot.lane.b32.xlu0 %v1678, 32
        %v1681 = vpop.permute.xlu0 %1680
        %v1683 = vmul.f32 %v1662, %v1681
        %v1684 = vxor.u32 %v1643, 2147483648
        %v1685 = vmul.f32 %v1684, 1.442695
        %v1686 = vpow.pop %v1685
        %v1687 = vadd.f32 %v1686, 1.0
        %v1688 = vrcp.pop %v1687
        %v1689 = vmul.f32 %v1687, %v1688
        %v1690 = vsub.f32 1.0, %v1689
        %v1691 = vmul.f32 %v1688, %v1690
        %v1692 = vadd.f32 %v1688, %v1691
        %vm1693 = vweird.f32 %v1687
        %vm1694 = vweird.f32 %v1688
        %vm1695 = vmor %vm1693, %vm1694
        %v1696 = vsel %vm1695, %v1688, %v1692
        %v1697 = vand.u32 2147483647, %v1687
        %vm1698 = vcmp.eq.f32.partialorder %v1697, 8.507059e+37
        %v1699 = vand.u32 %v1687, 2147483648
        %v1700 = vor.u32 1.1754944e-38, %v1699
        %v1701 = vsel %vm1698, %v1700, %v1696
        %v1702 = vmul.f32 1.0, %v1701
        %v1703 = vtanh.pop %v1643
        %v1705 = vrot.slane %v1576, 1
        %v1707 = vmul.f32 %v1702, %v1705
        %1709 = vrot.lane.b32.xlu0 %v1703, 96
        %v1710 = vpop.permute.xlu0 %1709
        %v1712 = vmul.f32 %v1702, %v1710
        %1714 = vrot.lane.b32.xlu0 %v1712, 16
        %v1715 = vpop.permute.xlu0 %1714
        %v1717 = vadd.f32 %v1707, %v1715
        %v1718 = vtanh.pop %v1717
        %1720 = vrot.lane.b32.xlu0 %v1718, 32
        %v1721 = vpop.permute.xlu0 %1720
        %v1723 = vmul.f32 %v1702, %v1721
        %v1725 = vrot.slane %v1683, 1
        %1726 = vrot.lane.b32.xlu0 %v1725, 80
        %v1727 = vpop.permute.xlu0 %1726
        %v1728 = vsel %vm1348, %v1727, 0
        %1730 = vmatpush.msra.mxu0 0.0
        %1731 = vmatpush.msra.mxu0 0.0
        %1732 = vmatpush.msra.mxu0 0.0
        %1733 = vmatpush.msra.mxu0 0.0
        %1734 = vmatpush.msra.mxu0 0.0
        %1735 = vmatpush.msra.mxu0 0.0
        %1736 = vmatpush.msra.mxu0 0.0
        %1737 = vmatpush.msra.mxu0 0.0
        %1738 = vmatpush.msra.mxu0 0.0
        %1739 = vmatpush.msra.mxu0 0.0
        %1740 = vmatpush.msra.mxu0 0.0
        %1741 = vmatpush.msra.mxu0 0.0
        %1742 = vmatpush.msra.mxu0 0.0
        %1743 = vmatpush.msra.mxu0 0.0
        %1744 = vmatpush.msra.mxu0 %v1455
        %1745 = vmatpush.msra.mxu0 %v1454
        %1746 = vmatmul.f32.gmra.mxu0 %v1728
        %v1747 = vpop.f32.mrf.mxu0
        %v1748 = vadd.f32 0.0, %v1747
        %1749 = vdwg.mxu0
        %v1751 = vrot.slane %v1748, 6
        %v1753 = vadd.f32 %v1452, %v1751
        %v1755 = vrot.slane %v1723, 6
        %1756 = vrot.lane.b32.xlu0 %v1755, 16
        %v1757 = vpop.permute.xlu0 %1756
        %v1758 = vsel %vm1348, %v1757, 0
        %1760 = vmatpush.msra.mxu0 0.0
        %1761 = vmatpush.msra.mxu0 0.0
        %1762 = vmatpush.msra.mxu0 0.0
        %1763 = vmatpush.msra.mxu0 0.0
        %1764 = vmatpush.msra.mxu0 0.0
        %1765 = vmatpush.msra.mxu0 0.0
        %1766 = vmatpush.msra.mxu0 0.0
        %1767 = vmatpush.msra.mxu0 0.0
        %1768 = vmatpush.msra.mxu0 0.0
        %1769 = vmatpush.msra.mxu0 0.0
        %1770 = vmatpush.msra.mxu0 0.0
        %1771 = vmatpush.msra.mxu0 0.0
        %1772 = vmatpush.msra.mxu0 0.0
        %1773 = vmatpush.msra.mxu0 0.0
        %1774 = vmatpush.msra.mxu0 %v1458
        %1775 = vmatpush.msra.mxu0 %v1457
        %1776 = vmatmul.f32.gmra.mxu0 %v1758
        %v1777 = vpop.f32.mrf.mxu0
        %v1778 = vadd.f32 0.0, %v1777
        %1779 = vdwg.mxu0
        %v1781 = vrot.slane %v1778, 3
        %1782 = vrot.lane.b32.xlu0 %v1781, 64
        %v1783 = vpop.permute.xlu0 %1782
        %v1785 = vadd.f32 %v1452, %v1783
        %v1786 = vxor.u32 %v1753, 2147483648
        %v1787 = vmul.f32 %v1786, 1.442695
        %v1788 = vpow.pop %v1787
        %v1789 = vadd.f32 %v1788, 1.0
        %v1790 = vrcp.pop %v1789
        %v1791 = vmul.f32 %v1789, %v1790
        %v1792 = vsub.f32 1.0, %v1791
        %v1793 = vmul.f32 %v1790, %v1792
        %v1794 = vadd.f32 %v1790, %v1793
        %vm1795 = vweird.f32 %v1789
        %vm1796 = vweird.f32 %v1790
        %vm1797 = vmor %vm1795, %vm1796
        %v1798 = vsel %vm1797, %v1790, %v1794
        %v1799 = vand.u32 2147483647, %v1789
        %vm1800 = vcmp.eq.f32.partialorder %v1799, 8.507059e+37
        %v1801 = vand.u32 %v1789, 2147483648
        %v1802 = vor.u32 1.1754944e-38, %v1801
        %v1803 = vsel %vm1800, %v1802, %v1798
        %v1804 = vmul.f32 1.0, %v1803
        %v1805 = vtanh.pop %v1753
        %v1807 = vrot.slane %v1677, 7
        %v1809 = vmul.f32 %v1804, %v1807
        %1811 = vrot.lane.b32.xlu0 %v1805, 96
        %v1812 = vpop.permute.xlu0 %1811
        %v1814 = vmul.f32 %v1804, %v1812
        %1816 = vrot.lane.b32.xlu0 %v1814, 16
        %v1817 = vpop.permute.xlu0 %1816
        %v1819 = vadd.f32 %v1809, %v1817
        %v1820 = vtanh.pop %v1819
        %1822 = vrot.lane.b32.xlu0 %v1820, 32
        %v1823 = vpop.permute.xlu0 %1822
        %v1825 = vmul.f32 %v1804, %v1823
        %v1826 = vxor.u32 %v1785, 2147483648
        %v1827 = vmul.f32 %v1826, 1.442695
        %v1828 = vpow.pop %v1827
        %v1829 = vadd.f32 %v1828, 1.0
        %v1830 = vrcp.pop %v1829
        %v1831 = vmul.f32 %v1829, %v1830
        %v1832 = vsub.f32 1.0, %v1831
        %v1833 = vmul.f32 %v1830, %v1832
        %v1834 = vadd.f32 %v1830, %v1833
        %vm1835 = vweird.f32 %v1829
        %vm1836 = vweird.f32 %v1830
        %vm1837 = vmor %vm1835, %vm1836
        %v1838 = vsel %vm1837, %v1830, %v1834
        %v1839 = vand.u32 2147483647, %v1829
        %vm1840 = vcmp.eq.f32.partialorder %v1839, 8.507059e+37
        %v1841 = vand.u32 %v1829, 2147483648
        %v1842 = vor.u32 1.1754944e-38, %v1841
        %v1843 = vsel %vm1840, %v1842, %v1838
        %v1844 = vmul.f32 1.0, %v1843
        %v1845 = vtanh.pop %v1785
        %v1847 = vrot.slane %v1717, 1
        %v1849 = vmul.f32 %v1844, %v1847
        %1851 = vrot.lane.b32.xlu0 %v1845, 96
        %v1852 = vpop.permute.xlu0 %1851
        %v1854 = vmul.f32 %v1844, %v1852
        %1856 = vrot.lane.b32.xlu0 %v1854, 16
        %v1857 = vpop.permute.xlu0 %1856
        %v1859 = vadd.f32 %v1849, %v1857
        %v1860 = vtanh.pop %v1859
        %1862 = vrot.lane.b32.xlu0 %v1860, 32
        %v1863 = vpop.permute.xlu0 %1862
        %v1865 = vmul.f32 %v1844, %v1863
        %v1867 = vrot.slane %v1825, 2
        %1868 = vrot.lane.b32.xlu0 %v1867, 80
        %v1869 = vpop.permute.xlu0 %1868
        %v1870 = vsel %vm1348, %v1869, 0
        %1872 = vmatpush.msra.mxu0 0.0
        %1873 = vmatpush.msra.mxu0 0.0
        %1874 = vmatpush.msra.mxu0 0.0
        %1875 = vmatpush.msra.mxu0 0.0
        %1876 = vmatpush.msra.mxu0 0.0
        %1877 = vmatpush.msra.mxu0 0.0
        %1878 = vmatpush.msra.mxu0 0.0
        %1879 = vmatpush.msra.mxu0 0.0
        %1880 = vmatpush.msra.mxu0 0.0
        %1881 = vmatpush.msra.mxu0 0.0
        %1882 = vmatpush.msra.mxu0 0.0
        %1883 = vmatpush.msra.mxu0 0.0
        %1884 = vmatpush.msra.mxu0 0.0
        %1885 = vmatpush.msra.mxu0 0.0
        %1886 = vmatpush.msra.mxu0 %v1455
        %1887 = vmatpush.msra.mxu0 %v1454
        %1888 = vmatmul.f32.gmra.mxu0 %v1870
        %v1889 = vpop.f32.mrf.mxu0
        %v1890 = vadd.f32 0.0, %v1889
        %1891 = vdwg.mxu0
        %v1893 = vrot.slane %v1890, 5
        %v1895 = vadd.f32 %v1452, %v1893
        %v1897 = vrot.slane %v1865, 5
        %1898 = vrot.lane.b32.xlu0 %v1897, 16
        %v1899 = vpop.permute.xlu0 %1898
        %v1900 = vsel %vm1348, %v1899, 0
        %1902 = vmatpush.msra.mxu0 0.0
        %1903 = vmatpush.msra.mxu0 0.0
        %1904 = vmatpush.msra.mxu0 0.0
        %1905 = vmatpush.msra.mxu0 0.0
        %1906 = vmatpush.msra.mxu0 0.0
        %1907 = vmatpush.msra.mxu0 0.0
        %1908 = vmatpush.msra.mxu0 0.0
        %1909 = vmatpush.msra.mxu0 0.0
        %1910 = vmatpush.msra.mxu0 0.0
        %1911 = vmatpush.msra.mxu0 0.0
        %1912 = vmatpush.msra.mxu0 0.0
        %1913 = vmatpush.msra.mxu0 0.0
        %1914 = vmatpush.msra.mxu0 0.0
        %1915 = vmatpush.msra.mxu0 0.0
        %1916 = vmatpush.msra.mxu0 %v1458
        %1917 = vmatpush.msra.mxu0 %v1457
        %1918 = vmatmul.f32.gmra.mxu0 %v1900
        %v1919 = vpop.f32.mrf.mxu0
        %v1920 = vadd.f32 0.0, %v1919
        %1921 = vdwg.mxu0
        %v1923 = vrot.slane %v1920, 4
        %1924 = vrot.lane.b32.xlu0 %v1923, 64
        %v1925 = vpop.permute.xlu0 %1924
        %v1927 = vadd.f32 %v1452, %v1925
        %v1928 = vxor.u32 %v1895, 2147483648
        %v1929 = vmul.f32 %v1928, 1.442695
        %v1930 = vpow.pop %v1929
        %v1931 = vadd.f32 %v1930, 1.0
        %v1932 = vrcp.pop %v1931
        %v1933 = vmul.f32 %v1931, %v1932
        %v1934 = vsub.f32 1.0, %v1933
        %v1935 = vmul.f32 %v1932, %v1934
        %v1936 = vadd.f32 %v1932, %v1935
        %vm1937 = vweird.f32 %v1931
        %vm1938 = vweird.f32 %v1932
        %vm1939 = vmor %vm1937, %vm1938
        %v1940 = vsel %vm1939, %v1932, %v1936
        %v1941 = vand.u32 2147483647, %v1931
        %vm1942 = vcmp.eq.f32.partialorder %v1941, 8.507059e+37
        %v1943 = vand.u32 %v1931, 2147483648
        %v1944 = vor.u32 1.1754944e-38, %v1943
        %v1945 = vsel %vm1942, %v1944, %v1940
        %v1946 = vmul.f32 1.0, %v1945
        %v1947 = vtanh.pop %v1895
        %v1949 = vrot.slane %v1819, 7
        %v1951 = vmul.f32 %v1946, %v1949
        %1953 = vrot.lane.b32.xlu0 %v1947, 96
        %v1954 = vpop.permute.xlu0 %1953
        %v1956 = vmul.f32 %v1946, %v1954
        %1958 = vrot.lane.b32.xlu0 %v1956, 16
        %v1959 = vpop.permute.xlu0 %1958
        %v1961 = vadd.f32 %v1951, %v1959
        %v1962 = vtanh.pop %v1961
        %1964 = vrot.lane.b32.xlu0 %v1962, 32
        %v1965 = vpop.permute.xlu0 %1964
        %v1967 = vmul.f32 %v1946, %v1965
        %v1968 = vxor.u32 %v1927, 2147483648
        %v1969 = vmul.f32 %v1968, 1.442695
        %v1970 = vpow.pop %v1969
        %v1971 = vadd.f32 %v1970, 1.0
        %v1972 = vrcp.pop %v1971
        %v1973 = vmul.f32 %v1971, %v1972
        %v1974 = vsub.f32 1.0, %v1973
        %v1975 = vmul.f32 %v1972, %v1974
        %v1976 = vadd.f32 %v1972, %v1975
        %vm1977 = vweird.f32 %v1971
        %vm1978 = vweird.f32 %v1972
        %vm1979 = vmor %vm1977, %vm1978
        %v1980 = vsel %vm1979, %v1972, %v1976
        %v1981 = vand.u32 2147483647, %v1971
        %vm1982 = vcmp.eq.f32.partialorder %v1981, 8.507059e+37
        %v1983 = vand.u32 %v1971, 2147483648
        %v1984 = vor.u32 1.1754944e-38, %v1983
        %v1985 = vsel %vm1982, %v1984, %v1980
        %v1986 = vmul.f32 1.0, %v1985
        %v1987 = vtanh.pop %v1927
        %v1989 = vrot.slane %v1859, 1
        %v1991 = vmul.f32 %v1986, %v1989
        %1993 = vrot.lane.b32.xlu0 %v1987, 96
        %v1994 = vpop.permute.xlu0 %1993
        %v1996 = vmul.f32 %v1986, %v1994
        %1998 = vrot.lane.b32.xlu0 %v1996, 16
        %v1999 = vpop.permute.xlu0 %1998
        %v2001 = vadd.f32 %v1991, %v1999
        %v2002 = vtanh.pop %v2001
        %2004 = vrot.lane.b32.xlu0 %v2002, 32
        %v2005 = vpop.permute.xlu0 %2004
        %v2007 = vmul.f32 %v1986, %v2005
        %v2009 = vrot.slane %v1967, 3
        %2010 = vrot.lane.b32.xlu0 %v2009, 80
        %v2011 = vpop.permute.xlu0 %2010
        %v2012 = vsel %vm1348, %v2011, 0
        %2014 = vmatpush.msra.mxu0 0.0
        %2015 = vmatpush.msra.mxu0 0.0
        %2016 = vmatpush.msra.mxu0 0.0
        %2017 = vmatpush.msra.mxu0 0.0
        %2018 = vmatpush.msra.mxu0 0.0
        %2019 = vmatpush.msra.mxu0 0.0
        %2020 = vmatpush.msra.mxu0 0.0
        %2021 = vmatpush.msra.mxu0 0.0
        %2022 = vmatpush.msra.mxu0 0.0
        %2023 = vmatpush.msra.mxu0 0.0
        %2024 = vmatpush.msra.mxu0 0.0
        %2025 = vmatpush.msra.mxu0 0.0
        %2026 = vmatpush.msra.mxu0 0.0
        %2027 = vmatpush.msra.mxu0 0.0
        %2028 = vmatpush.msra.mxu0 %v1455
        %2029 = vmatpush.msra.mxu0 %v1454
        %2030 = vmatmul.f32.gmra.mxu0 %v2012
        %v2031 = vpop.f32.mrf.mxu0
        %v2032 = vadd.f32 0.0, %v2031
        %2033 = vdwg.mxu0
        %v2035 = vrot.slane %v2032, 4
        %v2037 = vadd.f32 %v1452, %v2035
        %v2039 = vrot.slane %v2007, 4
        %2040 = vrot.lane.b32.xlu0 %v2039, 16
        %v2041 = vpop.permute.xlu0 %2040
        %v2042 = vsel %vm1348, %v2041, 0
        %2044 = vmatpush.msra.mxu0 0.0
        %2045 = vmatpush.msra.mxu0 0.0
        %2046 = vmatpush.msra.mxu0 0.0
        %2047 = vmatpush.msra.mxu0 0.0
        %2048 = vmatpush.msra.mxu0 0.0
        %2049 = vmatpush.msra.mxu0 0.0
        %2050 = vmatpush.msra.mxu0 0.0
        %2051 = vmatpush.msra.mxu0 0.0
        %2052 = vmatpush.msra.mxu0 0.0
        %2053 = vmatpush.msra.mxu0 0.0
        %2054 = vmatpush.msra.mxu0 0.0
        %2055 = vmatpush.msra.mxu0 0.0
        %2056 = vmatpush.msra.mxu0 0.0
        %2057 = vmatpush.msra.mxu0 0.0
        %2058 = vmatpush.msra.mxu0 %v1458
        %2059 = vmatpush.msra.mxu0 %v1457
        %2060 = vmatmul.f32.gmra.mxu0 %v2042
        %v2061 = vpop.f32.mrf.mxu0
        %v2062 = vadd.f32 0.0, %v2061
        %2063 = vdwg.mxu0
        %v2065 = vrot.slane %v2062, 5
        %2066 = vrot.lane.b32.xlu0 %v2065, 64
        %v2067 = vpop.permute.xlu0 %2066
        %v2069 = vadd.f32 %v1452, %v2067
        %v2070 = vxor.u32 %v2037, 2147483648
        %v2071 = vmul.f32 %v2070, 1.442695
        %v2072 = vpow.pop %v2071
        %v2073 = vadd.f32 %v2072, 1.0
        %v2074 = vrcp.pop %v2073
        %v2075 = vmul.f32 %v2073, %v2074
        %v2076 = vsub.f32 1.0, %v2075
        %v2077 = vmul.f32 %v2074, %v2076
        %v2078 = vadd.f32 %v2074, %v2077
        %vm2079 = vweird.f32 %v2073
        %vm2080 = vweird.f32 %v2074
        %vm2081 = vmor %vm2079, %vm2080
        %v2082 = vsel %vm2081, %v2074, %v2078
        %v2083 = vand.u32 2147483647, %v2073
        %vm2084 = vcmp.eq.f32.partialorder %v2083, 8.507059e+37
        %v2085 = vand.u32 %v2073, 2147483648
        %v2086 = vor.u32 1.1754944e-38, %v2085
        %v2087 = vsel %vm2084, %v2086, %v2082
        %v2088 = vmul.f32 1.0, %v2087
        %v2089 = vtanh.pop %v2037
        %v2091 = vrot.slane %v1961, 7
        %v2093 = vmul.f32 %v2088, %v2091
        %2095 = vrot.lane.b32.xlu0 %v2089, 96
        %v2096 = vpop.permute.xlu0 %2095
        %v2098 = vmul.f32 %v2088, %v2096
        %2100 = vrot.lane.b32.xlu0 %v2098, 16
        %v2101 = vpop.permute.xlu0 %2100
        %v2103 = vadd.f32 %v2093, %v2101
        %v2104 = vtanh.pop %v2103
        %2106 = vrot.lane.b32.xlu0 %v2104, 32
        %v2107 = vpop.permute.xlu0 %2106
        %v2109 = vmul.f32 %v2088, %v2107
        %v2110 = vxor.u32 %v2069, 2147483648
        %v2111 = vmul.f32 %v2110, 1.442695
        %v2112 = vpow.pop %v2111
        %v2113 = vadd.f32 %v2112, 1.0
        %v2114 = vrcp.pop %v2113
        %v2115 = vmul.f32 %v2113, %v2114
        %v2116 = vsub.f32 1.0, %v2115
        %v2117 = vmul.f32 %v2114, %v2116
        %v2118 = vadd.f32 %v2114, %v2117
        %vm2119 = vweird.f32 %v2113
        %vm2120 = vweird.f32 %v2114
        %vm2121 = vmor %vm2119, %vm2120
        %v2122 = vsel %vm2121, %v2114, %v2118
        %v2123 = vand.u32 2147483647, %v2113
        %vm2124 = vcmp.eq.f32.partialorder %v2123, 8.507059e+37
        %v2125 = vand.u32 %v2113, 2147483648
        %v2126 = vor.u32 1.1754944e-38, %v2125
        %v2127 = vsel %vm2124, %v2126, %v2122
        %v2128 = vmul.f32 1.0, %v2127
        %v2129 = vtanh.pop %v2069
        %v2131 = vrot.slane %v2001, 1
        %v2133 = vmul.f32 %v2128, %v2131
        %2135 = vrot.lane.b32.xlu0 %v2129, 96
        %v2136 = vpop.permute.xlu0 %2135
        %v2138 = vmul.f32 %v2128, %v2136
        %2140 = vrot.lane.b32.xlu0 %v2138, 16
        %v2141 = vpop.permute.xlu0 %2140
        %v2143 = vadd.f32 %v2133, %v2141
        %v2144 = vtanh.pop %v2143
        %2146 = vrot.lane.b32.xlu0 %v2144, 32
        %v2147 = vpop.permute.xlu0 %2146
        %v2149 = vmul.f32 %v2128, %v2147
        %v2151 = vrot.slane %v2109, 4
        %2152 = vrot.lane.b32.xlu0 %v2151, 80
        %v2153 = vpop.permute.xlu0 %2152
        %v2154 = vsel %vm1348, %v2153, 0
        %2156 = vmatpush.msra.mxu0 0.0
        %2157 = vmatpush.msra.mxu0 0.0
        %2158 = vmatpush.msra.mxu0 0.0
        %2159 = vmatpush.msra.mxu0 0.0
        %2160 = vmatpush.msra.mxu0 0.0
        %2161 = vmatpush.msra.mxu0 0.0
        %2162 = vmatpush.msra.mxu0 0.0
        %2163 = vmatpush.msra.mxu0 0.0
        %2164 = vmatpush.msra.mxu0 0.0
        %2165 = vmatpush.msra.mxu0 0.0
        %2166 = vmatpush.msra.mxu0 0.0
        %2167 = vmatpush.msra.mxu0 0.0
        %2168 = vmatpush.msra.mxu0 0.0
        %2169 = vmatpush.msra.mxu0 0.0
        %2170 = vmatpush.msra.mxu0 %v1455
        %2171 = vmatpush.msra.mxu0 %v1454
        %2172 = vmatmul.f32.gmra.mxu0 %v2154
        %v2173 = vpop.f32.mrf.mxu0
        %v2174 = vadd.f32 0.0, %v2173
        %2175 = vdwg.mxu0
        %v2177 = vrot.slane %v2174, 3
        %v2179 = vadd.f32 %v1452, %v2177
        %v2181 = vrot.slane %v2149, 3
        %2182 = vrot.lane.b32.xlu0 %v2181, 16
        %v2183 = vpop.permute.xlu0 %2182
        %v2184 = vsel %vm1348, %v2183, 0
        %2186 = vmatpush.msra.mxu0 0.0
        %2187 = vmatpush.msra.mxu0 0.0
        %2188 = vmatpush.msra.mxu0 0.0
        %2189 = vmatpush.msra.mxu0 0.0
        %2190 = vmatpush.msra.mxu0 0.0
        %2191 = vmatpush.msra.mxu0 0.0
        %2192 = vmatpush.msra.mxu0 0.0
        %2193 = vmatpush.msra.mxu0 0.0
        %2194 = vmatpush.msra.mxu0 0.0
        %2195 = vmatpush.msra.mxu0 0.0
        %2196 = vmatpush.msra.mxu0 0.0
        %2197 = vmatpush.msra.mxu0 0.0
        %2198 = vmatpush.msra.mxu0 0.0
        %2199 = vmatpush.msra.mxu0 0.0
        %2200 = vmatpush.msra.mxu0 %v1458
        %2201 = vmatpush.msra.mxu0 %v1457
        %2202 = vmatmul.f32.gmra.mxu0 %v2184
        %v2203 = vpop.f32.mrf.mxu0
        %v2204 = vadd.f32 0.0, %v2203
        %2205 = vdwg.mxu0
        %v2207 = vrot.slane %v2204, 6
        %2208 = vrot.lane.b32.xlu0 %v2207, 64
        %v2209 = vpop.permute.xlu0 %2208
        %v2211 = vadd.f32 %v1452, %v2209
        %v2212 = vxor.u32 %v2179, 2147483648
        %v2213 = vmul.f32 %v2212, 1.442695
        %v2214 = vpow.pop %v2213
        %v2215 = vadd.f32 %v2214, 1.0
        %v2216 = vrcp.pop %v2215
        %v2217 = vmul.f32 %v2215, %v2216
        %v2218 = vsub.f32 1.0, %v2217
        %v2219 = vmul.f32 %v2216, %v2218
        %v2220 = vadd.f32 %v2216, %v2219
        %vm2221 = vweird.f32 %v2215
        %vm2222 = vweird.f32 %v2216
        %vm2223 = vmor %vm2221, %vm2222
        %v2224 = vsel %vm2223, %v2216, %v2220
        %v2225 = vand.u32 2147483647, %v2215
        %vm2226 = vcmp.eq.f32.partialorder %v2225, 8.507059e+37
        %v2227 = vand.u32 %v2215, 2147483648
        %v2228 = vor.u32 1.1754944e-38, %v2227
        %v2229 = vsel %vm2226, %v2228, %v2224
        %v2230 = vmul.f32 1.0, %v2229
        %v2231 = vtanh.pop %v2179
        %v2233 = vrot.slane %v2103, 7
        %v2235 = vmul.f32 %v2230, %v2233
        %2237 = vrot.lane.b32.xlu0 %v2231, 96
        %v2238 = vpop.permute.xlu0 %2237
        %v2240 = vmul.f32 %v2230, %v2238
        %2242 = vrot.lane.b32.xlu0 %v2240, 16
        %v2243 = vpop.permute.xlu0 %2242
        %v2245 = vadd.f32 %v2235, %v2243
        %v2246 = vtanh.pop %v2245
        %2248 = vrot.lane.b32.xlu0 %v2246, 32
        %v2249 = vpop.permute.xlu0 %2248
        %v2251 = vmul.f32 %v2230, %v2249
        %v2252 = vxor.u32 %v2211, 2147483648
        %v2253 = vmul.f32 %v2252, 1.442695
        %v2254 = vpow.pop %v2253
        %v2255 = vadd.f32 %v2254, 1.0
        %v2256 = vrcp.pop %v2255
        %v2257 = vmul.f32 %v2255, %v2256
        %v2258 = vsub.f32 1.0, %v2257
        %v2259 = vmul.f32 %v2256, %v2258
        %v2260 = vadd.f32 %v2256, %v2259
        %vm2261 = vweird.f32 %v2255
        %vm2262 = vweird.f32 %v2256
        %vm2263 = vmor %vm2261, %vm2262
        %v2264 = vsel %vm2263, %v2256, %v2260
        %v2265 = vand.u32 2147483647, %v2255
        %vm2266 = vcmp.eq.f32.partialorder %v2265, 8.507059e+37
        %v2267 = vand.u32 %v2255, 2147483648
        %v2268 = vor.u32 1.1754944e-38, %v2267
        %v2269 = vsel %vm2266, %v2268, %v2264
        %v2270 = vmul.f32 1.0, %v2269
        %v2271 = vtanh.pop %v2211
        %v2273 = vrot.slane %v2143, 1
        %v2275 = vmul.f32 %v2270, %v2273
        %2277 = vrot.lane.b32.xlu0 %v2271, 96
        %v2278 = vpop.permute.xlu0 %2277
        %v2280 = vmul.f32 %v2270, %v2278
        %2282 = vrot.lane.b32.xlu0 %v2280, 16
        %v2283 = vpop.permute.xlu0 %2282
        %v2285 = vadd.f32 %v2275, %v2283
        %v2286 = vtanh.pop %v2285
        %2288 = vrot.lane.b32.xlu0 %v2286, 32
        %v2289 = vpop.permute.xlu0 %2288
        %v2291 = vmul.f32 %v2270, %v2289
        %v2293 = vrot.slane %v2251, 5
        %2294 = vrot.lane.b32.xlu0 %v2293, 80
        %v2295 = vpop.permute.xlu0 %2294
        %v2296 = vsel %vm1348, %v2295, 0
        %2298 = vmatpush.msra.mxu0 0.0
        %2299 = vmatpush.msra.mxu0 0.0
        %2300 = vmatpush.msra.mxu0 0.0
        %2301 = vmatpush.msra.mxu0 0.0
        %2302 = vmatpush.msra.mxu0 0.0
        %2303 = vmatpush.msra.mxu0 0.0
        %2304 = vmatpush.msra.mxu0 0.0
        %2305 = vmatpush.msra.mxu0 0.0
        %2306 = vmatpush.msra.mxu0 0.0
        %2307 = vmatpush.msra.mxu0 0.0
        %2308 = vmatpush.msra.mxu0 0.0
        %2309 = vmatpush.msra.mxu0 0.0
        %2310 = vmatpush.msra.mxu0 0.0
        %2311 = vmatpush.msra.mxu0 0.0
        %2312 = vmatpush.msra.mxu0 %v1455
        %2313 = vmatpush.msra.mxu0 %v1454
        %2314 = vmatmul.f32.gmra.mxu0 %v2296
        %v2315 = vpop.f32.mrf.mxu0
        %v2316 = vadd.f32 0.0, %v2315
        %2317 = vdwg.mxu0
        %v2319 = vrot.slane %v2316, 2
        %v2321 = vadd.f32 %v1452, %v2319
        %v2323 = vrot.slane %v2291, 2
        %2324 = vrot.lane.b32.xlu0 %v2323, 16
        %v2325 = vpop.permute.xlu0 %2324
        %v2326 = vsel %vm1348, %v2325, 0
        %2328 = vmatpush.msra.mxu0 0.0
        %2329 = vmatpush.msra.mxu0 0.0
        %2330 = vmatpush.msra.mxu0 0.0
        %2331 = vmatpush.msra.mxu0 0.0
        %2332 = vmatpush.msra.mxu0 0.0
        %2333 = vmatpush.msra.mxu0 0.0
        %2334 = vmatpush.msra.mxu0 0.0
        %2335 = vmatpush.msra.mxu0 0.0
        %2336 = vmatpush.msra.mxu0 0.0
        %2337 = vmatpush.msra.mxu0 0.0
        %2338 = vmatpush.msra.mxu0 0.0
        %2339 = vmatpush.msra.mxu0 0.0
        %2340 = vmatpush.msra.mxu0 0.0
        %2341 = vmatpush.msra.mxu0 0.0
        %2342 = vmatpush.msra.mxu0 %v1458
        %2343 = vmatpush.msra.mxu0 %v1457
        %2344 = vmatmul.f32.gmra.mxu0 %v2326
        %v2345 = vpop.f32.mrf.mxu0
        %v2346 = vadd.f32 0.0, %v2345
        %2347 = vdwg.mxu0
        %v2349 = vrot.slane %v2346, 7
        %2350 = vrot.lane.b32.xlu0 %v2349, 64
        %v2351 = vpop.permute.xlu0 %2350
        %v2353 = vadd.f32 %v1452, %v2351
        %v2354 = vxor.u32 %v2321, 2147483648
        %v2355 = vmul.f32 %v2354, 1.442695
        %v2356 = vpow.pop %v2355
        %v2357 = vadd.f32 %v2356, 1.0
        %v2358 = vrcp.pop %v2357
        %v2359 = vmul.f32 %v2357, %v2358
        %v2360 = vsub.f32 1.0, %v2359
        %v2361 = vmul.f32 %v2358, %v2360
        %v2362 = vadd.f32 %v2358, %v2361
        %vm2363 = vweird.f32 %v2357
        %vm2364 = vweird.f32 %v2358
        %vm2365 = vmor %vm2363, %vm2364
        %v2366 = vsel %vm2365, %v2358, %v2362
        %v2367 = vand.u32 2147483647, %v2357
        %vm2368 = vcmp.eq.f32.partialorder %v2367, 8.507059e+37
        %v2369 = vand.u32 %v2357, 2147483648
        %v2370 = vor.u32 1.1754944e-38, %v2369
        %v2371 = vsel %vm2368, %v2370, %v2366
        %v2372 = vmul.f32 1.0, %v2371
        %v2373 = vtanh.pop %v2321
        %v2375 = vrot.slane %v2245, 7
        %v2377 = vmul.f32 %v2372, %v2375
        %2379 = vrot.lane.b32.xlu0 %v2373, 96
        %v2380 = vpop.permute.xlu0 %2379
        %v2382 = vmul.f32 %v2372, %v2380
        %2384 = vrot.lane.b32.xlu0 %v2382, 16
        %v2385 = vpop.permute.xlu0 %2384
        %v2387 = vadd.f32 %v2377, %v2385
        %v2388 = vtanh.pop %v2387
        %2390 = vrot.lane.b32.xlu0 %v2388, 32
        %v2391 = vpop.permute.xlu0 %2390
        %v2393 = vmul.f32 %v2372, %v2391
        %v2394 = vxor.u32 %v2353, 2147483648
        %v2395 = vmul.f32 %v2394, 1.442695
        %v2396 = vpow.pop %v2395
        %v2397 = vadd.f32 %v2396, 1.0
        %v2398 = vrcp.pop %v2397
        %v2399 = vmul.f32 %v2397, %v2398
        %v2400 = vsub.f32 1.0, %v2399
        %v2401 = vmul.f32 %v2398, %v2400
        %v2402 = vadd.f32 %v2398, %v2401
        %vm2403 = vweird.f32 %v2397
        %vm2404 = vweird.f32 %v2398
        %vm2405 = vmor %vm2403, %vm2404
        %v2406 = vsel %vm2405, %v2398, %v2402
        %v2407 = vand.u32 2147483647, %v2397
        %vm2408 = vcmp.eq.f32.partialorder %v2407, 8.507059e+37
        %v2409 = vand.u32 %v2397, 2147483648
        %v2410 = vor.u32 1.1754944e-38, %v2409
        %v2411 = vsel %vm2408, %v2410, %v2406
        %v2412 = vmul.f32 1.0, %v2411
        %v2413 = vtanh.pop %v2353
        %v2415 = vrot.slane %v2285, 1
        %v2417 = vmul.f32 %v2412, %v2415
        %2419 = vrot.lane.b32.xlu0 %v2413, 96
        %v2420 = vpop.permute.xlu0 %2419
        %v2422 = vmul.f32 %v2412, %v2420
        %2424 = vrot.lane.b32.xlu0 %v2422, 16
        %v2425 = vpop.permute.xlu0 %2424
        %v2427 = vadd.f32 %v2417, %v2425
        %v2428 = vtanh.pop %v2427
        %2430 = vrot.lane.b32.xlu0 %v2428, 32
        %v2431 = vpop.permute.xlu0 %2430
        %v2433 = vmul.f32 %v2412, %v2431
        %v2435 = vrot.slane %v2393, 6
        %2436 = vrot.lane.b32.xlu0 %v2435, 80
        %v2437 = vpop.permute.xlu0 %2436
        %v2438 = vsel %vm1348, %v2437, 0
        %2440 = vmatpush.msra.mxu0 0.0
        %2441 = vmatpush.msra.mxu0 0.0
        %2442 = vmatpush.msra.mxu0 0.0
        %2443 = vmatpush.msra.mxu0 0.0
        %2444 = vmatpush.msra.mxu0 0.0
        %2445 = vmatpush.msra.mxu0 0.0
        %2446 = vmatpush.msra.mxu0 0.0
        %2447 = vmatpush.msra.mxu0 0.0
        %2448 = vmatpush.msra.mxu0 0.0
        %2449 = vmatpush.msra.mxu0 0.0
        %2450 = vmatpush.msra.mxu0 0.0
        %2451 = vmatpush.msra.mxu0 0.0
        %2452 = vmatpush.msra.mxu0 0.0
        %2453 = vmatpush.msra.mxu0 0.0
        %2454 = vmatpush.msra.mxu0 %v1455
        %2455 = vmatpush.msra.mxu0 %v1454
        %2456 = vmatmul.f32.gmra.mxu0 %v2438
        %v2457 = vpop.f32.mrf.mxu0
        %v2458 = vadd.f32 0.0, %v2457
        %2459 = vdwg.mxu0
        %v2461 = vrot.slane %v2458, 1
        %v2463 = vadd.f32 %v1452, %v2461
        %v2465 = vrot.slane %v2433, 1
        %2466 = vrot.lane.b32.xlu0 %v2465, 16
        %v2467 = vpop.permute.xlu0 %2466
        %v2468 = vsel %vm1348, %v2467, 0
        %2470 = vmatpush.msra.mxu0 0.0
        %2471 = vmatpush.msra.mxu0 0.0
        %2472 = vmatpush.msra.mxu0 0.0
        %2473 = vmatpush.msra.mxu0 0.0
        %2474 = vmatpush.msra.mxu0 0.0
        %2475 = vmatpush.msra.mxu0 0.0
        %2476 = vmatpush.msra.mxu0 0.0
        %2477 = vmatpush.msra.mxu0 0.0
        %2478 = vmatpush.msra.mxu0 0.0
        %2479 = vmatpush.msra.mxu0 0.0
        %2480 = vmatpush.msra.mxu0 0.0
        %2481 = vmatpush.msra.mxu0 0.0
        %2482 = vmatpush.msra.mxu0 0.0
        %2483 = vmatpush.msra.mxu0 0.0
        %2484 = vmatpush.msra.mxu0 %v1458
        %2485 = vmatpush.msra.mxu0 %v1457
        %2486 = vmatmul.f32.gmra.mxu0 %v2468
        %v2487 = vpop.f32.mrf.mxu0
        %v2488 = vadd.f32 0.0, %v2487
        %2489 = vdwg.mxu0
        %2491 = vrot.lane.b32.xlu0 %v2488, 64
        %v2492 = vpop.permute.xlu0 %2491
        %v2494 = vadd.f32 %v1452, %v2492
        %v2495 = vxor.u32 %v2463, 2147483648
        %v2496 = vmul.f32 %v2495, 1.442695
        %v2497 = vpow.pop %v2496
        %v2498 = vadd.f32 %v2497, 1.0
        %v2499 = vrcp.pop %v2498
        %v2500 = vmul.f32 %v2498, %v2499
        %v2501 = vsub.f32 1.0, %v2500
        %v2502 = vmul.f32 %v2499, %v2501
        %v2503 = vadd.f32 %v2499, %v2502
        %vm2504 = vweird.f32 %v2498
        %vm2505 = vweird.f32 %v2499
        %vm2506 = vmor %vm2504, %vm2505
        %v2507 = vsel %vm2506, %v2499, %v2503
        %v2508 = vand.u32 2147483647, %v2498
        %vm2509 = vcmp.eq.f32.partialorder %v2508, 8.507059e+37
        %v2510 = vand.u32 %v2498, 2147483648
        %v2511 = vor.u32 1.1754944e-38, %v2510
        %v2512 = vsel %vm2509, %v2511, %v2507
        %v2513 = vmul.f32 1.0, %v2512
        %v2514 = vtanh.pop %v2463
        %v2516 = vrot.slane %v2387, 7
        %v2518 = vmul.f32 %v2513, %v2516
        %2520 = vrot.lane.b32.xlu0 %v2514, 96
        %v2521 = vpop.permute.xlu0 %2520
        %v2523 = vmul.f32 %v2513, %v2521
        %2525 = vrot.lane.b32.xlu0 %v2523, 16
        %v2526 = vpop.permute.xlu0 %2525
        %v2528 = vadd.f32 %v2518, %v2526
        %v2529 = vtanh.pop %v2528
        %2531 = vrot.lane.b32.xlu0 %v2529, 32
        %v2532 = vpop.permute.xlu0 %2531
        %v2534 = vmul.f32 %v2513, %v2532
        %v2535 = vxor.u32 %v2494, 2147483648
        %v2536 = vmul.f32 %v2535, 1.442695
        %v2537 = vpow.pop %v2536
        %v2538 = vadd.f32 %v2537, 1.0
        %v2539 = vrcp.pop %v2538
        %v2540 = vmul.f32 %v2538, %v2539
        %v2541 = vsub.f32 1.0, %v2540
        %v2542 = vmul.f32 %v2539, %v2541
        %v2543 = vadd.f32 %v2539, %v2542
        %vm2544 = vweird.f32 %v2538
        %vm2545 = vweird.f32 %v2539
        %vm2546 = vmor %vm2544, %vm2545
        %v2547 = vsel %vm2546, %v2539, %v2543
        %v2548 = vand.u32 2147483647, %v2538
        %vm2549 = vcmp.eq.f32.partialorder %v2548, 8.507059e+37
        %v2550 = vand.u32 %v2538, 2147483648
        %v2551 = vor.u32 1.1754944e-38, %v2550
        %v2552 = vsel %vm2549, %v2551, %v2547
        %v2553 = vmul.f32 1.0, %v2552
        %v2554 = vtanh.pop %v2494
        %v2556 = vrot.slane %v2427, 1
        %v2558 = vmul.f32 %v2553, %v2556
        %2560 = vrot.lane.b32.xlu0 %v2554, 96
        %v2561 = vpop.permute.xlu0 %2560
        %v2563 = vmul.f32 %v2553, %v2561
        %2565 = vrot.lane.b32.xlu0 %v2563, 16
        %v2566 = vpop.permute.xlu0 %2565
        %v2568 = vadd.f32 %v2558, %v2566
        %v2569 = vtanh.pop %v2568
        %2571 = vrot.lane.b32.xlu0 %v2569, 32
        %v2572 = vpop.permute.xlu0 %2571
        %v2574 = vmul.f32 %v2553, %v2572
        %vm2575 = vcmask 1040384
        %v2576 = vsel %vm2575, %v1545, %v1683
        %vm2577 = vcmask 1041408
        %v2578 = vsel %vm2577, %v2576, %v1825
        %vm2579 = vcmask 1042432
        %v2580 = vsel %vm2579, %v2578, %v1967
        %vm2581 = vcmask 1043456
        %v2582 = vsel %vm2581, %v2580, %v2109
        %vm2583 = vcmask 1044480
        %v2584 = vsel %vm2583, %v2582, %v2251
        %vm2585 = vcmask 1045504
        %v2586 = vsel %vm2585, %v2584, %v2393
        %vm2587 = vcmask 1046528
        %v2588 = vsel %vm2587, %v2586, %v2534
        %v2589 = vsel %vm2575, %v2574, %v2433
        %v2590 = vsel %vm2577, %v2589, %v2291
        %v2591 = vsel %vm2579, %v2590, %v2149
        %v2592 = vsel %vm2581, %v2591, %v2007
        %v2593 = vsel %vm2583, %v2592, %v1865
        %v2594 = vsel %vm2585, %v2593, %v1723
        %v2595 = vsel %vm2587, %v2594, %v1582
        %2597 = vrot.lane.b32.xlu0 %v2588, 80
        %v2598 = vpop.permute.xlu0 %2597
        %2601 = vrot.lane.b32.xlu0 %v2595, 32
        %v2602 = vpop.permute.xlu0 %2601
        %v2604 = vsel %vm1348, %v2598, %v2602
        %v2605 = vadd.f32 %v1422, %v2604
        %v2606 = vld [vmem:[%s11] sm:$0x1]
        %v2607 = vld [vmem:[%s12] sm:$0x1]
        %v2608 = vsel %vm534, %v2605, 0.0
        %2609 = vadd.xlane.f32.xlu0 %v2608
        %v2610 = vpop.xlane.xlu0 %2609
        %v2611 = vmul.f32 %v2610, %v1395
        %v2612 = vsub.f32 %v2605, %v2611
        %v2613 = vmul.f32 %v2612, %v2612
        %v2614 = vsel %vm534, %v2613, 0.0
        %2615 = vadd.xlane.f32.xlu0 %v2614
        %v2616 = vpop.xlane.xlu0 %2615
        %v2617 = vmul.f32 %v2616, %v1395
        %v2618 = vadd.f32 %v2617, 1e-05
        %v2619 = vrsqrt.pop %v2618
        %v2620 = vmul.f32 %v2619, %v2618
        %v2621 = vmul.f32 %v2620, %v2619
        %v2622 = vmul.f32 0.5, %v2621
        %v2623 = vsub.f32 1.5, %v2622
        %v2624 = vmul.f32 %v2619, %v2623
        %vm2625 = vweird.f32 %v2618
        %vm2626 = vweird.f32 %v2619
        %vm2627 = vmor %vm2625, %vm2626
        %v2628 = vsel %vm2627, %v2619, %v2624
        %v2629 = vmul.f32 %v2612, %v2628
        %v2631 = vperm.slane %v2606, 0
        %v2633 = vmul.f32 %v2629, %v2631
        %v2635 = vperm.slane %v2607, 0
        %v2637 = vadd.f32 %v2633, %v2635
        %2638 = vst.msk [vmem:[%s524] sm:$0xff] %vm534, %v2637
        %v2640 = vrot.slane %v2534, 7
        %v2643 = vrot.slane %v2574, 7
        %2644 = vrot.lane.b32.xlu0 %v2643, 64
        %v2645 = vpop.permute.xlu0 %2644
        %v2647 = vsel %vm2575, %v2640, %v2645
        %2649 = vrot.lane.b32.xlu0 %v2647, 80
        %v2650 = vpop.permute.xlu0 %2649
        %vm2652 = vcmask 123904
        %2653 = vst.msk [vmem:[%s506] sm:$0x3] %vm2652, %v2650
        %v2655 = vrot.slane %v2528, 7
        %v2658 = vrot.slane %v2568, 7
        %2659 = vrot.lane.b32.xlu0 %v2658, 64
        %v2660 = vpop.permute.xlu0 %2659
        %v2662 = vsel %vm2575, %v2655, %v2660
        %2664 = vrot.lane.b32.xlu0 %v2662, 112
        %v2665 = vpop.permute.xlu0 %2664
        %2667 = vst.msk [vmem:[%s513] sm:$0x3] %vm2652, %v2665
        %p2668 = scmp.lt.s32.totalorder %s33, 1
        %s2669 = scalar_select %p2668, %s33, 1
        %s2670 = smul.addr %s2669, 8
        %s2671 = scalar_lea.vmem %s13, %s2670
        %s2672 = sand.u32 %s350, 1
        %s2673 = scalar_lea.sflag [#allocation3], %s2672
        %s2674 = sand.u32 %s350, 1
        %s2675 = smul.addr %s2674, 2
        %s2676 = scalar_lea.vmem [#allocation2], %s2675
        %s2677 = sand.u32 %s376, 1
        %s2678 = scalar_lea.sflag [#allocation5], %s2677
        %s2679 = sand.u32 %s376, 1
        %s2680 = smul.addr %s2679, 2
        %s2681 = scalar_lea.vmem [#allocation4], %s2680
        // Predicated region
        $region73: #{lab_forward.2} parent=71 // pred_check
          %p2682 = pneg %p334
        $region74: #{lab_forward.2} parent=71 // pred_check_branch
          %2684 = sbr.rel (%p2682) target = $region76
        $region75: #{lab_forward.2} parent=71 // pred_region
          _
        $region76: #{lab_forward.2} parent=71 // pred_fallthru
          _
        // Predicated region
        $region77: #{lab_forward.2} parent=71 // pred_check
          %p2685 = pneg %p360
        $region78: #{lab_forward.2} parent=71 // pred_check_branch
          %2687 = sbr.rel (%p2685) target = $region80
        $region79: #{lab_forward.2} parent=71 // pred_region
          %2689 = vsyncadd %s2673, 0
          %s2690 = smul.addr %s33, 2
          %s2691 = scalar_lea.hbm %s14, %s2690
          %s2693 = sshll.u32 %s2676, 4
          %s2694 = int_to_ptr.vmem [resolvable:$true] %s2693
          %s2695 = sshll.u32 %s2691, 4
          %s2696 = int_to_ptr.hbm [resolvable:$true] %s2695
          %2698 = dma.vmem_to_hbm [thread:$0]  %s2694, 32, %s2696, %s2673
        $region80: #{lab_forward.2} parent=71 // pred_fallthru
          _
        // Predicated region
        $region81: #{lab_forward.2} parent=71 // pred_check
          %p2699 = pneg %p386
        $region82: #{lab_forward.2} parent=71 // pred_check_branch
          %2701 = sbr.rel (%p2699) target = $region84
        $region83: #{lab_forward.2} parent=71 // pred_region
          %2703 = vsyncadd %s2678, 0
          %s2704 = smul.addr %s33, 2
          %s2705 = scalar_lea.hbm %s15, %s2704
          %s2707 = sshll.u32 %s2681, 4
          %s2708 = int_to_ptr.vmem [resolvable:$true] %s2707
          %s2709 = sshll.u32 %s2705, 4
          %s2710 = int_to_ptr.hbm [resolvable:$true] %s2709
          %2712 = dma.vmem_to_hbm [thread:$0]  %s2708, 32, %s2710, %s2678
        $region84: #{lab_forward.2} parent=71 // pred_fallthru
          _
      $region72: #{lab_forward.2} parent=5 // pred_fallthru
        _
      %p2713 = scmp.le.s32.totalorder 2, %s28
      // Predicated region
      $region85: #{lab_forward.2} parent=5 // pred_check
        %p2714 = pneg %p2713
      $region86: #{lab_forward.2} parent=5 // pred_check_branch
        %2716 = sbr.rel (%p2714) target = $region88
      $region87: #{lab_forward.2} parent=5 // pred_region
        %s2717 = ssub.s32 %s28, 2
        // Predicated region
        $region89: #{lab_forward.2} parent=87 // pred_check
          %p2718 = pneg %p340
        $region90: #{lab_forward.2} parent=87 // pred_check_branch
          %2720 = sbr.rel (%p2718) target = $region92
        $region91: #{lab_forward.2} parent=87 // pred_region
          %p2721 = scmp.lt.s32.totalorder %s34, 1
          %s2722 = scalar_select %p2721, %s34, 1
          %s2723 = smul.addr %s2722, 8
          %s2724 = scalar_lea.vmem %s13, %s2723
        $region92: #{lab_forward.2} parent=87 // pred_fallthru
          _
        // Predicated region
        $region93: #{lab_forward.2} parent=87 // pred_check
          %p2725 = pneg %p366
        $region94: #{lab_forward.2} parent=87 // pred_check_branch
          %2727 = sbr.rel (%p2725) target = $region96
        $region95: #{lab_forward.2} parent=87 // pred_region
          %s2728 = sand.u32 %s351, 1
          %s2729 = scalar_lea.sflag [#allocation3], %s2728
          %s2730 = sand.u32 %s351, 1
          %s2731 = smul.addr %s2730, 2
          %s2732 = scalar_lea.vmem [#allocation2], %s2731
          %2734 = dma.done %s2729, 32
        $region96: #{lab_forward.2} parent=87 // pred_fallthru
          _
        // Predicated region
        $region97: #{lab_forward.2} parent=87 // pred_check
          %p2735 = pneg %p392
        $region98: #{lab_forward.2} parent=87 // pred_check_branch
          %2737 = sbr.rel (%p2735) target = $region100
        $region99: #{lab_forward.2} parent=87 // pred_region
          %s2738 = sand.u32 %s377, 1
          %s2739 = scalar_lea.sflag [#allocation5], %s2738
          %s2740 = sand.u32 %s377, 1
          %s2741 = smul.addr %s2740, 2
          %s2742 = scalar_lea.vmem [#allocation4], %s2741
          %2744 = dma.done %s2739, 32
        $region100: #{lab_forward.2} parent=87 // pred_fallthru
          _
      $region88: #{lab_forward.2} parent=5 // pred_fallthru
        _
    $region6: #{lab_forward.2} parent=1 // loop_footer
      %s32 = sadd.s32 1, %s28
    $region7: #{lab_forward.2} parent=1 // loop_footer_branch
      %27 = sbr.rel target = $region3
    $region8: #{lab_forward.2} parent=1 // loop_exit
      _
    %2745 = vsyncpa [#allocation3], 1
    %s2746 = scalar_lea.sflag [#allocation3], 1
    %2747 = vsyncpa %s2746, 1
    %2748 = vsyncpa [#allocation5], 1
    %s2749 = scalar_lea.sflag [#allocation5], 1
    %2750 = vsyncpa %s2749, 1

</llo_original>
